<compile_context>
chip_gen: v7x
topology: tpu7x:2x2x1
jax: 0.10.0
libtpu: 0.0.40
codegen_flags: <defaults>
</compile_context>

<pallas_src>
import functools

import jax
import jax.numpy as jnp
from jax.experimental import pallas as pl
from jax.experimental.pallas import tpu as pltpu

EPS = 1e-5

TM_MAX = 512            # rows (M = N*H*W) per matmul block
TM_MIN = 32
TN_MAX = 512            # output-channel lanes per block
TK_MAX = 1536           # reduction depth per block
VMEM_LIMIT = 32 * 1024 * 1024          # scoped-VMEM cap, safe on v5e/v6e/v7x
DIRECT_VMEM_BUDGET = 20 * 1024 * 1024  # direct-conv path working-set guard


def _round_up(x, m):
    return (x + m - 1) // m * m


def _choose_m_tile(M):
    """Row tile.  Yields >= 2 M blocks when big enough (v7x megacore)."""
    M16 = _round_up(max(M, 1), 16)
    if M16 <= TM_MAX:
        nb = 2 if M16 >= 2 * TM_MIN else 1
    else:
        nb = pl.cdiv(M16, TM_MAX)
    return min(TM_MAX, _round_up(pl.cdiv(M16, nb), 16))


def _choose_n_tiling(N):
    pN = _round_up(N, 128)              # lane-dense output columns
    if pN <= TN_MAX:
        return pN, pN
    best_pN, best_tn = None, None
    for tn in range(128, TN_MAX + 1, 128):
        cand = _round_up(N, tn)
        if best_pN is None or cand < best_pN or (cand == best_pN and tn > best_tn):
            best_pN, best_tn = cand, tn
    return best_pN, best_tn


def _choose_k_tiling(K):
    pK = _round_up(K, 16)
    if pK <= TK_MAX:                    # single K block: tk == (rounded) K
        return pK, pK
    best_pK, best_tk = None, None
    for tk in range(128, TK_MAX + 1, 128):
        cand = _round_up(K, tk)
        if best_pK is None or cand < best_pK or (cand == best_pK and tk > best_tk):
            best_pK, best_tk = cand, tk
    return best_pK, best_tk


# ----------------------------------------------------------------------------
# Kernel 1: fused matmul  out = act(A @ W + bias [+ residual]), A optionally
# pre-ReLU'd.  Used for 1x1 convs, stride!=1 3x3 convs (im2col) and fallbacks.
# grid = (M blocks, N blocks, K blocks); K last; f32 accumulator scratch.
# ----------------------------------------------------------------------------
def _mm_kernel(a_ref, w_ref, b_ref, *rest, act, pre_act, has_res):
    if has_res:
        r_ref, o_ref, acc_ref = rest
    else:
        o_ref, acc_ref = rest
    k = pl.program_id(2)

    @pl.when(k == 0)
    def _():
        acc_ref[...] = jnp.zeros_like(acc_ref)

    a = a_ref[...]
    if pre_act == "relu":
        a = jnp.maximum(a, 0)
    acc_ref[...] += jnp.dot(a, w_ref[...], preferred_element_type=jnp.float32)

    @pl.when(k == pl.num_programs(2) - 1)
    def _():
        y = acc_ref[...] + b_ref[...]
        if has_res:
            y = y + r_ref[...].astype(jnp.float32)
        if act == "relu":
            y = jnp.maximum(y, 0.0)
        o_ref[...] = y.astype(o_ref.dtype)


def fused_matmul(a, w, b, *, act="none", pre_act="none", residual=None,
                 out_dtype=jnp.bfloat16):
    """a: (M, K).  w: (K, N) bf16 (BN scale pre-folded).  b: (N,) f32."""
    M, K = a.shape
    Kw, N = w.shape
    assert K == Kw, (K, Kw)
    pK, tk = _choose_k_tiling(K)
    pN, tn = _choose_n_tiling(N)
    tm = _choose_m_tile(M)

    a = a.astype(jnp.bfloat16)
    if pK != K:                          # K MUST be zero-padded (acc hygiene)
        a = jnp.pad(a, ((0, 0), (0, pK - K)))
    w_p = w if (pK, pN) == (K, N) else jnp.pad(w, ((0, pK - K), (0, pN - N)))
    b_p = b if pN == N else jnp.pad(b, (0, pN - N))
    b_p = b_p.reshape(1, pN).astype(jnp.float32)

    args = [a, w_p, b_p]
    in_specs = [
        pl.BlockSpec((tm, tk), lambda i, j, k: (i, k)),
        pl.BlockSpec((tk, tn), lambda i, j, k: (k, j)),
        pl.BlockSpec((1, tn), lambda i, j, k: (0, j)),
    ]
    has_res = residual is not None
    if has_res:
        res = residual.astype(jnp.bfloat16)
        if pN != N:
            res = jnp.pad(res, ((0, 0), (0, pN - N)))
        args.append(res)
        in_specs.append(pl.BlockSpec((tm, tn), lambda i, j, k: (i, j)))

    out = pl.pallas_call(
        functools.partial(_mm_kernel, act=act, pre_act=pre_act, has_res=has_res),
        out_shape=jax.ShapeDtypeStruct((M, pN), out_dtype),
        grid_spec=pltpu.PrefetchScalarGridSpec(
            num_scalar_prefetch=0,
            grid=(pl.cdiv(M, tm), pN // tn, pK // tk),
            in_specs=in_specs,
            out_specs=pl.BlockSpec((tm, tn), lambda i, j, k: (i, j)),
            scratch_shapes=[pltpu.VMEM((tm, tn), jnp.float32)],
        ),
        compiler_params=pltpu.CompilerParams(
            dimension_semantics=("parallel", "parallel", "arbitrary"),
            vmem_limit_bytes=VMEM_LIMIT),
    )(*args)
    return out if pN == N else out[:, :N]


# ----------------------------------------------------------------------------
# Kernel 2: direct 3x3 stride-1 conv (no im2col).  One grid step per batch
# element; the whole (+1)-padded image sits in VMEM and the 9 taps are
# accumulated in f32.  Optional fused epilogues: bias+residual+ReLU, or the
# full ConvLSTM gate math (sigmoid/tanh + cell update) emitting h (bf16), c (f32).
# ----------------------------------------------------------------------------
def _dconv_kernel(*refs, H, W, C, act, pre_act, has_res, fuse_lstm, hid):
    if fuse_lstm:
        xp_ref, w_ref, b_ref, c_ref, h_ref, co_ref = refs
    elif has_res:
        xp_ref, w_ref, b_ref, r_ref, o_ref = refs
    else:
        xp_ref, w_ref, b_ref, o_ref = refs

    acc = None
    for di in range(3):
        for dj in range(3):
            a_t = xp_ref[0, di:di + H, dj:dj + W, :].reshape(H * W, C)
            if pre_act == "relu":
                a_t = jnp.maximum(a_t, 0)
            t = di * 3 + dj
            w_t = w_ref[t * C:(t + 1) * C, :]
            p = jnp.dot(a_t, w_t, preferred_element_type=jnp.float32)
            acc = p if acc is None else acc + p
    y = acc + b_ref[...]                               # (HW, Nout) f32

    if fuse_lstm:
        c_prev = c_ref[0].astype(jnp.float32)          # (HW, hid)
        in_g = jax.nn.sigmoid(y[:, 0:hid])
        rem_g = jax.nn.sigmoid(y[:, hid:2 * hid])
        out_g = jax.nn.sigmoid(y[:, 2 * hid:3 * hid])
        cell_g = jnp.tanh(y[:, 3 * hid:4 * hid])
        c_new = rem_g * c_prev + in_g * cell_g
        h_ref[...] = (out_g * jnp.tanh(c_new)).astype(h_ref.dtype)[None]
        co_ref[...] = c_new.astype(co_ref.dtype)[None]
    else:
        if has_res:
            y = y + r_ref[0].astype(jnp.float32)
        if act == "relu":
            y = jnp.maximum(y, 0.0)
        o_ref[...] = y.astype(o_ref.dtype)[None]


def _direct_ok(H, W, C, Nout):
    if W % 8 != 0:
        return False
    xp_b = (H + 2) * (W + 2) * C * 2
    w_b = 9 * C * Nout * 2
    io_b = H * W * Nout * 4
    est = 2 * xp_b + w_b + 3 * io_b + 2 * H * W * C * 2
    return est < DIRECT_VMEM_BUDGET


def _direct_conv(x, w, b, *, act="none", pre_act="none", residual=None,
                 prev_cell=None, hid=None, out_dtype=jnp.bfloat16):
    """x: (N, H, W, C) NHWC.  Returns (N, H*W, Nout) (or (h, c) if prev_cell)."""
    N, H, W, C = x.shape
    K9, Nout = w.shape
    assert K9 == 9 * C, (K9, C)
    HW = H * W
    xp = jnp.pad(x.astype(jnp.bfloat16), ((0, 0), (1, 1), (1, 1), (0, 0)))
    b2 = b.reshape(1, Nout).astype(jnp.float32)

    args = [xp, w, b2]
    in_specs = [
        pl.BlockSpec((1, H + 2, W + 2, C), lambda n: (n, 0, 0, 0)),
        pl.BlockSpec((9 * C, Nout), lambda n: (0, 0)),
        pl.BlockSpec((1, Nout), lambda n: (0, 0)),
    ]
    has_res = residual is not None
    fuse_lstm = prev_cell is not None
    if has_res:
        args.append(residual.reshape(N, HW, Nout).astype(jnp.bfloat16))
        in_specs.append(pl.BlockSpec((1, HW, Nout), lambda n: (n, 0, 0)))
    if fuse_lstm:
        args.append(prev_cell.reshape(N, HW, hid).astype(jnp.float32))
        in_specs.append(pl.BlockSpec((1, HW, hid), lambda n: (n, 0, 0)))
        out_shape = (jax.ShapeDtypeStruct((N, HW, hid), jnp.bfloat16),
                     jax.ShapeDtypeStruct((N, HW, hid), jnp.float32))
        out_specs = (pl.BlockSpec((1, HW, hid), lambda n: (n, 0, 0)),
                     pl.BlockSpec((1, HW, hid), lambda n: (n, 0, 0)))
    else:
        out_shape = jax.ShapeDtypeStruct((N, HW, Nout), out_dtype)
        out_specs = pl.BlockSpec((1, HW, Nout), lambda n: (n, 0, 0))

    return pl.pallas_call(
        functools.partial(_dconv_kernel, H=H, W=W, C=C, act=act, pre_act=pre_act,
                          has_res=has_res, fuse_lstm=fuse_lstm, hid=hid),
        out_shape=out_shape,
        grid_spec=pltpu.PrefetchScalarGridSpec(
            num_scalar_prefetch=0, grid=(N,),
            in_specs=in_specs, out_specs=out_specs),
        compiler_params=pltpu.CompilerParams(
            dimension_semantics=("parallel",),
            vmem_limit_bytes=VMEM_LIMIT),
    )(*args)


# ----------------------------------------------------------------------------
# Kernel 3 (fallback only): standalone ConvLSTM gate math, tiled over M.
# ----------------------------------------------------------------------------
def _lstm_gate_kernel(g_ref, c_ref, h_ref, co_ref):
    hid = c_ref.shape[-1]
    g = g_ref[...].astype(jnp.float32)
    c_prev = c_ref[...].astype(jnp.float32)
    in_g = jax.nn.sigmoid(g[:, 0:hid])
    rem_g = jax.nn.sigmoid(g[:, hid:2 * hid])
    out_g = jax.nn.sigmoid(g[:, 2 * hid:3 * hid])
    cell_g = jnp.tanh(g[:, 3 * hid:4 * hid])
    c_new = rem_g * c_prev + in_g * cell_g
    h_ref[...] = (out_g * jnp.tanh(c_new)).astype(h_ref.dtype)
    co_ref[...] = c_new.astype(co_ref.dtype)


def lstm_gates(gates, prev_cell):
    M, hid4 = gates.shape
    hid = hid4 // 4
    tm = _choose_m_tile(M)
    gspec = pl.BlockSpec((tm, hid4), lambda i: (i, 0))
    cspec = pl.BlockSpec((tm, hid), lambda i: (i, 0))
    h, c = pl.pallas_call(
        _lstm_gate_kernel,
        out_shape=(jax.ShapeDtypeStruct((M, hid), jnp.bfloat16),
                   jax.ShapeDtypeStruct((M, hid), jnp.float32)),
        grid=(pl.cdiv(M, tm),),
        in_specs=[gspec, cspec],
        out_specs=(cspec, cspec),
        compiler_params=pltpu.CompilerParams(
            dimension_semantics=("parallel",),
            vmem_limit_bytes=VMEM_LIMIT),
    )(gates, prev_cell.astype(jnp.float32))
    return h, c


# ----------------------------------------------------------------------------
# Conv dispatcher.  Direct kernel for 3x3 stride-1; im2col fallback otherwise.
# ----------------------------------------------------------------------------
def _im2col(x, k, stride, pad):
    N, H, W, C = x.shape
    xp = jnp.pad(x, ((0, 0), (pad, pad), (pad, pad), (0, 0)))
    Ho = (H + 2 * pad - k) // stride + 1
    Wo = (W + 2 * pad - k) // stride + 1
    cols = []
    for i in range(k):
        for j in range(k):
            cols.append(xp[:, i:i + stride * (Ho - 1) + 1:stride,
                           j:j + stride * (Wo - 1) + 1:stride, :])
    cols = jnp.concatenate(cols, axis=-1)
    return cols.reshape(N * Ho * Wo, k * k * C), (N, Ho, Wo)


def conv2d(x, prep, *, stride=1, act="none", pre_act="none", residual=None,
           out_dtype=jnp.bfloat16):
    """x: NHWC.  prep: scale-folded weights/bias.  Returns NHWC."""
    x = x.astype(jnp.bfloat16)
    N, H, W, _ = x.shape
    kh, cin, cout = prep["kh"], prep["cin"], prep["N"]

    if kh == 3 and stride == 1 and _direct_ok(H, W, cin, cout):
        res3 = None if residual is None else residual.reshape(N, H * W, cout)
        y = _direct_conv(x, prep["w"], prep["b"], act=act, pre_act=pre_act,
                         residual=res3, out_dtype=out_dtype)
        return y.reshape(N, H, W, cout)

    # Fallback: 1x1 / strided 3x3 via (im2col +) fused matmul.
    if kh == 1:
        xs = x[:, ::stride, ::stride, :]
        Nb, Ho, Wo, _ = xs.shape
        a = xs.reshape(Nb * Ho * Wo, cin)
    else:
        a, (Nb, Ho, Wo) = _im2col(x, kh, stride, (kh - 1) // 2)
    res2 = None if residual is None else residual.reshape(Nb * Ho * Wo, cout)
    y = fused_matmul(a, prep["w"], prep["b"], act=act, pre_act=pre_act,
                     residual=res2, out_dtype=out_dtype)
    return y.reshape(Nb, Ho, Wo, cout)


# ----------------------------------------------------------------------------
# One-time weight preparation (BN fold + layout) — out of the per-call path.
# ----------------------------------------------------------------------------
def bn_scale_bias(bn):
    scale = bn["gamma"] / jnp.sqrt(bn["var"] + EPS)
    return scale, bn["beta"] - bn["mean"] * scale


def prep_conv(w_torch, scale, bias):
    """w_torch: (cout, cin, kh, kw).  BN scale is folded into the weights."""
    cout, cin, kh, kw = w_torch.shape
    w = w_torch * scale[:, None, None, None]
    if kh == 1:
        wmat = w.reshape(cout, cin).T
    else:
        wmat = jnp.transpose(w, (2, 3, 1, 0)).reshape(kh * kw * cin, cout)
    return dict(w=wmat.astype(jnp.bfloat16), b=bias.astype(jnp.float32),
                kh=kh, cin=cin, K=wmat.shape[0], N=cout)


def merge_conv_shortcut(prep3, prep1):
    """Embed the 1x1 shortcut at the centre tap of a 3x3 kernel and concat
    along N: one matmul produces [conv1 | shortcut] (lane-dense 2*cout)."""
    cin, cout = prep3["cin"], prep3["N"]
    w1_3x3 = jnp.zeros((9 * cin, cout), jnp.bfloat16)
    w1_3x3 = w1_3x3.at[4 * cin:5 * cin, :].set(prep1["w"])
    w = jnp.concatenate([prep3["w"], w1_3x3], axis=1)
    b = jnp.concatenate([prep3["b"], prep1["b"]])
    return dict(w=w, b=b, kh=3, cin=cin, K=9 * cin, N=2 * cout)


# ----------------------------------------------------------------------------
# Model pieces: BasicBlock layer + ConvLSTM
# ----------------------------------------------------------------------------
def basic_block(x, blk):
    cout = blk["cout"]
    if "merged" in blk:
        # one matmul: [bn1(conv1(x)) | shortcut(x)]; first ReLU moves into
        # conv2's input (pre_act), final ReLU + residual-add fused in conv2.
        rs = conv2d(x, blk["merged"], stride=blk["stride"], act="none")
        r_pre, sc = rs[..., :cout], rs[..., cout:]
        return conv2d(r_pre, blk["c2"], stride=1, act="relu", pre_act="relu",
                      residual=sc)
    r = conv2d(x, blk["c1"], stride=blk["stride"], act="relu")
    return conv2d(r, blk["c2"], stride=1, act="relu", residual=x)


def conv_lstm(x, lstm, h, c):
    N, H, W, _ = x.shape
    hid = lstm["hidden"]
    prep = lstm["gates"]
    stacked = jnp.concatenate([x.astype(jnp.bfloat16), h.astype(jnp.bfloat16)],
                              axis=-1)
    if _direct_ok(H, W, 2 * hid, 4 * hid):
        h2, c2 = _direct_conv(stacked, prep["w"], prep["b"], act="none",
                              prev_cell=c, hid=hid)
        return h2.reshape(N, H, W, hid), c2.reshape(N, H, W, hid)
    # Fallback: f32 gate pre-activations + standalone gate kernel.
    gates = conv2d(stacked, prep, stride=1, act="none", out_dtype=jnp.float32)
    h2, c2 = lstm_gates(gates.reshape(N * H * W, 4 * hid),
                        c.reshape(N * H * W, hid))
    return h2.reshape(N, H, W, hid), c2.reshape(N, H, W, hid)


def recurrent_down_forward(x_nchw, h_nchw, c_nchw, params):
    """Matches Recurrent_Down.forward: x -> conv_x -> ConvLSTM -> (out, state)."""
    x = jnp.transpose(x_nchw, (0, 2, 3, 1))          # NCHW -> NHWC
    for blk in params["blocks"]:
        x = basic_block(x, blk)
    h = jnp.transpose(h_nchw, (0, 2, 3, 1))
    c = jnp.transpose(c_nchw, (0, 2, 3, 1))
    h_new, c_new = conv_lstm(x, params["lstm"], h, c)
    out = jnp.transpose(h_new.astype(jnp.float32), (0, 3, 1, 2))   # NHWC -> NCHW
    cell = jnp.transpose(c_new, (0, 3, 1, 2))
    return out, (out, cell)                          # out == state[0] (hidden)


# ----------------------------------------------------------------------------
# Deterministic synthetic parameters
# ----------------------------------------------------------------------------
class _Init:
    def __init__(self, seed=0):
        self.key = jax.random.PRNGKey(seed)

    def k(self):
        self.key, sub = jax.random.split(self.key)
        return sub

    def conv(self, cout, cin, ksz):
        fan = cin * ksz * ksz
        return jax.random.normal(self.k(), (cout, cin, ksz, ksz),
                                 jnp.float32) / jnp.sqrt(float(fan))

    def bias(self, c):
        return 0.01 * jax.random.normal(self.k(), (c,), jnp.float32)

    def bn(self, c):
        return dict(
            gamma=1.0 + 0.1 * jax.random.normal(self.k(), (c,), jnp.float32),
            beta=0.05 * jax.random.normal(self.k(), (c,), jnp.float32),
            mean=0.05 * jax.random.normal(self.k(), (c,), jnp.float32),
            var=1.0 + 0.1 * jnp.abs(jax.random.normal(self.k(), (c,), jnp.float32)),
        )


def build_params(in_channels, out_channels, num_block, stride, seed=0):
    g = _Init(seed)
    blocks = []
    strides = [stride] + [1] * (num_block - 1)
    cin = in_channels
    for s in strides:
        w1, bn1 = g.conv(out_channels, cin, 3), g.bn(out_channels)
        w2, bn2 = g.conv(out_channels, out_channels, 3), g.bn(out_channels)
        c1 = prep_conv(w1, *bn_scale_bias(bn1))
        c2 = prep_conv(w2, *bn_scale_bias(bn2))
        blk = dict(c2=c2, stride=s, cout=out_channels)
        if s != 1 or cin != out_channels:        # BasicBlock (expansion=1) shortcut
            ws, bns = g.conv(out_channels, cin, 1), g.bn(out_channels)
            blk["merged"] = merge_conv_shortcut(c1, prep_conv(ws, *bn_scale_bias(bns)))
        else:
            blk["c1"] = c1
        blocks.append(blk)
        cin = out_channels
    # ConvLSTM: Gates = Conv2d(in+hid, 4*hid, 3, padding=1) with bias, no BN
    gates_w = g.conv(4 * out_channels, 2 * out_channels, 3)
    gates_b = g.bias(4 * out_channels)
    lstm = dict(gates=prep_conv(gates_w,
                                jnp.ones((4 * out_channels,), jnp.float32),
                                gates_b),
                hidden=out_channels)
    return dict(blocks=blocks, lstm=lstm)


if __name__ == "__main__":
    b = 2
    in_channels = 32
    out_channels = 64
    num_block = 2
    stride = 2
    H = W = 16

    params = build_params(in_channels, out_channels, num_block, stride, seed=0)
    x = jax.random.normal(jax.random.PRNGKey(0),
                          (b, in_channels, H, W), jnp.float32)

    # params are closed over (weights become jit constants; tiling ints stay static)
    fwd = jax.jit(functools.partial(recurrent_down_forward, params=params))

    Ho, Wo = H // stride, W // stride
    h0 = jnp.zeros((b, out_channels, Ho, Wo), jnp.float32)   # prev_state=None -> zeros
    c0 = jnp.zeros((b, out_channels, Ho, Wo), jnp.float32)

    out, state = fwd(x, h0, c0)
    out = jax.block_until_ready(out)
    # second recurrent step, feeding the returned state back in
    out2, state2 = fwd(x, state[0], state[1])
    out2 = jax.block_until_ready(out2)

    assert out.shape == (b, out_channels, Ho, Wo), out.shape
    assert state[0].shape == out.shape and state[1].shape == out.shape
    assert bool(jnp.all(jnp.isfinite(out)))
    assert bool(jnp.all(jnp.isfinite(out2)))
    print("KERNEL_OK")
</pallas_src>

<mosaic_0001>
module attributes {stable_mosaic.version = 11 : i64} {
  func.func @_mm_kernel(%arg0: i32, %arg1: i32, %arg2: i32, %arg3: memref<64x288xbf16, #tpu.memory_space<vmem>>, %arg4: memref<288x128xbf16, #tpu.memory_space<vmem>>, %arg5: memref<1x128xf32, #tpu.memory_space<vmem>>, %arg6: memref<64x128xbf16, #tpu.memory_space<vmem>>, %arg7: memref<64x128xf32, #tpu.memory_space<vmem>>) attributes {dimension_semantics = [#tpu.dimension_semantics<parallel>, #tpu.dimension_semantics<parallel>, #tpu.dimension_semantics<arbitrary>], iteration_bounds = array<i64: 2, 1, 1>, scalar_prefetch = 0 : i64, scratch_operands = 1 : i64, tpu.core_type = #tpu.core_type<tc>, window_params = [{transform_indices = @transform_0, window_bounds = array<i64: 64, 288>}, {transform_indices = @transform_1, window_bounds = array<i64: 288, 128>}, {transform_indices = @transform_2, window_bounds = array<i64: 1, 128>}, {transform_indices = @transform_3, window_bounds = array<i64: 64, 128>}]} {
    %c0_i32 = arith.constant 0 : i32
    %0 = arith.cmpi eq, %arg2, %c0_i32 : i32
    %1 = arith.extui %0 : i1 to i32
    %c0_i32_0 = arith.constant 0 : i32
    %2 = arith.cmpi ne, %1, %c0_i32_0 : i32
    scf.if %2 {
      %cst_10 = arith.constant 0.000000e+00 : f32
      %12 = vector.broadcast %cst_10 : f32 to vector<64x128xf32>
      %c0_11 = arith.constant 0 : index
      %c0_12 = arith.constant 0 : index
      %13 = vector.load %arg7[%c0_11, %c0_12] : memref<64x128xf32, #tpu.memory_space<vmem>>, vector<64x128xf32>
      tpu.vector_store %arg7[%c0_11, %c0_12], %12 {strides = array<i32>} : memref<64x128xf32, #tpu.memory_space<vmem>>, vector<64x128xf32>,
    } else {
    }
    %c0 = arith.constant 0 : index
    %c0_1 = arith.constant 0 : index
    %3 = vector.load %arg3[%c0, %c0_1] : memref<64x288xbf16, #tpu.memory_space<vmem>>, vector<64x288xbf16>
    %c0_2 = arith.constant 0 : index
    %c0_3 = arith.constant 0 : index
    %4 = vector.load %arg7[%c0_2, %c0_3] : memref<64x128xf32, #tpu.memory_space<vmem>>, vector<64x128xf32>
    %c0_4 = arith.constant 0 : index
    %c0_5 = arith.constant 0 : index
    %5 = vector.load %arg4[%c0_4, %c0_5] : memref<288x128xbf16, #tpu.memory_space<vmem>>, vector<288x128xbf16>
    %cst = arith.constant dense<0.000000e+00> : vector<64x128xf32>
    %6 = tpu.matmul %3, %5, %cst {dimension_numbers = #tpu.dot_dimension_numbers<[1], [0], [0], [1], [0, 0, 1, 1], [], []>} : vector<64x288xbf16>, vector<288x128xbf16>, vector<64x128xf32> -> vector<64x128xf32>
    %7 = arith.addf %4, %6 : vector<64x128xf32>
    %c0_6 = arith.constant 0 : index
    %c0_7 = arith.constant 0 : index
    %8 = vector.load %arg7[%c0_6, %c0_7] : memref<64x128xf32, #tpu.memory_space<vmem>>, vector<64x128xf32>
    tpu.vector_store %arg7[%c0_6, %c0_7], %7 {strides = array<i32>} : memref<64x128xf32, #tpu.memory_space<vmem>>, vector<64x128xf32>,
    %c0_i32_8 = arith.constant 0 : i32
    %9 = arith.cmpi eq, %arg2, %c0_i32_8 : i32
    %10 = arith.extui %9 : i1 to i32
    %c0_i32_9 = arith.constant 0 : i32
    %11 = arith.cmpi ne, %10, %c0_i32_9 : i32
    scf.if %11 {
      %c0_10 = arith.constant 0 : index
      %c0_11 = arith.constant 0 : index
      %12 = vector.load %arg7[%c0_10, %c0_11] : memref<64x128xf32, #tpu.memory_space<vmem>>, vector<64x128xf32>
      %c0_12 = arith.constant 0 : index
      %c0_13 = arith.constant 0 : index
      %13 = vector.load %arg5[%c0_12, %c0_13] : memref<1x128xf32, #tpu.memory_space<vmem>>, vector<1x128xf32>
      %14 = vector.broadcast %13 : vector<1x128xf32> to vector<64x128xf32>
      %15 = arith.addf %12, %14 : vector<64x128xf32>
      %16 = arith.truncf %15 : vector<64x128xf32> to vector<64x128xbf16>
      %c0_14 = arith.constant 0 : index
      %c0_15 = arith.constant 0 : index
      %17 = vector.load %arg6[%c0_14, %c0_15] : memref<64x128xbf16, #tpu.memory_space<vmem>>, vector<64x128xbf16>
      tpu.vector_store %arg6[%c0_14, %c0_15], %16 {strides = array<i32>} : memref<64x128xbf16, #tpu.memory_space<vmem>>, vector<64x128xbf16>,
    } else {
    }
    return
  }
  func.func @transform_0(%arg0: i32, %arg1: i32, %arg2: i32) -> (i32, i32) {
    %c0_i32 = arith.constant 0 : i32
    return %arg0, %arg2 : i32, i32
  }
  func.func @transform_1(%arg0: i32, %arg1: i32, %arg2: i32) -> (i32, i32) {
    %c0_i32 = arith.constant 0 : i32
    return %arg2, %arg1 : i32, i32
  }
  func.func @transform_2(%arg0: i32, %arg1: i32, %arg2: i32) -> (i32, i32) {
    %c0_i32 = arith.constant 0 : i32
    %c0_i32_0 = arith.constant 0 : i32
    return %c0_i32, %arg1 : i32, i32
  }
  func.func @transform_3(%arg0: i32, %arg1: i32, %arg2: i32) -> (i32, i32) {
    %c0_i32 = arith.constant 0 : i32
    return %arg0, %arg1 : i32, i32
  }
}

module attributes {stable_mosaic.version = 11 : i64} {
  func.func @_dconv_kernel(%arg0: i32, %arg1: memref<1x10x10x64xbf16, #tpu.memory_space<vmem>>, %arg2: memref<576x64xbf16, #tpu.memory_space<vmem>>, %arg3: memref<1x64xf32, #tpu.memory_space<vmem>>, %arg4: memref<1x64x64xbf16, #tpu.memory_space<vmem>>) attributes {dimension_semantics = [#tpu.dimension_semantics<parallel>], iteration_bounds = array<i64: 2>, scalar_prefetch = 0 : i64, scratch_operands = 0 : i64, tpu.core_type = #tpu.core_type<tc>, window_params = [{transform_indices = @transform_0, window_bounds = array<i64: 1, 10, 10, 64>}, {pipeline_mode = #tpu.pipeline_mode<synchronous>, transform_indices = @transform_1, window_bounds = array<i64: 576, 64>}, {pipeline_mode = #tpu.pipeline_mode<synchronous>, transform_indices = @transform_2, window_bounds = array<i64: 1, 64>}, {transform_indices = @transform_3, window_bounds = array<i64: 1, 64, 64>}]} {
    %c0 = arith.constant 0 : index
    %c0_0 = arith.constant 0 : index
    %c0_1 = arith.constant 0 : index
    %c0_2 = arith.constant 0 : index
    %0 = vector.load %arg1[%c0, %c0_0, %c0_1, %c0_2] : memref<1x10x10x64xbf16, #tpu.memory_space<vmem>>, vector<1x8x8x64xbf16>
    %1 = vector.shape_cast %0 : vector<1x8x8x64xbf16> to vector<8x8x64xbf16>
    %2 = vector.shape_cast %1 : vector<8x8x64xbf16> to vector<64x64xbf16>
    %c0_3 = arith.constant 0 : index
    %c0_4 = arith.constant 0 : index
    %3 = vector.load %arg2[%c0_3, %c0_4] : memref<576x64xbf16, #tpu.memory_space<vmem>>, vector<64x64xbf16>
    %cst = arith.constant dense<0.000000e+00> : vector<64x64xf32>
    %4 = tpu.matmul %2, %3, %cst {dimension_numbers = #tpu.dot_dimension_numbers<[1], [0], [0], [1], [0, 0, 1, 1], [], []>} : vector<64x64xbf16>, vector<64x64xbf16>, vector<64x64xf32> -> vector<64x64xf32>
    %c0_5 = arith.constant 0 : index
    %c0_6 = arith.constant 0 : index
    %c1 = arith.constant 1 : index
    %c0_7 = arith.constant 0 : index
    %5 = vector.load %arg1[%c0_5, %c0_6, %c1, %c0_7] : memref<1x10x10x64xbf16, #tpu.memory_space<vmem>>, vector<1x8x8x64xbf16>
    %6 = vector.shape_cast %5 : vector<1x8x8x64xbf16> to vector<8x8x64xbf16>
    %7 = vector.shape_cast %6 : vector<8x8x64xbf16> to vector<64x64xbf16>
    %c64 = arith.constant 64 : index
    %c0_8 = arith.constant 0 : index
    %8 = vector.load %arg2[%c64, %c0_8] : memref<576x64xbf16, #tpu.memory_space<vmem>>, vector<64x64xbf16>
    %cst_9 = arith.constant dense<0.000000e+00> : vector<64x64xf32>
    %9 = tpu.matmul %7, %8, %cst_9 {dimension_numbers = #tpu.dot_dimension_numbers<[1], [0], [0], [1], [0, 0, 1, 1], [], []>} : vector<64x64xbf16>, vector<64x64xbf16>, vector<64x64xf32> -> vector<64x64xf32>
    %10 = arith.addf %4, %9 : vector<64x64xf32>
    %c0_10 = arith.constant 0 : index
    %c0_11 = arith.constant 0 : index
    %c2 = arith.constant 2 : index
    %c0_12 = arith.constant 0 : index
    %11 = vector.load %arg1[%c0_10, %c0_11, %c2, %c0_12] : memref<1x10x10x64xbf16, #tpu.memory_space<vmem>>, vector<1x8x8x64xbf16>
    %12 = vector.shape_cast %11 : vector<1x8x8x64xbf16> to vector<8x8x64xbf16>
    %13 = vector.shape_cast %12 : vector<8x8x64xbf16> to vector<64x64xbf16>
    %c128 = arith.constant 128 : index
    %c0_13 = arith.constant 0 : index
    %14 = vector.load %arg2[%c128, %c0_13] : memref<576x64xbf16, #tpu.memory_space<vmem>>, vector<64x64xbf16>
    %cst_14 = arith.constant dense<0.000000e+00> : vector<64x64xf32>
    %15 = tpu.matmul %13, %14, %cst_14 {dimension_numbers = #tpu.dot_dimension_numbers<[1], [0], [0], [1], [0, 0, 1, 1], [], []>} : vector<64x64xbf16>, vector<64x64xbf16>, vector<64x64xf32> -> vector<64x64xf32>
    %16 = arith.addf %10, %15 : vector<64x64xf32>
    %c0_15 = arith.constant 0 : index
    %c1_16 = arith.constant 1 : index
    %c0_17 = arith.constant 0 : index
    %c0_18 = arith.constant 0 : index
    %17 = vector.load %arg1[%c0_15, %c1_16, %c0_17, %c0_18] : memref<1x10x10x64xbf16, #tpu.memory_space<vmem>>, vector<1x8x8x64xbf16>
    %18 = vector.shape_cast %17 : vector<1x8x8x64xbf16> to vector<8x8x64xbf16>
    %19 = vector.shape_cast %18 : vector<8x8x64xbf16> to vector<64x64xbf16>
    %c192 = arith.constant 192 : index
    %c0_19 = arith.constant 0 : index
    %20 = vector.load %arg2[%c192, %c0_19] : memref<576x64xbf16, #tpu.memory_space<vmem>>, vector<64x64xbf16>
    %cst_20 = arith.constant dense<0.000000e+00> : vector<64x64xf32>
    %21 = tpu.matmul %19, %20, %cst_20 {dimension_numbers = #tpu.dot_dimension_numbers<[1], [0], [0], [1], [0, 0, 1, 1], [], []>} : vector<64x64xbf16>, vector<64x64xbf16>, vector<64x64xf32> -> vector<64x64xf32>
    %22 = arith.addf %16, %21 : vector<64x64xf32>
    %c0_21 = arith.constant 0 : index
    %c1_22 = arith.constant 1 : index
    %c1_23 = arith.constant 1 : index
    %c0_24 = arith.constant 0 : index
    %23 = vector.load %arg1[%c0_21, %c1_22, %c1_23, %c0_24] : memref<1x10x10x64xbf16, #tpu.memory_space<vmem>>, vector<1x8x8x64xbf16>
    %24 = vector.shape_cast %23 : vector<1x8x8x64xbf16> to vector<8x8x64xbf16>
    %25 = vector.shape_cast %24 : vector<8x8x64xbf16> to vector<64x64xbf16>
    %c256 = arith.constant 256 : index
    %c0_25 = arith.constant 0 : index
    %26 = vector.load %arg2[%c256, %c0_25] : memref<576x64xbf16, #tpu.memory_space<vmem>>, vector<64x64xbf16>
    %cst_26 = arith.constant dense<0.000000e+00> : vector<64x64xf32>
    %27 = tpu.matmul %25, %26, %cst_26 {dimension_numbers = #tpu.dot_dimension_numbers<[1], [0], [0], [1], [0, 0, 1, 1], [], []>} : vector<64x64xbf16>, vector<64x64xbf16>, vector<64x64xf32> -> vector<64x64xf32>
    %28 = arith.addf %22, %27 : vector<64x64xf32>
    %c0_27 = arith.constant 0 : index
    %c1_28 = arith.constant 1 : index
    %c2_29 = arith.constant 2 : index
    %c0_30 = arith.constant 0 : index
    %29 = vector.load %arg1[%c0_27, %c1_28, %c2_29, %c0_30] : memref<1x10x10x64xbf16, #tpu.memory_space<vmem>>, vector<1x8x8x64xbf16>
    %30 = vector.shape_cast %29 : vector<1x8x8x64xbf16> to vector<8x8x64xbf16>
    %31 = vector.shape_cast %30 : vector<8x8x64xbf16> to vector<64x64xbf16>
    %c320 = arith.constant 320 : index
    %c0_31 = arith.constant 0 : index
    %32 = vector.load %arg2[%c320, %c0_31] : memref<576x64xbf16, #tpu.memory_space<vmem>>, vector<64x64xbf16>
    %cst_32 = arith.constant dense<0.000000e+00> : vector<64x64xf32>
    %33 = tpu.matmul %31, %32, %cst_32 {dimension_numbers = #tpu.dot_dimension_numbers<[1], [0], [0], [1], [0, 0, 1, 1], [], []>} : vector<64x64xbf16>, vector<64x64xbf16>, vector<64x64xf32> -> vector<64x64xf32>
    %34 = arith.addf %28, %33 : vector<64x64xf32>
    %c0_33 = arith.constant 0 : index
    %c2_34 = arith.constant 2 : index
    %c0_35 = arith.constant 0 : index
    %c0_36 = arith.constant 0 : index
    %35 = vector.load %arg1[%c0_33, %c2_34, %c0_35, %c0_36] : memref<1x10x10x64xbf16, #tpu.memory_space<vmem>>, vector<1x8x8x64xbf16>
    %36 = vector.shape_cast %35 : vector<1x8x8x64xbf16> to vector<8x8x64xbf16>
    %37 = vector.shape_cast %36 : vector<8x8x64xbf16> to vector<64x64xbf16>
    %c384 = arith.constant 384 : index
    %c0_37 = arith.constant 0 : index
    %38 = vector.load %arg2[%c384, %c0_37] : memref<576x64xbf16, #tpu.memory_space<vmem>>, vector<64x64xbf16>
    %cst_38 = arith.constant dense<0.000000e+00> : vector<64x64xf32>
    %39 = tpu.matmul %37, %38, %cst_38 {dimension_numbers = #tpu.dot_dimension_numbers<[1], [0], [0], [1], [0, 0, 1, 1], [], []>} : vector<64x64xbf16>, vector<64x64xbf16>, vector<64x64xf32> -> vector<64x64xf32>
    %40 = arith.addf %34, %39 : vector<64x64xf32>
    %c0_39 = arith.constant 0 : index
    %c2_40 = arith.constant 2 : index
    %c1_41 = arith.constant 1 : index
    %c0_42 = arith.constant 0 : index
    %41 = vector.load %arg1[%c0_39, %c2_40, %c1_41, %c0_42] : memref<1x10x10x64xbf16, #tpu.memory_space<vmem>>, vector<1x8x8x64xbf16>
    %42 = vector.shape_cast %41 : vector<1x8x8x64xbf16> to vector<8x8x64xbf16>
    %43 = vector.shape_cast %42 : vector<8x8x64xbf16> to vector<64x64xbf16>
    %c448 = arith.constant 448 : index
    %c0_43 = arith.constant 0 : index
    %44 = vector.load %arg2[%c448, %c0_43] : memref<576x64xbf16, #tpu.memory_space<vmem>>, vector<64x64xbf16>
    %cst_44 = arith.constant dense<0.000000e+00> : vector<64x64xf32>
    %45 = tpu.matmul %43, %44, %cst_44 {dimension_numbers = #tpu.dot_dimension_numbers<[1], [0], [0], [1], [0, 0, 1, 1], [], []>} : vector<64x64xbf16>, vector<64x64xbf16>, vector<64x64xf32> -> vector<64x64xf32>
    %46 = arith.addf %40, %45 : vector<64x64xf32>
    %c0_45 = arith.constant 0 : index
    %c2_46 = arith.constant 2 : index
    %c2_47 = arith.constant 2 : index
    %c0_48 = arith.constant 0 : index
    %47 = vector.load %arg1[%c0_45, %c2_46, %c2_47, %c0_48] : memref<1x10x10x64xbf16, #tpu.memory_space<vmem>>, vector<1x8x8x64xbf16>
    %48 = vector.shape_cast %47 : vector<1x8x8x64xbf16> to vector<8x8x64xbf16>
    %49 = vector.shape_cast %48 : vector<8x8x64xbf16> to vector<64x64xbf16>
    %c512 = arith.constant 512 : index
    %c0_49 = arith.constant 0 : index
    %50 = vector.load %arg2[%c512, %c0_49] : memref<576x64xbf16, #tpu.memory_space<vmem>>, vector<64x64xbf16>
    %cst_50 = arith.constant dense<0.000000e+00> : vector<64x64xf32>
    %51 = tpu.matmul %49, %50, %cst_50 {dimension_numbers = #tpu.dot_dimension_numbers<[1], [0], [0], [1], [0, 0, 1, 1], [], []>} : vector<64x64xbf16>, vector<64x64xbf16>, vector<64x64xf32> -> vector<64x64xf32>
    %52 = arith.addf %46, %51 : vector<64x64xf32>
    %c0_51 = arith.constant 0 : index
    %c0_52 = arith.constant 0 : index
    %53 = vector.load %arg3[%c0_51, %c0_52] : memref<1x64xf32, #tpu.memory_space<vmem>>, vector<1x64xf32>
    %54 = vector.broadcast %53 : vector<1x64xf32> to vector<64x64xf32>
    %55 = arith.addf %52, %54 : vector<64x64xf32>
    %cst_53 = arith.constant 0.000000e+00 : f32
    %56 = vector.broadcast %cst_53 : f32 to vector<64x64xf32>
    %57 = arith.maximumf %55, %56 : vector<64x64xf32>
    %58 = arith.truncf %57 : vector<64x64xf32> to vector<64x64xbf16>
    %59 = vector.shape_cast %58 : vector<64x64xbf16> to vector<1x64x64xbf16>
    %c0_54 = arith.constant 0 : index
    %c0_55 = arith.constant 0 : index
    %c0_56 = arith.constant 0 : index
    %60 = vector.load %arg4[%c0_54, %c0_55, %c0_56] : memref<1x64x64xbf16, #tpu.memory_space<vmem>>, vector<1x64x64xbf16>
    tpu.vector_store %arg4[%c0_54, %c0_55, %c0_56], %59 {strides = array<i32>} : memref<1x64x64xbf16, #tpu.memory_space<vmem>>, vector<1x64x64xbf16>,
    return
  }
  func.func @transform_0(%arg0: i32) -> (i32, i32, i32, i32) {
    %c0_i32 = arith.constant 0 : i32
    %c0_i32_0 = arith.constant 0 : i32
    %c0_i32_1 = arith.constant 0 : i32
    %c0_i32_2 = arith.constant 0 : i32
    return %arg0, %c0_i32, %c0_i32_0, %c0_i32_1 : i32, i32, i32, i32
  }
  func.func @transform_1(%arg0: i32) -> (i32, i32) {
    %c0_i32 = arith.constant 0 : i32
    %c0_i32_0 = arith.constant 0 : i32
    %c0_i32_1 = arith.constant 0 : i32
    return %c0_i32, %c0_i32_0 : i32, i32
  }
  func.func @transform_2(%arg0: i32) -> (i32, i32) {
    %c0_i32 = arith.constant 0 : i32
    %c0_i32_0 = arith.constant 0 : i32
    %c0_i32_1 = arith.constant 0 : i32
    return %c0_i32, %c0_i32_0 : i32, i32
  }
  func.func @transform_3(%arg0: i32) -> (i32, i32, i32) {
    %c0_i32 = arith.constant 0 : i32
    %c0_i32_0 = arith.constant 0 : i32
    %c0_i32_1 = arith.constant 0 : i32
    return %arg0, %c0_i32, %c0_i32_0 : i32, i32, i32
  }
}

module attributes {stable_mosaic.version = 11 : i64} {
  func.func @_dconv_kernel(%arg0: i32, %arg1: memref<1x10x10x64xbf16, #tpu.memory_space<vmem>>, %arg2: memref<576x64xbf16, #tpu.memory_space<vmem>>, %arg3: memref<1x64xf32, #tpu.memory_space<vmem>>, %arg4: memref<1x64x64xbf16, #tpu.memory_space<vmem>>, %arg5: memref<1x64x64xbf16, #tpu.memory_space<vmem>>) attributes {dimension_semantics = [#tpu.dimension_semantics<parallel>], iteration_bounds = array<i64: 2>, scalar_prefetch = 0 : i64, scratch_operands = 0 : i64, tpu.core_type = #tpu.core_type<tc>, window_params = [{transform_indices = @transform_0, window_bounds = array<i64: 1, 10, 10, 64>}, {pipeline_mode = #tpu.pipeline_mode<synchronous>, transform_indices = @transform_1, window_bounds = array<i64: 576, 64>}, {pipeline_mode = #tpu.pipeline_mode<synchronous>, transform_indices = @transform_2, window_bounds = array<i64: 1, 64>}, {transform_indices = @transform_3, window_bounds = array<i64: 1, 64, 64>}, {transform_indices = @transform_4, window_bounds = array<i64: 1, 64, 64>}]} {
    %c0 = arith.constant 0 : index
    %c0_0 = arith.constant 0 : index
    %c0_1 = arith.constant 0 : index
    %c0_2 = arith.constant 0 : index
    %0 = vector.load %arg1[%c0, %c0_0, %c0_1, %c0_2] : memref<1x10x10x64xbf16, #tpu.memory_space<vmem>>, vector<1x8x8x64xbf16>
    %1 = vector.shape_cast %0 : vector<1x8x8x64xbf16> to vector<8x8x64xbf16>
    %2 = vector.shape_cast %1 : vector<8x8x64xbf16> to vector<64x64xbf16>
    %cst = arith.constant 0.000000e+00 : bf16
    %3 = vector.broadcast %cst : bf16 to vector<64x64xbf16>
    %4 = arith.maximumf %2, %3 : vector<64x64xbf16>
    %c0_3 = arith.constant 0 : index
    %c0_4 = arith.constant 0 : index
    %5 = vector.load %arg2[%c0_3, %c0_4] : memref<576x64xbf16, #tpu.memory_space<vmem>>, vector<64x64xbf16>
    %cst_5 = arith.constant dense<0.000000e+00> : vector<64x64xf32>
    %6 = tpu.matmul %4, %5, %cst_5 {dimension_numbers = #tpu.dot_dimension_numbers<[1], [0], [0], [1], [0, 0, 1, 1], [], []>} : vector<64x64xbf16>, vector<64x64xbf16>, vector<64x64xf32> -> vector<64x64xf32>
    %c0_6 = arith.constant 0 : index
    %c0_7 = arith.constant 0 : index
    %c1 = arith.constant 1 : index
    %c0_8 = arith.constant 0 : index
    %7 = vector.load %arg1[%c0_6, %c0_7, %c1, %c0_8] : memref<1x10x10x64xbf16, #tpu.memory_space<vmem>>, vector<1x8x8x64xbf16>
    %8 = vector.shape_cast %7 : vector<1x8x8x64xbf16> to vector<8x8x64xbf16>
    %9 = vector.shape_cast %8 : vector<8x8x64xbf16> to vector<64x64xbf16>
    %cst_9 = arith.constant 0.000000e+00 : bf16
    %10 = vector.broadcast %cst_9 : bf16 to vector<64x64xbf16>
    %11 = arith.maximumf %9, %10 : vector<64x64xbf16>
    %c64 = arith.constant 64 : index
    %c0_10 = arith.constant 0 : index
    %12 = vector.load %arg2[%c64, %c0_10] : memref<576x64xbf16, #tpu.memory_space<vmem>>, vector<64x64xbf16>
    %cst_11 = arith.constant dense<0.000000e+00> : vector<64x64xf32>
    %13 = tpu.matmul %11, %12, %cst_11 {dimension_numbers = #tpu.dot_dimension_numbers<[1], [0], [0], [1], [0, 0, 1, 1], [], []>} : vector<64x64xbf16>, vector<64x64xbf16>, vector<64x64xf32> -> vector<64x64xf32>
    %14 = arith.addf %6, %13 : vector<64x64xf32>
    %c0_12 = arith.constant 0 : index
    %c0_13 = arith.constant 0 : index
    %c2 = arith.constant 2 : index
    %c0_14 = arith.constant 0 : index
    %15 = vector.load %arg1[%c0_12, %c0_13, %c2, %c0_14] : memref<1x10x10x64xbf16, #tpu.memory_space<vmem>>, vector<1x8x8x64xbf16>
    %16 = vector.shape_cast %15 : vector<1x8x8x64xbf16> to vector<8x8x64xbf16>
    %17 = vector.shape_cast %16 : vector<8x8x64xbf16> to vector<64x64xbf16>
    %cst_15 = arith.constant 0.000000e+00 : bf16
    %18 = vector.broadcast %cst_15 : bf16 to vector<64x64xbf16>
    %19 = arith.maximumf %17, %18 : vector<64x64xbf16>
    %c128 = arith.constant 128 : index
    %c0_16 = arith.constant 0 : index
    %20 = vector.load %arg2[%c128, %c0_16] : memref<576x64xbf16, #tpu.memory_space<vmem>>, vector<64x64xbf16>
    %cst_17 = arith.constant dense<0.000000e+00> : vector<64x64xf32>
    %21 = tpu.matmul %19, %20, %cst_17 {dimension_numbers = #tpu.dot_dimension_numbers<[1], [0], [0], [1], [0, 0, 1, 1], [], []>} : vector<64x64xbf16>, vector<64x64xbf16>, vector<64x64xf32> -> vector<64x64xf32>
    %22 = arith.addf %14, %21 : vector<64x64xf32>
    %c0_18 = arith.constant 0 : index
    %c1_19 = arith.constant 1 : index
    %c0_20 = arith.constant 0 : index
    %c0_21 = arith.constant 0 : index
    %23 = vector.load %arg1[%c0_18, %c1_19, %c0_20, %c0_21] : memref<1x10x10x64xbf16, #tpu.memory_space<vmem>>, vector<1x8x8x64xbf16>
    %24 = vector.shape_cast %23 : vector<1x8x8x64xbf16> to vector<8x8x64xbf16>
    %25 = vector.shape_cast %24 : vector<8x8x64xbf16> to vector<64x64xbf16>
    %cst_22 = arith.constant 0.000000e+00 : bf16
    %26 = vector.broadcast %cst_22 : bf16 to vector<64x64xbf16>
    %27 = arith.maximumf %25, %26 : vector<64x64xbf16>
    %c192 = arith.constant 192 : index
    %c0_23 = arith.constant 0 : index
    %28 = vector.load %arg2[%c192, %c0_23] : memref<576x64xbf16, #tpu.memory_space<vmem>>, vector<64x64xbf16>
    %cst_24 = arith.constant dense<0.000000e+00> : vector<64x64xf32>
    %29 = tpu.matmul %27, %28, %cst_24 {dimension_numbers = #tpu.dot_dimension_numbers<[1], [0], [0], [1], [0, 0, 1, 1], [], []>} : vector<64x64xbf16>, vector<64x64xbf16>, vector<64x64xf32> -> vector<64x64xf32>
    %30 = arith.addf %22, %29 : vector<64x64xf32>
    %c0_25 = arith.constant 0 : index
    %c1_26 = arith.constant 1 : index
    %c1_27 = arith.constant 1 : index
    %c0_28 = arith.constant 0 : index
    %31 = vector.load %arg1[%c0_25, %c1_26, %c1_27, %c0_28] : memref<1x10x10x64xbf16, #tpu.memory_space<vmem>>, vector<1x8x8x64xbf16>
    %32 = vector.shape_cast %31 : vector<1x8x8x64xbf16> to vector<8x8x64xbf16>
    %33 = vector.shape_cast %32 : vector<8x8x64xbf16> to vector<64x64xbf16>
    %cst_29 = arith.constant 0.000000e+00 : bf16
    %34 = vector.broadcast %cst_29 : bf16 to vector<64x64xbf16>
    %35 = arith.maximumf %33, %34 : vector<64x64xbf16>
    %c256 = arith.constant 256 : index
    %c0_30 = arith.constant 0 : index
    %36 = vector.load %arg2[%c256, %c0_30] : memref<576x64xbf16, #tpu.memory_space<vmem>>, vector<64x64xbf16>
    %cst_31 = arith.constant dense<0.000000e+00> : vector<64x64xf32>
    %37 = tpu.matmul %35, %36, %cst_31 {dimension_numbers = #tpu.dot_dimension_numbers<[1], [0], [0], [1], [0, 0, 1, 1], [], []>} : vector<64x64xbf16>, vector<64x64xbf16>, vector<64x64xf32> -> vector<64x64xf32>
    %38 = arith.addf %30, %37 : vector<64x64xf32>
    %c0_32 = arith.constant 0 : index
    %c1_33 = arith.constant 1 : index
    %c2_34 = arith.constant 2 : index
    %c0_35 = arith.constant 0 : index
    %39 = vector.load %arg1[%c0_32, %c1_33, %c2_34, %c0_35] : memref<1x10x10x64xbf16, #tpu.memory_space<vmem>>, vector<1x8x8x64xbf16>
    %40 = vector.shape_cast %39 : vector<1x8x8x64xbf16> to vector<8x8x64xbf16>
    %41 = vector.shape_cast %40 : vector<8x8x64xbf16> to vector<64x64xbf16>
    %cst_36 = arith.constant 0.000000e+00 : bf16
    %42 = vector.broadcast %cst_36 : bf16 to vector<64x64xbf16>
    %43 = arith.maximumf %41, %42 : vector<64x64xbf16>
    %c320 = arith.constant 320 : index
    %c0_37 = arith.constant 0 : index
    %44 = vector.load %arg2[%c320, %c0_37] : memref<576x64xbf16, #tpu.memory_space<vmem>>, vector<64x64xbf16>
    %cst_38 = arith.constant dense<0.000000e+00> : vector<64x64xf32>
    %45 = tpu.matmul %43, %44, %cst_38 {dimension_numbers = #tpu.dot_dimension_numbers<[1], [0], [0], [1], [0, 0, 1, 1], [], []>} : vector<64x64xbf16>, vector<64x64xbf16>, vector<64x64xf32> -> vector<64x64xf32>
    %46 = arith.addf %38, %45 : vector<64x64xf32>
    %c0_39 = arith.constant 0 : index
    %c2_40 = arith.constant 2 : index
    %c0_41 = arith.constant 0 : index
    %c0_42 = arith.constant 0 : index
    %47 = vector.load %arg1[%c0_39, %c2_40, %c0_41, %c0_42] : memref<1x10x10x64xbf16, #tpu.memory_space<vmem>>, vector<1x8x8x64xbf16>
    %48 = vector.shape_cast %47 : vector<1x8x8x64xbf16> to vector<8x8x64xbf16>
    %49 = vector.shape_cast %48 : vector<8x8x64xbf16> to vector<64x64xbf16>
    %cst_43 = arith.constant 0.000000e+00 : bf16
    %50 = vector.broadcast %cst_43 : bf16 to vector<64x64xbf16>
    %51 = arith.maximumf %49, %50 : vector<64x64xbf16>
    %c384 = arith.constant 384 : index
    %c0_44 = arith.constant 0 : index
    %52 = vector.load %arg2[%c384, %c0_44] : memref<576x64xbf16, #tpu.memory_space<vmem>>, vector<64x64xbf16>
    %cst_45 = arith.constant dense<0.000000e+00> : vector<64x64xf32>
    %53 = tpu.matmul %51, %52, %cst_45 {dimension_numbers = #tpu.dot_dimension_numbers<[1], [0], [0], [1], [0, 0, 1, 1], [], []>} : vector<64x64xbf16>, vector<64x64xbf16>, vector<64x64xf32> -> vector<64x64xf32>
    %54 = arith.addf %46, %53 : vector<64x64xf32>
    %c0_46 = arith.constant 0 : index
    %c2_47 = arith.constant 2 : index
    %c1_48 = arith.constant 1 : index
    %c0_49 = arith.constant 0 : index
    %55 = vector.load %arg1[%c0_46, %c2_47, %c1_48, %c0_49] : memref<1x10x10x64xbf16, #tpu.memory_space<vmem>>, vector<1x8x8x64xbf16>
    %56 = vector.shape_cast %55 : vector<1x8x8x64xbf16> to vector<8x8x64xbf16>
    %57 = vector.shape_cast %56 : vector<8x8x64xbf16> to vector<64x64xbf16>
    %cst_50 = arith.constant 0.000000e+00 : bf16
    %58 = vector.broadcast %cst_50 : bf16 to vector<64x64xbf16>
    %59 = arith.maximumf %57, %58 : vector<64x64xbf16>
    %c448 = arith.constant 448 : index
    %c0_51 = arith.constant 0 : index
    %60 = vector.load %arg2[%c448, %c0_51] : memref<576x64xbf16, #tpu.memory_space<vmem>>, vector<64x64xbf16>
    %cst_52 = arith.constant dense<0.000000e+00> : vector<64x64xf32>
    %61 = tpu.matmul %59, %60, %cst_52 {dimension_numbers = #tpu.dot_dimension_numbers<[1], [0], [0], [1], [0, 0, 1, 1], [], []>} : vector<64x64xbf16>, vector<64x64xbf16>, vector<64x64xf32> -> vector<64x64xf32>
    %62 = arith.addf %54, %61 : vector<64x64xf32>
    %c0_53 = arith.constant 0 : index
    %c2_54 = arith.constant 2 : index
    %c2_55 = arith.constant 2 : index
    %c0_56 = arith.constant 0 : index
    %63 = vector.load %arg1[%c0_53, %c2_54, %c2_55, %c0_56] : memref<1x10x10x64xbf16, #tpu.memory_space<vmem>>, vector<1x8x8x64xbf16>
    %64 = vector.shape_cast %63 : vector<1x8x8x64xbf16> to vector<8x8x64xbf16>
    %65 = vector.shape_cast %64 : vector<8x8x64xbf16> to vector<64x64xbf16>
    %cst_57 = arith.constant 0.000000e+00 : bf16
    %66 = vector.broadcast %cst_57 : bf16 to vector<64x64xbf16>
    %67 = arith.maximumf %65, %66 : vector<64x64xbf16>
    %c512 = arith.constant 512 : index
    %c0_58 = arith.constant 0 : index
    %68 = vector.load %arg2[%c512, %c0_58] : memref<576x64xbf16, #tpu.memory_space<vmem>>, vector<64x64xbf16>
    %cst_59 = arith.constant dense<0.000000e+00> : vector<64x64xf32>
    %69 = tpu.matmul %67, %68, %cst_59 {dimension_numbers = #tpu.dot_dimension_numbers<[1], [0], [0], [1], [0, 0, 1, 1], [], []>} : vector<64x64xbf16>, vector<64x64xbf16>, vector<64x64xf32> -> vector<64x64xf32>
    %70 = arith.addf %62, %69 : vector<64x64xf32>
    %c0_60 = arith.constant 0 : index
    %c0_61 = arith.constant 0 : index
    %71 = vector.load %arg3[%c0_60, %c0_61] : memref<1x64xf32, #tpu.memory_space<vmem>>, vector<1x64xf32>
    %72 = vector.broadcast %71 : vector<1x64xf32> to vector<64x64xf32>
    %73 = arith.addf %70, %72 : vector<64x64xf32>
    %c0_62 = arith.constant 0 : index
    %c0_63 = arith.constant 0 : index
    %c0_64 = arith.constant 0 : index
    %74 = vector.load %arg4[%c0_62, %c0_63, %c0_64] : memref<1x64x64xbf16, #tpu.memory_space<vmem>>, vector<1x64x64xbf16>
    %75 = vector.shape_cast %74 : vector<1x64x64xbf16> to vector<64x64xbf16>
    %76 = arith.extf %75 : vector<64x64xbf16> to vector<64x64xf32>
    %77 = arith.addf %73, %76 : vector<64x64xf32>
    %cst_65 = arith.constant 0.000000e+00 : f32
    %78 = vector.broadcast %cst_65 : f32 to vector<64x64xf32>
    %79 = arith.maximumf %77, %78 : vector<64x64xf32>
    %80 = arith.truncf %79 : vector<64x64xf32> to vector<64x64xbf16>
    %81 = vector.shape_cast %80 : vector<64x64xbf16> to vector<1x64x64xbf16>
    %c0_66 = arith.constant 0 : index
    %c0_67 = arith.constant 0 : index
    %c0_68 = arith.constant 0 : index
    %82 = vector.load %arg5[%c0_66, %c0_67, %c0_68] : memref<1x64x64xbf16, #tpu.memory_space<vmem>>, vector<1x64x64xbf16>
    tpu.vector_store %arg5[%c0_66, %c0_67, %c0_68], %81 {strides = array<i32>} : memref<1x64x64xbf16, #tpu.memory_space<vmem>>, vector<1x64x64xbf16>,
    return
  }
  func.func @transform_0(%arg0: i32) -> (i32, i32, i32, i32) {
    %c0_i32 = arith.constant 0 : i32
    %c0_i32_0 = arith.constant 0 : i32
    %c0_i32_1 = arith.constant 0 : i32
    %c0_i32_2 = arith.constant 0 : i32
    return %arg0, %c0_i32, %c0_i32_0, %c0_i32_1 : i32, i32, i32, i32
  }
  func.func @transform_1(%arg0: i32) -> (i32, i32) {
    %c0_i32 = arith.constant 0 : i32
    %c0_i32_0 = arith.constant 0 : i32
    %c0_i32_1 = arith.constant 0 : i32
    return %c0_i32, %c0_i32_0 : i32, i32
  }
  func.func @transform_2(%arg0: i32) -> (i32, i32) {
    %c0_i32 = arith.constant 0 : i32
    %c0_i32_0 = arith.constant 0 : i32
    %c0_i32_1 = arith.constant 0 : i32
    return %c0_i32, %c0_i32_0 : i32, i32
  }
  func.func @transform_3(%arg0: i32) -> (i32, i32, i32) {
    %c0_i32 = arith.constant 0 : i32
    %c0_i32_0 = arith.constant 0 : i32
    %c0_i32_1 = arith.constant 0 : i32
    return %arg0, %c0_i32, %c0_i32_0 : i32, i32, i32
  }
  func.func @transform_4(%arg0: i32) -> (i32, i32, i32) {
    %c0_i32 = arith.constant 0 : i32
    %c0_i32_0 = arith.constant 0 : i32
    %c0_i32_1 = arith.constant 0 : i32
    return %arg0, %c0_i32, %c0_i32_0 : i32, i32, i32
  }
}

module attributes {stable_mosaic.version = 11 : i64} {
  func.func @_dconv_kernel(%arg0: i32, %arg1: memref<1x10x10x64xbf16, #tpu.memory_space<vmem>>, %arg2: memref<576x64xbf16, #tpu.memory_space<vmem>>, %arg3: memref<1x64xf32, #tpu.memory_space<vmem>>, %arg4: memref<1x64x64xbf16, #tpu.memory_space<vmem>>, %arg5: memref<1x64x64xbf16, #tpu.memory_space<vmem>>) attributes {dimension_semantics = [#tpu.dimension_semantics<parallel>], iteration_bounds = array<i64: 2>, scalar_prefetch = 0 : i64, scratch_operands = 0 : i64, tpu.core_type = #tpu.core_type<tc>, window_params = [{transform_indices = @transform_0, window_bounds = array<i64: 1, 10, 10, 64>}, {pipeline_mode = #tpu.pipeline_mode<synchronous>, transform_indices = @transform_1, window_bounds = array<i64: 576, 64>}, {pipeline_mode = #tpu.pipeline_mode<synchronous>, transform_indices = @transform_2, window_bounds = array<i64: 1, 64>}, {transform_indices = @transform_3, window_bounds = array<i64: 1, 64, 64>}, {transform_indices = @transform_4, window_bounds = array<i64: 1, 64, 64>}]} {
    %c0 = arith.constant 0 : index
    %c0_0 = arith.constant 0 : index
    %c0_1 = arith.constant 0 : index
    %c0_2 = arith.constant 0 : index
    %0 = vector.load %arg1[%c0, %c0_0, %c0_1, %c0_2] : memref<1x10x10x64xbf16, #tpu.memory_space<vmem>>, vector<1x8x8x64xbf16>
    %1 = vector.shape_cast %0 : vector<1x8x8x64xbf16> to vector<8x8x64xbf16>
    %2 = vector.shape_cast %1 : vector<8x8x64xbf16> to vector<64x64xbf16>
    %c0_3 = arith.constant 0 : index
    %c0_4 = arith.constant 0 : index
    %3 = vector.load %arg2[%c0_3, %c0_4] : memref<576x64xbf16, #tpu.memory_space<vmem>>, vector<64x64xbf16>
    %cst = arith.constant dense<0.000000e+00> : vector<64x64xf32>
    %4 = tpu.matmul %2, %3, %cst {dimension_numbers = #tpu.dot_dimension_numbers<[1], [0], [0], [1], [0, 0, 1, 1], [], []>} : vector<64x64xbf16>, vector<64x64xbf16>, vector<64x64xf32> -> vector<64x64xf32>
    %c0_5 = arith.constant 0 : index
    %c0_6 = arith.constant 0 : index
    %c1 = arith.constant 1 : index
    %c0_7 = arith.constant 0 : index
    %5 = vector.load %arg1[%c0_5, %c0_6, %c1, %c0_7] : memref<1x10x10x64xbf16, #tpu.memory_space<vmem>>, vector<1x8x8x64xbf16>
    %6 = vector.shape_cast %5 : vector<1x8x8x64xbf16> to vector<8x8x64xbf16>
    %7 = vector.shape_cast %6 : vector<8x8x64xbf16> to vector<64x64xbf16>
    %c64 = arith.constant 64 : index
    %c0_8 = arith.constant 0 : index
    %8 = vector.load %arg2[%c64, %c0_8] : memref<576x64xbf16, #tpu.memory_space<vmem>>, vector<64x64xbf16>
    %cst_9 = arith.constant dense<0.000000e+00> : vector<64x64xf32>
    %9 = tpu.matmul %7, %8, %cst_9 {dimension_numbers = #tpu.dot_dimension_numbers<[1], [0], [0], [1], [0, 0, 1, 1], [], []>} : vector<64x64xbf16>, vector<64x64xbf16>, vector<64x64xf32> -> vector<64x64xf32>
    %10 = arith.addf %4, %9 : vector<64x64xf32>
    %c0_10 = arith.constant 0 : index
    %c0_11 = arith.constant 0 : index
    %c2 = arith.constant 2 : index
    %c0_12 = arith.constant 0 : index
    %11 = vector.load %arg1[%c0_10, %c0_11, %c2, %c0_12] : memref<1x10x10x64xbf16, #tpu.memory_space<vmem>>, vector<1x8x8x64xbf16>
    %12 = vector.shape_cast %11 : vector<1x8x8x64xbf16> to vector<8x8x64xbf16>
    %13 = vector.shape_cast %12 : vector<8x8x64xbf16> to vector<64x64xbf16>
    %c128 = arith.constant 128 : index
    %c0_13 = arith.constant 0 : index
    %14 = vector.load %arg2[%c128, %c0_13] : memref<576x64xbf16, #tpu.memory_space<vmem>>, vector<64x64xbf16>
    %cst_14 = arith.constant dense<0.000000e+00> : vector<64x64xf32>
    %15 = tpu.matmul %13, %14, %cst_14 {dimension_numbers = #tpu.dot_dimension_numbers<[1], [0], [0], [1], [0, 0, 1, 1], [], []>} : vector<64x64xbf16>, vector<64x64xbf16>, vector<64x64xf32> -> vector<64x64xf32>
    %16 = arith.addf %10, %15 : vector<64x64xf32>
    %c0_15 = arith.constant 0 : index
    %c1_16 = arith.constant 1 : index
    %c0_17 = arith.constant 0 : index
    %c0_18 = arith.constant 0 : index
    %17 = vector.load %arg1[%c0_15, %c1_16, %c0_17, %c0_18] : memref<1x10x10x64xbf16, #tpu.memory_space<vmem>>, vector<1x8x8x64xbf16>
    %18 = vector.shape_cast %17 : vector<1x8x8x64xbf16> to vector<8x8x64xbf16>
    %19 = vector.shape_cast %18 : vector<8x8x64xbf16> to vector<64x64xbf16>
    %c192 = arith.constant 192 : index
    %c0_19 = arith.constant 0 : index
    %20 = vector.load %arg2[%c192, %c0_19] : memref<576x64xbf16, #tpu.memory_space<vmem>>, vector<64x64xbf16>
    %cst_20 = arith.constant dense<0.000000e+00> : vector<64x64xf32>
    %21 = tpu.matmul %19, %20, %cst_20 {dimension_numbers = #tpu.dot_dimension_numbers<[1], [0], [0], [1], [0, 0, 1, 1], [], []>} : vector<64x64xbf16>, vector<64x64xbf16>, vector<64x64xf32> -> vector<64x64xf32>
    %22 = arith.addf %16, %21 : vector<64x64xf32>
    %c0_21 = arith.constant 0 : index
    %c1_22 = arith.constant 1 : index
    %c1_23 = arith.constant 1 : index
    %c0_24 = arith.constant 0 : index
    %23 = vector.load %arg1[%c0_21, %c1_22, %c1_23, %c0_24] : memref<1x10x10x64xbf16, #tpu.memory_space<vmem>>, vector<1x8x8x64xbf16>
    %24 = vector.shape_cast %23 : vector<1x8x8x64xbf16> to vector<8x8x64xbf16>
    %25 = vector.shape_cast %24 : vector<8x8x64xbf16> to vector<64x64xbf16>
    %c256 = arith.constant 256 : index
    %c0_25 = arith.constant 0 : index
    %26 = vector.load %arg2[%c256, %c0_25] : memref<576x64xbf16, #tpu.memory_space<vmem>>, vector<64x64xbf16>
    %cst_26 = arith.constant dense<0.000000e+00> : vector<64x64xf32>
    %27 = tpu.matmul %25, %26, %cst_26 {dimension_numbers = #tpu.dot_dimension_numbers<[1], [0], [0], [1], [0, 0, 1, 1], [], []>} : vector<64x64xbf16>, vector<64x64xbf16>, vector<64x64xf32> -> vector<64x64xf32>
    %28 = arith.addf %22, %27 : vector<64x64xf32>
    %c0_27 = arith.constant 0 : index
    %c1_28 = arith.constant 1 : index
    %c2_29 = arith.constant 2 : index
    %c0_30 = arith.constant 0 : index
    %29 = vector.load %arg1[%c0_27, %c1_28, %c2_29, %c0_30] : memref<1x10x10x64xbf16, #tpu.memory_space<vmem>>, vector<1x8x8x64xbf16>
    %30 = vector.shape_cast %29 : vector<1x8x8x64xbf16> to vector<8x8x64xbf16>
    %31 = vector.shape_cast %30 : vector<8x8x64xbf16> to vector<64x64xbf16>
    %c320 = arith.constant 320 : index
    %c0_31 = arith.constant 0 : index
    %32 = vector.load %arg2[%c320, %c0_31] : memref<576x64xbf16, #tpu.memory_space<vmem>>, vector<64x64xbf16>
    %cst_32 = arith.constant dense<0.000000e+00> : vector<64x64xf32>
    %33 = tpu.matmul %31, %32, %cst_32 {dimension_numbers = #tpu.dot_dimension_numbers<[1], [0], [0], [1], [0, 0, 1, 1], [], []>} : vector<64x64xbf16>, vector<64x64xbf16>, vector<64x64xf32> -> vector<64x64xf32>
    %34 = arith.addf %28, %33 : vector<64x64xf32>
    %c0_33 = arith.constant 0 : index
    %c2_34 = arith.constant 2 : index
    %c0_35 = arith.constant 0 : index
    %c0_36 = arith.constant 0 : index
    %35 = vector.load %arg1[%c0_33, %c2_34, %c0_35, %c0_36] : memref<1x10x10x64xbf16, #tpu.memory_space<vmem>>, vector<1x8x8x64xbf16>
    %36 = vector.shape_cast %35 : vector<1x8x8x64xbf16> to vector<8x8x64xbf16>
    %37 = vector.shape_cast %36 : vector<8x8x64xbf16> to vector<64x64xbf16>
    %c384 = arith.constant 384 : index
    %c0_37 = arith.constant 0 : index
    %38 = vector.load %arg2[%c384, %c0_37] : memref<576x64xbf16, #tpu.memory_space<vmem>>, vector<64x64xbf16>
    %cst_38 = arith.constant dense<0.000000e+00> : vector<64x64xf32>
    %39 = tpu.matmul %37, %38, %cst_38 {dimension_numbers = #tpu.dot_dimension_numbers<[1], [0], [0], [1], [0, 0, 1, 1], [], []>} : vector<64x64xbf16>, vector<64x64xbf16>, vector<64x64xf32> -> vector<64x64xf32>
    %40 = arith.addf %34, %39 : vector<64x64xf32>
    %c0_39 = arith.constant 0 : index
    %c2_40 = arith.constant 2 : index
    %c1_41 = arith.constant 1 : index
    %c0_42 = arith.constant 0 : index
    %41 = vector.load %arg1[%c0_39, %c2_40, %c1_41, %c0_42] : memref<1x10x10x64xbf16, #tpu.memory_space<vmem>>, vector<1x8x8x64xbf16>
    %42 = vector.shape_cast %41 : vector<1x8x8x64xbf16> to vector<8x8x64xbf16>
    %43 = vector.shape_cast %42 : vector<8x8x64xbf16> to vector<64x64xbf16>
    %c448 = arith.constant 448 : index
    %c0_43 = arith.constant 0 : index
    %44 = vector.load %arg2[%c448, %c0_43] : memref<576x64xbf16, #tpu.memory_space<vmem>>, vector<64x64xbf16>
    %cst_44 = arith.constant dense<0.000000e+00> : vector<64x64xf32>
    %45 = tpu.matmul %43, %44, %cst_44 {dimension_numbers = #tpu.dot_dimension_numbers<[1], [0], [0], [1], [0, 0, 1, 1], [], []>} : vector<64x64xbf16>, vector<64x64xbf16>, vector<64x64xf32> -> vector<64x64xf32>
    %46 = arith.addf %40, %45 : vector<64x64xf32>
    %c0_45 = arith.constant 0 : index
    %c2_46 = arith.constant 2 : index
    %c2_47 = arith.constant 2 : index
    %c0_48 = arith.constant 0 : index
    %47 = vector.load %arg1[%c0_45, %c2_46, %c2_47, %c0_48] : memref<1x10x10x64xbf16, #tpu.memory_space<vmem>>, vector<1x8x8x64xbf16>
    %48 = vector.shape_cast %47 : vector<1x8x8x64xbf16> to vector<8x8x64xbf16>
    %49 = vector.shape_cast %48 : vector<8x8x64xbf16> to vector<64x64xbf16>
    %c512 = arith.constant 512 : index
    %c0_49 = arith.constant 0 : index
    %50 = vector.load %arg2[%c512, %c0_49] : memref<576x64xbf16, #tpu.memory_space<vmem>>, vector<64x64xbf16>
    %cst_50 = arith.constant dense<0.000000e+00> : vector<64x64xf32>
    %51 = tpu.matmul %49, %50, %cst_50 {dimension_numbers = #tpu.dot_dimension_numbers<[1], [0], [0], [1], [0, 0, 1, 1], [], []>} : vector<64x64xbf16>, vector<64x64xbf16>, vector<64x64xf32> -> vector<64x64xf32>
    %52 = arith.addf %46, %51 : vector<64x64xf32>
    %c0_51 = arith.constant 0 : index
    %c0_52 = arith.constant 0 : index
    %53 = vector.load %arg3[%c0_51, %c0_52] : memref<1x64xf32, #tpu.memory_space<vmem>>, vector<1x64xf32>
    %54 = vector.broadcast %53 : vector<1x64xf32> to vector<64x64xf32>
    %55 = arith.addf %52, %54 : vector<64x64xf32>
    %c0_53 = arith.constant 0 : index
    %c0_54 = arith.constant 0 : index
    %c0_55 = arith.constant 0 : index
    %56 = vector.load %arg4[%c0_53, %c0_54, %c0_55] : memref<1x64x64xbf16, #tpu.memory_space<vmem>>, vector<1x64x64xbf16>
    %57 = vector.shape_cast %56 : vector<1x64x64xbf16> to vector<64x64xbf16>
    %58 = arith.extf %57 : vector<64x64xbf16> to vector<64x64xf32>
    %59 = arith.addf %55, %58 : vector<64x64xf32>
    %cst_56 = arith.constant 0.000000e+00 : f32
    %60 = vector.broadcast %cst_56 : f32 to vector<64x64xf32>
    %61 = arith.maximumf %59, %60 : vector<64x64xf32>
    %62 = arith.truncf %61 : vector<64x64xf32> to vector<64x64xbf16>
    %63 = vector.shape_cast %62 : vector<64x64xbf16> to vector<1x64x64xbf16>
    %c0_57 = arith.constant 0 : index
    %c0_58 = arith.constant 0 : index
    %c0_59 = arith.constant 0 : index
    %64 = vector.load %arg5[%c0_57, %c0_58, %c0_59] : memref<1x64x64xbf16, #tpu.memory_space<vmem>>, vector<1x64x64xbf16>
    tpu.vector_store %arg5[%c0_57, %c0_58, %c0_59], %63 {strides = array<i32>} : memref<1x64x64xbf16, #tpu.memory_space<vmem>>, vector<1x64x64xbf16>,
    return
  }
  func.func @transform_0(%arg0: i32) -> (i32, i32, i32, i32) {
    %c0_i32 = arith.constant 0 : i32
    %c0_i32_0 = arith.constant 0 : i32
    %c0_i32_1 = arith.constant 0 : i32
    %c0_i32_2 = arith.constant 0 : i32
    return %arg0, %c0_i32, %c0_i32_0, %c0_i32_1 : i32, i32, i32, i32
  }
  func.func @transform_1(%arg0: i32) -> (i32, i32) {
    %c0_i32 = arith.constant 0 : i32
    %c0_i32_0 = arith.constant 0 : i32
    %c0_i32_1 = arith.constant 0 : i32
    return %c0_i32, %c0_i32_0 : i32, i32
  }
  func.func @transform_2(%arg0: i32) -> (i32, i32) {
    %c0_i32 = arith.constant 0 : i32
    %c0_i32_0 = arith.constant 0 : i32
    %c0_i32_1 = arith.constant 0 : i32
    return %c0_i32, %c0_i32_0 : i32, i32
  }
  func.func @transform_3(%arg0: i32) -> (i32, i32, i32) {
    %c0_i32 = arith.constant 0 : i32
    %c0_i32_0 = arith.constant 0 : i32
    %c0_i32_1 = arith.constant 0 : i32
    return %arg0, %c0_i32, %c0_i32_0 : i32, i32, i32
  }
  func.func @transform_4(%arg0: i32) -> (i32, i32, i32) {
    %c0_i32 = arith.constant 0 : i32
    %c0_i32_0 = arith.constant 0 : i32
    %c0_i32_1 = arith.constant 0 : i32
    return %arg0, %c0_i32, %c0_i32_0 : i32, i32, i32
  }
}

module attributes {stable_mosaic.version = 11 : i64} {
  func.func @_dconv_kernel(%arg0: i32, %arg1: memref<1x10x10x128xbf16, #tpu.memory_space<vmem>>, %arg2: memref<1152x256xbf16, #tpu.memory_space<vmem>>, %arg3: memref<1x256xf32, #tpu.memory_space<vmem>>, %arg4: memref<1x64x64xf32, #tpu.memory_space<vmem>>, %arg5: memref<1x64x64xbf16, #tpu.memory_space<vmem>>, %arg6: memref<1x64x64xf32, #tpu.memory_space<vmem>>) attributes {dimension_semantics = [#tpu.dimension_semantics<parallel>], iteration_bounds = array<i64: 2>, scalar_prefetch = 0 : i64, scratch_operands = 0 : i64, tpu.core_type = #tpu.core_type<tc>, window_params = [{transform_indices = @transform_0, window_bounds = array<i64: 1, 10, 10, 128>}, {pipeline_mode = #tpu.pipeline_mode<synchronous>, transform_indices = @transform_1, window_bounds = array<i64: 1152, 256>}, {pipeline_mode = #tpu.pipeline_mode<synchronous>, transform_indices = @transform_2, window_bounds = array<i64: 1, 256>}, {transform_indices = @transform_3, window_bounds = array<i64: 1, 64, 64>}, {transform_indices = @transform_4, window_bounds = array<i64: 1, 64, 64>}, {transform_indices = @transform_5, window_bounds = array<i64: 1, 64, 64>}]} {
    %c0 = arith.constant 0 : index
    %c0_0 = arith.constant 0 : index
    %c0_1 = arith.constant 0 : index
    %c0_2 = arith.constant 0 : index
    %0 = vector.load %arg1[%c0, %c0_0, %c0_1, %c0_2] : memref<1x10x10x128xbf16, #tpu.memory_space<vmem>>, vector<1x8x8x128xbf16>
    %1 = vector.shape_cast %0 : vector<1x8x8x128xbf16> to vector<8x8x128xbf16>
    %2 = vector.shape_cast %1 : vector<8x8x128xbf16> to vector<64x128xbf16>
    %c0_3 = arith.constant 0 : index
    %c0_4 = arith.constant 0 : index
    %3 = vector.load %arg2[%c0_3, %c0_4] : memref<1152x256xbf16, #tpu.memory_space<vmem>>, vector<128x256xbf16>
    %cst = arith.constant dense<0.000000e+00> : vector<64x256xf32>
    %4 = tpu.matmul %2, %3, %cst {dimension_numbers = #tpu.dot_dimension_numbers<[1], [0], [0], [1], [0, 0, 1, 1], [], []>} : vector<64x128xbf16>, vector<128x256xbf16>, vector<64x256xf32> -> vector<64x256xf32>
    %c0_5 = arith.constant 0 : index
    %c0_6 = arith.constant 0 : index
    %c1 = arith.constant 1 : index
    %c0_7 = arith.constant 0 : index
    %5 = vector.load %arg1[%c0_5, %c0_6, %c1, %c0_7] : memref<1x10x10x128xbf16, #tpu.memory_space<vmem>>, vector<1x8x8x128xbf16>
    %6 = vector.shape_cast %5 : vector<1x8x8x128xbf16> to vector<8x8x128xbf16>
    %7 = vector.shape_cast %6 : vector<8x8x128xbf16> to vector<64x128xbf16>
    %c128 = arith.constant 128 : index
    %c0_8 = arith.constant 0 : index
    %8 = vector.load %arg2[%c128, %c0_8] : memref<1152x256xbf16, #tpu.memory_space<vmem>>, vector<128x256xbf16>
    %cst_9 = arith.constant dense<0.000000e+00> : vector<64x256xf32>
    %9 = tpu.matmul %7, %8, %cst_9 {dimension_numbers = #tpu.dot_dimension_numbers<[1], [0], [0], [1], [0, 0, 1, 1], [], []>} : vector<64x128xbf16>, vector<128x256xbf16>, vector<64x256xf32> -> vector<64x256xf32>
    %10 = arith.addf %4, %9 : vector<64x256xf32>
    %c0_10 = arith.constant 0 : index
    %c0_11 = arith.constant 0 : index
    %c2 = arith.constant 2 : index
    %c0_12 = arith.constant 0 : index
    %11 = vector.load %arg1[%c0_10, %c0_11, %c2, %c0_12] : memref<1x10x10x128xbf16, #tpu.memory_space<vmem>>, vector<1x8x8x128xbf16>
    %12 = vector.shape_cast %11 : vector<1x8x8x128xbf16> to vector<8x8x128xbf16>
    %13 = vector.shape_cast %12 : vector<8x8x128xbf16> to vector<64x128xbf16>
    %c256 = arith.constant 256 : index
    %c0_13 = arith.constant 0 : index
    %14 = vector.load %arg2[%c256, %c0_13] : memref<1152x256xbf16, #tpu.memory_space<vmem>>, vector<128x256xbf16>
    %cst_14 = arith.constant dense<0.000000e+00> : vector<64x256xf32>
    %15 = tpu.matmul %13, %14, %cst_14 {dimension_numbers = #tpu.dot_dimension_numbers<[1], [0], [0], [1], [0, 0, 1, 1], [], []>} : vector<64x128xbf16>, vector<128x256xbf16>, vector<64x256xf32> -> vector<64x256xf32>
    %16 = arith.addf %10, %15 : vector<64x256xf32>
    %c0_15 = arith.constant 0 : index
    %c1_16 = arith.constant 1 : index
    %c0_17 = arith.constant 0 : index
    %c0_18 = arith.constant 0 : index
    %17 = vector.load %arg1[%c0_15, %c1_16, %c0_17, %c0_18] : memref<1x10x10x128xbf16, #tpu.memory_space<vmem>>, vector<1x8x8x128xbf16>
    %18 = vector.shape_cast %17 : vector<1x8x8x128xbf16> to vector<8x8x128xbf16>
    %19 = vector.shape_cast %18 : vector<8x8x128xbf16> to vector<64x128xbf16>
    %c384 = arith.constant 384 : index
    %c0_19 = arith.constant 0 : index
    %20 = vector.load %arg2[%c384, %c0_19] : memref<1152x256xbf16, #tpu.memory_space<vmem>>, vector<128x256xbf16>
    %cst_20 = arith.constant dense<0.000000e+00> : vector<64x256xf32>
    %21 = tpu.matmul %19, %20, %cst_20 {dimension_numbers = #tpu.dot_dimension_numbers<[1], [0], [0], [1], [0, 0, 1, 1], [], []>} : vector<64x128xbf16>, vector<128x256xbf16>, vector<64x256xf32> -> vector<64x256xf32>
    %22 = arith.addf %16, %21 : vector<64x256xf32>
    %c0_21 = arith.constant 0 : index
    %c1_22 = arith.constant 1 : index
    %c1_23 = arith.constant 1 : index
    %c0_24 = arith.constant 0 : index
    %23 = vector.load %arg1[%c0_21, %c1_22, %c1_23, %c0_24] : memref<1x10x10x128xbf16, #tpu.memory_space<vmem>>, vector<1x8x8x128xbf16>
    %24 = vector.shape_cast %23 : vector<1x8x8x128xbf16> to vector<8x8x128xbf16>
    %25 = vector.shape_cast %24 : vector<8x8x128xbf16> to vector<64x128xbf16>
    %c512 = arith.constant 512 : index
    %c0_25 = arith.constant 0 : index
    %26 = vector.load %arg2[%c512, %c0_25] : memref<1152x256xbf16, #tpu.memory_space<vmem>>, vector<128x256xbf16>
    %cst_26 = arith.constant dense<0.000000e+00> : vector<64x256xf32>
    %27 = tpu.matmul %25, %26, %cst_26 {dimension_numbers = #tpu.dot_dimension_numbers<[1], [0], [0], [1], [0, 0, 1, 1], [], []>} : vector<64x128xbf16>, vector<128x256xbf16>, vector<64x256xf32> -> vector<64x256xf32>
    %28 = arith.addf %22, %27 : vector<64x256xf32>
    %c0_27 = arith.constant 0 : index
    %c1_28 = arith.constant 1 : index
    %c2_29 = arith.constant 2 : index
    %c0_30 = arith.constant 0 : index
    %29 = vector.load %arg1[%c0_27, %c1_28, %c2_29, %c0_30] : memref<1x10x10x128xbf16, #tpu.memory_space<vmem>>, vector<1x8x8x128xbf16>
    %30 = vector.shape_cast %29 : vector<1x8x8x128xbf16> to vector<8x8x128xbf16>
    %31 = vector.shape_cast %30 : vector<8x8x128xbf16> to vector<64x128xbf16>
    %c640 = arith.constant 640 : index
    %c0_31 = arith.constant 0 : index
    %32 = vector.load %arg2[%c640, %c0_31] : memref<1152x256xbf16, #tpu.memory_space<vmem>>, vector<128x256xbf16>
    %cst_32 = arith.constant dense<0.000000e+00> : vector<64x256xf32>
    %33 = tpu.matmul %31, %32, %cst_32 {dimension_numbers = #tpu.dot_dimension_numbers<[1], [0], [0], [1], [0, 0, 1, 1], [], []>} : vector<64x128xbf16>, vector<128x256xbf16>, vector<64x256xf32> -> vector<64x256xf32>
    %34 = arith.addf %28, %33 : vector<64x256xf32>
    %c0_33 = arith.constant 0 : index
    %c2_34 = arith.constant 2 : index
    %c0_35 = arith.constant 0 : index
    %c0_36 = arith.constant 0 : index
    %35 = vector.load %arg1[%c0_33, %c2_34, %c0_35, %c0_36] : memref<1x10x10x128xbf16, #tpu.memory_space<vmem>>, vector<1x8x8x128xbf16>
    %36 = vector.shape_cast %35 : vector<1x8x8x128xbf16> to vector<8x8x128xbf16>
    %37 = vector.shape_cast %36 : vector<8x8x128xbf16> to vector<64x128xbf16>
    %c768 = arith.constant 768 : index
    %c0_37 = arith.constant 0 : index
    %38 = vector.load %arg2[%c768, %c0_37] : memref<1152x256xbf16, #tpu.memory_space<vmem>>, vector<128x256xbf16>
    %cst_38 = arith.constant dense<0.000000e+00> : vector<64x256xf32>
    %39 = tpu.matmul %37, %38, %cst_38 {dimension_numbers = #tpu.dot_dimension_numbers<[1], [0], [0], [1], [0, 0, 1, 1], [], []>} : vector<64x128xbf16>, vector<128x256xbf16>, vector<64x256xf32> -> vector<64x256xf32>
    %40 = arith.addf %34, %39 : vector<64x256xf32>
    %c0_39 = arith.constant 0 : index
    %c2_40 = arith.constant 2 : index
    %c1_41 = arith.constant 1 : index
    %c0_42 = arith.constant 0 : index
    %41 = vector.load %arg1[%c0_39, %c2_40, %c1_41, %c0_42] : memref<1x10x10x128xbf16, #tpu.memory_space<vmem>>, vector<1x8x8x128xbf16>
    %42 = vector.shape_cast %41 : vector<1x8x8x128xbf16> to vector<8x8x128xbf16>
    %43 = vector.shape_cast %42 : vector<8x8x128xbf16> to vector<64x128xbf16>
    %c896 = arith.constant 896 : index
    %c0_43 = arith.constant 0 : index
    %44 = vector.load %arg2[%c896, %c0_43] : memref<1152x256xbf16, #tpu.memory_space<vmem>>, vector<128x256xbf16>
    %cst_44 = arith.constant dense<0.000000e+00> : vector<64x256xf32>
    %45 = tpu.matmul %43, %44, %cst_44 {dimension_numbers = #tpu.dot_dimension_numbers<[1], [0], [0], [1], [0, 0, 1, 1], [], []>} : vector<64x128xbf16>, vector<128x256xbf16>, vector<64x256xf32> -> vector<64x256xf32>
    %46 = arith.addf %40, %45 : vector<64x256xf32>
    %c0_45 = arith.constant 0 : index
    %c2_46 = arith.constant 2 : index
    %c2_47 = arith.constant 2 : index
    %c0_48 = arith.constant 0 : index
    %47 = vector.load %arg1[%c0_45, %c2_46, %c2_47, %c0_48] : memref<1x10x10x128xbf16, #tpu.memory_space<vmem>>, vector<1x8x8x128xbf16>
    %48 = vector.shape_cast %47 : vector<1x8x8x128xbf16> to vector<8x8x128xbf16>
    %49 = vector.shape_cast %48 : vector<8x8x128xbf16> to vector<64x128xbf16>
    %c1024 = arith.constant 1024 : index
    %c0_49 = arith.constant 0 : index
    %50 = vector.load %arg2[%c1024, %c0_49] : memref<1152x256xbf16, #tpu.memory_space<vmem>>, vector<128x256xbf16>
    %cst_50 = arith.constant dense<0.000000e+00> : vector<64x256xf32>
    %51 = tpu.matmul %49, %50, %cst_50 {dimension_numbers = #tpu.dot_dimension_numbers<[1], [0], [0], [1], [0, 0, 1, 1], [], []>} : vector<64x128xbf16>, vector<128x256xbf16>, vector<64x256xf32> -> vector<64x256xf32>
    %52 = arith.addf %46, %51 : vector<64x256xf32>
    %c0_51 = arith.constant 0 : index
    %c0_52 = arith.constant 0 : index
    %53 = vector.load %arg3[%c0_51, %c0_52] : memref<1x256xf32, #tpu.memory_space<vmem>>, vector<1x256xf32>
    %54 = vector.broadcast %53 : vector<1x256xf32> to vector<64x256xf32>
    %55 = arith.addf %52, %54 : vector<64x256xf32>
    %c0_53 = arith.constant 0 : index
    %c0_54 = arith.constant 0 : index
    %c0_55 = arith.constant 0 : index
    %56 = vector.load %arg4[%c0_53, %c0_54, %c0_55] : memref<1x64x64xf32, #tpu.memory_space<vmem>>, vector<1x64x64xf32>
    %57 = vector.shape_cast %56 : vector<1x64x64xf32> to vector<64x64xf32>
    %58 = vector.extract_strided_slice %55 {offsets = [0, 0], sizes = [64, 64], strides = [1, 1]} : vector<64x256xf32> to vector<64x64xf32>
    %59 = arith.negf %58 : vector<64x64xf32>
    %60 = math.exp %59 : vector<64x64xf32>
    %cst_56 = arith.constant 1.000000e+00 : f32
    %61 = vector.broadcast %cst_56 : f32 to vector<64x64xf32>
    %62 = arith.addf %61, %60 : vector<64x64xf32>
    %63 = arith.divf %61, %62 : vector<64x64xf32>
    %64 = vector.extract_strided_slice %55 {offsets = [0, 64], sizes = [64, 64], strides = [1, 1]} : vector<64x256xf32> to vector<64x64xf32>
    %65 = arith.negf %64 : vector<64x64xf32>
    %66 = math.exp %65 : vector<64x64xf32>
    %cst_57 = arith.constant 1.000000e+00 : f32
    %67 = vector.broadcast %cst_57 : f32 to vector<64x64xf32>
    %68 = arith.addf %67, %66 : vector<64x64xf32>
    %69 = arith.divf %67, %68 : vector<64x64xf32>
    %70 = vector.extract_strided_slice %55 {offsets = [0, 128], sizes = [64, 64], strides = [1, 1]} : vector<64x256xf32> to vector<64x64xf32>
    %71 = arith.negf %70 : vector<64x64xf32>
    %72 = math.exp %71 : vector<64x64xf32>
    %cst_58 = arith.constant 1.000000e+00 : f32
    %73 = vector.broadcast %cst_58 : f32 to vector<64x64xf32>
    %74 = arith.addf %73, %72 : vector<64x64xf32>
    %75 = arith.divf %73, %74 : vector<64x64xf32>
    %76 = vector.extract_strided_slice %55 {offsets = [0, 192], sizes = [64, 64], strides = [1, 1]} : vector<64x256xf32> to vector<64x64xf32>
    %77 = math.tanh %76 : vector<64x64xf32>
    %78 = arith.mulf %69, %57 : vector<64x64xf32>
    %79 = arith.mulf %63, %77 : vector<64x64xf32>
    %80 = arith.addf %78, %79 : vector<64x64xf32>
    %81 = math.tanh %80 : vector<64x64xf32>
    %82 = arith.mulf %75, %81 : vector<64x64xf32>
    %83 = arith.truncf %82 : vector<64x64xf32> to vector<64x64xbf16>
    %84 = vector.shape_cast %83 : vector<64x64xbf16> to vector<1x64x64xbf16>
    %c0_59 = arith.constant 0 : index
    %c0_60 = arith.constant 0 : index
    %c0_61 = arith.constant 0 : index
    %85 = vector.load %arg5[%c0_59, %c0_60, %c0_61] : memref<1x64x64xbf16, #tpu.memory_space<vmem>>, vector<1x64x64xbf16>
    tpu.vector_store %arg5[%c0_59, %c0_60, %c0_61], %84 {strides = array<i32>} : memref<1x64x64xbf16, #tpu.memory_space<vmem>>, vector<1x64x64xbf16>,
    %86 = vector.shape_cast %80 : vector<64x64xf32> to vector<1x64x64xf32>
    %c0_62 = arith.constant 0 : index
    %c0_63 = arith.constant 0 : index
    %c0_64 = arith.constant 0 : index
    %87 = vector.load %arg6[%c0_62, %c0_63, %c0_64] : memref<1x64x64xf32, #tpu.memory_space<vmem>>, vector<1x64x64xf32>
    tpu.vector_store %arg6[%c0_62, %c0_63, %c0_64], %86 {strides = array<i32>} : memref<1x64x64xf32, #tpu.memory_space<vmem>>, vector<1x64x64xf32>,
    return
  }
  func.func @transform_0(%arg0: i32) -> (i32, i32, i32, i32) {
    %c0_i32 = arith.constant 0 : i32
    %c0_i32_0 = arith.constant 0 : i32
    %c0_i32_1 = arith.constant 0 : i32
    %c0_i32_2 = arith.constant 0 : i32
    return %arg0, %c0_i32, %c0_i32_0, %c0_i32_1 : i32, i32, i32, i32
  }
  func.func @transform_1(%arg0: i32) -> (i32, i32) {
    %c0_i32 = arith.constant 0 : i32
    %c0_i32_0 = arith.constant 0 : i32
    %c0_i32_1 = arith.constant 0 : i32
    return %c0_i32, %c0_i32_0 : i32, i32
  }
  func.func @transform_2(%arg0: i32) -> (i32, i32) {
    %c0_i32 = arith.constant 0 : i32
    %c0_i32_0 = arith.constant 0 : i32
    %c0_i32_1 = arith.constant 0 : i32
    return %c0_i32, %c0_i32_0 : i32, i32
  }
  func.func @transform_3(%arg0: i32) -> (i32, i32, i32) {
    %c0_i32 = arith.constant 0 : i32
    %c0_i32_0 = arith.constant 0 : i32
    %c0_i32_1 = arith.constant 0 : i32
    return %arg0, %c0_i32, %c0_i32_0 : i32, i32, i32
  }
  func.func @transform_4(%arg0: i32) -> (i32, i32, i32) {
    %c0_i32 = arith.constant 0 : i32
    %c0_i32_0 = arith.constant 0 : i32
    %c0_i32_1 = arith.constant 0 : i32
    return %arg0, %c0_i32, %c0_i32_0 : i32, i32, i32
  }
  func.func @transform_5(%arg0: i32) -> (i32, i32, i32) {
    %c0_i32 = arith.constant 0 : i32
    %c0_i32_0 = arith.constant 0 : i32
    %c0_i32_1 = arith.constant 0 : i32
    return %arg0, %c0_i32, %c0_i32_0 : i32, i32, i32
  }
}

</mosaic_0001>

<llo_original>
// kernel: recurrent_down_forward.5
$region0: #{recurrent_down_forward.5}
  #allocation0 [shape = 'u32[]', space=smem, size = 0x4, offset = 0x4, fixed_abs, tag = 'smem constant byte address 0x4 - core index']
  #allocation1 [shape = 'u32[144,128]{1,0:T(1,128)}', space=vmem, size = 0x12000, scoped, tag = 'internal scratch']
  #allocation2 [shape = 'f32[64,128]{1,0:T(8,128)}', space=vmem, size = 0x8000, scoped, tag = 'scratch operand']
  %s0 = inlined_call_operand.vmem [shape: bf16[128,288], index: 0, kind: input, shape index: {}]
  %s1 = inlined_call_operand.vmem [shape: bf16[288,128], index: 1, kind: input, shape index: {}]
  %s2 = inlined_call_operand.vmem [shape: f32[1,128], index: 2, kind: input, shape index: {}]
  %s3 = inlined_call_operand.vmem [shape: bf16[128,128], index: 3, kind: output, shape index: {}]
  %s4 = sld [smem:[#allocation0]]
  $region53: #{recurrent_down_forward.5} parent=0
    _
  %s6 = ssub.s32 1, %s4
  %s7 = scalar_select 0, %s6, %s4
  loop: start=0, step=1, limit=4
  $region2: #{recurrent_down_forward.5} parent=0 // loop_pre_header
    _
  $region3: #{recurrent_down_forward.5} parent=0 // loop_header
    %s9 = sphi 0, %s13
    %p10 = scmp.ge.s32.totalorder %s9, 4
    %s16 = sphi 0, %s35
    %s17 = sphi 0, %s31
    %s18 = sphi 0, %s27
    %s19 = sphi 0, %s16
    %s20 = sphi 0, %s17
    %s21 = sphi 0, %s18
    %s22 = sphi 0, %s19
    %s23 = sphi 0, %s20
    %s24 = sphi 0, %s21
    %s40 = sphi 0, %s42
    %s43 = sphi 0, %s40
    %s44 = sphi 0, %s43
    %s60 = sphi 0, %s44
    %s68 = sphi 0, %s70
    %s71 = sphi 0, %s68
    %s72 = sphi 0, %s71
    %s88 = sphi 0, %s72
    %s94 = sphi 0, %s96
    %s97 = sphi 0, %s94
    %s98 = sphi 0, %s97
    %s114 = sphi 0, %s98
    %s122 = sphi 0, %s124
    %s125 = sphi 0, %s122
    %s126 = sphi 0, %s125
    %s142 = sphi 0, %s126
  $region4: #{recurrent_down_forward.5} parent=0 // loop_header_branch
    %12 = sbr.rel (%p10) target = $region8
  $region5: #{recurrent_down_forward.5} parent=0 // loop_body
    %s14 = ssub.s32 %s9, 1
    %s15 = ssub.s32 %s9, 2
    %s25 = sadd.s32 1, %s18
    %p26 = scmp.ge.s32.totalorder %s25, 1
    %s27 = scalar_select %p26, 0, %s25
    %s28 = sadd.s32 1, %s17
    %s29 = scalar_select %p26, %s28, %s17
    %p30 = scmp.ge.s32.totalorder %s29, 1
    %s31 = scalar_select %p30, 0, %s29
    %s32 = sadd.s32 1, %s16
    %s33 = scalar_select %p30, %s32, %s16
    %p34 = scmp.ge.s32.totalorder %s33, 2
    %s35 = scalar_select %p34, 0, %s33
    %s36 = ssub.s32 %s16, %s35
    %s37 = ssub.s32 %s18, %s27
    %s38 = sor.u32 %s36, %s37
    %p39 = scmp.eq.s32.totalorder %s38, 0
    %s41 = sadd.s32 %s40, 1
    %s42 = scalar_select %p39, %s40, %s41
    %p45 = pneg %p39
    %p46 = scmp.eq.s32.totalorder %s9, 1
    %p47 = por %p45, %p46
    %p48 = scmp.ne.s32.totalorder %s40, %s43
    %p49 = scmp.eq.s32.totalorder %s9, 0
    %p50 = por %p48, %p49
    %p51 = scmp.ne.s32.totalorder %s40, %s43
    %p52 = scmp.eq.s32.totalorder %s14, 1
    %p53 = por %p51, %p52
    %p54 = scmp.ne.s32.totalorder %s43, %s44
    %p55 = scmp.eq.s32.totalorder %s14, 0
    %p56 = por %p54, %p55
    %p57 = scmp.ne.s32.totalorder %s43, %s44
    %p58 = scmp.eq.s32.totalorder %s15, 1
    %p59 = por %p57, %p58
    %p61 = scmp.ne.s32.totalorder %s44, %s60
    %p62 = scmp.eq.s32.totalorder %s15, 0
    %p63 = por %p61, %p62
    %s64 = ssub.s32 %s18, %s27
    %s65 = ssub.s32 %s17, %s31
    %s66 = sor.u32 %s64, %s65
    %p67 = scmp.eq.s32.totalorder %s66, 0
    %s69 = sadd.s32 %s68, 1
    %s70 = scalar_select %p67, %s68, %s69
    %p73 = pneg %p67
    %p74 = scmp.eq.s32.totalorder %s9, 1
    %p75 = por %p73, %p74
    %p76 = scmp.ne.s32.totalorder %s68, %s71
    %p77 = scmp.eq.s32.totalorder %s9, 0
    %p78 = por %p76, %p77
    %p79 = scmp.ne.s32.totalorder %s68, %s71
    %p80 = scmp.eq.s32.totalorder %s14, 1
    %p81 = por %p79, %p80
    %p82 = scmp.ne.s32.totalorder %s71, %s72
    %p83 = scmp.eq.s32.totalorder %s14, 0
    %p84 = por %p82, %p83
    %p85 = scmp.ne.s32.totalorder %s71, %s72
    %p86 = scmp.eq.s32.totalorder %s15, 1
    %p87 = por %p85, %p86
    %p89 = scmp.ne.s32.totalorder %s72, %s88
    %p90 = scmp.eq.s32.totalorder %s15, 0
    %p91 = por %p89, %p90
    %s92 = ssub.s32 %s17, %s31
    %p93 = scmp.eq.s32.totalorder %s92, 0
    %s95 = sadd.s32 %s94, 1
    %s96 = scalar_select %p93, %s94, %s95
    %p99 = pneg %p93
    %p100 = scmp.eq.s32.totalorder %s9, 1
    %p101 = por %p99, %p100
    %p102 = scmp.ne.s32.totalorder %s94, %s97
    %p103 = scmp.eq.s32.totalorder %s9, 0
    %p104 = por %p102, %p103
    %p105 = scmp.ne.s32.totalorder %s94, %s97
    %p106 = scmp.eq.s32.totalorder %s14, 1
    %p107 = por %p105, %p106
    %p108 = scmp.ne.s32.totalorder %s97, %s98
    %p109 = scmp.eq.s32.totalorder %s14, 0
    %p110 = por %p108, %p109
    %p111 = scmp.ne.s32.totalorder %s97, %s98
    %p112 = scmp.eq.s32.totalorder %s15, 1
    %p113 = por %p111, %p112
    %p115 = scmp.ne.s32.totalorder %s98, %s114
    %p116 = scmp.eq.s32.totalorder %s15, 0
    %p117 = por %p115, %p116
    %s118 = ssub.s32 %s16, %s35
    %s119 = ssub.s32 %s17, %s31
    %s120 = sor.u32 %s118, %s119
    %p121 = scmp.eq.s32.totalorder %s120, 0
    %s123 = sadd.s32 %s122, 1
    %s124 = scalar_select %p121, %s122, %s123
    %p127 = pneg %p121
    %p128 = scmp.eq.s32.totalorder %s9, 1
    %p129 = por %p127, %p128
    %p130 = scmp.ne.s32.totalorder %s122, %s125
    %p131 = scmp.eq.s32.totalorder %s9, 0
    %p132 = por %p130, %p131
    %p133 = scmp.ne.s32.totalorder %s122, %s125
    %p134 = scmp.eq.s32.totalorder %s14, 1
    %p135 = por %p133, %p134
    %p136 = scmp.ne.s32.totalorder %s125, %s126
    %p137 = scmp.eq.s32.totalorder %s14, 0
    %p138 = por %p136, %p137
    %p139 = scmp.ne.s32.totalorder %s125, %s126
    %p140 = scmp.eq.s32.totalorder %s15, 1
    %p141 = por %p139, %p140
    %p143 = scmp.ne.s32.totalorder %s126, %s142
    %p144 = scmp.eq.s32.totalorder %s15, 0
    %p145 = por %p143, %p144
    %p146 = scmp.le.s32.totalorder 1, %s9
    %p147 = scmp.lt.s32.totalorder %s9, 3
    %p148 = pnand %p146, %p147
    %p149 = pneg %p148
    // Predicated region
    $region9: #{recurrent_down_forward.5} parent=5 // pred_check
      _
    $region10: #{recurrent_down_forward.5} parent=5 // pred_check_branch
      %151 = sbr.rel (%p148) target = $region12
    $region11: #{recurrent_down_forward.5} parent=5 // pred_region
      %s152 = ssub.s32 %s9, 1
      // Predicated region
      $region13: #{recurrent_down_forward.5} parent=11 // pred_check
        %p153 = pneg %p84
      $region14: #{recurrent_down_forward.5} parent=11 // pred_check_branch
        %155 = sbr.rel (%p153) target = $region16
      $region15: #{recurrent_down_forward.5} parent=11 // pred_region
        %s156 = smul.u32 36, %s21
        %p157 = scmp.lt.s32.totalorder %s156, 35
        %s158 = scalar_select %p157, %s156, 35
        %p159 = scmp.lt.s32.totalorder %s20, 0
        %s160 = scalar_select %p159, %s20, 0
        %s161 = sadd.s32 %s160, %s158
        %s162 = smul.addr %s161, 4
        %s163 = scalar_lea.vmem %s1, %s162
        %s164 = smul.u32 36, %s21
      $region16: #{recurrent_down_forward.5} parent=11 // pred_fallthru
        _
      // Predicated region
      $region17: #{recurrent_down_forward.5} parent=11 // pred_check
        %p165 = pneg %p110
      $region18: #{recurrent_down_forward.5} parent=11 // pred_check_branch
        %167 = sbr.rel (%p165) target = $region20
      $region19: #{recurrent_down_forward.5} parent=11 // pred_region
        %p168 = scmp.lt.s32.totalorder %s20, 0
        %s169 = scalar_select %p168, %s20, 0
        %s170 = scalar_lea.vmem %s2, %s169
      $region20: #{recurrent_down_forward.5} parent=11 // pred_fallthru
        _
    $region12: #{recurrent_down_forward.5} parent=5 // pred_fallthru
      _
    %p171 = scmp.lt.s32.totalorder %s9, 2
    // Predicated region
    $region21: #{recurrent_down_forward.5} parent=5 // pred_check
      %p172 = pneg %p171
    $region22: #{recurrent_down_forward.5} parent=5 // pred_check_branch
      %174 = sbr.rel (%p172) target = $region24
    $region23: #{recurrent_down_forward.5} parent=5 // pred_region
      // Predicated region
      $region25: #{recurrent_down_forward.5} parent=23 // pred_check
        %p175 = pneg %p50
      $region26: #{recurrent_down_forward.5} parent=23 // pred_check_branch
        %177 = sbr.rel (%p175) target = $region28
      $region27: #{recurrent_down_forward.5} parent=23 // pred_region
        %s178 = smul.u32 8, %s16
        %s179 = smul.u32 3, %s18
        %p180 = scmp.lt.s32.totalorder %s178, 15
        %s181 = scalar_select %p180, %s178, 15
        %p182 = scmp.lt.s32.totalorder %s179, 2
        %s183 = scalar_select %p182, %s179, 2
        %s184 = smul.addr %s181, 3
        %s185 = sadd.s32 %s183, %s184
        %s186 = smul.addr %s185, 4
        %s187 = scalar_lea.vmem %s0, %s186
        %s188 = smul.u32 8, %s16
        %s189 = smul.u32 3, %s18
      $region28: #{recurrent_down_forward.5} parent=23 // pred_fallthru
        _
    $region24: #{recurrent_down_forward.5} parent=5 // pred_fallthru
      _
    %p190 = scmp.le.s32.totalorder 1, %s9
    %p191 = scmp.lt.s32.totalorder %s9, 3
    %p192 = pnand %p190, %p191
    %p193 = pneg %p192
    // Predicated region
    $region29: #{recurrent_down_forward.5} parent=5 // pred_check
      _
    $region30: #{recurrent_down_forward.5} parent=5 // pred_check_branch
      %195 = sbr.rel (%p192) target = $region32
    $region31: #{recurrent_down_forward.5} parent=5 // pred_region
      %s196 = ssub.s32 %s9, 1
      %s197 = smul.u32 8, %s19
      %s198 = smul.u32 3, %s21
      %p199 = scmp.lt.s32.totalorder %s197, 15
      %s200 = scalar_select %p199, %s197, 15
      %p201 = scmp.lt.s32.totalorder %s198, 2
      %s202 = scalar_select %p201, %s198, 2
      %s203 = smul.addr %s200, 3
      %s204 = sadd.s32 %s202, %s203
      %s205 = smul.addr %s204, 4
      %s206 = scalar_lea.vmem %s0, %s205
      %p207 = pneg %p56
      %p208 = pneg %p53
      %s209 = smul.u32 36, %s21
      %p210 = scmp.lt.s32.totalorder %s209, 35
      %s211 = scalar_select %p210, %s209, 35
      %p212 = scmp.lt.s32.totalorder %s20, 0
      %s213 = scalar_select %p212, %s20, 0
      %s214 = sadd.s32 %s213, %s211
      %s215 = smul.addr %s214, 4
      %s216 = scalar_lea.vmem %s1, %s215
      %p217 = pneg %p84
      %p218 = pneg %p81
      %p219 = scmp.lt.s32.totalorder %s20, 0
      %s220 = scalar_select %p219, %s20, 0
      %s221 = scalar_lea.vmem %s2, %s220
      %p222 = pneg %p110
      %p223 = pneg %p107
      %p224 = pneg %p138
      %p225 = pneg %p135
      %s226 = smul.u32 8, %s19
      %p227 = scmp.lt.s32.totalorder %s226, 15
      %s228 = scalar_select %p227, %s226, 15
      %p229 = scmp.lt.s32.totalorder %s20, 0
      %s230 = scalar_select %p229, %s20, 0
      %s231 = sadd.s32 %s230, %s228
      %s232 = smul.addr %s231, 4
      %s233 = scalar_lea.vmem %s3, %s232
      %s234 = smul.u32 8, %s19
      %s235 = smul.u32 3, %s21
      %p236 = scmp.lt.s32.totalorder %s234, 15
      %s237 = scalar_select %p236, %s234, 15
      %p238 = scmp.lt.s32.totalorder %s235, 2
      %s239 = scalar_select %p238, %s235, 2
      %s240 = smul.addr %s237, 3
      %s241 = sadd.s32 %s239, %s240
      %s242 = smul.addr %s241, 4
      %s243 = scalar_lea.vmem %s0, %s242
      %s244 = smul.u32 8, %s19
      %s245 = smul.u32 3, %s21
      %s246 = smul.u32 36, %s21
      %p247 = scmp.lt.s32.totalorder %s246, 35
      %s248 = scalar_select %p247, %s246, 35
      %p249 = scmp.lt.s32.totalorder %s20, 0
      %s250 = scalar_select %p249, %s20, 0
      %s251 = sadd.s32 %s250, %s248
      %s252 = smul.addr %s251, 4
      %s253 = scalar_lea.vmem %s1, %s252
      %s254 = smul.u32 36, %s21
      %p255 = scmp.lt.s32.totalorder %s20, 0
      %s256 = scalar_select %p255, %s20, 0
      %s257 = scalar_lea.vmem %s2, %s256
      %s258 = smul.u32 8, %s19
      %p259 = scmp.lt.s32.totalorder %s258, 15
      %s260 = scalar_select %p259, %s258, 15
      %p261 = scmp.lt.s32.totalorder %s20, 0
      %s262 = scalar_select %p261, %s20, 0
      %s263 = sadd.s32 %s262, %s260
      %s264 = smul.addr %s263, 4
      %s265 = scalar_lea.vmem %s3, %s264
      %s266 = smul.u32 8, %s19
      %p268 = scmp.eq.s32.totalorder %s21, 0
      // Predicated region
      $region33: #{recurrent_down_forward.5} parent=31 // pred_check
        %p269 = pneg %p268
      $region34: #{recurrent_down_forward.5} parent=31 // pred_check_branch
        %271 = sbr.rel (%p269) target = $region36
      $region35: #{recurrent_down_forward.5} parent=31 // pred_region
        %272 = vst [vmem:[#allocation2] sm:$0xff] 0.0
        %273 = vst [vmem:[#allocation2 + $0x8] sm:$0xff] 0.0
        %274 = vst [vmem:[#allocation2 + $0x10] sm:$0xff] 0.0
        %275 = vst [vmem:[#allocation2 + $0x18] sm:$0xff] 0.0
        %276 = vst [vmem:[#allocation2 + $0x20] sm:$0xff] 0.0
        %277 = vst [vmem:[#allocation2 + $0x28] sm:$0xff] 0.0
        %278 = vst [vmem:[#allocation2 + $0x30] sm:$0xff] 0.0
        %279 = vst [vmem:[#allocation2 + $0x38] sm:$0xff] 0.0
      $region36: #{recurrent_down_forward.5} parent=31 // pred_fallthru
        _
      %v280 = vld [vmem:[%s243] sm:$0xff]
      %v281 = vld [vmem:[%s243 + $0x8] sm:$0xf]
      %v282 = vld [vmem:[%s243 + $0xc] sm:$0xff]
      %v283 = vld [vmem:[%s243 + $0x14] sm:$0xf]
      %v284 = vld [vmem:[%s243 + $0x18] sm:$0xff]
      %v285 = vld [vmem:[%s243 + $0x20] sm:$0xf]
      %v286 = vld [vmem:[%s243 + $0x24] sm:$0xff]
      %v287 = vld [vmem:[%s243 + $0x2c] sm:$0xf]
      %v288 = vld [vmem:[%s243 + $0x30] sm:$0xff]
      %v289 = vld [vmem:[%s243 + $0x38] sm:$0xf]
      %v290 = vld [vmem:[%s243 + $0x3c] sm:$0xff]
      %v291 = vld [vmem:[%s243 + $0x44] sm:$0xf]
      %v292 = vld [vmem:[%s243 + $0x48] sm:$0xff]
      %v293 = vld [vmem:[%s243 + $0x50] sm:$0xf]
      %v294 = vld [vmem:[%s243 + $0x54] sm:$0xff]
      %v295 = vld [vmem:[%s243 + $0x5c] sm:$0xf]
      %v296 = vld [vmem:[#allocation2] sm:$0xff]
      %v297 = vld [vmem:[#allocation2 + $0x8] sm:$0xff]
      %v298 = vld [vmem:[#allocation2 + $0x10] sm:$0xff]
      %v299 = vld [vmem:[#allocation2 + $0x18] sm:$0xff]
      %v300 = vld [vmem:[#allocation2 + $0x20] sm:$0xff]
      %v301 = vld [vmem:[#allocation2 + $0x28] sm:$0xff]
      %v302 = vld [vmem:[#allocation2 + $0x30] sm:$0xff]
      %v303 = vld [vmem:[#allocation2 + $0x38] sm:$0xff]
      %v304 = vld [vmem:[%s253] sm:$0xf]
      %v305 = vld [vmem:[%s253 + $0x4] sm:$0xf]
      %v306 = vld [vmem:[%s253 + $0x8] sm:$0xf]
      %v307 = vld [vmem:[%s253 + $0xc] sm:$0xf]
      %v308 = vld [vmem:[%s253 + $0x10] sm:$0xf]
      %v309 = vld [vmem:[%s253 + $0x14] sm:$0xf]
      %v310 = vld [vmem:[%s253 + $0x18] sm:$0xf]
      %v311 = vld [vmem:[%s253 + $0x1c] sm:$0xf]
      %v312 = vld [vmem:[%s253 + $0x20] sm:$0xf]
      %v313 = vld [vmem:[%s253 + $0x24] sm:$0xf]
      %v314 = vld [vmem:[%s253 + $0x28] sm:$0xf]
      %v315 = vld [vmem:[%s253 + $0x2c] sm:$0xf]
      %v316 = vld [vmem:[%s253 + $0x30] sm:$0xf]
      %v317 = vld [vmem:[%s253 + $0x34] sm:$0xf]
      %v318 = vld [vmem:[%s253 + $0x38] sm:$0xf]
      %v319 = vld [vmem:[%s253 + $0x3c] sm:$0xf]
      %v320 = vld [vmem:[%s253 + $0x40] sm:$0xf]
      %v321 = vld [vmem:[%s253 + $0x44] sm:$0xf]
      %v322 = vld [vmem:[%s253 + $0x48] sm:$0xf]
      %v323 = vld [vmem:[%s253 + $0x4c] sm:$0xf]
      %v324 = vld [vmem:[%s253 + $0x50] sm:$0xf]
      %v325 = vld [vmem:[%s253 + $0x54] sm:$0xf]
      %v326 = vld [vmem:[%s253 + $0x58] sm:$0xf]
      %v327 = vld [vmem:[%s253 + $0x5c] sm:$0xf]
      %v328 = vld [vmem:[%s253 + $0x60] sm:$0xf]
      %v329 = vld [vmem:[%s253 + $0x64] sm:$0xf]
      %v330 = vld [vmem:[%s253 + $0x68] sm:$0xf]
      %v331 = vld [vmem:[%s253 + $0x6c] sm:$0xf]
      %v332 = vld [vmem:[%s253 + $0x70] sm:$0xf]
      %v333 = vld [vmem:[%s253 + $0x74] sm:$0xf]
      %v334 = vld [vmem:[%s253 + $0x78] sm:$0xf]
      %v335 = vld [vmem:[%s253 + $0x7c] sm:$0xf]
      %v336 = vld [vmem:[%s253 + $0x80] sm:$0xf]
      %v337 = vld [vmem:[%s253 + $0x84] sm:$0xf]
      %v338 = vld [vmem:[%s253 + $0x88] sm:$0xf]
      %v339 = vld [vmem:[%s253 + $0x8c] sm:$0xf]
      %v356 = vunpack.c.l.b16 %v280
      %v357 = vunpack.c.h.b16 %v280
      %v358 = vunpack.c.l.b16 %v281
      %v359 = vunpack.c.l.b16 %v282
      %v360 = vunpack.c.h.b16 %v282
      %v361 = vunpack.c.l.b16 %v283
      %v362 = vunpack.c.l.b16 %v284
      %v363 = vunpack.c.h.b16 %v284
      %v364 = vunpack.c.l.b16 %v285
      %v365 = vunpack.c.l.b16 %v286
      %v366 = vunpack.c.h.b16 %v286
      %v367 = vunpack.c.l.b16 %v287
      %v368 = vunpack.c.l.b16 %v288
      %v369 = vunpack.c.h.b16 %v288
      %v370 = vunpack.c.l.b16 %v289
      %v371 = vunpack.c.l.b16 %v290
      %v372 = vunpack.c.h.b16 %v290
      %v373 = vunpack.c.l.b16 %v291
      %v374 = vunpack.c.l.b16 %v292
      %v375 = vunpack.c.h.b16 %v292
      %v376 = vunpack.c.l.b16 %v293
      %v377 = vunpack.c.l.b16 %v294
      %v378 = vunpack.c.h.b16 %v294
      %v379 = vunpack.c.l.b16 %v295
      %v380 = vpack.c.b16 %v359, %v356
      %v381 = vpack.c.b16 %v360, %v357
      %v382 = vpack.c.b16 %v361, %v358
      %v383 = vpack.c.b16 %v365, %v362
      %v384 = vpack.c.b16 %v366, %v363
      %v385 = vpack.c.b16 %v367, %v364
      %v386 = vpack.c.b16 %v371, %v368
      %v387 = vpack.c.b16 %v372, %v369
      %v388 = vpack.c.b16 %v373, %v370
      %v389 = vpack.c.b16 %v377, %v374
      %v390 = vpack.c.b16 %v378, %v375
      %v391 = vpack.c.b16 %v379, %v376
      %v436 = vunpack.c.l.b16 %v304
      %v437 = vunpack.c.l.b16 %v305
      %v438 = vunpack.c.l.b16 %v306
      %v439 = vunpack.c.l.b16 %v307
      %v440 = vunpack.c.l.b16 %v308
      %v441 = vunpack.c.l.b16 %v309
      %v442 = vunpack.c.l.b16 %v310
      %v443 = vunpack.c.l.b16 %v311
      %v444 = vunpack.c.l.b16 %v312
      %v445 = vunpack.c.l.b16 %v313
      %v446 = vunpack.c.l.b16 %v314
      %v447 = vunpack.c.l.b16 %v315
      %v448 = vunpack.c.l.b16 %v316
      %v449 = vunpack.c.l.b16 %v317
      %v450 = vunpack.c.l.b16 %v318
      %v451 = vunpack.c.l.b16 %v319
      %v452 = vunpack.c.l.b16 %v320
      %v453 = vunpack.c.l.b16 %v321
      %v454 = vunpack.c.l.b16 %v322
      %v455 = vunpack.c.l.b16 %v323
      %v456 = vunpack.c.l.b16 %v324
      %v457 = vunpack.c.l.b16 %v325
      %v458 = vunpack.c.l.b16 %v326
      %v459 = vunpack.c.l.b16 %v327
      %v460 = vunpack.c.l.b16 %v328
      %v461 = vunpack.c.l.b16 %v329
      %v462 = vunpack.c.l.b16 %v330
      %v463 = vunpack.c.l.b16 %v331
      %v464 = vunpack.c.l.b16 %v332
      %v465 = vunpack.c.l.b16 %v333
      %v466 = vunpack.c.l.b16 %v334
      %v467 = vunpack.c.l.b16 %v335
      %v468 = vunpack.c.l.b16 %v336
      %v469 = vunpack.c.l.b16 %v337
      %v470 = vunpack.c.l.b16 %v338
      %v471 = vunpack.c.l.b16 %v339
      %v472 = vpack.c.b16 %v437, %v436
      %v473 = vpack.c.b16 %v439, %v438
      %v474 = vpack.c.b16 %v441, %v440
      %v475 = vpack.c.b16 %v443, %v442
      %v476 = vpack.c.b16 %v445, %v444
      %v477 = vpack.c.b16 %v447, %v446
      %v478 = vpack.c.b16 %v449, %v448
      %v479 = vpack.c.b16 %v451, %v450
      %v480 = vpack.c.b16 %v453, %v452
      %v481 = vpack.c.b16 %v455, %v454
      %v482 = vpack.c.b16 %v457, %v456
      %v483 = vpack.c.b16 %v459, %v458
      %v484 = vpack.c.b16 %v461, %v460
      %v485 = vpack.c.b16 %v463, %v462
      %v486 = vpack.c.b16 %v465, %v464
      %v487 = vpack.c.b16 %v467, %v466
      %v488 = vpack.c.b16 %v469, %v468
      %v489 = vpack.c.b16 %v471, %v470
      %vm508 = vcmask 261120
      %v510 = vsel %vm508, %v382, 0
      %v513 = vsel %vm508, %v385, 0
      %v516 = vsel %vm508, %v388, 0
      %v519 = vsel %vm508, %v391, 0
      %521 = vmatprep.subr.bf16.mxu0 0
      %522 = vmatpush1.bf16.msra.mxu0 %v472
      %523 = vmatprep.subr.bf16.mxu0 0
      %524 = vmatpush1.bf16.msra.mxu0 %v473
      %525 = vmatprep.subr.bf16.mxu0 0
      %526 = vmatpush1.bf16.msra.mxu0 %v474
      %527 = vmatprep.subr.bf16.mxu0 0
      %528 = vmatpush1.bf16.msra.mxu0 %v475
      %529 = vmatprep.subr.bf16.mxu0 0
      %530 = vmatpush1.bf16.msra.mxu0 %v476
      %531 = vmatprep.subr.bf16.mxu0 0
      %532 = vmatpush1.bf16.msra.mxu0 %v477
      %533 = vmatprep.subr.bf16.mxu0 0
      %534 = vmatpush1.bf16.msra.mxu0 %v478
      %535 = vmatprep.subr.bf16.mxu0 0
      %536 = vmatpush1.bf16.msra.mxu0 %v479
      %537 = vmatprep.subr.bf16.mxu0 0
      %538 = vmatpush1.bf16.msra.mxu0 %v480
      %539 = vmatprep.subr.bf16.mxu0 0
      %540 = vmatpush1.bf16.msra.mxu0 %v481
      %541 = vmatprep.subr.bf16.mxu0 0
      %542 = vmatpush1.bf16.msra.mxu0 %v482
      %543 = vmatprep.subr.bf16.mxu0 0
      %544 = vmatpush1.bf16.msra.mxu0 %v483
      %545 = vmatprep.subr.bf16.mxu0 0
      %546 = vmatpush1.bf16.msra.mxu0 %v484
      %547 = vmatprep.subr.bf16.mxu0 0
      %548 = vmatpush1.bf16.msra.mxu0 %v485
      %549 = vmatprep.subr.bf16.mxu0 0
      %550 = vmatpush1.bf16.msra.mxu0 %v486
      %551 = vmatprep.subr.bf16.mxu0 0
      %552 = vmatpush1.bf16.msra.mxu0 %v487
      %553 = vmatprep.mubr.bf16.mxu0 %v381
      %554 = vmatmul.mubr.bf16.gmra.mrb[0].mxu0 %v380
      %v555 = vpop.f32.mrb[0].mxu0
      %v556 = vadd.f32 0.0, %v555
      %v557 = vpop.f32.mrb[0].mxu0
      %v558 = vpop.f32.mrb[0].mxu0
      %v559 = vadd.f32 0.0, %v558
      %v560 = vpop.f32.mrb[0].mxu0
      %561 = vmatprep.mubr.bf16.mxu0 %v384
      %562 = vmatmul.mubr.bf16.gmra.mrb[0].mxu0 %v383
      %v563 = vpop.f32.mrb[0].mxu0
      %v564 = vadd.f32 0.0, %v563
      %v565 = vpop.f32.mrb[0].mxu0
      %v566 = vpop.f32.mrb[0].mxu0
      %v567 = vadd.f32 0.0, %v566
      %v568 = vpop.f32.mrb[0].mxu0
      %569 = vmatprep.mubr.bf16.mxu0 %v387
      %570 = vmatmul.mubr.bf16.gmra.mrb[0].mxu0 %v386
      %v571 = vpop.f32.mrb[0].mxu0
      %v572 = vadd.f32 0.0, %v571
      %v573 = vpop.f32.mrb[0].mxu0
      %v574 = vpop.f32.mrb[0].mxu0
      %v575 = vadd.f32 0.0, %v574
      %v576 = vpop.f32.mrb[0].mxu0
      %577 = vmatprep.mubr.bf16.mxu0 %v390
      %578 = vmatmul.mubr.bf16.gmra.mrb[0].mxu0 %v389
      %v579 = vpop.f32.mrb[0].mxu0
      %v580 = vadd.f32 0.0, %v579
      %v581 = vpop.f32.mrb[0].mxu0
      %v582 = vpop.f32.mrb[0].mxu0
      %v583 = vadd.f32 0.0, %v582
      %v584 = vpop.f32.mrb[0].mxu0
      %585 = vdwg.mxu0
      %586 = vmatprep.subr.bf16.mxu0 0
      %587 = vmatpush1.bf16.msra.mxu0 %v488
      %588 = vmatprep.subr.bf16.mxu0 0
      %589 = vmatpush1.bf16.msra.mxu0 %v489
      %590 = vmatprep.subr.bf16.mxu0 0
      %591 = vmatpush1.bf16.msra.mxu0 0
      %592 = vmatprep.subr.bf16.mxu0 0
      %593 = vmatpush1.bf16.msra.mxu0 0
      %594 = vmatprep.subr.bf16.mxu0 0
      %595 = vmatpush1.bf16.msra.mxu0 0
      %596 = vmatprep.subr.bf16.mxu0 0
      %597 = vmatpush1.bf16.msra.mxu0 0
      %598 = vmatprep.subr.bf16.mxu0 0
      %599 = vmatpush1.bf16.msra.mxu0 0
      %600 = vmatprep.subr.bf16.mxu0 0
      %601 = vmatpush1.bf16.msra.mxu0 0
      %602 = vmatprep.subr.bf16.mxu0 0
      %603 = vmatpush1.bf16.msra.mxu0 0
      %604 = vmatprep.subr.bf16.mxu0 0
      %605 = vmatpush1.bf16.msra.mxu0 0
      %606 = vmatprep.subr.bf16.mxu0 0
      %607 = vmatpush1.bf16.msra.mxu0 0
      %608 = vmatprep.subr.bf16.mxu0 0
      %609 = vmatpush1.bf16.msra.mxu0 0
      %610 = vmatprep.subr.bf16.mxu0 0
      %611 = vmatpush1.bf16.msra.mxu0 0
      %612 = vmatprep.subr.bf16.mxu0 0
      %613 = vmatpush1.bf16.msra.mxu0 0
      %614 = vmatprep.subr.bf16.mxu0 0
      %615 = vmatpush1.bf16.msra.mxu0 0
      %616 = vmatprep.subr.bf16.mxu0 0
      %617 = vmatpush1.bf16.msra.mxu0 0
      %618 = vmatprep.mubr.bf16.mxu0 0
      %619 = vmatmul.mubr.bf16.gmra.mrb[0].mxu0 %v510
      %v620 = vpop.f32.mrb[0].mxu0
      %v621 = vadd.f32 %v556, %v620
      %v622 = vpop.f32.mrb[0].mxu0
      %v623 = vpop.f32.mrb[0].mxu0
      %v624 = vadd.f32 %v559, %v623
      %v625 = vpop.f32.mrb[0].mxu0
      %626 = vmatprep.mubr.bf16.mxu0 0
      %627 = vmatmul.mubr.bf16.gmra.mrb[0].mxu0 %v513
      %v628 = vpop.f32.mrb[0].mxu0
      %v629 = vadd.f32 %v564, %v628
      %v630 = vpop.f32.mrb[0].mxu0
      %v631 = vpop.f32.mrb[0].mxu0
      %v632 = vadd.f32 %v567, %v631
      %v633 = vpop.f32.mrb[0].mxu0
      %634 = vmatprep.mubr.bf16.mxu0 0
      %635 = vmatmul.mubr.bf16.gmra.mrb[0].mxu0 %v516
      %v636 = vpop.f32.mrb[0].mxu0
      %v637 = vadd.f32 %v572, %v636
      %v638 = vpop.f32.mrb[0].mxu0
      %v639 = vpop.f32.mrb[0].mxu0
      %v640 = vadd.f32 %v575, %v639
      %v641 = vpop.f32.mrb[0].mxu0
      %642 = vmatprep.mubr.bf16.mxu0 0
      %643 = vmatmul.mubr.bf16.gmra.mrb[0].mxu0 %v519
      %v644 = vpop.f32.mrb[0].mxu0
      %v645 = vadd.f32 %v580, %v644
      %v646 = vpop.f32.mrb[0].mxu0
      %v647 = vpop.f32.mrb[0].mxu0
      %v648 = vadd.f32 %v583, %v647
      %v649 = vpop.f32.mrb[0].mxu0
      %650 = vdwg.mxu0
      %v651 = vadd.f32 %v296, %v621
      %v652 = vadd.f32 %v297, %v624
      %v653 = vadd.f32 %v298, %v629
      %v654 = vadd.f32 %v299, %v632
      %v655 = vadd.f32 %v300, %v637
      %v656 = vadd.f32 %v301, %v640
      %v657 = vadd.f32 %v302, %v645
      %v658 = vadd.f32 %v303, %v648
      %659 = vst [vmem:[#allocation2] sm:$0xff] %v651
      %660 = vst [vmem:[#allocation2 + $0x8] sm:$0xff] %v652
      %661 = vst [vmem:[#allocation2 + $0x10] sm:$0xff] %v653
      %662 = vst [vmem:[#allocation2 + $0x18] sm:$0xff] %v654
      %663 = vst [vmem:[#allocation2 + $0x20] sm:$0xff] %v655
      %664 = vst [vmem:[#allocation2 + $0x28] sm:$0xff] %v656
      %665 = vst [vmem:[#allocation2 + $0x30] sm:$0xff] %v657
      %666 = vst [vmem:[#allocation2 + $0x38] sm:$0xff] %v658
      // Predicated region
      $region37: #{recurrent_down_forward.5} parent=31 // pred_check
        %p667 = pneg %p268
      $region38: #{recurrent_down_forward.5} parent=31 // pred_check_branch
        %669 = sbr.rel (%p667) target = $region40
      $region39: #{recurrent_down_forward.5} parent=31 // pred_region
        %v670 = vld [vmem:[#allocation2] sm:$0xff]
        %v671 = vld [vmem:[#allocation2 + $0x8] sm:$0xff]
        %v672 = vld [vmem:[#allocation2 + $0x10] sm:$0xff]
        %v673 = vld [vmem:[#allocation2 + $0x18] sm:$0xff]
        %v674 = vld [vmem:[#allocation2 + $0x20] sm:$0xff]
        %v675 = vld [vmem:[#allocation2 + $0x28] sm:$0xff]
        %v676 = vld [vmem:[#allocation2 + $0x30] sm:$0xff]
        %v677 = vld [vmem:[#allocation2 + $0x38] sm:$0xff]
        %v678 = vld [vmem:[%s257] sm:$0x1]
        %v680 = vlaneseq
        %v681 = vshrl.u32 %v680, 7
        %v682 = vsub.s32 0, %v681
        %v683 = vrot.slane %v678, %v682
        %v685 = vadd.f32 %v670, %v683
        %v686 = vadd.f32 %v671, %v683
        %v687 = vadd.f32 %v672, %v683
        %v688 = vadd.f32 %v673, %v683
        %v689 = vadd.f32 %v674, %v683
        %v690 = vadd.f32 %v675, %v683
        %v691 = vadd.f32 %v676, %v683
        %v692 = vadd.f32 %v677, %v683
        %v693 = vpack.c.bf16 %v686, %v685
        %v694 = vpack.c.bf16 %v688, %v687
        %v695 = vpack.c.bf16 %v690, %v689
        %v696 = vpack.c.bf16 %v692, %v691
        %v701 = vunpack.c.l.b16 %v693
        %v702 = vunpack.c.h.b16 %v693
        %v703 = vunpack.c.l.b16 %v694
        %v704 = vunpack.c.h.b16 %v694
        %v705 = vunpack.c.l.b16 %v695
        %v706 = vunpack.c.h.b16 %v695
        %v707 = vunpack.c.l.b16 %v696
        %v708 = vunpack.c.h.b16 %v696
        %v709 = vpack.c.b16 %v701, %v701
        %v710 = vpack.c.b16 %v702, %v702
        %v711 = vpack.c.b16 %v703, %v703
        %v712 = vpack.c.b16 %v704, %v704
        %v713 = vpack.c.b16 %v705, %v705
        %v714 = vpack.c.b16 %v706, %v706
        %v715 = vpack.c.b16 %v707, %v707
        %v716 = vpack.c.b16 %v708, %v708
        %725 = vst [vmem:[%s265] sm:$0xf] %v709
        %726 = vst [vmem:[%s265 + $0x4] sm:$0xf] %v710
        %727 = vst [vmem:[%s265 + $0x8] sm:$0xf] %v711
        %728 = vst [vmem:[%s265 + $0xc] sm:$0xf] %v712
        %729 = vst [vmem:[%s265 + $0x10] sm:$0xf] %v713
        %730 = vst [vmem:[%s265 + $0x14] sm:$0xf] %v714
        %731 = vst [vmem:[%s265 + $0x18] sm:$0xf] %v715
        %732 = vst [vmem:[%s265 + $0x1c] sm:$0xf] %v716
      $region40: #{recurrent_down_forward.5} parent=31 // pred_fallthru
        _
      %s733 = smul.u32 8, %s19
      %p734 = scmp.lt.s32.totalorder %s733, 15
      %s735 = scalar_select %p734, %s733, 15
      %p736 = scmp.lt.s32.totalorder %s20, 0
      %s737 = scalar_select %p736, %s20, 0
      %s738 = sadd.s32 %s737, %s735
      %s739 = smul.addr %s738, 4
      %s740 = scalar_lea.vmem %s3, %s739
      // Predicated region
      $region41: #{recurrent_down_forward.5} parent=31 // pred_check
        %p741 = pneg %p135
      $region42: #{recurrent_down_forward.5} parent=31 // pred_check_branch
        %743 = sbr.rel (%p741) target = $region44
      $region43: #{recurrent_down_forward.5} parent=31 // pred_region
        %s744 = smul.u32 8, %s19
      $region44: #{recurrent_down_forward.5} parent=31 // pred_fallthru
        _
    $region32: #{recurrent_down_forward.5} parent=5 // pred_fallthru
      _
    %p745 = scmp.le.s32.totalorder 2, %s9
    // Predicated region
    $region45: #{recurrent_down_forward.5} parent=5 // pred_check
      %p746 = pneg %p745
    $region46: #{recurrent_down_forward.5} parent=5 // pred_check_branch
      %748 = sbr.rel (%p746) target = $region48
    $region47: #{recurrent_down_forward.5} parent=5 // pred_region
      %s749 = ssub.s32 %s9, 2
      // Predicated region
      $region49: #{recurrent_down_forward.5} parent=47 // pred_check
        %p750 = pneg %p141
      $region50: #{recurrent_down_forward.5} parent=47 // pred_check_branch
        %752 = sbr.rel (%p750) target = $region52
      $region51: #{recurrent_down_forward.5} parent=47 // pred_region
        %s753 = smul.u32 8, %s22
        %p754 = scmp.lt.s32.totalorder %s753, 15
        %s755 = scalar_select %p754, %s753, 15
        %p756 = scmp.lt.s32.totalorder %s23, 0
        %s757 = scalar_select %p756, %s23, 0
        %s758 = sadd.s32 %s757, %s755
        %s759 = smul.addr %s758, 4
        %s760 = scalar_lea.vmem %s3, %s759
      $region52: #{recurrent_down_forward.5} parent=47 // pred_fallthru
        _
    $region48: #{recurrent_down_forward.5} parent=5 // pred_fallthru
      _
  $region6: #{recurrent_down_forward.5} parent=0 // loop_footer
    %s13 = sadd.s32 1, %s9
  $region7: #{recurrent_down_forward.5} parent=0 // loop_footer_branch
    %8 = sbr.rel target = $region3
  $region8: #{recurrent_down_forward.5} parent=0 // loop_exit
    _

// kernel: recurrent_down_forward.7
$region0: #{recurrent_down_forward.7}
  #allocation0 [shape = 'u32[]', space=smem, size = 0x4, offset = 0x4, fixed_abs, tag = 'smem constant byte address 0x4 - core index']
  #allocation1 [shape = 'u32[144,128]{1,0:T(1,128)}', space=vmem, size = 0x12000, scoped, tag = 'internal scratch']
  %s0 = inlined_call_operand.vmem [shape: bf16[2,10,10,64], index: 0, kind: input, shape index: {}]
  %s1 = inlined_call_operand.vmem [shape: bf16[576,64], index: 1, kind: input, shape index: {}]
  %s2 = inlined_call_operand.vmem [shape: f32[1,64], index: 2, kind: input, shape index: {}]
  %s3 = inlined_call_operand.vmem [shape: bf16[2,64,64], index: 3, kind: output, shape index: {}]
  %s4 = sld [smem:[#allocation0]]
  $region45: #{recurrent_down_forward.7} parent=0
    _
  %s6 = ssub.s32 1, %s4
  %s7 = scalar_select 0, %s6, %s4
  loop: start=0, step=1, limit=4
  $region2: #{recurrent_down_forward.7} parent=0 // loop_pre_header
    _
  $region3: #{recurrent_down_forward.7} parent=0 // loop_header
    %s9 = sphi 0, %s13
    %p10 = scmp.ge.s32.totalorder %s9, 4
    %s19 = sphi 0, %s21
    %s22 = sphi 0, %s19
    %s23 = sphi 0, %s22
    %s39 = sphi 0, %s23
    %s43 = sphi 0, %s43
    %s45 = sphi 0, %s43
    %s46 = sphi 0, %s45
    %s60 = sphi 0, %s46
    %s64 = sphi 0, %s64
    %s66 = sphi 0, %s64
    %s67 = sphi 0, %s66
    %s81 = sphi 0, %s67
    %s87 = sphi 0, %s89
    %s90 = sphi 0, %s87
    %s91 = sphi 0, %s90
    %s107 = sphi 0, %s91
  $region4: #{recurrent_down_forward.7} parent=0 // loop_header_branch
    %12 = sbr.rel (%p10) target = $region8
  $region5: #{recurrent_down_forward.7} parent=0 // loop_body
    %s14 = ssub.s32 %s9, 1
    %s15 = ssub.s32 %s9, 2
    %s16 = sadd.s32 %s9, 1
    %s17 = ssub.s32 %s9, %s16
    %p18 = scmp.eq.s32.totalorder %s17, 0
    %s20 = sadd.s32 %s19, 1
    %s21 = scalar_select %p18, %s19, %s20
    %p24 = pneg %p18
    %p25 = scmp.eq.s32.totalorder %s9, 1
    %p26 = por %p24, %p25
    %p27 = scmp.ne.s32.totalorder %s19, %s22
    %p28 = scmp.eq.s32.totalorder %s9, 0
    %p29 = por %p27, %p28
    %p30 = scmp.ne.s32.totalorder %s19, %s22
    %p31 = scmp.eq.s32.totalorder %s14, 1
    %p32 = por %p30, %p31
    %p33 = scmp.ne.s32.totalorder %s22, %s23
    %p34 = scmp.eq.s32.totalorder %s14, 0
    %p35 = por %p33, %p34
    %p36 = scmp.ne.s32.totalorder %s22, %s23
    %p37 = scmp.eq.s32.totalorder %s15, 1
    %p38 = por %p36, %p37
    %p40 = scmp.ne.s32.totalorder %s23, %s39
    %p41 = scmp.eq.s32.totalorder %s15, 0
    %p42 = por %p40, %p41
    %s44 = sadd.s32 %s43, 1
    %p47 = scmp.eq.s32.totalorder %s9, 1
    %p48 = scmp.ne.s32.totalorder %s43, %s45
    %p49 = scmp.eq.s32.totalorder %s9, 0
    %p50 = por %p48, %p49
    %p51 = scmp.ne.s32.totalorder %s43, %s45
    %p52 = scmp.eq.s32.totalorder %s14, 1
    %p53 = por %p51, %p52
    %p54 = scmp.ne.s32.totalorder %s45, %s46
    %p55 = scmp.eq.s32.totalorder %s14, 0
    %p56 = por %p54, %p55
    %p57 = scmp.ne.s32.totalorder %s45, %s46
    %p58 = scmp.eq.s32.totalorder %s15, 1
    %p59 = por %p57, %p58
    %p61 = scmp.ne.s32.totalorder %s46, %s60
    %p62 = scmp.eq.s32.totalorder %s15, 0
    %p63 = por %p61, %p62
    %s65 = sadd.s32 %s64, 1
    %p68 = scmp.eq.s32.totalorder %s9, 1
    %p69 = scmp.ne.s32.totalorder %s64, %s66
    %p70 = scmp.eq.s32.totalorder %s9, 0
    %p71 = por %p69, %p70
    %p72 = scmp.ne.s32.totalorder %s64, %s66
    %p73 = scmp.eq.s32.totalorder %s14, 1
    %p74 = por %p72, %p73
    %p75 = scmp.ne.s32.totalorder %s66, %s67
    %p76 = scmp.eq.s32.totalorder %s14, 0
    %p77 = por %p75, %p76
    %p78 = scmp.ne.s32.totalorder %s66, %s67
    %p79 = scmp.eq.s32.totalorder %s15, 1
    %p80 = por %p78, %p79
    %p82 = scmp.ne.s32.totalorder %s67, %s81
    %p83 = scmp.eq.s32.totalorder %s15, 0
    %p84 = por %p82, %p83
    %s85 = ssub.s32 %s9, %s16
    %p86 = scmp.eq.s32.totalorder %s85, 0
    %s88 = sadd.s32 %s87, 1
    %s89 = scalar_select %p86, %s87, %s88
    %p92 = pneg %p86
    %p93 = scmp.eq.s32.totalorder %s9, 1
    %p94 = por %p92, %p93
    %p95 = scmp.ne.s32.totalorder %s87, %s90
    %p96 = scmp.eq.s32.totalorder %s9, 0
    %p97 = por %p95, %p96
    %p98 = scmp.ne.s32.totalorder %s87, %s90
    %p99 = scmp.eq.s32.totalorder %s14, 1
    %p100 = por %p98, %p99
    %p101 = scmp.ne.s32.totalorder %s90, %s91
    %p102 = scmp.eq.s32.totalorder %s14, 0
    %p103 = por %p101, %p102
    %p104 = scmp.ne.s32.totalorder %s90, %s91
    %p105 = scmp.eq.s32.totalorder %s15, 1
    %p106 = por %p104, %p105
    %p108 = scmp.ne.s32.totalorder %s91, %s107
    %p109 = scmp.eq.s32.totalorder %s15, 0
    %p110 = por %p108, %p109
    %p111 = scmp.le.s32.totalorder 1, %s9
    %p112 = scmp.lt.s32.totalorder %s9, 3
    %p113 = pnand %p111, %p112
    %p114 = pneg %p113
    // Predicated region
    $region9: #{recurrent_down_forward.7} parent=5 // pred_check
      _
    $region10: #{recurrent_down_forward.7} parent=5 // pred_check_branch
      %116 = sbr.rel (%p113) target = $region12
    $region11: #{recurrent_down_forward.7} parent=5 // pred_region
      %s117 = ssub.s32 %s9, 1
      // Predicated region
      $region13: #{recurrent_down_forward.7} parent=11 // pred_check
        %p118 = pneg %p56
      $region14: #{recurrent_down_forward.7} parent=11 // pred_check_branch
        %120 = sbr.rel (%p118) target = $region16
      $region15: #{recurrent_down_forward.7} parent=11 // pred_region
        _
      $region16: #{recurrent_down_forward.7} parent=11 // pred_fallthru
        _
      // Predicated region
      $region17: #{recurrent_down_forward.7} parent=11 // pred_check
        %p121 = pneg %p77
      $region18: #{recurrent_down_forward.7} parent=11 // pred_check_branch
        %123 = sbr.rel (%p121) target = $region20
      $region19: #{recurrent_down_forward.7} parent=11 // pred_region
        _
      $region20: #{recurrent_down_forward.7} parent=11 // pred_fallthru
        _
    $region12: #{recurrent_down_forward.7} parent=5 // pred_fallthru
      _
    %p124 = scmp.lt.s32.totalorder %s9, 2
    // Predicated region
    $region21: #{recurrent_down_forward.7} parent=5 // pred_check
      %p125 = pneg %p124
    $region22: #{recurrent_down_forward.7} parent=5 // pred_check_branch
      %127 = sbr.rel (%p125) target = $region24
    $region23: #{recurrent_down_forward.7} parent=5 // pred_region
      // Predicated region
      $region25: #{recurrent_down_forward.7} parent=23 // pred_check
        %p128 = pneg %p29
      $region26: #{recurrent_down_forward.7} parent=23 // pred_check_branch
        %130 = sbr.rel (%p128) target = $region28
      $region27: #{recurrent_down_forward.7} parent=23 // pred_region
        %p131 = scmp.lt.s32.totalorder %s9, 1
        %s132 = scalar_select %p131, %s9, 1
        %s133 = smul.addr %s132, 20
        %s134 = smul.addr %s133, 4
        %s135 = scalar_lea.vmem %s0, %s134
      $region28: #{recurrent_down_forward.7} parent=23 // pred_fallthru
        _
    $region24: #{recurrent_down_forward.7} parent=5 // pred_fallthru
      _
    %p136 = scmp.le.s32.totalorder 1, %s9
    %p137 = scmp.lt.s32.totalorder %s9, 3
    %p138 = pnand %p136, %p137
    %p139 = pneg %p138
    // Predicated region
    $region29: #{recurrent_down_forward.7} parent=5 // pred_check
      _
    $region30: #{recurrent_down_forward.7} parent=5 // pred_check_branch
      %141 = sbr.rel (%p138) target = $region32
    $region31: #{recurrent_down_forward.7} parent=5 // pred_region
      %s142 = ssub.s32 %s9, 1
      %p143 = scmp.lt.s32.totalorder %s14, 1
      %s144 = scalar_select %p143, %s14, 1
      %s145 = smul.addr %s144, 20
      %s146 = smul.addr %s145, 4
      %s147 = scalar_lea.vmem %s0, %s146
      %p148 = pneg %p35
      %p149 = pneg %p32
      %p150 = pneg %p56
      %p151 = pneg %p53
      %p152 = pneg %p77
      %p153 = pneg %p74
      %p154 = pneg %p103
      %p155 = pneg %p100
      %p156 = scmp.lt.s32.totalorder %s14, 1
      %s157 = scalar_select %p156, %s14, 1
      %s158 = smul.addr %s157, 8
      %s159 = smul.addr %s158, 4
      %s160 = scalar_lea.vmem %s3, %s159
      %p161 = scmp.lt.s32.totalorder %s14, 1
      %s162 = scalar_select %p161, %s14, 1
      %s163 = smul.addr %s162, 20
      %s164 = smul.addr %s163, 4
      %s165 = scalar_lea.vmem %s0, %s164
      %p166 = scmp.lt.s32.totalorder %s14, 1
      %s167 = scalar_select %p166, %s14, 1
      %s168 = smul.addr %s167, 8
      %s169 = smul.addr %s168, 4
      %s170 = scalar_lea.vmem %s3, %s169
      %v172 = vld [vmem:[%s165] sm:$0xf]
      %v173 = vld [vmem:[%s165 + $0x8] sm:$0xf]
      %v174 = vld [vmem:[%s165 + $0x10] sm:$0xf]
      %v175 = vld [vmem:[%s165 + $0x18] sm:$0xf]
      %v176 = vld [vmem:[%s165 + $0x20] sm:$0xf]
      %v177 = vld [vmem:[%s165 + $0x28] sm:$0xf]
      %v178 = vld [vmem:[%s165 + $0x30] sm:$0xf]
      %v179 = vld [vmem:[%s165 + $0x38] sm:$0xf]
      %v180 = vld [vmem:[%s1] sm:$0xf]
      %v181 = vld [vmem:[%s1 + $0x4] sm:$0xf]
      %v182 = vld [vmem:[%s1 + $0x8] sm:$0xf]
      %v183 = vld [vmem:[%s1 + $0xc] sm:$0xf]
      %v184 = vld [vmem:[%s1 + $0x10] sm:$0xf]
      %v185 = vld [vmem:[%s1 + $0x14] sm:$0xf]
      %v186 = vld [vmem:[%s1 + $0x18] sm:$0xf]
      %v187 = vld [vmem:[%s1 + $0x1c] sm:$0xf]
      %v188 = vld [vmem:[%s165 + $0x4] sm:$0x1]
      %v189 = vld [vmem:[%s165 + $0xc] sm:$0x1]
      %v190 = vld [vmem:[%s165 + $0x14] sm:$0x1]
      %v191 = vld [vmem:[%s165 + $0x1c] sm:$0x1]
      %v192 = vld [vmem:[%s165 + $0x24] sm:$0x1]
      %v193 = vld [vmem:[%s165 + $0x2c] sm:$0x1]
      %v194 = vld [vmem:[%s165 + $0x34] sm:$0x1]
      %v195 = vld [vmem:[%s165 + $0x3c] sm:$0x1]
      %vm196 = vsmask.f32 3328
      %vm197 = vsmask.f32 7440
      %vm198 = vmor %vm196, %vm197
      %v200 = vshrl.u32 %v172, 16
      %v202 = vrot.slane %v200, 4
      %v203 = vshll.u32 %v172, 16
      %v205 = vrot.slane %v203, 5
      %v206 = vor.u32 %v202, %v205
      %v207 = vrot.slane %v206, 4
      %v209 = vshll.u32 %v188, 16
      %v211 = vrot.slane %v209, 5
      %v212 = vsel %vm198, %v207, %v211
      %v214 = vshrl.u32 %v173, 16
      %v216 = vrot.slane %v214, 4
      %v217 = vshll.u32 %v173, 16
      %v219 = vrot.slane %v217, 5
      %v220 = vor.u32 %v216, %v219
      %v221 = vrot.slane %v220, 4
      %v223 = vshll.u32 %v189, 16
      %v225 = vrot.slane %v223, 5
      %v226 = vsel %vm198, %v221, %v225
      %v228 = vshrl.u32 %v174, 16
      %v230 = vrot.slane %v228, 4
      %v231 = vshll.u32 %v174, 16
      %v233 = vrot.slane %v231, 5
      %v234 = vor.u32 %v230, %v233
      %v235 = vrot.slane %v234, 4
      %v237 = vshll.u32 %v190, 16
      %v239 = vrot.slane %v237, 5
      %v240 = vsel %vm198, %v235, %v239
      %v242 = vshrl.u32 %v175, 16
      %v244 = vrot.slane %v242, 4
      %v245 = vshll.u32 %v175, 16
      %v247 = vrot.slane %v245, 5
      %v248 = vor.u32 %v244, %v247
      %v249 = vrot.slane %v248, 4
      %v251 = vshll.u32 %v191, 16
      %v253 = vrot.slane %v251, 5
      %v254 = vsel %vm198, %v249, %v253
      %v256 = vshrl.u32 %v176, 16
      %v258 = vrot.slane %v256, 4
      %v259 = vshll.u32 %v176, 16
      %v261 = vrot.slane %v259, 5
      %v262 = vor.u32 %v258, %v261
      %v263 = vrot.slane %v262, 4
      %v265 = vshll.u32 %v192, 16
      %v267 = vrot.slane %v265, 5
      %v268 = vsel %vm198, %v263, %v267
      %v270 = vshrl.u32 %v177, 16
      %v272 = vrot.slane %v270, 4
      %v273 = vshll.u32 %v177, 16
      %v275 = vrot.slane %v273, 5
      %v276 = vor.u32 %v272, %v275
      %v277 = vrot.slane %v276, 4
      %v279 = vshll.u32 %v193, 16
      %v281 = vrot.slane %v279, 5
      %v282 = vsel %vm198, %v277, %v281
      %v284 = vshrl.u32 %v178, 16
      %v286 = vrot.slane %v284, 4
      %v287 = vshll.u32 %v178, 16
      %v289 = vrot.slane %v287, 5
      %v290 = vor.u32 %v286, %v289
      %v291 = vrot.slane %v290, 4
      %v293 = vshll.u32 %v194, 16
      %v295 = vrot.slane %v293, 5
      %v296 = vsel %vm198, %v291, %v295
      %v298 = vshrl.u32 %v179, 16
      %v300 = vrot.slane %v298, 4
      %v301 = vshll.u32 %v179, 16
      %v303 = vrot.slane %v301, 5
      %v304 = vor.u32 %v300, %v303
      %v305 = vrot.slane %v304, 4
      %v307 = vshll.u32 %v195, 16
      %v309 = vrot.slane %v307, 5
      %v310 = vsel %vm198, %v305, %v309
      %v311 = vld [vmem:[%s1 + $0x20] sm:$0xf]
      %v312 = vld [vmem:[%s1 + $0x24] sm:$0xf]
      %v313 = vld [vmem:[%s1 + $0x28] sm:$0xf]
      %v314 = vld [vmem:[%s1 + $0x2c] sm:$0xf]
      %v315 = vld [vmem:[%s1 + $0x30] sm:$0xf]
      %v316 = vld [vmem:[%s1 + $0x34] sm:$0xf]
      %v317 = vld [vmem:[%s1 + $0x38] sm:$0xf]
      %v318 = vld [vmem:[%s1 + $0x3c] sm:$0xf]
      %v319 = vunpack.c.l.b16 %v212
      %v320 = vunpack.c.l.b16 %v226
      %v321 = vunpack.c.l.b16 %v240
      %v322 = vunpack.c.l.b16 %v254
      %v323 = vunpack.c.l.b16 %v268
      %v324 = vunpack.c.l.b16 %v282
      %v325 = vunpack.c.l.b16 %v296
      %v326 = vunpack.c.l.b16 %v310
      %v327 = vpack.c.b16 %v320, %v319
      %v328 = vpack.c.b16 %v322, %v321
      %v329 = vpack.c.b16 %v324, %v323
      %v330 = vpack.c.b16 %v326, %v325
      %v339 = vunpack.c.l.b16 %v311
      %v340 = vunpack.c.l.b16 %v312
      %v341 = vunpack.c.l.b16 %v313
      %v342 = vunpack.c.l.b16 %v314
      %v343 = vunpack.c.l.b16 %v315
      %v344 = vunpack.c.l.b16 %v316
      %v345 = vunpack.c.l.b16 %v317
      %v346 = vunpack.c.l.b16 %v318
      %v347 = vpack.c.b16 %v340, %v339
      %v348 = vpack.c.b16 %v342, %v341
      %v349 = vpack.c.b16 %v344, %v343
      %v350 = vpack.c.b16 %v346, %v345
      %vm355 = vcmask 523264
      %v357 = vsel %vm355, %v327, 0
      %v360 = vsel %vm355, %v328, 0
      %v363 = vsel %vm355, %v329, 0
      %v366 = vsel %vm355, %v330, 0
      %368 = vmatprep.subr.bf16.mxu0 0
      %369 = vmatpush1.bf16.msra.mxu0 %v347
      %370 = vmatprep.subr.bf16.mxu0 0
      %371 = vmatpush1.bf16.msra.mxu0 %v348
      %372 = vmatprep.subr.bf16.mxu0 0
      %373 = vmatpush1.bf16.msra.mxu0 %v349
      %374 = vmatprep.subr.bf16.mxu0 0
      %375 = vmatpush1.bf16.msra.mxu0 %v350
      %376 = vmatprep.subr.bf16.mxu0 0
      %377 = vmatpush1.bf16.msra.mxu0 0
      %378 = vmatprep.subr.bf16.mxu0 0
      %379 = vmatpush1.bf16.msra.mxu0 0
      %380 = vmatprep.subr.bf16.mxu0 0
      %381 = vmatpush1.bf16.msra.mxu0 0
      %382 = vmatprep.subr.bf16.mxu0 0
      %383 = vmatpush1.bf16.msra.mxu0 0
      %384 = vmatprep.subr.bf16.mxu0 0
      %385 = vmatpush1.bf16.msra.mxu0 0
      %386 = vmatprep.subr.bf16.mxu0 0
      %387 = vmatpush1.bf16.msra.mxu0 0
      %388 = vmatprep.subr.bf16.mxu0 0
      %389 = vmatpush1.bf16.msra.mxu0 0
      %390 = vmatprep.subr.bf16.mxu0 0
      %391 = vmatpush1.bf16.msra.mxu0 0
      %392 = vmatprep.subr.bf16.mxu0 0
      %393 = vmatpush1.bf16.msra.mxu0 0
      %394 = vmatprep.subr.bf16.mxu0 0
      %395 = vmatpush1.bf16.msra.mxu0 0
      %396 = vmatprep.subr.bf16.mxu0 0
      %397 = vmatpush1.bf16.msra.mxu0 0
      %398 = vmatprep.subr.bf16.mxu0 0
      %399 = vmatpush1.bf16.msra.mxu0 0
      %400 = vmatprep.mubr.bf16.mxu0 0
      %401 = vmatmul.mubr.bf16.gmra.mrb[0].mxu0 %v357
      %v402 = vpop.f32.mrb[0].mxu0
      %v403 = vadd.f32 0.0, %v402
      %v404 = vpop.f32.mrb[0].mxu0
      %v405 = vpop.f32.mrb[0].mxu0
      %v406 = vadd.f32 0.0, %v405
      %v407 = vpop.f32.mrb[0].mxu0
      %408 = vmatprep.mubr.bf16.mxu0 0
      %409 = vmatmul.mubr.bf16.gmra.mrb[0].mxu0 %v360
      %v410 = vpop.f32.mrb[0].mxu0
      %v411 = vadd.f32 0.0, %v410
      %v412 = vpop.f32.mrb[0].mxu0
      %v413 = vpop.f32.mrb[0].mxu0
      %v414 = vadd.f32 0.0, %v413
      %v415 = vpop.f32.mrb[0].mxu0
      %416 = vmatprep.mubr.bf16.mxu0 0
      %417 = vmatmul.mubr.bf16.gmra.mrb[0].mxu0 %v363
      %v418 = vpop.f32.mrb[0].mxu0
      %v419 = vadd.f32 0.0, %v418
      %v420 = vpop.f32.mrb[0].mxu0
      %v421 = vpop.f32.mrb[0].mxu0
      %v422 = vadd.f32 0.0, %v421
      %v423 = vpop.f32.mrb[0].mxu0
      %424 = vmatprep.mubr.bf16.mxu0 0
      %425 = vmatmul.mubr.bf16.gmra.mrb[0].mxu0 %v366
      %v426 = vpop.f32.mrb[0].mxu0
      %v427 = vadd.f32 0.0, %v426
      %v428 = vpop.f32.mrb[0].mxu0
      %v429 = vpop.f32.mrb[0].mxu0
      %v430 = vadd.f32 0.0, %v429
      %v431 = vpop.f32.mrb[0].mxu0
      %432 = vdwg.mxu0
      %v441 = vunpack.c.l.b16 %v172
      %v442 = vunpack.c.l.b16 %v173
      %v443 = vunpack.c.l.b16 %v174
      %v444 = vunpack.c.l.b16 %v175
      %v445 = vunpack.c.l.b16 %v176
      %v446 = vunpack.c.l.b16 %v177
      %v447 = vunpack.c.l.b16 %v178
      %v448 = vunpack.c.l.b16 %v179
      %v449 = vpack.c.b16 %v442, %v441
      %v450 = vpack.c.b16 %v444, %v443
      %v451 = vpack.c.b16 %v446, %v445
      %v452 = vpack.c.b16 %v448, %v447
      %v461 = vunpack.c.l.b16 %v180
      %v462 = vunpack.c.l.b16 %v181
      %v463 = vunpack.c.l.b16 %v182
      %v464 = vunpack.c.l.b16 %v183
      %v465 = vunpack.c.l.b16 %v184
      %v466 = vunpack.c.l.b16 %v185
      %v467 = vunpack.c.l.b16 %v186
      %v468 = vunpack.c.l.b16 %v187
      %v469 = vpack.c.b16 %v462, %v461
      %v470 = vpack.c.b16 %v464, %v463
      %v471 = vpack.c.b16 %v466, %v465
      %v472 = vpack.c.b16 %v468, %v467
      %v478 = vsel %vm355, %v449, 0
      %v481 = vsel %vm355, %v450, 0
      %v484 = vsel %vm355, %v451, 0
      %v487 = vsel %vm355, %v452, 0
      %489 = vmatprep.subr.bf16.mxu0 0
      %490 = vmatpush1.bf16.msra.mxu0 %v469
      %491 = vmatprep.subr.bf16.mxu0 0
      %492 = vmatpush1.bf16.msra.mxu0 %v470
      %493 = vmatprep.subr.bf16.mxu0 0
      %494 = vmatpush1.bf16.msra.mxu0 %v471
      %495 = vmatprep.subr.bf16.mxu0 0
      %496 = vmatpush1.bf16.msra.mxu0 %v472
      %497 = vmatprep.subr.bf16.mxu0 0
      %498 = vmatpush1.bf16.msra.mxu0 0
      %499 = vmatprep.subr.bf16.mxu0 0
      %500 = vmatpush1.bf16.msra.mxu0 0
      %501 = vmatprep.subr.bf16.mxu0 0
      %502 = vmatpush1.bf16.msra.mxu0 0
      %503 = vmatprep.subr.bf16.mxu0 0
      %504 = vmatpush1.bf16.msra.mxu0 0
      %505 = vmatprep.subr.bf16.mxu0 0
      %506 = vmatpush1.bf16.msra.mxu0 0
      %507 = vmatprep.subr.bf16.mxu0 0
      %508 = vmatpush1.bf16.msra.mxu0 0
      %509 = vmatprep.subr.bf16.mxu0 0
      %510 = vmatpush1.bf16.msra.mxu0 0
      %511 = vmatprep.subr.bf16.mxu0 0
      %512 = vmatpush1.bf16.msra.mxu0 0
      %513 = vmatprep.subr.bf16.mxu0 0
      %514 = vmatpush1.bf16.msra.mxu0 0
      %515 = vmatprep.subr.bf16.mxu0 0
      %516 = vmatpush1.bf16.msra.mxu0 0
      %517 = vmatprep.subr.bf16.mxu0 0
      %518 = vmatpush1.bf16.msra.mxu0 0
      %519 = vmatprep.subr.bf16.mxu0 0
      %520 = vmatpush1.bf16.msra.mxu0 0
      %521 = vmatprep.mubr.bf16.mxu0 0
      %522 = vmatmul.mubr.bf16.gmra.mrb[0].mxu0 %v478
      %v523 = vpop.f32.mrb[0].mxu0
      %v524 = vadd.f32 %v403, %v523
      %v525 = vpop.f32.mrb[0].mxu0
      %v526 = vpop.f32.mrb[0].mxu0
      %v527 = vadd.f32 %v406, %v526
      %v528 = vpop.f32.mrb[0].mxu0
      %529 = vmatprep.mubr.bf16.mxu0 0
      %530 = vmatmul.mubr.bf16.gmra.mrb[0].mxu0 %v481
      %v531 = vpop.f32.mrb[0].mxu0
      %v532 = vadd.f32 %v411, %v531
      %v533 = vpop.f32.mrb[0].mxu0
      %v534 = vpop.f32.mrb[0].mxu0
      %v535 = vadd.f32 %v414, %v534
      %v536 = vpop.f32.mrb[0].mxu0
      %537 = vmatprep.mubr.bf16.mxu0 0
      %538 = vmatmul.mubr.bf16.gmra.mrb[0].mxu0 %v484
      %v539 = vpop.f32.mrb[0].mxu0
      %v540 = vadd.f32 %v419, %v539
      %v541 = vpop.f32.mrb[0].mxu0
      %v542 = vpop.f32.mrb[0].mxu0
      %v543 = vadd.f32 %v422, %v542
      %v544 = vpop.f32.mrb[0].mxu0
      %545 = vmatprep.mubr.bf16.mxu0 0
      %546 = vmatmul.mubr.bf16.gmra.mrb[0].mxu0 %v487
      %v547 = vpop.f32.mrb[0].mxu0
      %v548 = vadd.f32 %v427, %v547
      %v549 = vpop.f32.mrb[0].mxu0
      %v550 = vpop.f32.mrb[0].mxu0
      %v551 = vadd.f32 %v430, %v550
      %v552 = vpop.f32.mrb[0].mxu0
      %553 = vdwg.mxu0
      %v554 = vld [vmem:[%s165] sm:$0xe]
      %v555 = vld [vmem:[%s165 + $0x8] sm:$0xe]
      %v556 = vld [vmem:[%s165 + $0x10] sm:$0xe]
      %v557 = vld [vmem:[%s165 + $0x18] sm:$0xe]
      %v558 = vld [vmem:[%s165 + $0x20] sm:$0xe]
      %v559 = vld [vmem:[%s165 + $0x28] sm:$0xe]
      %v560 = vld [vmem:[%s165 + $0x30] sm:$0xe]
      %v561 = vld [vmem:[%s165 + $0x38] sm:$0xe]
      %vm578 = vcmask 1042432
      %vm579 = vcmask 1046532
      %vm580 = vmor %vm578, %vm579
      %v581 = vrot.slane %v554, 5
      %v582 = vrot.slane %v581, 4
      %v583 = vrot.slane %v188, 5
      %v584 = vsel %vm580, %v582, %v583
      %v585 = vrot.slane %v555, 5
      %v586 = vrot.slane %v585, 4
      %v587 = vrot.slane %v189, 5
      %v588 = vsel %vm580, %v586, %v587
      %v589 = vrot.slane %v556, 5
      %v590 = vrot.slane %v589, 4
      %v591 = vrot.slane %v190, 5
      %v592 = vsel %vm580, %v590, %v591
      %v593 = vrot.slane %v557, 5
      %v594 = vrot.slane %v593, 4
      %v595 = vrot.slane %v191, 5
      %v596 = vsel %vm580, %v594, %v595
      %v597 = vrot.slane %v558, 5
      %v598 = vrot.slane %v597, 4
      %v599 = vrot.slane %v192, 5
      %v600 = vsel %vm580, %v598, %v599
      %v601 = vrot.slane %v559, 5
      %v602 = vrot.slane %v601, 4
      %v603 = vrot.slane %v193, 5
      %v604 = vsel %vm580, %v602, %v603
      %v605 = vrot.slane %v560, 5
      %v606 = vrot.slane %v605, 4
      %v607 = vrot.slane %v194, 5
      %v608 = vsel %vm580, %v606, %v607
      %v609 = vrot.slane %v561, 5
      %v610 = vrot.slane %v609, 4
      %v611 = vrot.slane %v195, 5
      %v612 = vsel %vm580, %v610, %v611
      %v613 = vld [vmem:[%s1 + $0x40] sm:$0xf]
      %v614 = vld [vmem:[%s1 + $0x44] sm:$0xf]
      %v615 = vld [vmem:[%s1 + $0x48] sm:$0xf]
      %v616 = vld [vmem:[%s1 + $0x4c] sm:$0xf]
      %v617 = vld [vmem:[%s1 + $0x50] sm:$0xf]
      %v618 = vld [vmem:[%s1 + $0x54] sm:$0xf]
      %v619 = vld [vmem:[%s1 + $0x58] sm:$0xf]
      %v620 = vld [vmem:[%s1 + $0x5c] sm:$0xf]
      %v621 = vunpack.c.l.b16 %v584
      %v622 = vunpack.c.l.b16 %v588
      %v623 = vunpack.c.l.b16 %v592
      %v624 = vunpack.c.l.b16 %v596
      %v625 = vunpack.c.l.b16 %v600
      %v626 = vunpack.c.l.b16 %v604
      %v627 = vunpack.c.l.b16 %v608
      %v628 = vunpack.c.l.b16 %v612
      %v629 = vpack.c.b16 %v622, %v621
      %v630 = vpack.c.b16 %v624, %v623
      %v631 = vpack.c.b16 %v626, %v625
      %v632 = vpack.c.b16 %v628, %v627
      %v641 = vunpack.c.l.b16 %v613
      %v642 = vunpack.c.l.b16 %v614
      %v643 = vunpack.c.l.b16 %v615
      %v644 = vunpack.c.l.b16 %v616
      %v645 = vunpack.c.l.b16 %v617
      %v646 = vunpack.c.l.b16 %v618
      %v647 = vunpack.c.l.b16 %v619
      %v648 = vunpack.c.l.b16 %v620
      %v649 = vpack.c.b16 %v642, %v641
      %v650 = vpack.c.b16 %v644, %v643
      %v651 = vpack.c.b16 %v646, %v645
      %v652 = vpack.c.b16 %v648, %v647
      %v658 = vsel %vm355, %v629, 0
      %v661 = vsel %vm355, %v630, 0
      %v664 = vsel %vm355, %v631, 0
      %v667 = vsel %vm355, %v632, 0
      %669 = vmatprep.subr.bf16.mxu0 0
      %670 = vmatpush1.bf16.msra.mxu0 %v649
      %671 = vmatprep.subr.bf16.mxu0 0
      %672 = vmatpush1.bf16.msra.mxu0 %v650
      %673 = vmatprep.subr.bf16.mxu0 0
      %674 = vmatpush1.bf16.msra.mxu0 %v651
      %675 = vmatprep.subr.bf16.mxu0 0
      %676 = vmatpush1.bf16.msra.mxu0 %v652
      %677 = vmatprep.subr.bf16.mxu0 0
      %678 = vmatpush1.bf16.msra.mxu0 0
      %679 = vmatprep.subr.bf16.mxu0 0
      %680 = vmatpush1.bf16.msra.mxu0 0
      %681 = vmatprep.subr.bf16.mxu0 0
      %682 = vmatpush1.bf16.msra.mxu0 0
      %683 = vmatprep.subr.bf16.mxu0 0
      %684 = vmatpush1.bf16.msra.mxu0 0
      %685 = vmatprep.subr.bf16.mxu0 0
      %686 = vmatpush1.bf16.msra.mxu0 0
      %687 = vmatprep.subr.bf16.mxu0 0
      %688 = vmatpush1.bf16.msra.mxu0 0
      %689 = vmatprep.subr.bf16.mxu0 0
      %690 = vmatpush1.bf16.msra.mxu0 0
      %691 = vmatprep.subr.bf16.mxu0 0
      %692 = vmatpush1.bf16.msra.mxu0 0
      %693 = vmatprep.subr.bf16.mxu0 0
      %694 = vmatpush1.bf16.msra.mxu0 0
      %695 = vmatprep.subr.bf16.mxu0 0
      %696 = vmatpush1.bf16.msra.mxu0 0
      %697 = vmatprep.subr.bf16.mxu0 0
      %698 = vmatpush1.bf16.msra.mxu0 0
      %699 = vmatprep.subr.bf16.mxu0 0
      %700 = vmatpush1.bf16.msra.mxu0 0
      %701 = vmatprep.mubr.bf16.mxu0 0
      %702 = vmatmul.mubr.bf16.gmra.mrb[0].mxu0 %v658
      %v703 = vpop.f32.mrb[0].mxu0
      %v704 = vadd.f32 0.0, %v703
      %v705 = vpop.f32.mrb[0].mxu0
      %v706 = vpop.f32.mrb[0].mxu0
      %v707 = vadd.f32 0.0, %v706
      %v708 = vpop.f32.mrb[0].mxu0
      %709 = vmatprep.mubr.bf16.mxu0 0
      %710 = vmatmul.mubr.bf16.gmra.mrb[0].mxu0 %v661
      %v711 = vpop.f32.mrb[0].mxu0
      %v712 = vadd.f32 0.0, %v711
      %v713 = vpop.f32.mrb[0].mxu0
      %v714 = vpop.f32.mrb[0].mxu0
      %v715 = vadd.f32 0.0, %v714
      %v716 = vpop.f32.mrb[0].mxu0
      %717 = vmatprep.mubr.bf16.mxu0 0
      %718 = vmatmul.mubr.bf16.gmra.mrb[0].mxu0 %v664
      %v719 = vpop.f32.mrb[0].mxu0
      %v720 = vadd.f32 0.0, %v719
      %v721 = vpop.f32.mrb[0].mxu0
      %v722 = vpop.f32.mrb[0].mxu0
      %v723 = vadd.f32 0.0, %v722
      %v724 = vpop.f32.mrb[0].mxu0
      %725 = vmatprep.mubr.bf16.mxu0 0
      %726 = vmatmul.mubr.bf16.gmra.mrb[0].mxu0 %v667
      %v727 = vpop.f32.mrb[0].mxu0
      %v728 = vadd.f32 0.0, %v727
      %v729 = vpop.f32.mrb[0].mxu0
      %v730 = vpop.f32.mrb[0].mxu0
      %v731 = vadd.f32 0.0, %v730
      %v732 = vpop.f32.mrb[0].mxu0
      %733 = vdwg.mxu0
      %v734 = vadd.f32 %v524, %v704
      %v735 = vadd.f32 %v527, %v707
      %v736 = vadd.f32 %v532, %v712
      %v737 = vadd.f32 %v535, %v715
      %v738 = vadd.f32 %v540, %v720
      %v739 = vadd.f32 %v543, %v723
      %v740 = vadd.f32 %v548, %v728
      %v741 = vadd.f32 %v551, %v731
      %s742 = scalar_lea.vmem %s165, 8
      %v743 = vld [vmem:[%s742] sm:$0xf]
      %v744 = vld [vmem:[%s742 + $0x8] sm:$0xf]
      %v745 = vld [vmem:[%s742 + $0x10] sm:$0xf]
      %v746 = vld [vmem:[%s742 + $0x18] sm:$0xf]
      %v747 = vld [vmem:[%s742 + $0x20] sm:$0xf]
      %v748 = vld [vmem:[%s742 + $0x28] sm:$0xf]
      %v749 = vld [vmem:[%s742 + $0x30] sm:$0xf]
      %v750 = vld [vmem:[%s742 + $0x38] sm:$0xf]
      %v751 = vld [vmem:[%s1 + $0x60] sm:$0xf]
      %v752 = vld [vmem:[%s1 + $0x64] sm:$0xf]
      %v753 = vld [vmem:[%s1 + $0x68] sm:$0xf]
      %v754 = vld [vmem:[%s1 + $0x6c] sm:$0xf]
      %v755 = vld [vmem:[%s1 + $0x70] sm:$0xf]
      %v756 = vld [vmem:[%s1 + $0x74] sm:$0xf]
      %v757 = vld [vmem:[%s1 + $0x78] sm:$0xf]
      %v758 = vld [vmem:[%s1 + $0x7c] sm:$0xf]
      %v767 = vunpack.c.l.b16 %v743
      %v768 = vunpack.c.l.b16 %v744
      %v769 = vunpack.c.l.b16 %v745
      %v770 = vunpack.c.l.b16 %v746
      %v771 = vunpack.c.l.b16 %v747
      %v772 = vunpack.c.l.b16 %v748
      %v773 = vunpack.c.l.b16 %v749
      %v774 = vunpack.c.l.b16 %v750
      %v775 = vpack.c.b16 %v768, %v767
      %v776 = vpack.c.b16 %v770, %v769
      %v777 = vpack.c.b16 %v772, %v771
      %v778 = vpack.c.b16 %v774, %v773
      %v787 = vunpack.c.l.b16 %v751
      %v788 = vunpack.c.l.b16 %v752
      %v789 = vunpack.c.l.b16 %v753
      %v790 = vunpack.c.l.b16 %v754
      %v791 = vunpack.c.l.b16 %v755
      %v792 = vunpack.c.l.b16 %v756
      %v793 = vunpack.c.l.b16 %v757
      %v794 = vunpack.c.l.b16 %v758
      %v795 = vpack.c.b16 %v788, %v787
      %v796 = vpack.c.b16 %v790, %v789
      %v797 = vpack.c.b16 %v792, %v791
      %v798 = vpack.c.b16 %v794, %v793
      %v804 = vsel %vm355, %v775, 0
      %v807 = vsel %vm355, %v776, 0
      %v810 = vsel %vm355, %v777, 0
      %v813 = vsel %vm355, %v778, 0
      %815 = vmatprep.subr.bf16.mxu0 0
      %816 = vmatpush1.bf16.msra.mxu0 %v795
      %817 = vmatprep.subr.bf16.mxu0 0
      %818 = vmatpush1.bf16.msra.mxu0 %v796
      %819 = vmatprep.subr.bf16.mxu0 0
      %820 = vmatpush1.bf16.msra.mxu0 %v797
      %821 = vmatprep.subr.bf16.mxu0 0
      %822 = vmatpush1.bf16.msra.mxu0 %v798
      %823 = vmatprep.subr.bf16.mxu0 0
      %824 = vmatpush1.bf16.msra.mxu0 0
      %825 = vmatprep.subr.bf16.mxu0 0
      %826 = vmatpush1.bf16.msra.mxu0 0
      %827 = vmatprep.subr.bf16.mxu0 0
      %828 = vmatpush1.bf16.msra.mxu0 0
      %829 = vmatprep.subr.bf16.mxu0 0
      %830 = vmatpush1.bf16.msra.mxu0 0
      %831 = vmatprep.subr.bf16.mxu0 0
      %832 = vmatpush1.bf16.msra.mxu0 0
      %833 = vmatprep.subr.bf16.mxu0 0
      %834 = vmatpush1.bf16.msra.mxu0 0
      %835 = vmatprep.subr.bf16.mxu0 0
      %836 = vmatpush1.bf16.msra.mxu0 0
      %837 = vmatprep.subr.bf16.mxu0 0
      %838 = vmatpush1.bf16.msra.mxu0 0
      %839 = vmatprep.subr.bf16.mxu0 0
      %840 = vmatpush1.bf16.msra.mxu0 0
      %841 = vmatprep.subr.bf16.mxu0 0
      %842 = vmatpush1.bf16.msra.mxu0 0
      %843 = vmatprep.subr.bf16.mxu0 0
      %844 = vmatpush1.bf16.msra.mxu0 0
      %845 = vmatprep.subr.bf16.mxu0 0
      %846 = vmatpush1.bf16.msra.mxu0 0
      %847 = vmatprep.mubr.bf16.mxu0 0
      %848 = vmatmul.mubr.bf16.gmra.mrb[0].mxu0 %v804
      %v849 = vpop.f32.mrb[0].mxu0
      %v850 = vadd.f32 0.0, %v849
      %v851 = vpop.f32.mrb[0].mxu0
      %v852 = vpop.f32.mrb[0].mxu0
      %v853 = vadd.f32 0.0, %v852
      %v854 = vpop.f32.mrb[0].mxu0
      %855 = vmatprep.mubr.bf16.mxu0 0
      %856 = vmatmul.mubr.bf16.gmra.mrb[0].mxu0 %v807
      %v857 = vpop.f32.mrb[0].mxu0
      %v858 = vadd.f32 0.0, %v857
      %v859 = vpop.f32.mrb[0].mxu0
      %v860 = vpop.f32.mrb[0].mxu0
      %v861 = vadd.f32 0.0, %v860
      %v862 = vpop.f32.mrb[0].mxu0
      %863 = vmatprep.mubr.bf16.mxu0 0
      %864 = vmatmul.mubr.bf16.gmra.mrb[0].mxu0 %v810
      %v865 = vpop.f32.mrb[0].mxu0
      %v866 = vadd.f32 0.0, %v865
      %v867 = vpop.f32.mrb[0].mxu0
      %v868 = vpop.f32.mrb[0].mxu0
      %v869 = vadd.f32 0.0, %v868
      %v870 = vpop.f32.mrb[0].mxu0
      %871 = vmatprep.mubr.bf16.mxu0 0
      %872 = vmatmul.mubr.bf16.gmra.mrb[0].mxu0 %v813
      %v873 = vpop.f32.mrb[0].mxu0
      %v874 = vadd.f32 0.0, %v873
      %v875 = vpop.f32.mrb[0].mxu0
      %v876 = vpop.f32.mrb[0].mxu0
      %v877 = vadd.f32 0.0, %v876
      %v878 = vpop.f32.mrb[0].mxu0
      %879 = vdwg.mxu0
      %v880 = vadd.f32 %v734, %v850
      %v881 = vadd.f32 %v735, %v853
      %v882 = vadd.f32 %v736, %v858
      %v883 = vadd.f32 %v737, %v861
      %v884 = vadd.f32 %v738, %v866
      %v885 = vadd.f32 %v739, %v869
      %v886 = vadd.f32 %v740, %v874
      %v887 = vadd.f32 %v741, %v877
      %v888 = vld [vmem:[%s742] sm:$0xf]
      %v889 = vld [vmem:[%s742 + $0x4] sm:$0x1]
      %v890 = vld [vmem:[%s742 + $0x8] sm:$0xf]
      %v891 = vld [vmem:[%s742 + $0xc] sm:$0x1]
      %v892 = vld [vmem:[%s742 + $0x10] sm:$0xf]
      %v893 = vld [vmem:[%s742 + $0x14] sm:$0x1]
      %v894 = vld [vmem:[%s742 + $0x18] sm:$0xf]
      %v895 = vld [vmem:[%s742 + $0x1c] sm:$0x1]
      %v896 = vld [vmem:[%s742 + $0x20] sm:$0xf]
      %v897 = vld [vmem:[%s742 + $0x24] sm:$0x1]
      %v898 = vld [vmem:[%s742 + $0x28] sm:$0xf]
      %v899 = vld [vmem:[%s742 + $0x2c] sm:$0x1]
      %v900 = vld [vmem:[%s742 + $0x30] sm:$0xf]
      %v901 = vld [vmem:[%s742 + $0x34] sm:$0x1]
      %v902 = vld [vmem:[%s742 + $0x38] sm:$0xf]
      %v903 = vld [vmem:[%s742 + $0x3c] sm:$0x1]
      %v905 = vshrl.u32 %v888, 16
      %v907 = vrot.slane %v905, 4
      %v908 = vshll.u32 %v888, 16
      %v910 = vrot.slane %v908, 5
      %v911 = vor.u32 %v907, %v910
      %v912 = vrot.slane %v911, 4
      %v914 = vshll.u32 %v889, 16
      %v916 = vrot.slane %v914, 5
      %v917 = vsel %vm198, %v912, %v916
      %v919 = vshrl.u32 %v890, 16
      %v921 = vrot.slane %v919, 4
      %v922 = vshll.u32 %v890, 16
      %v924 = vrot.slane %v922, 5
      %v925 = vor.u32 %v921, %v924
      %v926 = vrot.slane %v925, 4
      %v928 = vshll.u32 %v891, 16
      %v930 = vrot.slane %v928, 5
      %v931 = vsel %vm198, %v926, %v930
      %v933 = vshrl.u32 %v892, 16
      %v935 = vrot.slane %v933, 4
      %v936 = vshll.u32 %v892, 16
      %v938 = vrot.slane %v936, 5
      %v939 = vor.u32 %v935, %v938
      %v940 = vrot.slane %v939, 4
      %v942 = vshll.u32 %v893, 16
      %v944 = vrot.slane %v942, 5
      %v945 = vsel %vm198, %v940, %v944
      %v947 = vshrl.u32 %v894, 16
      %v949 = vrot.slane %v947, 4
      %v950 = vshll.u32 %v894, 16
      %v952 = vrot.slane %v950, 5
      %v953 = vor.u32 %v949, %v952
      %v954 = vrot.slane %v953, 4
      %v956 = vshll.u32 %v895, 16
      %v958 = vrot.slane %v956, 5
      %v959 = vsel %vm198, %v954, %v958
      %v961 = vshrl.u32 %v896, 16
      %v963 = vrot.slane %v961, 4
      %v964 = vshll.u32 %v896, 16
      %v966 = vrot.slane %v964, 5
      %v967 = vor.u32 %v963, %v966
      %v968 = vrot.slane %v967, 4
      %v970 = vshll.u32 %v897, 16
      %v972 = vrot.slane %v970, 5
      %v973 = vsel %vm198, %v968, %v972
      %v975 = vshrl.u32 %v898, 16
      %v977 = vrot.slane %v975, 4
      %v978 = vshll.u32 %v898, 16
      %v980 = vrot.slane %v978, 5
      %v981 = vor.u32 %v977, %v980
      %v982 = vrot.slane %v981, 4
      %v984 = vshll.u32 %v899, 16
      %v986 = vrot.slane %v984, 5
      %v987 = vsel %vm198, %v982, %v986
      %v989 = vshrl.u32 %v900, 16
      %v991 = vrot.slane %v989, 4
      %v992 = vshll.u32 %v900, 16
      %v994 = vrot.slane %v992, 5
      %v995 = vor.u32 %v991, %v994
      %v996 = vrot.slane %v995, 4
      %v998 = vshll.u32 %v901, 16
      %v1000 = vrot.slane %v998, 5
      %v1001 = vsel %vm198, %v996, %v1000
      %v1003 = vshrl.u32 %v902, 16
      %v1005 = vrot.slane %v1003, 4
      %v1006 = vshll.u32 %v902, 16
      %v1008 = vrot.slane %v1006, 5
      %v1009 = vor.u32 %v1005, %v1008
      %v1010 = vrot.slane %v1009, 4
      %v1012 = vshll.u32 %v903, 16
      %v1014 = vrot.slane %v1012, 5
      %v1015 = vsel %vm198, %v1010, %v1014
      %v1016 = vld [vmem:[%s1 + $0x80] sm:$0xf]
      %v1017 = vld [vmem:[%s1 + $0x84] sm:$0xf]
      %v1018 = vld [vmem:[%s1 + $0x88] sm:$0xf]
      %v1019 = vld [vmem:[%s1 + $0x8c] sm:$0xf]
      %v1020 = vld [vmem:[%s1 + $0x90] sm:$0xf]
      %v1021 = vld [vmem:[%s1 + $0x94] sm:$0xf]
      %v1022 = vld [vmem:[%s1 + $0x98] sm:$0xf]
      %v1023 = vld [vmem:[%s1 + $0x9c] sm:$0xf]
      %v1024 = vunpack.c.l.b16 %v917
      %v1025 = vunpack.c.l.b16 %v931
      %v1026 = vunpack.c.l.b16 %v945
      %v1027 = vunpack.c.l.b16 %v959
      %v1028 = vunpack.c.l.b16 %v973
      %v1029 = vunpack.c.l.b16 %v987
      %v1030 = vunpack.c.l.b16 %v1001
      %v1031 = vunpack.c.l.b16 %v1015
      %v1032 = vpack.c.b16 %v1025, %v1024
      %v1033 = vpack.c.b16 %v1027, %v1026
      %v1034 = vpack.c.b16 %v1029, %v1028
      %v1035 = vpack.c.b16 %v1031, %v1030
      %v1044 = vunpack.c.l.b16 %v1016
      %v1045 = vunpack.c.l.b16 %v1017
      %v1046 = vunpack.c.l.b16 %v1018
      %v1047 = vunpack.c.l.b16 %v1019
      %v1048 = vunpack.c.l.b16 %v1020
      %v1049 = vunpack.c.l.b16 %v1021
      %v1050 = vunpack.c.l.b16 %v1022
      %v1051 = vunpack.c.l.b16 %v1023
      %v1052 = vpack.c.b16 %v1045, %v1044
      %v1053 = vpack.c.b16 %v1047, %v1046
      %v1054 = vpack.c.b16 %v1049, %v1048
      %v1055 = vpack.c.b16 %v1051, %v1050
      %v1061 = vsel %vm355, %v1032, 0
      %v1064 = vsel %vm355, %v1033, 0
      %v1067 = vsel %vm355, %v1034, 0
      %v1070 = vsel %vm355, %v1035, 0
      %1072 = vmatprep.subr.bf16.mxu0 0
      %1073 = vmatpush1.bf16.msra.mxu0 %v1052
      %1074 = vmatprep.subr.bf16.mxu0 0
      %1075 = vmatpush1.bf16.msra.mxu0 %v1053
      %1076 = vmatprep.subr.bf16.mxu0 0
      %1077 = vmatpush1.bf16.msra.mxu0 %v1054
      %1078 = vmatprep.subr.bf16.mxu0 0
      %1079 = vmatpush1.bf16.msra.mxu0 %v1055
      %1080 = vmatprep.subr.bf16.mxu0 0
      %1081 = vmatpush1.bf16.msra.mxu0 0
      %1082 = vmatprep.subr.bf16.mxu0 0
      %1083 = vmatpush1.bf16.msra.mxu0 0
      %1084 = vmatprep.subr.bf16.mxu0 0
      %1085 = vmatpush1.bf16.msra.mxu0 0
      %1086 = vmatprep.subr.bf16.mxu0 0
      %1087 = vmatpush1.bf16.msra.mxu0 0
      %1088 = vmatprep.subr.bf16.mxu0 0
      %1089 = vmatpush1.bf16.msra.mxu0 0
      %1090 = vmatprep.subr.bf16.mxu0 0
      %1091 = vmatpush1.bf16.msra.mxu0 0
      %1092 = vmatprep.subr.bf16.mxu0 0
      %1093 = vmatpush1.bf16.msra.mxu0 0
      %1094 = vmatprep.subr.bf16.mxu0 0
      %1095 = vmatpush1.bf16.msra.mxu0 0
      %1096 = vmatprep.subr.bf16.mxu0 0
      %1097 = vmatpush1.bf16.msra.mxu0 0
      %1098 = vmatprep.subr.bf16.mxu0 0
      %1099 = vmatpush1.bf16.msra.mxu0 0
      %1100 = vmatprep.subr.bf16.mxu0 0
      %1101 = vmatpush1.bf16.msra.mxu0 0
      %1102 = vmatprep.subr.bf16.mxu0 0
      %1103 = vmatpush1.bf16.msra.mxu0 0
      %1104 = vmatprep.mubr.bf16.mxu0 0
      %1105 = vmatmul.mubr.bf16.gmra.mrb[0].mxu0 %v1061
      %v1106 = vpop.f32.mrb[0].mxu0
      %v1107 = vadd.f32 0.0, %v1106
      %v1108 = vpop.f32.mrb[0].mxu0
      %v1109 = vpop.f32.mrb[0].mxu0
      %v1110 = vadd.f32 0.0, %v1109
      %v1111 = vpop.f32.mrb[0].mxu0
      %1112 = vmatprep.mubr.bf16.mxu0 0
      %1113 = vmatmul.mubr.bf16.gmra.mrb[0].mxu0 %v1064
      %v1114 = vpop.f32.mrb[0].mxu0
      %v1115 = vadd.f32 0.0, %v1114
      %v1116 = vpop.f32.mrb[0].mxu0
      %v1117 = vpop.f32.mrb[0].mxu0
      %v1118 = vadd.f32 0.0, %v1117
      %v1119 = vpop.f32.mrb[0].mxu0
      %1120 = vmatprep.mubr.bf16.mxu0 0
      %1121 = vmatmul.mubr.bf16.gmra.mrb[0].mxu0 %v1067
      %v1122 = vpop.f32.mrb[0].mxu0
      %v1123 = vadd.f32 0.0, %v1122
      %v1124 = vpop.f32.mrb[0].mxu0
      %v1125 = vpop.f32.mrb[0].mxu0
      %v1126 = vadd.f32 0.0, %v1125
      %v1127 = vpop.f32.mrb[0].mxu0
      %1128 = vmatprep.mubr.bf16.mxu0 0
      %1129 = vmatmul.mubr.bf16.gmra.mrb[0].mxu0 %v1070
      %v1130 = vpop.f32.mrb[0].mxu0
      %v1131 = vadd.f32 0.0, %v1130
      %v1132 = vpop.f32.mrb[0].mxu0
      %v1133 = vpop.f32.mrb[0].mxu0
      %v1134 = vadd.f32 0.0, %v1133
      %v1135 = vpop.f32.mrb[0].mxu0
      %1136 = vdwg.mxu0
      %v1137 = vadd.f32 %v880, %v1107
      %v1138 = vadd.f32 %v881, %v1110
      %v1139 = vadd.f32 %v882, %v1115
      %v1140 = vadd.f32 %v883, %v1118
      %v1141 = vadd.f32 %v884, %v1123
      %v1142 = vadd.f32 %v885, %v1126
      %v1143 = vadd.f32 %v886, %v1131
      %v1144 = vadd.f32 %v887, %v1134
      %v1145 = vld [vmem:[%s742] sm:$0xe]
      %v1146 = vld [vmem:[%s742 + $0x8] sm:$0xe]
      %v1147 = vld [vmem:[%s742 + $0x10] sm:$0xe]
      %v1148 = vld [vmem:[%s742 + $0x18] sm:$0xe]
      %v1149 = vld [vmem:[%s742 + $0x20] sm:$0xe]
      %v1150 = vld [vmem:[%s742 + $0x28] sm:$0xe]
      %v1151 = vld [vmem:[%s742 + $0x30] sm:$0xe]
      %v1152 = vld [vmem:[%s742 + $0x38] sm:$0xe]
      %v1169 = vrot.slane %v1145, 5
      %v1170 = vrot.slane %v1169, 4
      %v1171 = vrot.slane %v889, 5
      %v1172 = vsel %vm580, %v1170, %v1171
      %v1173 = vrot.slane %v1146, 5
      %v1174 = vrot.slane %v1173, 4
      %v1175 = vrot.slane %v891, 5
      %v1176 = vsel %vm580, %v1174, %v1175
      %v1177 = vrot.slane %v1147, 5
      %v1178 = vrot.slane %v1177, 4
      %v1179 = vrot.slane %v893, 5
      %v1180 = vsel %vm580, %v1178, %v1179
      %v1181 = vrot.slane %v1148, 5
      %v1182 = vrot.slane %v1181, 4
      %v1183 = vrot.slane %v895, 5
      %v1184 = vsel %vm580, %v1182, %v1183
      %v1185 = vrot.slane %v1149, 5
      %v1186 = vrot.slane %v1185, 4
      %v1187 = vrot.slane %v897, 5
      %v1188 = vsel %vm580, %v1186, %v1187
      %v1189 = vrot.slane %v1150, 5
      %v1190 = vrot.slane %v1189, 4
      %v1191 = vrot.slane %v899, 5
      %v1192 = vsel %vm580, %v1190, %v1191
      %v1193 = vrot.slane %v1151, 5
      %v1194 = vrot.slane %v1193, 4
      %v1195 = vrot.slane %v901, 5
      %v1196 = vsel %vm580, %v1194, %v1195
      %v1197 = vrot.slane %v1152, 5
      %v1198 = vrot.slane %v1197, 4
      %v1199 = vrot.slane %v903, 5
      %v1200 = vsel %vm580, %v1198, %v1199
      %v1201 = vld [vmem:[%s1 + $0xa0] sm:$0xf]
      %v1202 = vld [vmem:[%s1 + $0xa4] sm:$0xf]
      %v1203 = vld [vmem:[%s1 + $0xa8] sm:$0xf]
      %v1204 = vld [vmem:[%s1 + $0xac] sm:$0xf]
      %v1205 = vld [vmem:[%s1 + $0xb0] sm:$0xf]
      %v1206 = vld [vmem:[%s1 + $0xb4] sm:$0xf]
      %v1207 = vld [vmem:[%s1 + $0xb8] sm:$0xf]
      %v1208 = vld [vmem:[%s1 + $0xbc] sm:$0xf]
      %v1209 = vunpack.c.l.b16 %v1172
      %v1210 = vunpack.c.l.b16 %v1176
      %v1211 = vunpack.c.l.b16 %v1180
      %v1212 = vunpack.c.l.b16 %v1184
      %v1213 = vunpack.c.l.b16 %v1188
      %v1214 = vunpack.c.l.b16 %v1192
      %v1215 = vunpack.c.l.b16 %v1196
      %v1216 = vunpack.c.l.b16 %v1200
      %v1217 = vpack.c.b16 %v1210, %v1209
      %v1218 = vpack.c.b16 %v1212, %v1211
      %v1219 = vpack.c.b16 %v1214, %v1213
      %v1220 = vpack.c.b16 %v1216, %v1215
      %v1229 = vunpack.c.l.b16 %v1201
      %v1230 = vunpack.c.l.b16 %v1202
      %v1231 = vunpack.c.l.b16 %v1203
      %v1232 = vunpack.c.l.b16 %v1204
      %v1233 = vunpack.c.l.b16 %v1205
      %v1234 = vunpack.c.l.b16 %v1206
      %v1235 = vunpack.c.l.b16 %v1207
      %v1236 = vunpack.c.l.b16 %v1208
      %v1237 = vpack.c.b16 %v1230, %v1229
      %v1238 = vpack.c.b16 %v1232, %v1231
      %v1239 = vpack.c.b16 %v1234, %v1233
      %v1240 = vpack.c.b16 %v1236, %v1235
      %v1246 = vsel %vm355, %v1217, 0
      %v1249 = vsel %vm355, %v1218, 0
      %v1252 = vsel %vm355, %v1219, 0
      %v1255 = vsel %vm355, %v1220, 0
      %1257 = vmatprep.subr.bf16.mxu0 0
      %1258 = vmatpush1.bf16.msra.mxu0 %v1237
      %1259 = vmatprep.subr.bf16.mxu0 0
      %1260 = vmatpush1.bf16.msra.mxu0 %v1238
      %1261 = vmatprep.subr.bf16.mxu0 0
      %1262 = vmatpush1.bf16.msra.mxu0 %v1239
      %1263 = vmatprep.subr.bf16.mxu0 0
      %1264 = vmatpush1.bf16.msra.mxu0 %v1240
      %1265 = vmatprep.subr.bf16.mxu0 0
      %1266 = vmatpush1.bf16.msra.mxu0 0
      %1267 = vmatprep.subr.bf16.mxu0 0
      %1268 = vmatpush1.bf16.msra.mxu0 0
      %1269 = vmatprep.subr.bf16.mxu0 0
      %1270 = vmatpush1.bf16.msra.mxu0 0
      %1271 = vmatprep.subr.bf16.mxu0 0
      %1272 = vmatpush1.bf16.msra.mxu0 0
      %1273 = vmatprep.subr.bf16.mxu0 0
      %1274 = vmatpush1.bf16.msra.mxu0 0
      %1275 = vmatprep.subr.bf16.mxu0 0
      %1276 = vmatpush1.bf16.msra.mxu0 0
      %1277 = vmatprep.subr.bf16.mxu0 0
      %1278 = vmatpush1.bf16.msra.mxu0 0
      %1279 = vmatprep.subr.bf16.mxu0 0
      %1280 = vmatpush1.bf16.msra.mxu0 0
      %1281 = vmatprep.subr.bf16.mxu0 0
      %1282 = vmatpush1.bf16.msra.mxu0 0
      %1283 = vmatprep.subr.bf16.mxu0 0
      %1284 = vmatpush1.bf16.msra.mxu0 0
      %1285 = vmatprep.subr.bf16.mxu0 0
      %1286 = vmatpush1.bf16.msra.mxu0 0
      %1287 = vmatprep.subr.bf16.mxu0 0
      %1288 = vmatpush1.bf16.msra.mxu0 0
      %1289 = vmatprep.mubr.bf16.mxu0 0
      %1290 = vmatmul.mubr.bf16.gmra.mrb[0].mxu0 %v1246
      %v1291 = vpop.f32.mrb[0].mxu0
      %v1292 = vadd.f32 0.0, %v1291
      %v1293 = vpop.f32.mrb[0].mxu0
      %v1294 = vpop.f32.mrb[0].mxu0
      %v1295 = vadd.f32 0.0, %v1294
      %v1296 = vpop.f32.mrb[0].mxu0
      %1297 = vmatprep.mubr.bf16.mxu0 0
      %1298 = vmatmul.mubr.bf16.gmra.mrb[0].mxu0 %v1249
      %v1299 = vpop.f32.mrb[0].mxu0
      %v1300 = vadd.f32 0.0, %v1299
      %v1301 = vpop.f32.mrb[0].mxu0
      %v1302 = vpop.f32.mrb[0].mxu0
      %v1303 = vadd.f32 0.0, %v1302
      %v1304 = vpop.f32.mrb[0].mxu0
      %1305 = vmatprep.mubr.bf16.mxu0 0
      %1306 = vmatmul.mubr.bf16.gmra.mrb[0].mxu0 %v1252
      %v1307 = vpop.f32.mrb[0].mxu0
      %v1308 = vadd.f32 0.0, %v1307
      %v1309 = vpop.f32.mrb[0].mxu0
      %v1310 = vpop.f32.mrb[0].mxu0
      %v1311 = vadd.f32 0.0, %v1310
      %v1312 = vpop.f32.mrb[0].mxu0
      %1313 = vmatprep.mubr.bf16.mxu0 0
      %1314 = vmatmul.mubr.bf16.gmra.mrb[0].mxu0 %v1255
      %v1315 = vpop.f32.mrb[0].mxu0
      %v1316 = vadd.f32 0.0, %v1315
      %v1317 = vpop.f32.mrb[0].mxu0
      %v1318 = vpop.f32.mrb[0].mxu0
      %v1319 = vadd.f32 0.0, %v1318
      %v1320 = vpop.f32.mrb[0].mxu0
      %1321 = vdwg.mxu0
      %v1322 = vadd.f32 %v1137, %v1292
      %v1323 = vadd.f32 %v1138, %v1295
      %v1324 = vadd.f32 %v1139, %v1300
      %v1325 = vadd.f32 %v1140, %v1303
      %v1326 = vadd.f32 %v1141, %v1308
      %v1327 = vadd.f32 %v1142, %v1311
      %v1328 = vadd.f32 %v1143, %v1316
      %v1329 = vadd.f32 %v1144, %v1319
      %s1330 = scalar_lea.vmem %s165, 16
      %v1331 = vld [vmem:[%s1330] sm:$0xf]
      %v1332 = vld [vmem:[%s1330 + $0x8] sm:$0xf]
      %v1333 = vld [vmem:[%s1330 + $0x10] sm:$0xf]
      %v1334 = vld [vmem:[%s1330 + $0x18] sm:$0xf]
      %v1335 = vld [vmem:[%s1330 + $0x20] sm:$0xf]
      %v1336 = vld [vmem:[%s1330 + $0x28] sm:$0xf]
      %v1337 = vld [vmem:[%s1330 + $0x30] sm:$0xf]
      %v1338 = vld [vmem:[%s1330 + $0x38] sm:$0xf]
      %v1339 = vld [vmem:[%s1 + $0xc0] sm:$0xf]
      %v1340 = vld [vmem:[%s1 + $0xc4] sm:$0xf]
      %v1341 = vld [vmem:[%s1 + $0xc8] sm:$0xf]
      %v1342 = vld [vmem:[%s1 + $0xcc] sm:$0xf]
      %v1343 = vld [vmem:[%s1 + $0xd0] sm:$0xf]
      %v1344 = vld [vmem:[%s1 + $0xd4] sm:$0xf]
      %v1345 = vld [vmem:[%s1 + $0xd8] sm:$0xf]
      %v1346 = vld [vmem:[%s1 + $0xdc] sm:$0xf]
      %v1355 = vunpack.c.l.b16 %v1331
      %v1356 = vunpack.c.l.b16 %v1332
      %v1357 = vunpack.c.l.b16 %v1333
      %v1358 = vunpack.c.l.b16 %v1334
      %v1359 = vunpack.c.l.b16 %v1335
      %v1360 = vunpack.c.l.b16 %v1336
      %v1361 = vunpack.c.l.b16 %v1337
      %v1362 = vunpack.c.l.b16 %v1338
      %v1363 = vpack.c.b16 %v1356, %v1355
      %v1364 = vpack.c.b16 %v1358, %v1357
      %v1365 = vpack.c.b16 %v1360, %v1359
      %v1366 = vpack.c.b16 %v1362, %v1361
      %v1375 = vunpack.c.l.b16 %v1339
      %v1376 = vunpack.c.l.b16 %v1340
      %v1377 = vunpack.c.l.b16 %v1341
      %v1378 = vunpack.c.l.b16 %v1342
      %v1379 = vunpack.c.l.b16 %v1343
      %v1380 = vunpack.c.l.b16 %v1344
      %v1381 = vunpack.c.l.b16 %v1345
      %v1382 = vunpack.c.l.b16 %v1346
      %v1383 = vpack.c.b16 %v1376, %v1375
      %v1384 = vpack.c.b16 %v1378, %v1377
      %v1385 = vpack.c.b16 %v1380, %v1379
      %v1386 = vpack.c.b16 %v1382, %v1381
      %v1392 = vsel %vm355, %v1363, 0
      %v1395 = vsel %vm355, %v1364, 0
      %v1398 = vsel %vm355, %v1365, 0
      %v1401 = vsel %vm355, %v1366, 0
      %1403 = vmatprep.subr.bf16.mxu0 0
      %1404 = vmatpush1.bf16.msra.mxu0 %v1383
      %1405 = vmatprep.subr.bf16.mxu0 0
      %1406 = vmatpush1.bf16.msra.mxu0 %v1384
      %1407 = vmatprep.subr.bf16.mxu0 0
      %1408 = vmatpush1.bf16.msra.mxu0 %v1385
      %1409 = vmatprep.subr.bf16.mxu0 0
      %1410 = vmatpush1.bf16.msra.mxu0 %v1386
      %1411 = vmatprep.subr.bf16.mxu0 0
      %1412 = vmatpush1.bf16.msra.mxu0 0
      %1413 = vmatprep.subr.bf16.mxu0 0
      %1414 = vmatpush1.bf16.msra.mxu0 0
      %1415 = vmatprep.subr.bf16.mxu0 0
      %1416 = vmatpush1.bf16.msra.mxu0 0
      %1417 = vmatprep.subr.bf16.mxu0 0
      %1418 = vmatpush1.bf16.msra.mxu0 0
      %1419 = vmatprep.subr.bf16.mxu0 0
      %1420 = vmatpush1.bf16.msra.mxu0 0
      %1421 = vmatprep.subr.bf16.mxu0 0
      %1422 = vmatpush1.bf16.msra.mxu0 0
      %1423 = vmatprep.subr.bf16.mxu0 0
      %1424 = vmatpush1.bf16.msra.mxu0 0
      %1425 = vmatprep.subr.bf16.mxu0 0
      %1426 = vmatpush1.bf16.msra.mxu0 0
      %1427 = vmatprep.subr.bf16.mxu0 0
      %1428 = vmatpush1.bf16.msra.mxu0 0
      %1429 = vmatprep.subr.bf16.mxu0 0
      %1430 = vmatpush1.bf16.msra.mxu0 0
      %1431 = vmatprep.subr.bf16.mxu0 0
      %1432 = vmatpush1.bf16.msra.mxu0 0
      %1433 = vmatprep.subr.bf16.mxu0 0
      %1434 = vmatpush1.bf16.msra.mxu0 0
      %1435 = vmatprep.mubr.bf16.mxu0 0
      %1436 = vmatmul.mubr.bf16.gmra.mrb[0].mxu0 %v1392
      %v1437 = vpop.f32.mrb[0].mxu0
      %v1438 = vadd.f32 0.0, %v1437
      %v1439 = vpop.f32.mrb[0].mxu0
      %v1440 = vpop.f32.mrb[0].mxu0
      %v1441 = vadd.f32 0.0, %v1440
      %v1442 = vpop.f32.mrb[0].mxu0
      %1443 = vmatprep.mubr.bf16.mxu0 0
      %1444 = vmatmul.mubr.bf16.gmra.mrb[0].mxu0 %v1395
      %v1445 = vpop.f32.mrb[0].mxu0
      %v1446 = vadd.f32 0.0, %v1445
      %v1447 = vpop.f32.mrb[0].mxu0
      %v1448 = vpop.f32.mrb[0].mxu0
      %v1449 = vadd.f32 0.0, %v1448
      %v1450 = vpop.f32.mrb[0].mxu0
      %1451 = vmatprep.mubr.bf16.mxu0 0
      %1452 = vmatmul.mubr.bf16.gmra.mrb[0].mxu0 %v1398
      %v1453 = vpop.f32.mrb[0].mxu0
      %v1454 = vadd.f32 0.0, %v1453
      %v1455 = vpop.f32.mrb[0].mxu0
      %v1456 = vpop.f32.mrb[0].mxu0
      %v1457 = vadd.f32 0.0, %v1456
      %v1458 = vpop.f32.mrb[0].mxu0
      %1459 = vmatprep.mubr.bf16.mxu0 0
      %1460 = vmatmul.mubr.bf16.gmra.mrb[0].mxu0 %v1401
      %v1461 = vpop.f32.mrb[0].mxu0
      %v1462 = vadd.f32 0.0, %v1461
      %v1463 = vpop.f32.mrb[0].mxu0
      %v1464 = vpop.f32.mrb[0].mxu0
      %v1465 = vadd.f32 0.0, %v1464
      %v1466 = vpop.f32.mrb[0].mxu0
      %1467 = vdwg.mxu0
      %v1468 = vadd.f32 %v1322, %v1438
      %v1469 = vadd.f32 %v1323, %v1441
      %v1470 = vadd.f32 %v1324, %v1446
      %v1471 = vadd.f32 %v1325, %v1449
      %v1472 = vadd.f32 %v1326, %v1454
      %v1473 = vadd.f32 %v1327, %v1457
      %v1474 = vadd.f32 %v1328, %v1462
      %v1475 = vadd.f32 %v1329, %v1465
      %v1476 = vld [vmem:[%s1330] sm:$0xf]
      %v1477 = vld [vmem:[%s1330 + $0x4] sm:$0x1]
      %v1478 = vld [vmem:[%s1330 + $0x8] sm:$0xf]
      %v1479 = vld [vmem:[%s1330 + $0xc] sm:$0x1]
      %v1480 = vld [vmem:[%s1330 + $0x10] sm:$0xf]
      %v1481 = vld [vmem:[%s1330 + $0x14] sm:$0x1]
      %v1482 = vld [vmem:[%s1330 + $0x18] sm:$0xf]
      %v1483 = vld [vmem:[%s1330 + $0x1c] sm:$0x1]
      %v1484 = vld [vmem:[%s1330 + $0x20] sm:$0xf]
      %v1485 = vld [vmem:[%s1330 + $0x24] sm:$0x1]
      %v1486 = vld [vmem:[%s1330 + $0x28] sm:$0xf]
      %v1487 = vld [vmem:[%s1330 + $0x2c] sm:$0x1]
      %v1488 = vld [vmem:[%s1330 + $0x30] sm:$0xf]
      %v1489 = vld [vmem:[%s1330 + $0x34] sm:$0x1]
      %v1490 = vld [vmem:[%s1330 + $0x38] sm:$0xf]
      %v1491 = vld [vmem:[%s1330 + $0x3c] sm:$0x1]
      %v1493 = vshrl.u32 %v1476, 16
      %v1495 = vrot.slane %v1493, 4
      %v1496 = vshll.u32 %v1476, 16
      %v1498 = vrot.slane %v1496, 5
      %v1499 = vor.u32 %v1495, %v1498
      %v1500 = vrot.slane %v1499, 4
      %v1502 = vshll.u32 %v1477, 16
      %v1504 = vrot.slane %v1502, 5
      %v1505 = vsel %vm198, %v1500, %v1504
      %v1507 = vshrl.u32 %v1478, 16
      %v1509 = vrot.slane %v1507, 4
      %v1510 = vshll.u32 %v1478, 16
      %v1512 = vrot.slane %v1510, 5
      %v1513 = vor.u32 %v1509, %v1512
      %v1514 = vrot.slane %v1513, 4
      %v1516 = vshll.u32 %v1479, 16
      %v1518 = vrot.slane %v1516, 5
      %v1519 = vsel %vm198, %v1514, %v1518
      %v1521 = vshrl.u32 %v1480, 16
      %v1523 = vrot.slane %v1521, 4
      %v1524 = vshll.u32 %v1480, 16
      %v1526 = vrot.slane %v1524, 5
      %v1527 = vor.u32 %v1523, %v1526
      %v1528 = vrot.slane %v1527, 4
      %v1530 = vshll.u32 %v1481, 16
      %v1532 = vrot.slane %v1530, 5
      %v1533 = vsel %vm198, %v1528, %v1532
      %v1535 = vshrl.u32 %v1482, 16
      %v1537 = vrot.slane %v1535, 4
      %v1538 = vshll.u32 %v1482, 16
      %v1540 = vrot.slane %v1538, 5
      %v1541 = vor.u32 %v1537, %v1540
      %v1542 = vrot.slane %v1541, 4
      %v1544 = vshll.u32 %v1483, 16
      %v1546 = vrot.slane %v1544, 5
      %v1547 = vsel %vm198, %v1542, %v1546
      %v1549 = vshrl.u32 %v1484, 16
      %v1551 = vrot.slane %v1549, 4
      %v1552 = vshll.u32 %v1484, 16
      %v1554 = vrot.slane %v1552, 5
      %v1555 = vor.u32 %v1551, %v1554
      %v1556 = vrot.slane %v1555, 4
      %v1558 = vshll.u32 %v1485, 16
      %v1560 = vrot.slane %v1558, 5
      %v1561 = vsel %vm198, %v1556, %v1560
      %v1563 = vshrl.u32 %v1486, 16
      %v1565 = vrot.slane %v1563, 4
      %v1566 = vshll.u32 %v1486, 16
      %v1568 = vrot.slane %v1566, 5
      %v1569 = vor.u32 %v1565, %v1568
      %v1570 = vrot.slane %v1569, 4
      %v1572 = vshll.u32 %v1487, 16
      %v1574 = vrot.slane %v1572, 5
      %v1575 = vsel %vm198, %v1570, %v1574
      %v1577 = vshrl.u32 %v1488, 16
      %v1579 = vrot.slane %v1577, 4
      %v1580 = vshll.u32 %v1488, 16
      %v1582 = vrot.slane %v1580, 5
      %v1583 = vor.u32 %v1579, %v1582
      %v1584 = vrot.slane %v1583, 4
      %v1586 = vshll.u32 %v1489, 16
      %v1588 = vrot.slane %v1586, 5
      %v1589 = vsel %vm198, %v1584, %v1588
      %v1591 = vshrl.u32 %v1490, 16
      %v1593 = vrot.slane %v1591, 4
      %v1594 = vshll.u32 %v1490, 16
      %v1596 = vrot.slane %v1594, 5
      %v1597 = vor.u32 %v1593, %v1596
      %v1598 = vrot.slane %v1597, 4
      %v1600 = vshll.u32 %v1491, 16
      %v1602 = vrot.slane %v1600, 5
      %v1603 = vsel %vm198, %v1598, %v1602
      %v1604 = vld [vmem:[%s1 + $0xe0] sm:$0xf]
      %v1605 = vld [vmem:[%s1 + $0xe4] sm:$0xf]
      %v1606 = vld [vmem:[%s1 + $0xe8] sm:$0xf]
      %v1607 = vld [vmem:[%s1 + $0xec] sm:$0xf]
      %v1608 = vld [vmem:[%s1 + $0xf0] sm:$0xf]
      %v1609 = vld [vmem:[%s1 + $0xf4] sm:$0xf]
      %v1610 = vld [vmem:[%s1 + $0xf8] sm:$0xf]
      %v1611 = vld [vmem:[%s1 + $0xfc] sm:$0xf]
      %v1612 = vunpack.c.l.b16 %v1505
      %v1613 = vunpack.c.l.b16 %v1519
      %v1614 = vunpack.c.l.b16 %v1533
      %v1615 = vunpack.c.l.b16 %v1547
      %v1616 = vunpack.c.l.b16 %v1561
      %v1617 = vunpack.c.l.b16 %v1575
      %v1618 = vunpack.c.l.b16 %v1589
      %v1619 = vunpack.c.l.b16 %v1603
      %v1620 = vpack.c.b16 %v1613, %v1612
      %v1621 = vpack.c.b16 %v1615, %v1614
      %v1622 = vpack.c.b16 %v1617, %v1616
      %v1623 = vpack.c.b16 %v1619, %v1618
      %v1632 = vunpack.c.l.b16 %v1604
      %v1633 = vunpack.c.l.b16 %v1605
      %v1634 = vunpack.c.l.b16 %v1606
      %v1635 = vunpack.c.l.b16 %v1607
      %v1636 = vunpack.c.l.b16 %v1608
      %v1637 = vunpack.c.l.b16 %v1609
      %v1638 = vunpack.c.l.b16 %v1610
      %v1639 = vunpack.c.l.b16 %v1611
      %v1640 = vpack.c.b16 %v1633, %v1632
      %v1641 = vpack.c.b16 %v1635, %v1634
      %v1642 = vpack.c.b16 %v1637, %v1636
      %v1643 = vpack.c.b16 %v1639, %v1638
      %v1649 = vsel %vm355, %v1620, 0
      %v1652 = vsel %vm355, %v1621, 0
      %v1655 = vsel %vm355, %v1622, 0
      %v1658 = vsel %vm355, %v1623, 0
      %1660 = vmatprep.subr.bf16.mxu0 0
      %1661 = vmatpush1.bf16.msra.mxu0 %v1640
      %1662 = vmatprep.subr.bf16.mxu0 0
      %1663 = vmatpush1.bf16.msra.mxu0 %v1641
      %1664 = vmatprep.subr.bf16.mxu0 0
      %1665 = vmatpush1.bf16.msra.mxu0 %v1642
      %1666 = vmatprep.subr.bf16.mxu0 0
      %1667 = vmatpush1.bf16.msra.mxu0 %v1643
      %1668 = vmatprep.subr.bf16.mxu0 0
      %1669 = vmatpush1.bf16.msra.mxu0 0
      %1670 = vmatprep.subr.bf16.mxu0 0
      %1671 = vmatpush1.bf16.msra.mxu0 0
      %1672 = vmatprep.subr.bf16.mxu0 0
      %1673 = vmatpush1.bf16.msra.mxu0 0
      %1674 = vmatprep.subr.bf16.mxu0 0
      %1675 = vmatpush1.bf16.msra.mxu0 0
      %1676 = vmatprep.subr.bf16.mxu0 0
      %1677 = vmatpush1.bf16.msra.mxu0 0
      %1678 = vmatprep.subr.bf16.mxu0 0
      %1679 = vmatpush1.bf16.msra.mxu0 0
      %1680 = vmatprep.subr.bf16.mxu0 0
      %1681 = vmatpush1.bf16.msra.mxu0 0
      %1682 = vmatprep.subr.bf16.mxu0 0
      %1683 = vmatpush1.bf16.msra.mxu0 0
      %1684 = vmatprep.subr.bf16.mxu0 0
      %1685 = vmatpush1.bf16.msra.mxu0 0
      %1686 = vmatprep.subr.bf16.mxu0 0
      %1687 = vmatpush1.bf16.msra.mxu0 0
      %1688 = vmatprep.subr.bf16.mxu0 0
      %1689 = vmatpush1.bf16.msra.mxu0 0
      %1690 = vmatprep.subr.bf16.mxu0 0
      %1691 = vmatpush1.bf16.msra.mxu0 0
      %1692 = vmatprep.mubr.bf16.mxu0 0
      %1693 = vmatmul.mubr.bf16.gmra.mrb[0].mxu0 %v1649
      %v1694 = vpop.f32.mrb[0].mxu0
      %v1695 = vadd.f32 0.0, %v1694
      %v1696 = vpop.f32.mrb[0].mxu0
      %v1697 = vpop.f32.mrb[0].mxu0
      %v1698 = vadd.f32 0.0, %v1697
      %v1699 = vpop.f32.mrb[0].mxu0
      %1700 = vmatprep.mubr.bf16.mxu0 0
      %1701 = vmatmul.mubr.bf16.gmra.mrb[0].mxu0 %v1652
      %v1702 = vpop.f32.mrb[0].mxu0
      %v1703 = vadd.f32 0.0, %v1702
      %v1704 = vpop.f32.mrb[0].mxu0
      %v1705 = vpop.f32.mrb[0].mxu0
      %v1706 = vadd.f32 0.0, %v1705
      %v1707 = vpop.f32.mrb[0].mxu0
      %1708 = vmatprep.mubr.bf16.mxu0 0
      %1709 = vmatmul.mubr.bf16.gmra.mrb[0].mxu0 %v1655
      %v1710 = vpop.f32.mrb[0].mxu0
      %v1711 = vadd.f32 0.0, %v1710
      %v1712 = vpop.f32.mrb[0].mxu0
      %v1713 = vpop.f32.mrb[0].mxu0
      %v1714 = vadd.f32 0.0, %v1713
      %v1715 = vpop.f32.mrb[0].mxu0
      %1716 = vmatprep.mubr.bf16.mxu0 0
      %1717 = vmatmul.mubr.bf16.gmra.mrb[0].mxu0 %v1658
      %v1718 = vpop.f32.mrb[0].mxu0
      %v1719 = vadd.f32 0.0, %v1718
      %v1720 = vpop.f32.mrb[0].mxu0
      %v1721 = vpop.f32.mrb[0].mxu0
      %v1722 = vadd.f32 0.0, %v1721
      %v1723 = vpop.f32.mrb[0].mxu0
      %1724 = vdwg.mxu0
      %v1725 = vadd.f32 %v1468, %v1695
      %v1726 = vadd.f32 %v1469, %v1698
      %v1727 = vadd.f32 %v1470, %v1703
      %v1728 = vadd.f32 %v1471, %v1706
      %v1729 = vadd.f32 %v1472, %v1711
      %v1730 = vadd.f32 %v1473, %v1714
      %v1731 = vadd.f32 %v1474, %v1719
      %v1732 = vadd.f32 %v1475, %v1722
      %v1733 = vld [vmem:[%s1330] sm:$0xe]
      %v1734 = vld [vmem:[%s1330 + $0x8] sm:$0xe]
      %v1735 = vld [vmem:[%s1330 + $0x10] sm:$0xe]
      %v1736 = vld [vmem:[%s1330 + $0x18] sm:$0xe]
      %v1737 = vld [vmem:[%s1330 + $0x20] sm:$0xe]
      %v1738 = vld [vmem:[%s1330 + $0x28] sm:$0xe]
      %v1739 = vld [vmem:[%s1330 + $0x30] sm:$0xe]
      %v1740 = vld [vmem:[%s1330 + $0x38] sm:$0xe]
      %v1757 = vrot.slane %v1733, 5
      %v1758 = vrot.slane %v1757, 4
      %v1759 = vrot.slane %v1477, 5
      %v1760 = vsel %vm580, %v1758, %v1759
      %v1761 = vrot.slane %v1734, 5
      %v1762 = vrot.slane %v1761, 4
      %v1763 = vrot.slane %v1479, 5
      %v1764 = vsel %vm580, %v1762, %v1763
      %v1765 = vrot.slane %v1735, 5
      %v1766 = vrot.slane %v1765, 4
      %v1767 = vrot.slane %v1481, 5
      %v1768 = vsel %vm580, %v1766, %v1767
      %v1769 = vrot.slane %v1736, 5
      %v1770 = vrot.slane %v1769, 4
      %v1771 = vrot.slane %v1483, 5
      %v1772 = vsel %vm580, %v1770, %v1771
      %v1773 = vrot.slane %v1737, 5
      %v1774 = vrot.slane %v1773, 4
      %v1775 = vrot.slane %v1485, 5
      %v1776 = vsel %vm580, %v1774, %v1775
      %v1777 = vrot.slane %v1738, 5
      %v1778 = vrot.slane %v1777, 4
      %v1779 = vrot.slane %v1487, 5
      %v1780 = vsel %vm580, %v1778, %v1779
      %v1781 = vrot.slane %v1739, 5
      %v1782 = vrot.slane %v1781, 4
      %v1783 = vrot.slane %v1489, 5
      %v1784 = vsel %vm580, %v1782, %v1783
      %v1785 = vrot.slane %v1740, 5
      %v1786 = vrot.slane %v1785, 4
      %v1787 = vrot.slane %v1491, 5
      %v1788 = vsel %vm580, %v1786, %v1787
      %v1789 = vld [vmem:[%s1 + $0x100] sm:$0xf]
      %v1790 = vld [vmem:[%s1 + $0x104] sm:$0xf]
      %v1791 = vld [vmem:[%s1 + $0x108] sm:$0xf]
      %v1792 = vld [vmem:[%s1 + $0x10c] sm:$0xf]
      %v1793 = vld [vmem:[%s1 + $0x110] sm:$0xf]
      %v1794 = vld [vmem:[%s1 + $0x114] sm:$0xf]
      %v1795 = vld [vmem:[%s1 + $0x118] sm:$0xf]
      %v1796 = vld [vmem:[%s1 + $0x11c] sm:$0xf]
      %v1797 = vunpack.c.l.b16 %v1760
      %v1798 = vunpack.c.l.b16 %v1764
      %v1799 = vunpack.c.l.b16 %v1768
      %v1800 = vunpack.c.l.b16 %v1772
      %v1801 = vunpack.c.l.b16 %v1776
      %v1802 = vunpack.c.l.b16 %v1780
      %v1803 = vunpack.c.l.b16 %v1784
      %v1804 = vunpack.c.l.b16 %v1788
      %v1805 = vpack.c.b16 %v1798, %v1797
      %v1806 = vpack.c.b16 %v1800, %v1799
      %v1807 = vpack.c.b16 %v1802, %v1801
      %v1808 = vpack.c.b16 %v1804, %v1803
      %v1817 = vunpack.c.l.b16 %v1789
      %v1818 = vunpack.c.l.b16 %v1790
      %v1819 = vunpack.c.l.b16 %v1791
      %v1820 = vunpack.c.l.b16 %v1792
      %v1821 = vunpack.c.l.b16 %v1793
      %v1822 = vunpack.c.l.b16 %v1794
      %v1823 = vunpack.c.l.b16 %v1795
      %v1824 = vunpack.c.l.b16 %v1796
      %v1825 = vpack.c.b16 %v1818, %v1817
      %v1826 = vpack.c.b16 %v1820, %v1819
      %v1827 = vpack.c.b16 %v1822, %v1821
      %v1828 = vpack.c.b16 %v1824, %v1823
      %v1834 = vsel %vm355, %v1805, 0
      %v1837 = vsel %vm355, %v1806, 0
      %v1840 = vsel %vm355, %v1807, 0
      %v1843 = vsel %vm355, %v1808, 0
      %1845 = vmatprep.subr.bf16.mxu0 0
      %1846 = vmatpush1.bf16.msra.mxu0 %v1825
      %1847 = vmatprep.subr.bf16.mxu0 0
      %1848 = vmatpush1.bf16.msra.mxu0 %v1826
      %1849 = vmatprep.subr.bf16.mxu0 0
      %1850 = vmatpush1.bf16.msra.mxu0 %v1827
      %1851 = vmatprep.subr.bf16.mxu0 0
      %1852 = vmatpush1.bf16.msra.mxu0 %v1828
      %1853 = vmatprep.subr.bf16.mxu0 0
      %1854 = vmatpush1.bf16.msra.mxu0 0
      %1855 = vmatprep.subr.bf16.mxu0 0
      %1856 = vmatpush1.bf16.msra.mxu0 0
      %1857 = vmatprep.subr.bf16.mxu0 0
      %1858 = vmatpush1.bf16.msra.mxu0 0
      %1859 = vmatprep.subr.bf16.mxu0 0
      %1860 = vmatpush1.bf16.msra.mxu0 0
      %1861 = vmatprep.subr.bf16.mxu0 0
      %1862 = vmatpush1.bf16.msra.mxu0 0
      %1863 = vmatprep.subr.bf16.mxu0 0
      %1864 = vmatpush1.bf16.msra.mxu0 0
      %1865 = vmatprep.subr.bf16.mxu0 0
      %1866 = vmatpush1.bf16.msra.mxu0 0
      %1867 = vmatprep.subr.bf16.mxu0 0
      %1868 = vmatpush1.bf16.msra.mxu0 0
      %1869 = vmatprep.subr.bf16.mxu0 0
      %1870 = vmatpush1.bf16.msra.mxu0 0
      %1871 = vmatprep.subr.bf16.mxu0 0
      %1872 = vmatpush1.bf16.msra.mxu0 0
      %1873 = vmatprep.subr.bf16.mxu0 0
      %1874 = vmatpush1.bf16.msra.mxu0 0
      %1875 = vmatprep.subr.bf16.mxu0 0
      %1876 = vmatpush1.bf16.msra.mxu0 0
      %1877 = vmatprep.mubr.bf16.mxu0 0
      %1878 = vmatmul.mubr.bf16.gmra.mrb[0].mxu0 %v1834
      %v1879 = vpop.f32.mrb[0].mxu0
      %v1880 = vadd.f32 0.0, %v1879
      %v1881 = vpop.f32.mrb[0].mxu0
      %v1882 = vpop.f32.mrb[0].mxu0
      %v1883 = vadd.f32 0.0, %v1882
      %v1884 = vpop.f32.mrb[0].mxu0
      %1885 = vmatprep.mubr.bf16.mxu0 0
      %1886 = vmatmul.mubr.bf16.gmra.mrb[0].mxu0 %v1837
      %v1887 = vpop.f32.mrb[0].mxu0
      %v1888 = vadd.f32 0.0, %v1887
      %v1889 = vpop.f32.mrb[0].mxu0
      %v1890 = vpop.f32.mrb[0].mxu0
      %v1891 = vadd.f32 0.0, %v1890
      %v1892 = vpop.f32.mrb[0].mxu0
      %1893 = vmatprep.mubr.bf16.mxu0 0
      %1894 = vmatmul.mubr.bf16.gmra.mrb[0].mxu0 %v1840
      %v1895 = vpop.f32.mrb[0].mxu0
      %v1896 = vadd.f32 0.0, %v1895
      %v1897 = vpop.f32.mrb[0].mxu0
      %v1898 = vpop.f32.mrb[0].mxu0
      %v1899 = vadd.f32 0.0, %v1898
      %v1900 = vpop.f32.mrb[0].mxu0
      %1901 = vmatprep.mubr.bf16.mxu0 0
      %1902 = vmatmul.mubr.bf16.gmra.mrb[0].mxu0 %v1843
      %v1903 = vpop.f32.mrb[0].mxu0
      %v1904 = vadd.f32 0.0, %v1903
      %v1905 = vpop.f32.mrb[0].mxu0
      %v1906 = vpop.f32.mrb[0].mxu0
      %v1907 = vadd.f32 0.0, %v1906
      %v1908 = vpop.f32.mrb[0].mxu0
      %1909 = vdwg.mxu0
      %v1910 = vadd.f32 %v1725, %v1880
      %v1911 = vadd.f32 %v1726, %v1883
      %v1912 = vadd.f32 %v1727, %v1888
      %v1913 = vadd.f32 %v1728, %v1891
      %v1914 = vadd.f32 %v1729, %v1896
      %v1915 = vadd.f32 %v1730, %v1899
      %v1916 = vadd.f32 %v1731, %v1904
      %v1917 = vadd.f32 %v1732, %v1907
      %v1918 = vld [vmem:[%s2] sm:$0x1]
      %v1920 = vlaneseq
      %v1921 = vshrl.u32 %v1920, 7
      %v1922 = vsub.s32 0, %v1921
      %v1923 = vrot.slane %v1918, %v1922
      %v1925 = vadd.f32 %v1910, %v1923
      %v1926 = vadd.f32 %v1911, %v1923
      %v1927 = vadd.f32 %v1912, %v1923
      %v1928 = vadd.f32 %v1913, %v1923
      %v1929 = vadd.f32 %v1914, %v1923
      %v1930 = vadd.f32 %v1915, %v1923
      %v1931 = vadd.f32 %v1916, %v1923
      %v1932 = vadd.f32 %v1917, %v1923
      %v1933 = vmax.f32 %v1925, 0.0
      %v1934 = vmax.f32 %v1926, 0.0
      %v1935 = vmax.f32 %v1927, 0.0
      %v1936 = vmax.f32 %v1928, 0.0
      %v1937 = vmax.f32 %v1929, 0.0
      %v1938 = vmax.f32 %v1930, 0.0
      %v1939 = vmax.f32 %v1931, 0.0
      %v1940 = vmax.f32 %v1932, 0.0
      %v1941 = vpack.c.bf16 %v1934, %v1933
      %v1942 = vpack.c.bf16 %v1936, %v1935
      %v1943 = vpack.c.bf16 %v1938, %v1937
      %v1944 = vpack.c.bf16 %v1940, %v1939
      %v1949 = vunpack.c.l.b16 %v1941
      %v1950 = vunpack.c.h.b16 %v1941
      %v1951 = vunpack.c.l.b16 %v1942
      %v1952 = vunpack.c.h.b16 %v1942
      %v1953 = vunpack.c.l.b16 %v1943
      %v1954 = vunpack.c.h.b16 %v1943
      %v1955 = vunpack.c.l.b16 %v1944
      %v1956 = vunpack.c.h.b16 %v1944
      %v1957 = vpack.c.b16 %v1949, %v1949
      %v1958 = vpack.c.b16 %v1950, %v1950
      %v1959 = vpack.c.b16 %v1951, %v1951
      %v1960 = vpack.c.b16 %v1952, %v1952
      %v1961 = vpack.c.b16 %v1953, %v1953
      %v1962 = vpack.c.b16 %v1954, %v1954
      %v1963 = vpack.c.b16 %v1955, %v1955
      %v1964 = vpack.c.b16 %v1956, %v1956
      %vm1973 = vcmask 519168
      %1974 = vst.msk [vmem:[%s170] sm:$0xf] %vm1973, %v1957
      %1975 = vst.msk [vmem:[%s170 + $0x4] sm:$0xf] %vm1973, %v1958
      %1976 = vst.msk [vmem:[%s170 + $0x8] sm:$0xf] %vm1973, %v1959
      %1977 = vst.msk [vmem:[%s170 + $0xc] sm:$0xf] %vm1973, %v1960
      %1978 = vst.msk [vmem:[%s170 + $0x10] sm:$0xf] %vm1973, %v1961
      %1979 = vst.msk [vmem:[%s170 + $0x14] sm:$0xf] %vm1973, %v1962
      %1980 = vst.msk [vmem:[%s170 + $0x18] sm:$0xf] %vm1973, %v1963
      %1981 = vst.msk [vmem:[%s170 + $0x1c] sm:$0xf] %vm1973, %v1964
      %p1982 = scmp.lt.s32.totalorder %s14, 1
      %s1983 = scalar_select %p1982, %s14, 1
      %s1984 = smul.addr %s1983, 8
      %s1985 = smul.addr %s1984, 4
      %s1986 = scalar_lea.vmem %s3, %s1985
      // Predicated region
      $region33: #{recurrent_down_forward.7} parent=31 // pred_check
        %p1987 = pneg %p100
      $region34: #{recurrent_down_forward.7} parent=31 // pred_check_branch
        %1989 = sbr.rel (%p1987) target = $region36
      $region35: #{recurrent_down_forward.7} parent=31 // pred_region
        _
      $region36: #{recurrent_down_forward.7} parent=31 // pred_fallthru
        _
    $region32: #{recurrent_down_forward.7} parent=5 // pred_fallthru
      _
    %p1990 = scmp.le.s32.totalorder 2, %s9
    // Predicated region
    $region37: #{recurrent_down_forward.7} parent=5 // pred_check
      %p1991 = pneg %p1990
    $region38: #{recurrent_down_forward.7} parent=5 // pred_check_branch
      %1993 = sbr.rel (%p1991) target = $region40
    $region39: #{recurrent_down_forward.7} parent=5 // pred_region
      %s1994 = ssub.s32 %s9, 2
      // Predicated region
      $region41: #{recurrent_down_forward.7} parent=39 // pred_check
        %p1995 = pneg %p106
      $region42: #{recurrent_down_forward.7} parent=39 // pred_check_branch
        %1997 = sbr.rel (%p1995) target = $region44
      $region43: #{recurrent_down_forward.7} parent=39 // pred_region
        %p1998 = scmp.lt.s32.totalorder %s15, 1
        %s1999 = scalar_select %p1998, %s15, 1
        %s2000 = smul.addr %s1999, 8
        %s2001 = smul.addr %s2000, 4
        %s2002 = scalar_lea.vmem %s3, %s2001
      $region44: #{recurrent_down_forward.7} parent=39 // pred_fallthru
        _
    $region40: #{recurrent_down_forward.7} parent=5 // pred_fallthru
      _
  $region6: #{recurrent_down_forward.7} parent=0 // loop_footer
    %s13 = sadd.s32 1, %s9
  $region7: #{recurrent_down_forward.7} parent=0 // loop_footer_branch
    %8 = sbr.rel target = $region3
  $region8: #{recurrent_down_forward.7} parent=0 // loop_exit
    _

// kernel: recurrent_down_forward.6
$region0: #{recurrent_down_forward.6}
  #allocation0 [shape = 'u32[]', space=smem, size = 0x4, offset = 0x4, fixed_abs, tag = 'smem constant byte address 0x4 - core index']
  #allocation1 [shape = 'u32[144,128]{1,0:T(1,128)}', space=vmem, size = 0x12000, scoped, tag = 'internal scratch']
  %s0 = inlined_call_operand.vmem [shape: bf16[2,10,10,64], index: 0, kind: input, shape index: {}]
  %s1 = inlined_call_operand.vmem [shape: bf16[576,64], index: 1, kind: input, shape index: {}]
  %s2 = inlined_call_operand.vmem [shape: f32[1,64], index: 2, kind: input, shape index: {}]
  %s3 = inlined_call_operand.vmem [shape: bf16[2,64,64], index: 3, kind: input, shape index: {}]
  %s4 = inlined_call_operand.vmem [shape: bf16[2,64,64], index: 4, kind: output, shape index: {}]
  %s5 = sld [smem:[#allocation0]]
  $region49: #{recurrent_down_forward.6} parent=0
    _
  %s7 = ssub.s32 1, %s5
  %s8 = scalar_select 0, %s7, %s5
  loop: start=0, step=1, limit=4
  $region2: #{recurrent_down_forward.6} parent=0 // loop_pre_header
    _
  $region3: #{recurrent_down_forward.6} parent=0 // loop_header
    %s10 = sphi 0, %s14
    %p11 = scmp.ge.s32.totalorder %s10, 4
    %s20 = sphi 0, %s22
    %s23 = sphi 0, %s20
    %s24 = sphi 0, %s23
    %s40 = sphi 0, %s24
    %s44 = sphi 0, %s44
    %s46 = sphi 0, %s44
    %s47 = sphi 0, %s46
    %s61 = sphi 0, %s47
    %s65 = sphi 0, %s65
    %s67 = sphi 0, %s65
    %s68 = sphi 0, %s67
    %s82 = sphi 0, %s68
    %s88 = sphi 0, %s90
    %s91 = sphi 0, %s88
    %s92 = sphi 0, %s91
    %s108 = sphi 0, %s92
    %s114 = sphi 0, %s116
    %s117 = sphi 0, %s114
    %s118 = sphi 0, %s117
    %s134 = sphi 0, %s118
  $region4: #{recurrent_down_forward.6} parent=0 // loop_header_branch
    %13 = sbr.rel (%p11) target = $region8
  $region5: #{recurrent_down_forward.6} parent=0 // loop_body
    %s15 = ssub.s32 %s10, 1
    %s16 = ssub.s32 %s10, 2
    %s17 = sadd.s32 %s10, 1
    %s18 = ssub.s32 %s10, %s17
    %p19 = scmp.eq.s32.totalorder %s18, 0
    %s21 = sadd.s32 %s20, 1
    %s22 = scalar_select %p19, %s20, %s21
    %p25 = pneg %p19
    %p26 = scmp.eq.s32.totalorder %s10, 1
    %p27 = por %p25, %p26
    %p28 = scmp.ne.s32.totalorder %s20, %s23
    %p29 = scmp.eq.s32.totalorder %s10, 0
    %p30 = por %p28, %p29
    %p31 = scmp.ne.s32.totalorder %s20, %s23
    %p32 = scmp.eq.s32.totalorder %s15, 1
    %p33 = por %p31, %p32
    %p34 = scmp.ne.s32.totalorder %s23, %s24
    %p35 = scmp.eq.s32.totalorder %s15, 0
    %p36 = por %p34, %p35
    %p37 = scmp.ne.s32.totalorder %s23, %s24
    %p38 = scmp.eq.s32.totalorder %s16, 1
    %p39 = por %p37, %p38
    %p41 = scmp.ne.s32.totalorder %s24, %s40
    %p42 = scmp.eq.s32.totalorder %s16, 0
    %p43 = por %p41, %p42
    %s45 = sadd.s32 %s44, 1
    %p48 = scmp.eq.s32.totalorder %s10, 1
    %p49 = scmp.ne.s32.totalorder %s44, %s46
    %p50 = scmp.eq.s32.totalorder %s10, 0
    %p51 = por %p49, %p50
    %p52 = scmp.ne.s32.totalorder %s44, %s46
    %p53 = scmp.eq.s32.totalorder %s15, 1
    %p54 = por %p52, %p53
    %p55 = scmp.ne.s32.totalorder %s46, %s47
    %p56 = scmp.eq.s32.totalorder %s15, 0
    %p57 = por %p55, %p56
    %p58 = scmp.ne.s32.totalorder %s46, %s47
    %p59 = scmp.eq.s32.totalorder %s16, 1
    %p60 = por %p58, %p59
    %p62 = scmp.ne.s32.totalorder %s47, %s61
    %p63 = scmp.eq.s32.totalorder %s16, 0
    %p64 = por %p62, %p63
    %s66 = sadd.s32 %s65, 1
    %p69 = scmp.eq.s32.totalorder %s10, 1
    %p70 = scmp.ne.s32.totalorder %s65, %s67
    %p71 = scmp.eq.s32.totalorder %s10, 0
    %p72 = por %p70, %p71
    %p73 = scmp.ne.s32.totalorder %s65, %s67
    %p74 = scmp.eq.s32.totalorder %s15, 1
    %p75 = por %p73, %p74
    %p76 = scmp.ne.s32.totalorder %s67, %s68
    %p77 = scmp.eq.s32.totalorder %s15, 0
    %p78 = por %p76, %p77
    %p79 = scmp.ne.s32.totalorder %s67, %s68
    %p80 = scmp.eq.s32.totalorder %s16, 1
    %p81 = por %p79, %p80
    %p83 = scmp.ne.s32.totalorder %s68, %s82
    %p84 = scmp.eq.s32.totalorder %s16, 0
    %p85 = por %p83, %p84
    %s86 = ssub.s32 %s10, %s17
    %p87 = scmp.eq.s32.totalorder %s86, 0
    %s89 = sadd.s32 %s88, 1
    %s90 = scalar_select %p87, %s88, %s89
    %p93 = pneg %p87
    %p94 = scmp.eq.s32.totalorder %s10, 1
    %p95 = por %p93, %p94
    %p96 = scmp.ne.s32.totalorder %s88, %s91
    %p97 = scmp.eq.s32.totalorder %s10, 0
    %p98 = por %p96, %p97
    %p99 = scmp.ne.s32.totalorder %s88, %s91
    %p100 = scmp.eq.s32.totalorder %s15, 1
    %p101 = por %p99, %p100
    %p102 = scmp.ne.s32.totalorder %s91, %s92
    %p103 = scmp.eq.s32.totalorder %s15, 0
    %p104 = por %p102, %p103
    %p105 = scmp.ne.s32.totalorder %s91, %s92
    %p106 = scmp.eq.s32.totalorder %s16, 1
    %p107 = por %p105, %p106
    %p109 = scmp.ne.s32.totalorder %s92, %s108
    %p110 = scmp.eq.s32.totalorder %s16, 0
    %p111 = por %p109, %p110
    %s112 = ssub.s32 %s10, %s17
    %p113 = scmp.eq.s32.totalorder %s112, 0
    %s115 = sadd.s32 %s114, 1
    %s116 = scalar_select %p113, %s114, %s115
    %p119 = pneg %p113
    %p120 = scmp.eq.s32.totalorder %s10, 1
    %p121 = por %p119, %p120
    %p122 = scmp.ne.s32.totalorder %s114, %s117
    %p123 = scmp.eq.s32.totalorder %s10, 0
    %p124 = por %p122, %p123
    %p125 = scmp.ne.s32.totalorder %s114, %s117
    %p126 = scmp.eq.s32.totalorder %s15, 1
    %p127 = por %p125, %p126
    %p128 = scmp.ne.s32.totalorder %s117, %s118
    %p129 = scmp.eq.s32.totalorder %s15, 0
    %p130 = por %p128, %p129
    %p131 = scmp.ne.s32.totalorder %s117, %s118
    %p132 = scmp.eq.s32.totalorder %s16, 1
    %p133 = por %p131, %p132
    %p135 = scmp.ne.s32.totalorder %s118, %s134
    %p136 = scmp.eq.s32.totalorder %s16, 0
    %p137 = por %p135, %p136
    %p138 = scmp.le.s32.totalorder 1, %s10
    %p139 = scmp.lt.s32.totalorder %s10, 3
    %p140 = pnand %p138, %p139
    %p141 = pneg %p140
    // Predicated region
    $region9: #{recurrent_down_forward.6} parent=5 // pred_check
      _
    $region10: #{recurrent_down_forward.6} parent=5 // pred_check_branch
      %143 = sbr.rel (%p140) target = $region12
    $region11: #{recurrent_down_forward.6} parent=5 // pred_region
      %s144 = ssub.s32 %s10, 1
      // Predicated region
      $region13: #{recurrent_down_forward.6} parent=11 // pred_check
        %p145 = pneg %p57
      $region14: #{recurrent_down_forward.6} parent=11 // pred_check_branch
        %147 = sbr.rel (%p145) target = $region16
      $region15: #{recurrent_down_forward.6} parent=11 // pred_region
        _
      $region16: #{recurrent_down_forward.6} parent=11 // pred_fallthru
        _
      // Predicated region
      $region17: #{recurrent_down_forward.6} parent=11 // pred_check
        %p148 = pneg %p78
      $region18: #{recurrent_down_forward.6} parent=11 // pred_check_branch
        %150 = sbr.rel (%p148) target = $region20
      $region19: #{recurrent_down_forward.6} parent=11 // pred_region
        _
      $region20: #{recurrent_down_forward.6} parent=11 // pred_fallthru
        _
    $region12: #{recurrent_down_forward.6} parent=5 // pred_fallthru
      _
    %p151 = scmp.lt.s32.totalorder %s10, 2
    // Predicated region
    $region21: #{recurrent_down_forward.6} parent=5 // pred_check
      %p152 = pneg %p151
    $region22: #{recurrent_down_forward.6} parent=5 // pred_check_branch
      %154 = sbr.rel (%p152) target = $region24
    $region23: #{recurrent_down_forward.6} parent=5 // pred_region
      // Predicated region
      $region25: #{recurrent_down_forward.6} parent=23 // pred_check
        %p155 = pneg %p30
      $region26: #{recurrent_down_forward.6} parent=23 // pred_check_branch
        %157 = sbr.rel (%p155) target = $region28
      $region27: #{recurrent_down_forward.6} parent=23 // pred_region
        %p158 = scmp.lt.s32.totalorder %s10, 1
        %s159 = scalar_select %p158, %s10, 1
        %s160 = smul.addr %s159, 20
        %s161 = smul.addr %s160, 4
        %s162 = scalar_lea.vmem %s0, %s161
      $region28: #{recurrent_down_forward.6} parent=23 // pred_fallthru
        _
      // Predicated region
      $region29: #{recurrent_down_forward.6} parent=23 // pred_check
        %p163 = pneg %p98
      $region30: #{recurrent_down_forward.6} parent=23 // pred_check_branch
        %165 = sbr.rel (%p163) target = $region32
      $region31: #{recurrent_down_forward.6} parent=23 // pred_region
        %p166 = scmp.lt.s32.totalorder %s10, 1
        %s167 = scalar_select %p166, %s10, 1
        %s168 = smul.addr %s167, 8
        %s169 = smul.addr %s168, 4
        %s170 = scalar_lea.vmem %s3, %s169
      $region32: #{recurrent_down_forward.6} parent=23 // pred_fallthru
        _
    $region24: #{recurrent_down_forward.6} parent=5 // pred_fallthru
      _
    %p171 = scmp.le.s32.totalorder 1, %s10
    %p172 = scmp.lt.s32.totalorder %s10, 3
    %p173 = pnand %p171, %p172
    %p174 = pneg %p173
    // Predicated region
    $region33: #{recurrent_down_forward.6} parent=5 // pred_check
      _
    $region34: #{recurrent_down_forward.6} parent=5 // pred_check_branch
      %176 = sbr.rel (%p173) target = $region36
    $region35: #{recurrent_down_forward.6} parent=5 // pred_region
      %s177 = ssub.s32 %s10, 1
      %p178 = scmp.lt.s32.totalorder %s15, 1
      %s179 = scalar_select %p178, %s15, 1
      %s180 = smul.addr %s179, 20
      %s181 = smul.addr %s180, 4
      %s182 = scalar_lea.vmem %s0, %s181
      %p183 = pneg %p36
      %p184 = pneg %p33
      %p185 = pneg %p57
      %p186 = pneg %p54
      %p187 = pneg %p78
      %p188 = pneg %p75
      %p189 = scmp.lt.s32.totalorder %s15, 1
      %s190 = scalar_select %p189, %s15, 1
      %s191 = smul.addr %s190, 8
      %s192 = smul.addr %s191, 4
      %s193 = scalar_lea.vmem %s3, %s192
      %p194 = pneg %p104
      %p195 = pneg %p101
      %p196 = pneg %p130
      %p197 = pneg %p127
      %p198 = scmp.lt.s32.totalorder %s15, 1
      %s199 = scalar_select %p198, %s15, 1
      %s200 = smul.addr %s199, 8
      %s201 = smul.addr %s200, 4
      %s202 = scalar_lea.vmem %s4, %s201
      %p203 = scmp.lt.s32.totalorder %s15, 1
      %s204 = scalar_select %p203, %s15, 1
      %s205 = smul.addr %s204, 20
      %s206 = smul.addr %s205, 4
      %s207 = scalar_lea.vmem %s0, %s206
      %p208 = scmp.lt.s32.totalorder %s15, 1
      %s209 = scalar_select %p208, %s15, 1
      %s210 = smul.addr %s209, 8
      %s211 = smul.addr %s210, 4
      %s212 = scalar_lea.vmem %s3, %s211
      %p213 = scmp.lt.s32.totalorder %s15, 1
      %s214 = scalar_select %p213, %s15, 1
      %s215 = smul.addr %s214, 8
      %s216 = smul.addr %s215, 4
      %s217 = scalar_lea.vmem %s4, %s216
      %v219 = vld [vmem:[%s207] sm:$0xf]
      %v220 = vld [vmem:[%s207 + $0x8] sm:$0xf]
      %v221 = vld [vmem:[%s207 + $0x10] sm:$0xf]
      %v222 = vld [vmem:[%s207 + $0x18] sm:$0xf]
      %v223 = vld [vmem:[%s207 + $0x20] sm:$0xf]
      %v224 = vld [vmem:[%s207 + $0x28] sm:$0xf]
      %v225 = vld [vmem:[%s207 + $0x30] sm:$0xf]
      %v226 = vld [vmem:[%s207 + $0x38] sm:$0xf]
      %v227 = vmax.bf16 %v219, 0
      %v228 = vmax.bf16 %v220, 0
      %v229 = vmax.bf16 %v221, 0
      %v230 = vmax.bf16 %v222, 0
      %v231 = vmax.bf16 %v223, 0
      %v232 = vmax.bf16 %v224, 0
      %v233 = vmax.bf16 %v225, 0
      %v234 = vmax.bf16 %v226, 0
      %v235 = vld [vmem:[%s1] sm:$0xf]
      %v236 = vld [vmem:[%s1 + $0x4] sm:$0xf]
      %v237 = vld [vmem:[%s1 + $0x8] sm:$0xf]
      %v238 = vld [vmem:[%s1 + $0xc] sm:$0xf]
      %v239 = vld [vmem:[%s1 + $0x10] sm:$0xf]
      %v240 = vld [vmem:[%s1 + $0x14] sm:$0xf]
      %v241 = vld [vmem:[%s1 + $0x18] sm:$0xf]
      %v242 = vld [vmem:[%s1 + $0x1c] sm:$0xf]
      %v243 = vld [vmem:[%s207 + $0x4] sm:$0x1]
      %v244 = vld [vmem:[%s207 + $0xc] sm:$0x1]
      %v245 = vld [vmem:[%s207 + $0x14] sm:$0x1]
      %v246 = vld [vmem:[%s207 + $0x1c] sm:$0x1]
      %v247 = vld [vmem:[%s207 + $0x24] sm:$0x1]
      %v248 = vld [vmem:[%s207 + $0x2c] sm:$0x1]
      %v249 = vld [vmem:[%s207 + $0x34] sm:$0x1]
      %v250 = vld [vmem:[%s207 + $0x3c] sm:$0x1]
      %vm251 = vsmask.f32 3328
      %vm252 = vsmask.f32 7440
      %vm253 = vmor %vm251, %vm252
      %v255 = vshrl.u32 %v219, 16
      %v257 = vrot.slane %v255, 4
      %v258 = vshll.u32 %v219, 16
      %v260 = vrot.slane %v258, 5
      %v261 = vor.u32 %v257, %v260
      %v262 = vrot.slane %v261, 4
      %v264 = vshll.u32 %v243, 16
      %v266 = vrot.slane %v264, 5
      %v267 = vsel %vm253, %v262, %v266
      %v269 = vshrl.u32 %v220, 16
      %v271 = vrot.slane %v269, 4
      %v272 = vshll.u32 %v220, 16
      %v274 = vrot.slane %v272, 5
      %v275 = vor.u32 %v271, %v274
      %v276 = vrot.slane %v275, 4
      %v278 = vshll.u32 %v244, 16
      %v280 = vrot.slane %v278, 5
      %v281 = vsel %vm253, %v276, %v280
      %v283 = vshrl.u32 %v221, 16
      %v285 = vrot.slane %v283, 4
      %v286 = vshll.u32 %v221, 16
      %v288 = vrot.slane %v286, 5
      %v289 = vor.u32 %v285, %v288
      %v290 = vrot.slane %v289, 4
      %v292 = vshll.u32 %v245, 16
      %v294 = vrot.slane %v292, 5
      %v295 = vsel %vm253, %v290, %v294
      %v297 = vshrl.u32 %v222, 16
      %v299 = vrot.slane %v297, 4
      %v300 = vshll.u32 %v222, 16
      %v302 = vrot.slane %v300, 5
      %v303 = vor.u32 %v299, %v302
      %v304 = vrot.slane %v303, 4
      %v306 = vshll.u32 %v246, 16
      %v308 = vrot.slane %v306, 5
      %v309 = vsel %vm253, %v304, %v308
      %v311 = vshrl.u32 %v223, 16
      %v313 = vrot.slane %v311, 4
      %v314 = vshll.u32 %v223, 16
      %v316 = vrot.slane %v314, 5
      %v317 = vor.u32 %v313, %v316
      %v318 = vrot.slane %v317, 4
      %v320 = vshll.u32 %v247, 16
      %v322 = vrot.slane %v320, 5
      %v323 = vsel %vm253, %v318, %v322
      %v325 = vshrl.u32 %v224, 16
      %v327 = vrot.slane %v325, 4
      %v328 = vshll.u32 %v224, 16
      %v330 = vrot.slane %v328, 5
      %v331 = vor.u32 %v327, %v330
      %v332 = vrot.slane %v331, 4
      %v334 = vshll.u32 %v248, 16
      %v336 = vrot.slane %v334, 5
      %v337 = vsel %vm253, %v332, %v336
      %v339 = vshrl.u32 %v225, 16
      %v341 = vrot.slane %v339, 4
      %v342 = vshll.u32 %v225, 16
      %v344 = vrot.slane %v342, 5
      %v345 = vor.u32 %v341, %v344
      %v346 = vrot.slane %v345, 4
      %v348 = vshll.u32 %v249, 16
      %v350 = vrot.slane %v348, 5
      %v351 = vsel %vm253, %v346, %v350
      %v353 = vshrl.u32 %v226, 16
      %v355 = vrot.slane %v353, 4
      %v356 = vshll.u32 %v226, 16
      %v358 = vrot.slane %v356, 5
      %v359 = vor.u32 %v355, %v358
      %v360 = vrot.slane %v359, 4
      %v362 = vshll.u32 %v250, 16
      %v364 = vrot.slane %v362, 5
      %v365 = vsel %vm253, %v360, %v364
      %v374 = vmax.bf16 %v267, 0
      %v375 = vmax.bf16 %v281, 0
      %v376 = vmax.bf16 %v295, 0
      %v377 = vmax.bf16 %v309, 0
      %v378 = vmax.bf16 %v323, 0
      %v379 = vmax.bf16 %v337, 0
      %v380 = vmax.bf16 %v351, 0
      %v381 = vmax.bf16 %v365, 0
      %v382 = vld [vmem:[%s1 + $0x20] sm:$0xf]
      %v383 = vld [vmem:[%s1 + $0x24] sm:$0xf]
      %v384 = vld [vmem:[%s1 + $0x28] sm:$0xf]
      %v385 = vld [vmem:[%s1 + $0x2c] sm:$0xf]
      %v386 = vld [vmem:[%s1 + $0x30] sm:$0xf]
      %v387 = vld [vmem:[%s1 + $0x34] sm:$0xf]
      %v388 = vld [vmem:[%s1 + $0x38] sm:$0xf]
      %v389 = vld [vmem:[%s1 + $0x3c] sm:$0xf]
      %v398 = vunpack.c.l.b16 %v374
      %v399 = vunpack.c.l.b16 %v375
      %v400 = vunpack.c.l.b16 %v376
      %v401 = vunpack.c.l.b16 %v377
      %v402 = vunpack.c.l.b16 %v378
      %v403 = vunpack.c.l.b16 %v379
      %v404 = vunpack.c.l.b16 %v380
      %v405 = vunpack.c.l.b16 %v381
      %v406 = vpack.c.b16 %v399, %v398
      %v407 = vpack.c.b16 %v401, %v400
      %v408 = vpack.c.b16 %v403, %v402
      %v409 = vpack.c.b16 %v405, %v404
      %v418 = vunpack.c.l.b16 %v382
      %v419 = vunpack.c.l.b16 %v383
      %v420 = vunpack.c.l.b16 %v384
      %v421 = vunpack.c.l.b16 %v385
      %v422 = vunpack.c.l.b16 %v386
      %v423 = vunpack.c.l.b16 %v387
      %v424 = vunpack.c.l.b16 %v388
      %v425 = vunpack.c.l.b16 %v389
      %v426 = vpack.c.b16 %v419, %v418
      %v427 = vpack.c.b16 %v421, %v420
      %v428 = vpack.c.b16 %v423, %v422
      %v429 = vpack.c.b16 %v425, %v424
      %vm434 = vcmask 523264
      %v436 = vsel %vm434, %v406, 0
      %v439 = vsel %vm434, %v407, 0
      %v442 = vsel %vm434, %v408, 0
      %v445 = vsel %vm434, %v409, 0
      %447 = vmatprep.subr.bf16.mxu0 0
      %448 = vmatpush1.bf16.msra.mxu0 %v426
      %449 = vmatprep.subr.bf16.mxu0 0
      %450 = vmatpush1.bf16.msra.mxu0 %v427
      %451 = vmatprep.subr.bf16.mxu0 0
      %452 = vmatpush1.bf16.msra.mxu0 %v428
      %453 = vmatprep.subr.bf16.mxu0 0
      %454 = vmatpush1.bf16.msra.mxu0 %v429
      %455 = vmatprep.subr.bf16.mxu0 0
      %456 = vmatpush1.bf16.msra.mxu0 0
      %457 = vmatprep.subr.bf16.mxu0 0
      %458 = vmatpush1.bf16.msra.mxu0 0
      %459 = vmatprep.subr.bf16.mxu0 0
      %460 = vmatpush1.bf16.msra.mxu0 0
      %461 = vmatprep.subr.bf16.mxu0 0
      %462 = vmatpush1.bf16.msra.mxu0 0
      %463 = vmatprep.subr.bf16.mxu0 0
      %464 = vmatpush1.bf16.msra.mxu0 0
      %465 = vmatprep.subr.bf16.mxu0 0
      %466 = vmatpush1.bf16.msra.mxu0 0
      %467 = vmatprep.subr.bf16.mxu0 0
      %468 = vmatpush1.bf16.msra.mxu0 0
      %469 = vmatprep.subr.bf16.mxu0 0
      %470 = vmatpush1.bf16.msra.mxu0 0
      %471 = vmatprep.subr.bf16.mxu0 0
      %472 = vmatpush1.bf16.msra.mxu0 0
      %473 = vmatprep.subr.bf16.mxu0 0
      %474 = vmatpush1.bf16.msra.mxu0 0
      %475 = vmatprep.subr.bf16.mxu0 0
      %476 = vmatpush1.bf16.msra.mxu0 0
      %477 = vmatprep.subr.bf16.mxu0 0
      %478 = vmatpush1.bf16.msra.mxu0 0
      %479 = vmatprep.mubr.bf16.mxu0 0
      %480 = vmatmul.mubr.bf16.gmra.mrb[0].mxu0 %v436
      %v481 = vpop.f32.mrb[0].mxu0
      %v482 = vadd.f32 0.0, %v481
      %v483 = vpop.f32.mrb[0].mxu0
      %v484 = vpop.f32.mrb[0].mxu0
      %v485 = vadd.f32 0.0, %v484
      %v486 = vpop.f32.mrb[0].mxu0
      %487 = vmatprep.mubr.bf16.mxu0 0
      %488 = vmatmul.mubr.bf16.gmra.mrb[0].mxu0 %v439
      %v489 = vpop.f32.mrb[0].mxu0
      %v490 = vadd.f32 0.0, %v489
      %v491 = vpop.f32.mrb[0].mxu0
      %v492 = vpop.f32.mrb[0].mxu0
      %v493 = vadd.f32 0.0, %v492
      %v494 = vpop.f32.mrb[0].mxu0
      %495 = vmatprep.mubr.bf16.mxu0 0
      %496 = vmatmul.mubr.bf16.gmra.mrb[0].mxu0 %v442
      %v497 = vpop.f32.mrb[0].mxu0
      %v498 = vadd.f32 0.0, %v497
      %v499 = vpop.f32.mrb[0].mxu0
      %v500 = vpop.f32.mrb[0].mxu0
      %v501 = vadd.f32 0.0, %v500
      %v502 = vpop.f32.mrb[0].mxu0
      %503 = vmatprep.mubr.bf16.mxu0 0
      %504 = vmatmul.mubr.bf16.gmra.mrb[0].mxu0 %v445
      %v505 = vpop.f32.mrb[0].mxu0
      %v506 = vadd.f32 0.0, %v505
      %v507 = vpop.f32.mrb[0].mxu0
      %v508 = vpop.f32.mrb[0].mxu0
      %v509 = vadd.f32 0.0, %v508
      %v510 = vpop.f32.mrb[0].mxu0
      %511 = vdwg.mxu0
      %v520 = vunpack.c.l.b16 %v227
      %v521 = vunpack.c.l.b16 %v228
      %v522 = vunpack.c.l.b16 %v229
      %v523 = vunpack.c.l.b16 %v230
      %v524 = vunpack.c.l.b16 %v231
      %v525 = vunpack.c.l.b16 %v232
      %v526 = vunpack.c.l.b16 %v233
      %v527 = vunpack.c.l.b16 %v234
      %v528 = vpack.c.b16 %v521, %v520
      %v529 = vpack.c.b16 %v523, %v522
      %v530 = vpack.c.b16 %v525, %v524
      %v531 = vpack.c.b16 %v527, %v526
      %v540 = vunpack.c.l.b16 %v235
      %v541 = vunpack.c.l.b16 %v236
      %v542 = vunpack.c.l.b16 %v237
      %v543 = vunpack.c.l.b16 %v238
      %v544 = vunpack.c.l.b16 %v239
      %v545 = vunpack.c.l.b16 %v240
      %v546 = vunpack.c.l.b16 %v241
      %v547 = vunpack.c.l.b16 %v242
      %v548 = vpack.c.b16 %v541, %v540
      %v549 = vpack.c.b16 %v543, %v542
      %v550 = vpack.c.b16 %v545, %v544
      %v551 = vpack.c.b16 %v547, %v546
      %v557 = vsel %vm434, %v528, 0
      %v560 = vsel %vm434, %v529, 0
      %v563 = vsel %vm434, %v530, 0
      %v566 = vsel %vm434, %v531, 0
      %568 = vmatprep.subr.bf16.mxu0 0
      %569 = vmatpush1.bf16.msra.mxu0 %v548
      %570 = vmatprep.subr.bf16.mxu0 0
      %571 = vmatpush1.bf16.msra.mxu0 %v549
      %572 = vmatprep.subr.bf16.mxu0 0
      %573 = vmatpush1.bf16.msra.mxu0 %v550
      %574 = vmatprep.subr.bf16.mxu0 0
      %575 = vmatpush1.bf16.msra.mxu0 %v551
      %576 = vmatprep.subr.bf16.mxu0 0
      %577 = vmatpush1.bf16.msra.mxu0 0
      %578 = vmatprep.subr.bf16.mxu0 0
      %579 = vmatpush1.bf16.msra.mxu0 0
      %580 = vmatprep.subr.bf16.mxu0 0
      %581 = vmatpush1.bf16.msra.mxu0 0
      %582 = vmatprep.subr.bf16.mxu0 0
      %583 = vmatpush1.bf16.msra.mxu0 0
      %584 = vmatprep.subr.bf16.mxu0 0
      %585 = vmatpush1.bf16.msra.mxu0 0
      %586 = vmatprep.subr.bf16.mxu0 0
      %587 = vmatpush1.bf16.msra.mxu0 0
      %588 = vmatprep.subr.bf16.mxu0 0
      %589 = vmatpush1.bf16.msra.mxu0 0
      %590 = vmatprep.subr.bf16.mxu0 0
      %591 = vmatpush1.bf16.msra.mxu0 0
      %592 = vmatprep.subr.bf16.mxu0 0
      %593 = vmatpush1.bf16.msra.mxu0 0
      %594 = vmatprep.subr.bf16.mxu0 0
      %595 = vmatpush1.bf16.msra.mxu0 0
      %596 = vmatprep.subr.bf16.mxu0 0
      %597 = vmatpush1.bf16.msra.mxu0 0
      %598 = vmatprep.subr.bf16.mxu0 0
      %599 = vmatpush1.bf16.msra.mxu0 0
      %600 = vmatprep.mubr.bf16.mxu0 0
      %601 = vmatmul.mubr.bf16.gmra.mrb[0].mxu0 %v557
      %v602 = vpop.f32.mrb[0].mxu0
      %v603 = vadd.f32 %v482, %v602
      %v604 = vpop.f32.mrb[0].mxu0
      %v605 = vpop.f32.mrb[0].mxu0
      %v606 = vadd.f32 %v485, %v605
      %v607 = vpop.f32.mrb[0].mxu0
      %608 = vmatprep.mubr.bf16.mxu0 0
      %609 = vmatmul.mubr.bf16.gmra.mrb[0].mxu0 %v560
      %v610 = vpop.f32.mrb[0].mxu0
      %v611 = vadd.f32 %v490, %v610
      %v612 = vpop.f32.mrb[0].mxu0
      %v613 = vpop.f32.mrb[0].mxu0
      %v614 = vadd.f32 %v493, %v613
      %v615 = vpop.f32.mrb[0].mxu0
      %616 = vmatprep.mubr.bf16.mxu0 0
      %617 = vmatmul.mubr.bf16.gmra.mrb[0].mxu0 %v563
      %v618 = vpop.f32.mrb[0].mxu0
      %v619 = vadd.f32 %v498, %v618
      %v620 = vpop.f32.mrb[0].mxu0
      %v621 = vpop.f32.mrb[0].mxu0
      %v622 = vadd.f32 %v501, %v621
      %v623 = vpop.f32.mrb[0].mxu0
      %624 = vmatprep.mubr.bf16.mxu0 0
      %625 = vmatmul.mubr.bf16.gmra.mrb[0].mxu0 %v566
      %v626 = vpop.f32.mrb[0].mxu0
      %v627 = vadd.f32 %v506, %v626
      %v628 = vpop.f32.mrb[0].mxu0
      %v629 = vpop.f32.mrb[0].mxu0
      %v630 = vadd.f32 %v509, %v629
      %v631 = vpop.f32.mrb[0].mxu0
      %632 = vdwg.mxu0
      %v633 = vld [vmem:[%s207] sm:$0xe]
      %v634 = vld [vmem:[%s207 + $0x8] sm:$0xe]
      %v635 = vld [vmem:[%s207 + $0x10] sm:$0xe]
      %v636 = vld [vmem:[%s207 + $0x18] sm:$0xe]
      %v637 = vld [vmem:[%s207 + $0x20] sm:$0xe]
      %v638 = vld [vmem:[%s207 + $0x28] sm:$0xe]
      %v639 = vld [vmem:[%s207 + $0x30] sm:$0xe]
      %v640 = vld [vmem:[%s207 + $0x38] sm:$0xe]
      %vm657 = vcmask 1042432
      %vm658 = vcmask 1046532
      %vm659 = vmor %vm657, %vm658
      %v660 = vrot.slane %v633, 5
      %v661 = vrot.slane %v660, 4
      %v662 = vrot.slane %v243, 5
      %v663 = vsel %vm659, %v661, %v662
      %v664 = vrot.slane %v634, 5
      %v665 = vrot.slane %v664, 4
      %v666 = vrot.slane %v244, 5
      %v667 = vsel %vm659, %v665, %v666
      %v668 = vrot.slane %v635, 5
      %v669 = vrot.slane %v668, 4
      %v670 = vrot.slane %v245, 5
      %v671 = vsel %vm659, %v669, %v670
      %v672 = vrot.slane %v636, 5
      %v673 = vrot.slane %v672, 4
      %v674 = vrot.slane %v246, 5
      %v675 = vsel %vm659, %v673, %v674
      %v676 = vrot.slane %v637, 5
      %v677 = vrot.slane %v676, 4
      %v678 = vrot.slane %v247, 5
      %v679 = vsel %vm659, %v677, %v678
      %v680 = vrot.slane %v638, 5
      %v681 = vrot.slane %v680, 4
      %v682 = vrot.slane %v248, 5
      %v683 = vsel %vm659, %v681, %v682
      %v684 = vrot.slane %v639, 5
      %v685 = vrot.slane %v684, 4
      %v686 = vrot.slane %v249, 5
      %v687 = vsel %vm659, %v685, %v686
      %v688 = vrot.slane %v640, 5
      %v689 = vrot.slane %v688, 4
      %v690 = vrot.slane %v250, 5
      %v691 = vsel %vm659, %v689, %v690
      %v700 = vmax.bf16 %v663, 0
      %v701 = vmax.bf16 %v667, 0
      %v702 = vmax.bf16 %v671, 0
      %v703 = vmax.bf16 %v675, 0
      %v704 = vmax.bf16 %v679, 0
      %v705 = vmax.bf16 %v683, 0
      %v706 = vmax.bf16 %v687, 0
      %v707 = vmax.bf16 %v691, 0
      %v708 = vld [vmem:[%s1 + $0x40] sm:$0xf]
      %v709 = vld [vmem:[%s1 + $0x44] sm:$0xf]
      %v710 = vld [vmem:[%s1 + $0x48] sm:$0xf]
      %v711 = vld [vmem:[%s1 + $0x4c] sm:$0xf]
      %v712 = vld [vmem:[%s1 + $0x50] sm:$0xf]
      %v713 = vld [vmem:[%s1 + $0x54] sm:$0xf]
      %v714 = vld [vmem:[%s1 + $0x58] sm:$0xf]
      %v715 = vld [vmem:[%s1 + $0x5c] sm:$0xf]
      %v724 = vunpack.c.l.b16 %v700
      %v725 = vunpack.c.l.b16 %v701
      %v726 = vunpack.c.l.b16 %v702
      %v727 = vunpack.c.l.b16 %v703
      %v728 = vunpack.c.l.b16 %v704
      %v729 = vunpack.c.l.b16 %v705
      %v730 = vunpack.c.l.b16 %v706
      %v731 = vunpack.c.l.b16 %v707
      %v732 = vpack.c.b16 %v725, %v724
      %v733 = vpack.c.b16 %v727, %v726
      %v734 = vpack.c.b16 %v729, %v728
      %v735 = vpack.c.b16 %v731, %v730
      %v744 = vunpack.c.l.b16 %v708
      %v745 = vunpack.c.l.b16 %v709
      %v746 = vunpack.c.l.b16 %v710
      %v747 = vunpack.c.l.b16 %v711
      %v748 = vunpack.c.l.b16 %v712
      %v749 = vunpack.c.l.b16 %v713
      %v750 = vunpack.c.l.b16 %v714
      %v751 = vunpack.c.l.b16 %v715
      %v752 = vpack.c.b16 %v745, %v744
      %v753 = vpack.c.b16 %v747, %v746
      %v754 = vpack.c.b16 %v749, %v748
      %v755 = vpack.c.b16 %v751, %v750
      %v761 = vsel %vm434, %v732, 0
      %v764 = vsel %vm434, %v733, 0
      %v767 = vsel %vm434, %v734, 0
      %v770 = vsel %vm434, %v735, 0
      %772 = vmatprep.subr.bf16.mxu0 0
      %773 = vmatpush1.bf16.msra.mxu0 %v752
      %774 = vmatprep.subr.bf16.mxu0 0
      %775 = vmatpush1.bf16.msra.mxu0 %v753
      %776 = vmatprep.subr.bf16.mxu0 0
      %777 = vmatpush1.bf16.msra.mxu0 %v754
      %778 = vmatprep.subr.bf16.mxu0 0
      %779 = vmatpush1.bf16.msra.mxu0 %v755
      %780 = vmatprep.subr.bf16.mxu0 0
      %781 = vmatpush1.bf16.msra.mxu0 0
      %782 = vmatprep.subr.bf16.mxu0 0
      %783 = vmatpush1.bf16.msra.mxu0 0
      %784 = vmatprep.subr.bf16.mxu0 0
      %785 = vmatpush1.bf16.msra.mxu0 0
      %786 = vmatprep.subr.bf16.mxu0 0
      %787 = vmatpush1.bf16.msra.mxu0 0
      %788 = vmatprep.subr.bf16.mxu0 0
      %789 = vmatpush1.bf16.msra.mxu0 0
      %790 = vmatprep.subr.bf16.mxu0 0
      %791 = vmatpush1.bf16.msra.mxu0 0
      %792 = vmatprep.subr.bf16.mxu0 0
      %793 = vmatpush1.bf16.msra.mxu0 0
      %794 = vmatprep.subr.bf16.mxu0 0
      %795 = vmatpush1.bf16.msra.mxu0 0
      %796 = vmatprep.subr.bf16.mxu0 0
      %797 = vmatpush1.bf16.msra.mxu0 0
      %798 = vmatprep.subr.bf16.mxu0 0
      %799 = vmatpush1.bf16.msra.mxu0 0
      %800 = vmatprep.subr.bf16.mxu0 0
      %801 = vmatpush1.bf16.msra.mxu0 0
      %802 = vmatprep.subr.bf16.mxu0 0
      %803 = vmatpush1.bf16.msra.mxu0 0
      %804 = vmatprep.mubr.bf16.mxu0 0
      %805 = vmatmul.mubr.bf16.gmra.mrb[0].mxu0 %v761
      %v806 = vpop.f32.mrb[0].mxu0
      %v807 = vadd.f32 0.0, %v806
      %v808 = vpop.f32.mrb[0].mxu0
      %v809 = vpop.f32.mrb[0].mxu0
      %v810 = vadd.f32 0.0, %v809
      %v811 = vpop.f32.mrb[0].mxu0
      %812 = vmatprep.mubr.bf16.mxu0 0
      %813 = vmatmul.mubr.bf16.gmra.mrb[0].mxu0 %v764
      %v814 = vpop.f32.mrb[0].mxu0
      %v815 = vadd.f32 0.0, %v814
      %v816 = vpop.f32.mrb[0].mxu0
      %v817 = vpop.f32.mrb[0].mxu0
      %v818 = vadd.f32 0.0, %v817
      %v819 = vpop.f32.mrb[0].mxu0
      %820 = vmatprep.mubr.bf16.mxu0 0
      %821 = vmatmul.mubr.bf16.gmra.mrb[0].mxu0 %v767
      %v822 = vpop.f32.mrb[0].mxu0
      %v823 = vadd.f32 0.0, %v822
      %v824 = vpop.f32.mrb[0].mxu0
      %v825 = vpop.f32.mrb[0].mxu0
      %v826 = vadd.f32 0.0, %v825
      %v827 = vpop.f32.mrb[0].mxu0
      %828 = vmatprep.mubr.bf16.mxu0 0
      %829 = vmatmul.mubr.bf16.gmra.mrb[0].mxu0 %v770
      %v830 = vpop.f32.mrb[0].mxu0
      %v831 = vadd.f32 0.0, %v830
      %v832 = vpop.f32.mrb[0].mxu0
      %v833 = vpop.f32.mrb[0].mxu0
      %v834 = vadd.f32 0.0, %v833
      %v835 = vpop.f32.mrb[0].mxu0
      %836 = vdwg.mxu0
      %v837 = vadd.f32 %v603, %v807
      %v838 = vadd.f32 %v606, %v810
      %v839 = vadd.f32 %v611, %v815
      %v840 = vadd.f32 %v614, %v818
      %v841 = vadd.f32 %v619, %v823
      %v842 = vadd.f32 %v622, %v826
      %v843 = vadd.f32 %v627, %v831
      %v844 = vadd.f32 %v630, %v834
      %s845 = scalar_lea.vmem %s207, 8
      %v846 = vld [vmem:[%s845] sm:$0xf]
      %v847 = vld [vmem:[%s845 + $0x8] sm:$0xf]
      %v848 = vld [vmem:[%s845 + $0x10] sm:$0xf]
      %v849 = vld [vmem:[%s845 + $0x18] sm:$0xf]
      %v850 = vld [vmem:[%s845 + $0x20] sm:$0xf]
      %v851 = vld [vmem:[%s845 + $0x28] sm:$0xf]
      %v852 = vld [vmem:[%s845 + $0x30] sm:$0xf]
      %v853 = vld [vmem:[%s845 + $0x38] sm:$0xf]
      %v854 = vmax.bf16 %v846, 0
      %v855 = vmax.bf16 %v847, 0
      %v856 = vmax.bf16 %v848, 0
      %v857 = vmax.bf16 %v849, 0
      %v858 = vmax.bf16 %v850, 0
      %v859 = vmax.bf16 %v851, 0
      %v860 = vmax.bf16 %v852, 0
      %v861 = vmax.bf16 %v853, 0
      %v862 = vld [vmem:[%s1 + $0x60] sm:$0xf]
      %v863 = vld [vmem:[%s1 + $0x64] sm:$0xf]
      %v864 = vld [vmem:[%s1 + $0x68] sm:$0xf]
      %v865 = vld [vmem:[%s1 + $0x6c] sm:$0xf]
      %v866 = vld [vmem:[%s1 + $0x70] sm:$0xf]
      %v867 = vld [vmem:[%s1 + $0x74] sm:$0xf]
      %v868 = vld [vmem:[%s1 + $0x78] sm:$0xf]
      %v869 = vld [vmem:[%s1 + $0x7c] sm:$0xf]
      %v878 = vunpack.c.l.b16 %v854
      %v879 = vunpack.c.l.b16 %v855
      %v880 = vunpack.c.l.b16 %v856
      %v881 = vunpack.c.l.b16 %v857
      %v882 = vunpack.c.l.b16 %v858
      %v883 = vunpack.c.l.b16 %v859
      %v884 = vunpack.c.l.b16 %v860
      %v885 = vunpack.c.l.b16 %v861
      %v886 = vpack.c.b16 %v879, %v878
      %v887 = vpack.c.b16 %v881, %v880
      %v888 = vpack.c.b16 %v883, %v882
      %v889 = vpack.c.b16 %v885, %v884
      %v898 = vunpack.c.l.b16 %v862
      %v899 = vunpack.c.l.b16 %v863
      %v900 = vunpack.c.l.b16 %v864
      %v901 = vunpack.c.l.b16 %v865
      %v902 = vunpack.c.l.b16 %v866
      %v903 = vunpack.c.l.b16 %v867
      %v904 = vunpack.c.l.b16 %v868
      %v905 = vunpack.c.l.b16 %v869
      %v906 = vpack.c.b16 %v899, %v898
      %v907 = vpack.c.b16 %v901, %v900
      %v908 = vpack.c.b16 %v903, %v902
      %v909 = vpack.c.b16 %v905, %v904
      %v915 = vsel %vm434, %v886, 0
      %v918 = vsel %vm434, %v887, 0
      %v921 = vsel %vm434, %v888, 0
      %v924 = vsel %vm434, %v889, 0
      %926 = vmatprep.subr.bf16.mxu0 0
      %927 = vmatpush1.bf16.msra.mxu0 %v906
      %928 = vmatprep.subr.bf16.mxu0 0
      %929 = vmatpush1.bf16.msra.mxu0 %v907
      %930 = vmatprep.subr.bf16.mxu0 0
      %931 = vmatpush1.bf16.msra.mxu0 %v908
      %932 = vmatprep.subr.bf16.mxu0 0
      %933 = vmatpush1.bf16.msra.mxu0 %v909
      %934 = vmatprep.subr.bf16.mxu0 0
      %935 = vmatpush1.bf16.msra.mxu0 0
      %936 = vmatprep.subr.bf16.mxu0 0
      %937 = vmatpush1.bf16.msra.mxu0 0
      %938 = vmatprep.subr.bf16.mxu0 0
      %939 = vmatpush1.bf16.msra.mxu0 0
      %940 = vmatprep.subr.bf16.mxu0 0
      %941 = vmatpush1.bf16.msra.mxu0 0
      %942 = vmatprep.subr.bf16.mxu0 0
      %943 = vmatpush1.bf16.msra.mxu0 0
      %944 = vmatprep.subr.bf16.mxu0 0
      %945 = vmatpush1.bf16.msra.mxu0 0
      %946 = vmatprep.subr.bf16.mxu0 0
      %947 = vmatpush1.bf16.msra.mxu0 0
      %948 = vmatprep.subr.bf16.mxu0 0
      %949 = vmatpush1.bf16.msra.mxu0 0
      %950 = vmatprep.subr.bf16.mxu0 0
      %951 = vmatpush1.bf16.msra.mxu0 0
      %952 = vmatprep.subr.bf16.mxu0 0
      %953 = vmatpush1.bf16.msra.mxu0 0
      %954 = vmatprep.subr.bf16.mxu0 0
      %955 = vmatpush1.bf16.msra.mxu0 0
      %956 = vmatprep.subr.bf16.mxu0 0
      %957 = vmatpush1.bf16.msra.mxu0 0
      %958 = vmatprep.mubr.bf16.mxu0 0
      %959 = vmatmul.mubr.bf16.gmra.mrb[0].mxu0 %v915
      %v960 = vpop.f32.mrb[0].mxu0
      %v961 = vadd.f32 0.0, %v960
      %v962 = vpop.f32.mrb[0].mxu0
      %v963 = vpop.f32.mrb[0].mxu0
      %v964 = vadd.f32 0.0, %v963
      %v965 = vpop.f32.mrb[0].mxu0
      %966 = vmatprep.mubr.bf16.mxu0 0
      %967 = vmatmul.mubr.bf16.gmra.mrb[0].mxu0 %v918
      %v968 = vpop.f32.mrb[0].mxu0
      %v969 = vadd.f32 0.0, %v968
      %v970 = vpop.f32.mrb[0].mxu0
      %v971 = vpop.f32.mrb[0].mxu0
      %v972 = vadd.f32 0.0, %v971
      %v973 = vpop.f32.mrb[0].mxu0
      %974 = vmatprep.mubr.bf16.mxu0 0
      %975 = vmatmul.mubr.bf16.gmra.mrb[0].mxu0 %v921
      %v976 = vpop.f32.mrb[0].mxu0
      %v977 = vadd.f32 0.0, %v976
      %v978 = vpop.f32.mrb[0].mxu0
      %v979 = vpop.f32.mrb[0].mxu0
      %v980 = vadd.f32 0.0, %v979
      %v981 = vpop.f32.mrb[0].mxu0
      %982 = vmatprep.mubr.bf16.mxu0 0
      %983 = vmatmul.mubr.bf16.gmra.mrb[0].mxu0 %v924
      %v984 = vpop.f32.mrb[0].mxu0
      %v985 = vadd.f32 0.0, %v984
      %v986 = vpop.f32.mrb[0].mxu0
      %v987 = vpop.f32.mrb[0].mxu0
      %v988 = vadd.f32 0.0, %v987
      %v989 = vpop.f32.mrb[0].mxu0
      %990 = vdwg.mxu0
      %v991 = vadd.f32 %v837, %v961
      %v992 = vadd.f32 %v838, %v964
      %v993 = vadd.f32 %v839, %v969
      %v994 = vadd.f32 %v840, %v972
      %v995 = vadd.f32 %v841, %v977
      %v996 = vadd.f32 %v842, %v980
      %v997 = vadd.f32 %v843, %v985
      %v998 = vadd.f32 %v844, %v988
      %v999 = vld [vmem:[%s845] sm:$0xf]
      %v1000 = vld [vmem:[%s845 + $0x4] sm:$0x1]
      %v1001 = vld [vmem:[%s845 + $0x8] sm:$0xf]
      %v1002 = vld [vmem:[%s845 + $0xc] sm:$0x1]
      %v1003 = vld [vmem:[%s845 + $0x10] sm:$0xf]
      %v1004 = vld [vmem:[%s845 + $0x14] sm:$0x1]
      %v1005 = vld [vmem:[%s845 + $0x18] sm:$0xf]
      %v1006 = vld [vmem:[%s845 + $0x1c] sm:$0x1]
      %v1007 = vld [vmem:[%s845 + $0x20] sm:$0xf]
      %v1008 = vld [vmem:[%s845 + $0x24] sm:$0x1]
      %v1009 = vld [vmem:[%s845 + $0x28] sm:$0xf]
      %v1010 = vld [vmem:[%s845 + $0x2c] sm:$0x1]
      %v1011 = vld [vmem:[%s845 + $0x30] sm:$0xf]
      %v1012 = vld [vmem:[%s845 + $0x34] sm:$0x1]
      %v1013 = vld [vmem:[%s845 + $0x38] sm:$0xf]
      %v1014 = vld [vmem:[%s845 + $0x3c] sm:$0x1]
      %v1016 = vshrl.u32 %v999, 16
      %v1018 = vrot.slane %v1016, 4
      %v1019 = vshll.u32 %v999, 16
      %v1021 = vrot.slane %v1019, 5
      %v1022 = vor.u32 %v1018, %v1021
      %v1023 = vrot.slane %v1022, 4
      %v1025 = vshll.u32 %v1000, 16
      %v1027 = vrot.slane %v1025, 5
      %v1028 = vsel %vm253, %v1023, %v1027
      %v1030 = vshrl.u32 %v1001, 16
      %v1032 = vrot.slane %v1030, 4
      %v1033 = vshll.u32 %v1001, 16
      %v1035 = vrot.slane %v1033, 5
      %v1036 = vor.u32 %v1032, %v1035
      %v1037 = vrot.slane %v1036, 4
      %v1039 = vshll.u32 %v1002, 16
      %v1041 = vrot.slane %v1039, 5
      %v1042 = vsel %vm253, %v1037, %v1041
      %v1044 = vshrl.u32 %v1003, 16
      %v1046 = vrot.slane %v1044, 4
      %v1047 = vshll.u32 %v1003, 16
      %v1049 = vrot.slane %v1047, 5
      %v1050 = vor.u32 %v1046, %v1049
      %v1051 = vrot.slane %v1050, 4
      %v1053 = vshll.u32 %v1004, 16
      %v1055 = vrot.slane %v1053, 5
      %v1056 = vsel %vm253, %v1051, %v1055
      %v1058 = vshrl.u32 %v1005, 16
      %v1060 = vrot.slane %v1058, 4
      %v1061 = vshll.u32 %v1005, 16
      %v1063 = vrot.slane %v1061, 5
      %v1064 = vor.u32 %v1060, %v1063
      %v1065 = vrot.slane %v1064, 4
      %v1067 = vshll.u32 %v1006, 16
      %v1069 = vrot.slane %v1067, 5
      %v1070 = vsel %vm253, %v1065, %v1069
      %v1072 = vshrl.u32 %v1007, 16
      %v1074 = vrot.slane %v1072, 4
      %v1075 = vshll.u32 %v1007, 16
      %v1077 = vrot.slane %v1075, 5
      %v1078 = vor.u32 %v1074, %v1077
      %v1079 = vrot.slane %v1078, 4
      %v1081 = vshll.u32 %v1008, 16
      %v1083 = vrot.slane %v1081, 5
      %v1084 = vsel %vm253, %v1079, %v1083
      %v1086 = vshrl.u32 %v1009, 16
      %v1088 = vrot.slane %v1086, 4
      %v1089 = vshll.u32 %v1009, 16
      %v1091 = vrot.slane %v1089, 5
      %v1092 = vor.u32 %v1088, %v1091
      %v1093 = vrot.slane %v1092, 4
      %v1095 = vshll.u32 %v1010, 16
      %v1097 = vrot.slane %v1095, 5
      %v1098 = vsel %vm253, %v1093, %v1097
      %v1100 = vshrl.u32 %v1011, 16
      %v1102 = vrot.slane %v1100, 4
      %v1103 = vshll.u32 %v1011, 16
      %v1105 = vrot.slane %v1103, 5
      %v1106 = vor.u32 %v1102, %v1105
      %v1107 = vrot.slane %v1106, 4
      %v1109 = vshll.u32 %v1012, 16
      %v1111 = vrot.slane %v1109, 5
      %v1112 = vsel %vm253, %v1107, %v1111
      %v1114 = vshrl.u32 %v1013, 16
      %v1116 = vrot.slane %v1114, 4
      %v1117 = vshll.u32 %v1013, 16
      %v1119 = vrot.slane %v1117, 5
      %v1120 = vor.u32 %v1116, %v1119
      %v1121 = vrot.slane %v1120, 4
      %v1123 = vshll.u32 %v1014, 16
      %v1125 = vrot.slane %v1123, 5
      %v1126 = vsel %vm253, %v1121, %v1125
      %v1135 = vmax.bf16 %v1028, 0
      %v1136 = vmax.bf16 %v1042, 0
      %v1137 = vmax.bf16 %v1056, 0
      %v1138 = vmax.bf16 %v1070, 0
      %v1139 = vmax.bf16 %v1084, 0
      %v1140 = vmax.bf16 %v1098, 0
      %v1141 = vmax.bf16 %v1112, 0
      %v1142 = vmax.bf16 %v1126, 0
      %v1143 = vld [vmem:[%s1 + $0x80] sm:$0xf]
      %v1144 = vld [vmem:[%s1 + $0x84] sm:$0xf]
      %v1145 = vld [vmem:[%s1 + $0x88] sm:$0xf]
      %v1146 = vld [vmem:[%s1 + $0x8c] sm:$0xf]
      %v1147 = vld [vmem:[%s1 + $0x90] sm:$0xf]
      %v1148 = vld [vmem:[%s1 + $0x94] sm:$0xf]
      %v1149 = vld [vmem:[%s1 + $0x98] sm:$0xf]
      %v1150 = vld [vmem:[%s1 + $0x9c] sm:$0xf]
      %v1159 = vunpack.c.l.b16 %v1135
      %v1160 = vunpack.c.l.b16 %v1136
      %v1161 = vunpack.c.l.b16 %v1137
      %v1162 = vunpack.c.l.b16 %v1138
      %v1163 = vunpack.c.l.b16 %v1139
      %v1164 = vunpack.c.l.b16 %v1140
      %v1165 = vunpack.c.l.b16 %v1141
      %v1166 = vunpack.c.l.b16 %v1142
      %v1167 = vpack.c.b16 %v1160, %v1159
      %v1168 = vpack.c.b16 %v1162, %v1161
      %v1169 = vpack.c.b16 %v1164, %v1163
      %v1170 = vpack.c.b16 %v1166, %v1165
      %v1179 = vunpack.c.l.b16 %v1143
      %v1180 = vunpack.c.l.b16 %v1144
      %v1181 = vunpack.c.l.b16 %v1145
      %v1182 = vunpack.c.l.b16 %v1146
      %v1183 = vunpack.c.l.b16 %v1147
      %v1184 = vunpack.c.l.b16 %v1148
      %v1185 = vunpack.c.l.b16 %v1149
      %v1186 = vunpack.c.l.b16 %v1150
      %v1187 = vpack.c.b16 %v1180, %v1179
      %v1188 = vpack.c.b16 %v1182, %v1181
      %v1189 = vpack.c.b16 %v1184, %v1183
      %v1190 = vpack.c.b16 %v1186, %v1185
      %v1196 = vsel %vm434, %v1167, 0
      %v1199 = vsel %vm434, %v1168, 0
      %v1202 = vsel %vm434, %v1169, 0
      %v1205 = vsel %vm434, %v1170, 0
      %1207 = vmatprep.subr.bf16.mxu0 0
      %1208 = vmatpush1.bf16.msra.mxu0 %v1187
      %1209 = vmatprep.subr.bf16.mxu0 0
      %1210 = vmatpush1.bf16.msra.mxu0 %v1188
      %1211 = vmatprep.subr.bf16.mxu0 0
      %1212 = vmatpush1.bf16.msra.mxu0 %v1189
      %1213 = vmatprep.subr.bf16.mxu0 0
      %1214 = vmatpush1.bf16.msra.mxu0 %v1190
      %1215 = vmatprep.subr.bf16.mxu0 0
      %1216 = vmatpush1.bf16.msra.mxu0 0
      %1217 = vmatprep.subr.bf16.mxu0 0
      %1218 = vmatpush1.bf16.msra.mxu0 0
      %1219 = vmatprep.subr.bf16.mxu0 0
      %1220 = vmatpush1.bf16.msra.mxu0 0
      %1221 = vmatprep.subr.bf16.mxu0 0
      %1222 = vmatpush1.bf16.msra.mxu0 0
      %1223 = vmatprep.subr.bf16.mxu0 0
      %1224 = vmatpush1.bf16.msra.mxu0 0
      %1225 = vmatprep.subr.bf16.mxu0 0
      %1226 = vmatpush1.bf16.msra.mxu0 0
      %1227 = vmatprep.subr.bf16.mxu0 0
      %1228 = vmatpush1.bf16.msra.mxu0 0
      %1229 = vmatprep.subr.bf16.mxu0 0
      %1230 = vmatpush1.bf16.msra.mxu0 0
      %1231 = vmatprep.subr.bf16.mxu0 0
      %1232 = vmatpush1.bf16.msra.mxu0 0
      %1233 = vmatprep.subr.bf16.mxu0 0
      %1234 = vmatpush1.bf16.msra.mxu0 0
      %1235 = vmatprep.subr.bf16.mxu0 0
      %1236 = vmatpush1.bf16.msra.mxu0 0
      %1237 = vmatprep.subr.bf16.mxu0 0
      %1238 = vmatpush1.bf16.msra.mxu0 0
      %1239 = vmatprep.mubr.bf16.mxu0 0
      %1240 = vmatmul.mubr.bf16.gmra.mrb[0].mxu0 %v1196
      %v1241 = vpop.f32.mrb[0].mxu0
      %v1242 = vadd.f32 0.0, %v1241
      %v1243 = vpop.f32.mrb[0].mxu0
      %v1244 = vpop.f32.mrb[0].mxu0
      %v1245 = vadd.f32 0.0, %v1244
      %v1246 = vpop.f32.mrb[0].mxu0
      %1247 = vmatprep.mubr.bf16.mxu0 0
      %1248 = vmatmul.mubr.bf16.gmra.mrb[0].mxu0 %v1199
      %v1249 = vpop.f32.mrb[0].mxu0
      %v1250 = vadd.f32 0.0, %v1249
      %v1251 = vpop.f32.mrb[0].mxu0
      %v1252 = vpop.f32.mrb[0].mxu0
      %v1253 = vadd.f32 0.0, %v1252
      %v1254 = vpop.f32.mrb[0].mxu0
      %1255 = vmatprep.mubr.bf16.mxu0 0
      %1256 = vmatmul.mubr.bf16.gmra.mrb[0].mxu0 %v1202
      %v1257 = vpop.f32.mrb[0].mxu0
      %v1258 = vadd.f32 0.0, %v1257
      %v1259 = vpop.f32.mrb[0].mxu0
      %v1260 = vpop.f32.mrb[0].mxu0
      %v1261 = vadd.f32 0.0, %v1260
      %v1262 = vpop.f32.mrb[0].mxu0
      %1263 = vmatprep.mubr.bf16.mxu0 0
      %1264 = vmatmul.mubr.bf16.gmra.mrb[0].mxu0 %v1205
      %v1265 = vpop.f32.mrb[0].mxu0
      %v1266 = vadd.f32 0.0, %v1265
      %v1267 = vpop.f32.mrb[0].mxu0
      %v1268 = vpop.f32.mrb[0].mxu0
      %v1269 = vadd.f32 0.0, %v1268
      %v1270 = vpop.f32.mrb[0].mxu0
      %1271 = vdwg.mxu0
      %v1272 = vadd.f32 %v991, %v1242
      %v1273 = vadd.f32 %v992, %v1245
      %v1274 = vadd.f32 %v993, %v1250
      %v1275 = vadd.f32 %v994, %v1253
      %v1276 = vadd.f32 %v995, %v1258
      %v1277 = vadd.f32 %v996, %v1261
      %v1278 = vadd.f32 %v997, %v1266
      %v1279 = vadd.f32 %v998, %v1269
      %v1280 = vld [vmem:[%s845] sm:$0xe]
      %v1281 = vld [vmem:[%s845 + $0x8] sm:$0xe]
      %v1282 = vld [vmem:[%s845 + $0x10] sm:$0xe]
      %v1283 = vld [vmem:[%s845 + $0x18] sm:$0xe]
      %v1284 = vld [vmem:[%s845 + $0x20] sm:$0xe]
      %v1285 = vld [vmem:[%s845 + $0x28] sm:$0xe]
      %v1286 = vld [vmem:[%s845 + $0x30] sm:$0xe]
      %v1287 = vld [vmem:[%s845 + $0x38] sm:$0xe]
      %v1304 = vrot.slane %v1280, 5
      %v1305 = vrot.slane %v1304, 4
      %v1306 = vrot.slane %v1000, 5
      %v1307 = vsel %vm659, %v1305, %v1306
      %v1308 = vrot.slane %v1281, 5
      %v1309 = vrot.slane %v1308, 4
      %v1310 = vrot.slane %v1002, 5
      %v1311 = vsel %vm659, %v1309, %v1310
      %v1312 = vrot.slane %v1282, 5
      %v1313 = vrot.slane %v1312, 4
      %v1314 = vrot.slane %v1004, 5
      %v1315 = vsel %vm659, %v1313, %v1314
      %v1316 = vrot.slane %v1283, 5
      %v1317 = vrot.slane %v1316, 4
      %v1318 = vrot.slane %v1006, 5
      %v1319 = vsel %vm659, %v1317, %v1318
      %v1320 = vrot.slane %v1284, 5
      %v1321 = vrot.slane %v1320, 4
      %v1322 = vrot.slane %v1008, 5
      %v1323 = vsel %vm659, %v1321, %v1322
      %v1324 = vrot.slane %v1285, 5
      %v1325 = vrot.slane %v1324, 4
      %v1326 = vrot.slane %v1010, 5
      %v1327 = vsel %vm659, %v1325, %v1326
      %v1328 = vrot.slane %v1286, 5
      %v1329 = vrot.slane %v1328, 4
      %v1330 = vrot.slane %v1012, 5
      %v1331 = vsel %vm659, %v1329, %v1330
      %v1332 = vrot.slane %v1287, 5
      %v1333 = vrot.slane %v1332, 4
      %v1334 = vrot.slane %v1014, 5
      %v1335 = vsel %vm659, %v1333, %v1334
      %v1344 = vmax.bf16 %v1307, 0
      %v1345 = vmax.bf16 %v1311, 0
      %v1346 = vmax.bf16 %v1315, 0
      %v1347 = vmax.bf16 %v1319, 0
      %v1348 = vmax.bf16 %v1323, 0
      %v1349 = vmax.bf16 %v1327, 0
      %v1350 = vmax.bf16 %v1331, 0
      %v1351 = vmax.bf16 %v1335, 0
      %v1352 = vld [vmem:[%s1 + $0xa0] sm:$0xf]
      %v1353 = vld [vmem:[%s1 + $0xa4] sm:$0xf]
      %v1354 = vld [vmem:[%s1 + $0xa8] sm:$0xf]
      %v1355 = vld [vmem:[%s1 + $0xac] sm:$0xf]
      %v1356 = vld [vmem:[%s1 + $0xb0] sm:$0xf]
      %v1357 = vld [vmem:[%s1 + $0xb4] sm:$0xf]
      %v1358 = vld [vmem:[%s1 + $0xb8] sm:$0xf]
      %v1359 = vld [vmem:[%s1 + $0xbc] sm:$0xf]
      %v1368 = vunpack.c.l.b16 %v1344
      %v1369 = vunpack.c.l.b16 %v1345
      %v1370 = vunpack.c.l.b16 %v1346
      %v1371 = vunpack.c.l.b16 %v1347
      %v1372 = vunpack.c.l.b16 %v1348
      %v1373 = vunpack.c.l.b16 %v1349
      %v1374 = vunpack.c.l.b16 %v1350
      %v1375 = vunpack.c.l.b16 %v1351
      %v1376 = vpack.c.b16 %v1369, %v1368
      %v1377 = vpack.c.b16 %v1371, %v1370
      %v1378 = vpack.c.b16 %v1373, %v1372
      %v1379 = vpack.c.b16 %v1375, %v1374
      %v1388 = vunpack.c.l.b16 %v1352
      %v1389 = vunpack.c.l.b16 %v1353
      %v1390 = vunpack.c.l.b16 %v1354
      %v1391 = vunpack.c.l.b16 %v1355
      %v1392 = vunpack.c.l.b16 %v1356
      %v1393 = vunpack.c.l.b16 %v1357
      %v1394 = vunpack.c.l.b16 %v1358
      %v1395 = vunpack.c.l.b16 %v1359
      %v1396 = vpack.c.b16 %v1389, %v1388
      %v1397 = vpack.c.b16 %v1391, %v1390
      %v1398 = vpack.c.b16 %v1393, %v1392
      %v1399 = vpack.c.b16 %v1395, %v1394
      %v1405 = vsel %vm434, %v1376, 0
      %v1408 = vsel %vm434, %v1377, 0
      %v1411 = vsel %vm434, %v1378, 0
      %v1414 = vsel %vm434, %v1379, 0
      %1416 = vmatprep.subr.bf16.mxu0 0
      %1417 = vmatpush1.bf16.msra.mxu0 %v1396
      %1418 = vmatprep.subr.bf16.mxu0 0
      %1419 = vmatpush1.bf16.msra.mxu0 %v1397
      %1420 = vmatprep.subr.bf16.mxu0 0
      %1421 = vmatpush1.bf16.msra.mxu0 %v1398
      %1422 = vmatprep.subr.bf16.mxu0 0
      %1423 = vmatpush1.bf16.msra.mxu0 %v1399
      %1424 = vmatprep.subr.bf16.mxu0 0
      %1425 = vmatpush1.bf16.msra.mxu0 0
      %1426 = vmatprep.subr.bf16.mxu0 0
      %1427 = vmatpush1.bf16.msra.mxu0 0
      %1428 = vmatprep.subr.bf16.mxu0 0
      %1429 = vmatpush1.bf16.msra.mxu0 0
      %1430 = vmatprep.subr.bf16.mxu0 0
      %1431 = vmatpush1.bf16.msra.mxu0 0
      %1432 = vmatprep.subr.bf16.mxu0 0
      %1433 = vmatpush1.bf16.msra.mxu0 0
      %1434 = vmatprep.subr.bf16.mxu0 0
      %1435 = vmatpush1.bf16.msra.mxu0 0
      %1436 = vmatprep.subr.bf16.mxu0 0
      %1437 = vmatpush1.bf16.msra.mxu0 0
      %1438 = vmatprep.subr.bf16.mxu0 0
      %1439 = vmatpush1.bf16.msra.mxu0 0
      %1440 = vmatprep.subr.bf16.mxu0 0
      %1441 = vmatpush1.bf16.msra.mxu0 0
      %1442 = vmatprep.subr.bf16.mxu0 0
      %1443 = vmatpush1.bf16.msra.mxu0 0
      %1444 = vmatprep.subr.bf16.mxu0 0
      %1445 = vmatpush1.bf16.msra.mxu0 0
      %1446 = vmatprep.subr.bf16.mxu0 0
      %1447 = vmatpush1.bf16.msra.mxu0 0
      %1448 = vmatprep.mubr.bf16.mxu0 0
      %1449 = vmatmul.mubr.bf16.gmra.mrb[0].mxu0 %v1405
      %v1450 = vpop.f32.mrb[0].mxu0
      %v1451 = vadd.f32 0.0, %v1450
      %v1452 = vpop.f32.mrb[0].mxu0
      %v1453 = vpop.f32.mrb[0].mxu0
      %v1454 = vadd.f32 0.0, %v1453
      %v1455 = vpop.f32.mrb[0].mxu0
      %1456 = vmatprep.mubr.bf16.mxu0 0
      %1457 = vmatmul.mubr.bf16.gmra.mrb[0].mxu0 %v1408
      %v1458 = vpop.f32.mrb[0].mxu0
      %v1459 = vadd.f32 0.0, %v1458
      %v1460 = vpop.f32.mrb[0].mxu0
      %v1461 = vpop.f32.mrb[0].mxu0
      %v1462 = vadd.f32 0.0, %v1461
      %v1463 = vpop.f32.mrb[0].mxu0
      %1464 = vmatprep.mubr.bf16.mxu0 0
      %1465 = vmatmul.mubr.bf16.gmra.mrb[0].mxu0 %v1411
      %v1466 = vpop.f32.mrb[0].mxu0
      %v1467 = vadd.f32 0.0, %v1466
      %v1468 = vpop.f32.mrb[0].mxu0
      %v1469 = vpop.f32.mrb[0].mxu0
      %v1470 = vadd.f32 0.0, %v1469
      %v1471 = vpop.f32.mrb[0].mxu0
      %1472 = vmatprep.mubr.bf16.mxu0 0
      %1473 = vmatmul.mubr.bf16.gmra.mrb[0].mxu0 %v1414
      %v1474 = vpop.f32.mrb[0].mxu0
      %v1475 = vadd.f32 0.0, %v1474
      %v1476 = vpop.f32.mrb[0].mxu0
      %v1477 = vpop.f32.mrb[0].mxu0
      %v1478 = vadd.f32 0.0, %v1477
      %v1479 = vpop.f32.mrb[0].mxu0
      %1480 = vdwg.mxu0
      %v1481 = vadd.f32 %v1272, %v1451
      %v1482 = vadd.f32 %v1273, %v1454
      %v1483 = vadd.f32 %v1274, %v1459
      %v1484 = vadd.f32 %v1275, %v1462
      %v1485 = vadd.f32 %v1276, %v1467
      %v1486 = vadd.f32 %v1277, %v1470
      %v1487 = vadd.f32 %v1278, %v1475
      %v1488 = vadd.f32 %v1279, %v1478
      %s1489 = scalar_lea.vmem %s207, 16
      %v1490 = vld [vmem:[%s1489] sm:$0xf]
      %v1491 = vld [vmem:[%s1489 + $0x8] sm:$0xf]
      %v1492 = vld [vmem:[%s1489 + $0x10] sm:$0xf]
      %v1493 = vld [vmem:[%s1489 + $0x18] sm:$0xf]
      %v1494 = vld [vmem:[%s1489 + $0x20] sm:$0xf]
      %v1495 = vld [vmem:[%s1489 + $0x28] sm:$0xf]
      %v1496 = vld [vmem:[%s1489 + $0x30] sm:$0xf]
      %v1497 = vld [vmem:[%s1489 + $0x38] sm:$0xf]
      %v1498 = vmax.bf16 %v1490, 0
      %v1499 = vmax.bf16 %v1491, 0
      %v1500 = vmax.bf16 %v1492, 0
      %v1501 = vmax.bf16 %v1493, 0
      %v1502 = vmax.bf16 %v1494, 0
      %v1503 = vmax.bf16 %v1495, 0
      %v1504 = vmax.bf16 %v1496, 0
      %v1505 = vmax.bf16 %v1497, 0
      %v1506 = vld [vmem:[%s1 + $0xc0] sm:$0xf]
      %v1507 = vld [vmem:[%s1 + $0xc4] sm:$0xf]
      %v1508 = vld [vmem:[%s1 + $0xc8] sm:$0xf]
      %v1509 = vld [vmem:[%s1 + $0xcc] sm:$0xf]
      %v1510 = vld [vmem:[%s1 + $0xd0] sm:$0xf]
      %v1511 = vld [vmem:[%s1 + $0xd4] sm:$0xf]
      %v1512 = vld [vmem:[%s1 + $0xd8] sm:$0xf]
      %v1513 = vld [vmem:[%s1 + $0xdc] sm:$0xf]
      %v1522 = vunpack.c.l.b16 %v1498
      %v1523 = vunpack.c.l.b16 %v1499
      %v1524 = vunpack.c.l.b16 %v1500
      %v1525 = vunpack.c.l.b16 %v1501
      %v1526 = vunpack.c.l.b16 %v1502
      %v1527 = vunpack.c.l.b16 %v1503
      %v1528 = vunpack.c.l.b16 %v1504
      %v1529 = vunpack.c.l.b16 %v1505
      %v1530 = vpack.c.b16 %v1523, %v1522
      %v1531 = vpack.c.b16 %v1525, %v1524
      %v1532 = vpack.c.b16 %v1527, %v1526
      %v1533 = vpack.c.b16 %v1529, %v1528
      %v1542 = vunpack.c.l.b16 %v1506
      %v1543 = vunpack.c.l.b16 %v1507
      %v1544 = vunpack.c.l.b16 %v1508
      %v1545 = vunpack.c.l.b16 %v1509
      %v1546 = vunpack.c.l.b16 %v1510
      %v1547 = vunpack.c.l.b16 %v1511
      %v1548 = vunpack.c.l.b16 %v1512
      %v1549 = vunpack.c.l.b16 %v1513
      %v1550 = vpack.c.b16 %v1543, %v1542
      %v1551 = vpack.c.b16 %v1545, %v1544
      %v1552 = vpack.c.b16 %v1547, %v1546
      %v1553 = vpack.c.b16 %v1549, %v1548
      %v1559 = vsel %vm434, %v1530, 0
      %v1562 = vsel %vm434, %v1531, 0
      %v1565 = vsel %vm434, %v1532, 0
      %v1568 = vsel %vm434, %v1533, 0
      %1570 = vmatprep.subr.bf16.mxu0 0
      %1571 = vmatpush1.bf16.msra.mxu0 %v1550
      %1572 = vmatprep.subr.bf16.mxu0 0
      %1573 = vmatpush1.bf16.msra.mxu0 %v1551
      %1574 = vmatprep.subr.bf16.mxu0 0
      %1575 = vmatpush1.bf16.msra.mxu0 %v1552
      %1576 = vmatprep.subr.bf16.mxu0 0
      %1577 = vmatpush1.bf16.msra.mxu0 %v1553
      %1578 = vmatprep.subr.bf16.mxu0 0
      %1579 = vmatpush1.bf16.msra.mxu0 0
      %1580 = vmatprep.subr.bf16.mxu0 0
      %1581 = vmatpush1.bf16.msra.mxu0 0
      %1582 = vmatprep.subr.bf16.mxu0 0
      %1583 = vmatpush1.bf16.msra.mxu0 0
      %1584 = vmatprep.subr.bf16.mxu0 0
      %1585 = vmatpush1.bf16.msra.mxu0 0
      %1586 = vmatprep.subr.bf16.mxu0 0
      %1587 = vmatpush1.bf16.msra.mxu0 0
      %1588 = vmatprep.subr.bf16.mxu0 0
      %1589 = vmatpush1.bf16.msra.mxu0 0
      %1590 = vmatprep.subr.bf16.mxu0 0
      %1591 = vmatpush1.bf16.msra.mxu0 0
      %1592 = vmatprep.subr.bf16.mxu0 0
      %1593 = vmatpush1.bf16.msra.mxu0 0
      %1594 = vmatprep.subr.bf16.mxu0 0
      %1595 = vmatpush1.bf16.msra.mxu0 0
      %1596 = vmatprep.subr.bf16.mxu0 0
      %1597 = vmatpush1.bf16.msra.mxu0 0
      %1598 = vmatprep.subr.bf16.mxu0 0
      %1599 = vmatpush1.bf16.msra.mxu0 0
      %1600 = vmatprep.subr.bf16.mxu0 0
      %1601 = vmatpush1.bf16.msra.mxu0 0
      %1602 = vmatprep.mubr.bf16.mxu0 0
      %1603 = vmatmul.mubr.bf16.gmra.mrb[0].mxu0 %v1559
      %v1604 = vpop.f32.mrb[0].mxu0
      %v1605 = vadd.f32 0.0, %v1604
      %v1606 = vpop.f32.mrb[0].mxu0
      %v1607 = vpop.f32.mrb[0].mxu0
      %v1608 = vadd.f32 0.0, %v1607
      %v1609 = vpop.f32.mrb[0].mxu0
      %1610 = vmatprep.mubr.bf16.mxu0 0
      %1611 = vmatmul.mubr.bf16.gmra.mrb[0].mxu0 %v1562
      %v1612 = vpop.f32.mrb[0].mxu0
      %v1613 = vadd.f32 0.0, %v1612
      %v1614 = vpop.f32.mrb[0].mxu0
      %v1615 = vpop.f32.mrb[0].mxu0
      %v1616 = vadd.f32 0.0, %v1615
      %v1617 = vpop.f32.mrb[0].mxu0
      %1618 = vmatprep.mubr.bf16.mxu0 0
      %1619 = vmatmul.mubr.bf16.gmra.mrb[0].mxu0 %v1565
      %v1620 = vpop.f32.mrb[0].mxu0
      %v1621 = vadd.f32 0.0, %v1620
      %v1622 = vpop.f32.mrb[0].mxu0
      %v1623 = vpop.f32.mrb[0].mxu0
      %v1624 = vadd.f32 0.0, %v1623
      %v1625 = vpop.f32.mrb[0].mxu0
      %1626 = vmatprep.mubr.bf16.mxu0 0
      %1627 = vmatmul.mubr.bf16.gmra.mrb[0].mxu0 %v1568
      %v1628 = vpop.f32.mrb[0].mxu0
      %v1629 = vadd.f32 0.0, %v1628
      %v1630 = vpop.f32.mrb[0].mxu0
      %v1631 = vpop.f32.mrb[0].mxu0
      %v1632 = vadd.f32 0.0, %v1631
      %v1633 = vpop.f32.mrb[0].mxu0
      %1634 = vdwg.mxu0
      %v1635 = vadd.f32 %v1481, %v1605
      %v1636 = vadd.f32 %v1482, %v1608
      %v1637 = vadd.f32 %v1483, %v1613
      %v1638 = vadd.f32 %v1484, %v1616
      %v1639 = vadd.f32 %v1485, %v1621
      %v1640 = vadd.f32 %v1486, %v1624
      %v1641 = vadd.f32 %v1487, %v1629
      %v1642 = vadd.f32 %v1488, %v1632
      %v1643 = vld [vmem:[%s1489] sm:$0xf]
      %v1644 = vld [vmem:[%s1489 + $0x4] sm:$0x1]
      %v1645 = vld [vmem:[%s1489 + $0x8] sm:$0xf]
      %v1646 = vld [vmem:[%s1489 + $0xc] sm:$0x1]
      %v1647 = vld [vmem:[%s1489 + $0x10] sm:$0xf]
      %v1648 = vld [vmem:[%s1489 + $0x14] sm:$0x1]
      %v1649 = vld [vmem:[%s1489 + $0x18] sm:$0xf]
      %v1650 = vld [vmem:[%s1489 + $0x1c] sm:$0x1]
      %v1651 = vld [vmem:[%s1489 + $0x20] sm:$0xf]
      %v1652 = vld [vmem:[%s1489 + $0x24] sm:$0x1]
      %v1653 = vld [vmem:[%s1489 + $0x28] sm:$0xf]
      %v1654 = vld [vmem:[%s1489 + $0x2c] sm:$0x1]
      %v1655 = vld [vmem:[%s1489 + $0x30] sm:$0xf]
      %v1656 = vld [vmem:[%s1489 + $0x34] sm:$0x1]
      %v1657 = vld [vmem:[%s1489 + $0x38] sm:$0xf]
      %v1658 = vld [vmem:[%s1489 + $0x3c] sm:$0x1]
      %v1660 = vshrl.u32 %v1643, 16
      %v1662 = vrot.slane %v1660, 4
      %v1663 = vshll.u32 %v1643, 16
      %v1665 = vrot.slane %v1663, 5
      %v1666 = vor.u32 %v1662, %v1665
      %v1667 = vrot.slane %v1666, 4
      %v1669 = vshll.u32 %v1644, 16
      %v1671 = vrot.slane %v1669, 5
      %v1672 = vsel %vm253, %v1667, %v1671
      %v1674 = vshrl.u32 %v1645, 16
      %v1676 = vrot.slane %v1674, 4
      %v1677 = vshll.u32 %v1645, 16
      %v1679 = vrot.slane %v1677, 5
      %v1680 = vor.u32 %v1676, %v1679
      %v1681 = vrot.slane %v1680, 4
      %v1683 = vshll.u32 %v1646, 16
      %v1685 = vrot.slane %v1683, 5
      %v1686 = vsel %vm253, %v1681, %v1685
      %v1688 = vshrl.u32 %v1647, 16
      %v1690 = vrot.slane %v1688, 4
      %v1691 = vshll.u32 %v1647, 16
      %v1693 = vrot.slane %v1691, 5
      %v1694 = vor.u32 %v1690, %v1693
      %v1695 = vrot.slane %v1694, 4
      %v1697 = vshll.u32 %v1648, 16
      %v1699 = vrot.slane %v1697, 5
      %v1700 = vsel %vm253, %v1695, %v1699
      %v1702 = vshrl.u32 %v1649, 16
      %v1704 = vrot.slane %v1702, 4
      %v1705 = vshll.u32 %v1649, 16
      %v1707 = vrot.slane %v1705, 5
      %v1708 = vor.u32 %v1704, %v1707
      %v1709 = vrot.slane %v1708, 4
      %v1711 = vshll.u32 %v1650, 16
      %v1713 = vrot.slane %v1711, 5
      %v1714 = vsel %vm253, %v1709, %v1713
      %v1716 = vshrl.u32 %v1651, 16
      %v1718 = vrot.slane %v1716, 4
      %v1719 = vshll.u32 %v1651, 16
      %v1721 = vrot.slane %v1719, 5
      %v1722 = vor.u32 %v1718, %v1721
      %v1723 = vrot.slane %v1722, 4
      %v1725 = vshll.u32 %v1652, 16
      %v1727 = vrot.slane %v1725, 5
      %v1728 = vsel %vm253, %v1723, %v1727
      %v1730 = vshrl.u32 %v1653, 16
      %v1732 = vrot.slane %v1730, 4
      %v1733 = vshll.u32 %v1653, 16
      %v1735 = vrot.slane %v1733, 5
      %v1736 = vor.u32 %v1732, %v1735
      %v1737 = vrot.slane %v1736, 4
      %v1739 = vshll.u32 %v1654, 16
      %v1741 = vrot.slane %v1739, 5
      %v1742 = vsel %vm253, %v1737, %v1741
      %v1744 = vshrl.u32 %v1655, 16
      %v1746 = vrot.slane %v1744, 4
      %v1747 = vshll.u32 %v1655, 16
      %v1749 = vrot.slane %v1747, 5
      %v1750 = vor.u32 %v1746, %v1749
      %v1751 = vrot.slane %v1750, 4
      %v1753 = vshll.u32 %v1656, 16
      %v1755 = vrot.slane %v1753, 5
      %v1756 = vsel %vm253, %v1751, %v1755
      %v1758 = vshrl.u32 %v1657, 16
      %v1760 = vrot.slane %v1758, 4
      %v1761 = vshll.u32 %v1657, 16
      %v1763 = vrot.slane %v1761, 5
      %v1764 = vor.u32 %v1760, %v1763
      %v1765 = vrot.slane %v1764, 4
      %v1767 = vshll.u32 %v1658, 16
      %v1769 = vrot.slane %v1767, 5
      %v1770 = vsel %vm253, %v1765, %v1769
      %v1779 = vmax.bf16 %v1672, 0
      %v1780 = vmax.bf16 %v1686, 0
      %v1781 = vmax.bf16 %v1700, 0
      %v1782 = vmax.bf16 %v1714, 0
      %v1783 = vmax.bf16 %v1728, 0
      %v1784 = vmax.bf16 %v1742, 0
      %v1785 = vmax.bf16 %v1756, 0
      %v1786 = vmax.bf16 %v1770, 0
      %v1787 = vld [vmem:[%s1 + $0xe0] sm:$0xf]
      %v1788 = vld [vmem:[%s1 + $0xe4] sm:$0xf]
      %v1789 = vld [vmem:[%s1 + $0xe8] sm:$0xf]
      %v1790 = vld [vmem:[%s1 + $0xec] sm:$0xf]
      %v1791 = vld [vmem:[%s1 + $0xf0] sm:$0xf]
      %v1792 = vld [vmem:[%s1 + $0xf4] sm:$0xf]
      %v1793 = vld [vmem:[%s1 + $0xf8] sm:$0xf]
      %v1794 = vld [vmem:[%s1 + $0xfc] sm:$0xf]
      %v1803 = vunpack.c.l.b16 %v1779
      %v1804 = vunpack.c.l.b16 %v1780
      %v1805 = vunpack.c.l.b16 %v1781
      %v1806 = vunpack.c.l.b16 %v1782
      %v1807 = vunpack.c.l.b16 %v1783
      %v1808 = vunpack.c.l.b16 %v1784
      %v1809 = vunpack.c.l.b16 %v1785
      %v1810 = vunpack.c.l.b16 %v1786
      %v1811 = vpack.c.b16 %v1804, %v1803
      %v1812 = vpack.c.b16 %v1806, %v1805
      %v1813 = vpack.c.b16 %v1808, %v1807
      %v1814 = vpack.c.b16 %v1810, %v1809
      %v1823 = vunpack.c.l.b16 %v1787
      %v1824 = vunpack.c.l.b16 %v1788
      %v1825 = vunpack.c.l.b16 %v1789
      %v1826 = vunpack.c.l.b16 %v1790
      %v1827 = vunpack.c.l.b16 %v1791
      %v1828 = vunpack.c.l.b16 %v1792
      %v1829 = vunpack.c.l.b16 %v1793
      %v1830 = vunpack.c.l.b16 %v1794
      %v1831 = vpack.c.b16 %v1824, %v1823
      %v1832 = vpack.c.b16 %v1826, %v1825
      %v1833 = vpack.c.b16 %v1828, %v1827
      %v1834 = vpack.c.b16 %v1830, %v1829
      %v1840 = vsel %vm434, %v1811, 0
      %v1843 = vsel %vm434, %v1812, 0
      %v1846 = vsel %vm434, %v1813, 0
      %v1849 = vsel %vm434, %v1814, 0
      %1851 = vmatprep.subr.bf16.mxu0 0
      %1852 = vmatpush1.bf16.msra.mxu0 %v1831
      %1853 = vmatprep.subr.bf16.mxu0 0
      %1854 = vmatpush1.bf16.msra.mxu0 %v1832
      %1855 = vmatprep.subr.bf16.mxu0 0
      %1856 = vmatpush1.bf16.msra.mxu0 %v1833
      %1857 = vmatprep.subr.bf16.mxu0 0
      %1858 = vmatpush1.bf16.msra.mxu0 %v1834
      %1859 = vmatprep.subr.bf16.mxu0 0
      %1860 = vmatpush1.bf16.msra.mxu0 0
      %1861 = vmatprep.subr.bf16.mxu0 0
      %1862 = vmatpush1.bf16.msra.mxu0 0
      %1863 = vmatprep.subr.bf16.mxu0 0
      %1864 = vmatpush1.bf16.msra.mxu0 0
      %1865 = vmatprep.subr.bf16.mxu0 0
      %1866 = vmatpush1.bf16.msra.mxu0 0
      %1867 = vmatprep.subr.bf16.mxu0 0
      %1868 = vmatpush1.bf16.msra.mxu0 0
      %1869 = vmatprep.subr.bf16.mxu0 0
      %1870 = vmatpush1.bf16.msra.mxu0 0
      %1871 = vmatprep.subr.bf16.mxu0 0
      %1872 = vmatpush1.bf16.msra.mxu0 0
      %1873 = vmatprep.subr.bf16.mxu0 0
      %1874 = vmatpush1.bf16.msra.mxu0 0
      %1875 = vmatprep.subr.bf16.mxu0 0
      %1876 = vmatpush1.bf16.msra.mxu0 0
      %1877 = vmatprep.subr.bf16.mxu0 0
      %1878 = vmatpush1.bf16.msra.mxu0 0
      %1879 = vmatprep.subr.bf16.mxu0 0
      %1880 = vmatpush1.bf16.msra.mxu0 0
      %1881 = vmatprep.subr.bf16.mxu0 0
      %1882 = vmatpush1.bf16.msra.mxu0 0
      %1883 = vmatprep.mubr.bf16.mxu0 0
      %1884 = vmatmul.mubr.bf16.gmra.mrb[0].mxu0 %v1840
      %v1885 = vpop.f32.mrb[0].mxu0
      %v1886 = vadd.f32 0.0, %v1885
      %v1887 = vpop.f32.mrb[0].mxu0
      %v1888 = vpop.f32.mrb[0].mxu0
      %v1889 = vadd.f32 0.0, %v1888
      %v1890 = vpop.f32.mrb[0].mxu0
      %1891 = vmatprep.mubr.bf16.mxu0 0
      %1892 = vmatmul.mubr.bf16.gmra.mrb[0].mxu0 %v1843
      %v1893 = vpop.f32.mrb[0].mxu0
      %v1894 = vadd.f32 0.0, %v1893
      %v1895 = vpop.f32.mrb[0].mxu0
      %v1896 = vpop.f32.mrb[0].mxu0
      %v1897 = vadd.f32 0.0, %v1896
      %v1898 = vpop.f32.mrb[0].mxu0
      %1899 = vmatprep.mubr.bf16.mxu0 0
      %1900 = vmatmul.mubr.bf16.gmra.mrb[0].mxu0 %v1846
      %v1901 = vpop.f32.mrb[0].mxu0
      %v1902 = vadd.f32 0.0, %v1901
      %v1903 = vpop.f32.mrb[0].mxu0
      %v1904 = vpop.f32.mrb[0].mxu0
      %v1905 = vadd.f32 0.0, %v1904
      %v1906 = vpop.f32.mrb[0].mxu0
      %1907 = vmatprep.mubr.bf16.mxu0 0
      %1908 = vmatmul.mubr.bf16.gmra.mrb[0].mxu0 %v1849
      %v1909 = vpop.f32.mrb[0].mxu0
      %v1910 = vadd.f32 0.0, %v1909
      %v1911 = vpop.f32.mrb[0].mxu0
      %v1912 = vpop.f32.mrb[0].mxu0
      %v1913 = vadd.f32 0.0, %v1912
      %v1914 = vpop.f32.mrb[0].mxu0
      %1915 = vdwg.mxu0
      %v1916 = vadd.f32 %v1635, %v1886
      %v1917 = vadd.f32 %v1636, %v1889
      %v1918 = vadd.f32 %v1637, %v1894
      %v1919 = vadd.f32 %v1638, %v1897
      %v1920 = vadd.f32 %v1639, %v1902
      %v1921 = vadd.f32 %v1640, %v1905
      %v1922 = vadd.f32 %v1641, %v1910
      %v1923 = vadd.f32 %v1642, %v1913
      %v1924 = vld [vmem:[%s1489] sm:$0xe]
      %v1925 = vld [vmem:[%s1489 + $0x8] sm:$0xe]
      %v1926 = vld [vmem:[%s1489 + $0x10] sm:$0xe]
      %v1927 = vld [vmem:[%s1489 + $0x18] sm:$0xe]
      %v1928 = vld [vmem:[%s1489 + $0x20] sm:$0xe]
      %v1929 = vld [vmem:[%s1489 + $0x28] sm:$0xe]
      %v1930 = vld [vmem:[%s1489 + $0x30] sm:$0xe]
      %v1931 = vld [vmem:[%s1489 + $0x38] sm:$0xe]
      %v1948 = vrot.slane %v1924, 5
      %v1949 = vrot.slane %v1948, 4
      %v1950 = vrot.slane %v1644, 5
      %v1951 = vsel %vm659, %v1949, %v1950
      %v1952 = vrot.slane %v1925, 5
      %v1953 = vrot.slane %v1952, 4
      %v1954 = vrot.slane %v1646, 5
      %v1955 = vsel %vm659, %v1953, %v1954
      %v1956 = vrot.slane %v1926, 5
      %v1957 = vrot.slane %v1956, 4
      %v1958 = vrot.slane %v1648, 5
      %v1959 = vsel %vm659, %v1957, %v1958
      %v1960 = vrot.slane %v1927, 5
      %v1961 = vrot.slane %v1960, 4
      %v1962 = vrot.slane %v1650, 5
      %v1963 = vsel %vm659, %v1961, %v1962
      %v1964 = vrot.slane %v1928, 5
      %v1965 = vrot.slane %v1964, 4
      %v1966 = vrot.slane %v1652, 5
      %v1967 = vsel %vm659, %v1965, %v1966
      %v1968 = vrot.slane %v1929, 5
      %v1969 = vrot.slane %v1968, 4
      %v1970 = vrot.slane %v1654, 5
      %v1971 = vsel %vm659, %v1969, %v1970
      %v1972 = vrot.slane %v1930, 5
      %v1973 = vrot.slane %v1972, 4
      %v1974 = vrot.slane %v1656, 5
      %v1975 = vsel %vm659, %v1973, %v1974
      %v1976 = vrot.slane %v1931, 5
      %v1977 = vrot.slane %v1976, 4
      %v1978 = vrot.slane %v1658, 5
      %v1979 = vsel %vm659, %v1977, %v1978
      %v1988 = vmax.bf16 %v1951, 0
      %v1989 = vmax.bf16 %v1955, 0
      %v1990 = vmax.bf16 %v1959, 0
      %v1991 = vmax.bf16 %v1963, 0
      %v1992 = vmax.bf16 %v1967, 0
      %v1993 = vmax.bf16 %v1971, 0
      %v1994 = vmax.bf16 %v1975, 0
      %v1995 = vmax.bf16 %v1979, 0
      %v1996 = vld [vmem:[%s1 + $0x100] sm:$0xf]
      %v1997 = vld [vmem:[%s1 + $0x104] sm:$0xf]
      %v1998 = vld [vmem:[%s1 + $0x108] sm:$0xf]
      %v1999 = vld [vmem:[%s1 + $0x10c] sm:$0xf]
      %v2000 = vld [vmem:[%s1 + $0x110] sm:$0xf]
      %v2001 = vld [vmem:[%s1 + $0x114] sm:$0xf]
      %v2002 = vld [vmem:[%s1 + $0x118] sm:$0xf]
      %v2003 = vld [vmem:[%s1 + $0x11c] sm:$0xf]
      %v2012 = vunpack.c.l.b16 %v1988
      %v2013 = vunpack.c.l.b16 %v1989
      %v2014 = vunpack.c.l.b16 %v1990
      %v2015 = vunpack.c.l.b16 %v1991
      %v2016 = vunpack.c.l.b16 %v1992
      %v2017 = vunpack.c.l.b16 %v1993
      %v2018 = vunpack.c.l.b16 %v1994
      %v2019 = vunpack.c.l.b16 %v1995
      %v2020 = vpack.c.b16 %v2013, %v2012
      %v2021 = vpack.c.b16 %v2015, %v2014
      %v2022 = vpack.c.b16 %v2017, %v2016
      %v2023 = vpack.c.b16 %v2019, %v2018
      %v2032 = vunpack.c.l.b16 %v1996
      %v2033 = vunpack.c.l.b16 %v1997
      %v2034 = vunpack.c.l.b16 %v1998
      %v2035 = vunpack.c.l.b16 %v1999
      %v2036 = vunpack.c.l.b16 %v2000
      %v2037 = vunpack.c.l.b16 %v2001
      %v2038 = vunpack.c.l.b16 %v2002
      %v2039 = vunpack.c.l.b16 %v2003
      %v2040 = vpack.c.b16 %v2033, %v2032
      %v2041 = vpack.c.b16 %v2035, %v2034
      %v2042 = vpack.c.b16 %v2037, %v2036
      %v2043 = vpack.c.b16 %v2039, %v2038
      %v2049 = vsel %vm434, %v2020, 0
      %v2052 = vsel %vm434, %v2021, 0
      %v2055 = vsel %vm434, %v2022, 0
      %v2058 = vsel %vm434, %v2023, 0
      %2060 = vmatprep.subr.bf16.mxu0 0
      %2061 = vmatpush1.bf16.msra.mxu0 %v2040
      %2062 = vmatprep.subr.bf16.mxu0 0
      %2063 = vmatpush1.bf16.msra.mxu0 %v2041
      %2064 = vmatprep.subr.bf16.mxu0 0
      %2065 = vmatpush1.bf16.msra.mxu0 %v2042
      %2066 = vmatprep.subr.bf16.mxu0 0
      %2067 = vmatpush1.bf16.msra.mxu0 %v2043
      %2068 = vmatprep.subr.bf16.mxu0 0
      %2069 = vmatpush1.bf16.msra.mxu0 0
      %2070 = vmatprep.subr.bf16.mxu0 0
      %2071 = vmatpush1.bf16.msra.mxu0 0
      %2072 = vmatprep.subr.bf16.mxu0 0
      %2073 = vmatpush1.bf16.msra.mxu0 0
      %2074 = vmatprep.subr.bf16.mxu0 0
      %2075 = vmatpush1.bf16.msra.mxu0 0
      %2076 = vmatprep.subr.bf16.mxu0 0
      %2077 = vmatpush1.bf16.msra.mxu0 0
      %2078 = vmatprep.subr.bf16.mxu0 0
      %2079 = vmatpush1.bf16.msra.mxu0 0
      %2080 = vmatprep.subr.bf16.mxu0 0
      %2081 = vmatpush1.bf16.msra.mxu0 0
      %2082 = vmatprep.subr.bf16.mxu0 0
      %2083 = vmatpush1.bf16.msra.mxu0 0
      %2084 = vmatprep.subr.bf16.mxu0 0
      %2085 = vmatpush1.bf16.msra.mxu0 0
      %2086 = vmatprep.subr.bf16.mxu0 0
      %2087 = vmatpush1.bf16.msra.mxu0 0
      %2088 = vmatprep.subr.bf16.mxu0 0
      %2089 = vmatpush1.bf16.msra.mxu0 0
      %2090 = vmatprep.subr.bf16.mxu0 0
      %2091 = vmatpush1.bf16.msra.mxu0 0
      %2092 = vmatprep.mubr.bf16.mxu0 0
      %2093 = vmatmul.mubr.bf16.gmra.mrb[0].mxu0 %v2049
      %v2094 = vpop.f32.mrb[0].mxu0
      %v2095 = vadd.f32 0.0, %v2094
      %v2096 = vpop.f32.mrb[0].mxu0
      %v2097 = vpop.f32.mrb[0].mxu0
      %v2098 = vadd.f32 0.0, %v2097
      %v2099 = vpop.f32.mrb[0].mxu0
      %2100 = vmatprep.mubr.bf16.mxu0 0
      %2101 = vmatmul.mubr.bf16.gmra.mrb[0].mxu0 %v2052
      %v2102 = vpop.f32.mrb[0].mxu0
      %v2103 = vadd.f32 0.0, %v2102
      %v2104 = vpop.f32.mrb[0].mxu0
      %v2105 = vpop.f32.mrb[0].mxu0
      %v2106 = vadd.f32 0.0, %v2105
      %v2107 = vpop.f32.mrb[0].mxu0
      %2108 = vmatprep.mubr.bf16.mxu0 0
      %2109 = vmatmul.mubr.bf16.gmra.mrb[0].mxu0 %v2055
      %v2110 = vpop.f32.mrb[0].mxu0
      %v2111 = vadd.f32 0.0, %v2110
      %v2112 = vpop.f32.mrb[0].mxu0
      %v2113 = vpop.f32.mrb[0].mxu0
      %v2114 = vadd.f32 0.0, %v2113
      %v2115 = vpop.f32.mrb[0].mxu0
      %2116 = vmatprep.mubr.bf16.mxu0 0
      %2117 = vmatmul.mubr.bf16.gmra.mrb[0].mxu0 %v2058
      %v2118 = vpop.f32.mrb[0].mxu0
      %v2119 = vadd.f32 0.0, %v2118
      %v2120 = vpop.f32.mrb[0].mxu0
      %v2121 = vpop.f32.mrb[0].mxu0
      %v2122 = vadd.f32 0.0, %v2121
      %v2123 = vpop.f32.mrb[0].mxu0
      %2124 = vdwg.mxu0
      %v2125 = vadd.f32 %v1916, %v2095
      %v2126 = vadd.f32 %v1917, %v2098
      %v2127 = vadd.f32 %v1918, %v2103
      %v2128 = vadd.f32 %v1919, %v2106
      %v2129 = vadd.f32 %v1920, %v2111
      %v2130 = vadd.f32 %v1921, %v2114
      %v2131 = vadd.f32 %v1922, %v2119
      %v2132 = vadd.f32 %v1923, %v2122
      %v2133 = vld [vmem:[%s2] sm:$0x1]
      %v2135 = vlaneseq
      %v2136 = vshrl.u32 %v2135, 7
      %v2137 = vsub.s32 0, %v2136
      %v2138 = vrot.slane %v2133, %v2137
      %v2140 = vadd.f32 %v2125, %v2138
      %v2141 = vadd.f32 %v2126, %v2138
      %v2142 = vadd.f32 %v2127, %v2138
      %v2143 = vadd.f32 %v2128, %v2138
      %v2144 = vadd.f32 %v2129, %v2138
      %v2145 = vadd.f32 %v2130, %v2138
      %v2146 = vadd.f32 %v2131, %v2138
      %v2147 = vadd.f32 %v2132, %v2138
      %v2148 = vld [vmem:[%s212] sm:$0xf]
      %v2149 = vld [vmem:[%s212 + $0x4] sm:$0xf]
      %v2150 = vld [vmem:[%s212 + $0x8] sm:$0xf]
      %v2151 = vld [vmem:[%s212 + $0xc] sm:$0xf]
      %v2152 = vld [vmem:[%s212 + $0x10] sm:$0xf]
      %v2153 = vld [vmem:[%s212 + $0x14] sm:$0xf]
      %v2154 = vld [vmem:[%s212 + $0x18] sm:$0xf]
      %v2155 = vld [vmem:[%s212 + $0x1c] sm:$0xf]
      %v2156 = vunpack.c.l.bf16 %v2148
      %v2157 = vunpack.c.l.bf16 %v2149
      %v2158 = vunpack.c.l.bf16 %v2150
      %v2159 = vunpack.c.l.bf16 %v2151
      %v2160 = vunpack.c.l.bf16 %v2152
      %v2161 = vunpack.c.l.bf16 %v2153
      %v2162 = vunpack.c.l.bf16 %v2154
      %v2163 = vunpack.c.l.bf16 %v2155
      %v2164 = vadd.f32 %v2140, %v2156
      %v2165 = vadd.f32 %v2141, %v2157
      %v2166 = vadd.f32 %v2142, %v2158
      %v2167 = vadd.f32 %v2143, %v2159
      %v2168 = vadd.f32 %v2144, %v2160
      %v2169 = vadd.f32 %v2145, %v2161
      %v2170 = vadd.f32 %v2146, %v2162
      %v2171 = vadd.f32 %v2147, %v2163
      %v2172 = vmax.f32 %v2164, 0.0
      %v2173 = vmax.f32 %v2165, 0.0
      %v2174 = vmax.f32 %v2166, 0.0
      %v2175 = vmax.f32 %v2167, 0.0
      %v2176 = vmax.f32 %v2168, 0.0
      %v2177 = vmax.f32 %v2169, 0.0
      %v2178 = vmax.f32 %v2170, 0.0
      %v2179 = vmax.f32 %v2171, 0.0
      %v2180 = vpack.c.bf16 %v2173, %v2172
      %v2181 = vpack.c.bf16 %v2175, %v2174
      %v2182 = vpack.c.bf16 %v2177, %v2176
      %v2183 = vpack.c.bf16 %v2179, %v2178
      %v2188 = vunpack.c.l.b16 %v2180
      %v2189 = vunpack.c.h.b16 %v2180
      %v2190 = vunpack.c.l.b16 %v2181
      %v2191 = vunpack.c.h.b16 %v2181
      %v2192 = vunpack.c.l.b16 %v2182
      %v2193 = vunpack.c.h.b16 %v2182
      %v2194 = vunpack.c.l.b16 %v2183
      %v2195 = vunpack.c.h.b16 %v2183
      %v2196 = vpack.c.b16 %v2188, %v2188
      %v2197 = vpack.c.b16 %v2189, %v2189
      %v2198 = vpack.c.b16 %v2190, %v2190
      %v2199 = vpack.c.b16 %v2191, %v2191
      %v2200 = vpack.c.b16 %v2192, %v2192
      %v2201 = vpack.c.b16 %v2193, %v2193
      %v2202 = vpack.c.b16 %v2194, %v2194
      %v2203 = vpack.c.b16 %v2195, %v2195
      %vm2212 = vcmask 519168
      %2213 = vst.msk [vmem:[%s217] sm:$0xf] %vm2212, %v2196
      %2214 = vst.msk [vmem:[%s217 + $0x4] sm:$0xf] %vm2212, %v2197
      %2215 = vst.msk [vmem:[%s217 + $0x8] sm:$0xf] %vm2212, %v2198
      %2216 = vst.msk [vmem:[%s217 + $0xc] sm:$0xf] %vm2212, %v2199
      %2217 = vst.msk [vmem:[%s217 + $0x10] sm:$0xf] %vm2212, %v2200
      %2218 = vst.msk [vmem:[%s217 + $0x14] sm:$0xf] %vm2212, %v2201
      %2219 = vst.msk [vmem:[%s217 + $0x18] sm:$0xf] %vm2212, %v2202
      %2220 = vst.msk [vmem:[%s217 + $0x1c] sm:$0xf] %vm2212, %v2203
      %p2221 = scmp.lt.s32.totalorder %s15, 1
      %s2222 = scalar_select %p2221, %s15, 1
      %s2223 = smul.addr %s2222, 8
      %s2224 = smul.addr %s2223, 4
      %s2225 = scalar_lea.vmem %s4, %s2224
      // Predicated region
      $region37: #{recurrent_down_forward.6} parent=35 // pred_check
        %p2226 = pneg %p127
      $region38: #{recurrent_down_forward.6} parent=35 // pred_check_branch
        %2228 = sbr.rel (%p2226) target = $region40
      $region39: #{recurrent_down_forward.6} parent=35 // pred_region
        _
      $region40: #{recurrent_down_forward.6} parent=35 // pred_fallthru
        _
    $region36: #{recurrent_down_forward.6} parent=5 // pred_fallthru
      _
    %p2229 = scmp.le.s32.totalorder 2, %s10
    // Predicated region
    $region41: #{recurrent_down_forward.6} parent=5 // pred_check
      %p2230 = pneg %p2229
    $region42: #{recurrent_down_forward.6} parent=5 // pred_check_branch
      %2232 = sbr.rel (%p2230) target = $region44
    $region43: #{recurrent_down_forward.6} parent=5 // pred_region
      %s2233 = ssub.s32 %s10, 2
      // Predicated region
      $region45: #{recurrent_down_forward.6} parent=43 // pred_check
        %p2234 = pneg %p133
      $region46: #{recurrent_down_forward.6} parent=43 // pred_check_branch
        %2236 = sbr.rel (%p2234) target = $region48
      $region47: #{recurrent_down_forward.6} parent=43 // pred_region
        %p2237 = scmp.lt.s32.totalorder %s16, 1
        %s2238 = scalar_select %p2237, %s16, 1
        %s2239 = smul.addr %s2238, 8
        %s2240 = smul.addr %s2239, 4
        %s2241 = scalar_lea.vmem %s4, %s2240
      $region48: #{recurrent_down_forward.6} parent=43 // pred_fallthru
        _
    $region44: #{recurrent_down_forward.6} parent=5 // pred_fallthru
      _
  $region6: #{recurrent_down_forward.6} parent=0 // loop_footer
    %s14 = sadd.s32 1, %s10
  $region7: #{recurrent_down_forward.6} parent=0 // loop_footer_branch
    %9 = sbr.rel target = $region3
  $region8: #{recurrent_down_forward.6} parent=0 // loop_exit
    _

// kernel: recurrent_down_forward.8
$region0: #{recurrent_down_forward.8}
  #allocation0 [shape = 'u32[]', space=smem, size = 0x4, offset = 0x4, fixed_abs, tag = 'smem constant byte address 0x4 - core index']
  #allocation1 [shape = 'u32[144,128]{1,0:T(1,128)}', space=vmem, size = 0x12000, scoped, tag = 'internal scratch']
  %s0 = inlined_call_operand.vmem [shape: bf16[2,10,10,64], index: 0, kind: input, shape index: {}]
  %s1 = inlined_call_operand.vmem [shape: bf16[576,64], index: 1, kind: input, shape index: {}]
  %s2 = inlined_call_operand.vmem [shape: f32[1,64], index: 2, kind: input, shape index: {}]
  %s3 = inlined_call_operand.vmem [shape: bf16[2,64,64], index: 3, kind: input, shape index: {}]
  %s4 = inlined_call_operand.vmem [shape: bf16[2,64,64], index: 4, kind: output, shape index: {}]
  %s5 = sld [smem:[#allocation0]]
  $region49: #{recurrent_down_forward.8} parent=0
    _
  %s7 = ssub.s32 1, %s5
  %s8 = scalar_select 0, %s7, %s5
  loop: start=0, step=1, limit=4
  $region2: #{recurrent_down_forward.8} parent=0 // loop_pre_header
    _
  $region3: #{recurrent_down_forward.8} parent=0 // loop_header
    %s10 = sphi 0, %s14
    %p11 = scmp.ge.s32.totalorder %s10, 4
    %s20 = sphi 0, %s22
    %s23 = sphi 0, %s20
    %s24 = sphi 0, %s23
    %s40 = sphi 0, %s24
    %s44 = sphi 0, %s44
    %s46 = sphi 0, %s44
    %s47 = sphi 0, %s46
    %s61 = sphi 0, %s47
    %s65 = sphi 0, %s65
    %s67 = sphi 0, %s65
    %s68 = sphi 0, %s67
    %s82 = sphi 0, %s68
    %s88 = sphi 0, %s90
    %s91 = sphi 0, %s88
    %s92 = sphi 0, %s91
    %s108 = sphi 0, %s92
    %s114 = sphi 0, %s116
    %s117 = sphi 0, %s114
    %s118 = sphi 0, %s117
    %s134 = sphi 0, %s118
  $region4: #{recurrent_down_forward.8} parent=0 // loop_header_branch
    %13 = sbr.rel (%p11) target = $region8
  $region5: #{recurrent_down_forward.8} parent=0 // loop_body
    %s15 = ssub.s32 %s10, 1
    %s16 = ssub.s32 %s10, 2
    %s17 = sadd.s32 %s10, 1
    %s18 = ssub.s32 %s10, %s17
    %p19 = scmp.eq.s32.totalorder %s18, 0
    %s21 = sadd.s32 %s20, 1
    %s22 = scalar_select %p19, %s20, %s21
    %p25 = pneg %p19
    %p26 = scmp.eq.s32.totalorder %s10, 1
    %p27 = por %p25, %p26
    %p28 = scmp.ne.s32.totalorder %s20, %s23
    %p29 = scmp.eq.s32.totalorder %s10, 0
    %p30 = por %p28, %p29
    %p31 = scmp.ne.s32.totalorder %s20, %s23
    %p32 = scmp.eq.s32.totalorder %s15, 1
    %p33 = por %p31, %p32
    %p34 = scmp.ne.s32.totalorder %s23, %s24
    %p35 = scmp.eq.s32.totalorder %s15, 0
    %p36 = por %p34, %p35
    %p37 = scmp.ne.s32.totalorder %s23, %s24
    %p38 = scmp.eq.s32.totalorder %s16, 1
    %p39 = por %p37, %p38
    %p41 = scmp.ne.s32.totalorder %s24, %s40
    %p42 = scmp.eq.s32.totalorder %s16, 0
    %p43 = por %p41, %p42
    %s45 = sadd.s32 %s44, 1
    %p48 = scmp.eq.s32.totalorder %s10, 1
    %p49 = scmp.ne.s32.totalorder %s44, %s46
    %p50 = scmp.eq.s32.totalorder %s10, 0
    %p51 = por %p49, %p50
    %p52 = scmp.ne.s32.totalorder %s44, %s46
    %p53 = scmp.eq.s32.totalorder %s15, 1
    %p54 = por %p52, %p53
    %p55 = scmp.ne.s32.totalorder %s46, %s47
    %p56 = scmp.eq.s32.totalorder %s15, 0
    %p57 = por %p55, %p56
    %p58 = scmp.ne.s32.totalorder %s46, %s47
    %p59 = scmp.eq.s32.totalorder %s16, 1
    %p60 = por %p58, %p59
    %p62 = scmp.ne.s32.totalorder %s47, %s61
    %p63 = scmp.eq.s32.totalorder %s16, 0
    %p64 = por %p62, %p63
    %s66 = sadd.s32 %s65, 1
    %p69 = scmp.eq.s32.totalorder %s10, 1
    %p70 = scmp.ne.s32.totalorder %s65, %s67
    %p71 = scmp.eq.s32.totalorder %s10, 0
    %p72 = por %p70, %p71
    %p73 = scmp.ne.s32.totalorder %s65, %s67
    %p74 = scmp.eq.s32.totalorder %s15, 1
    %p75 = por %p73, %p74
    %p76 = scmp.ne.s32.totalorder %s67, %s68
    %p77 = scmp.eq.s32.totalorder %s15, 0
    %p78 = por %p76, %p77
    %p79 = scmp.ne.s32.totalorder %s67, %s68
    %p80 = scmp.eq.s32.totalorder %s16, 1
    %p81 = por %p79, %p80
    %p83 = scmp.ne.s32.totalorder %s68, %s82
    %p84 = scmp.eq.s32.totalorder %s16, 0
    %p85 = por %p83, %p84
    %s86 = ssub.s32 %s10, %s17
    %p87 = scmp.eq.s32.totalorder %s86, 0
    %s89 = sadd.s32 %s88, 1
    %s90 = scalar_select %p87, %s88, %s89
    %p93 = pneg %p87
    %p94 = scmp.eq.s32.totalorder %s10, 1
    %p95 = por %p93, %p94
    %p96 = scmp.ne.s32.totalorder %s88, %s91
    %p97 = scmp.eq.s32.totalorder %s10, 0
    %p98 = por %p96, %p97
    %p99 = scmp.ne.s32.totalorder %s88, %s91
    %p100 = scmp.eq.s32.totalorder %s15, 1
    %p101 = por %p99, %p100
    %p102 = scmp.ne.s32.totalorder %s91, %s92
    %p103 = scmp.eq.s32.totalorder %s15, 0
    %p104 = por %p102, %p103
    %p105 = scmp.ne.s32.totalorder %s91, %s92
    %p106 = scmp.eq.s32.totalorder %s16, 1
    %p107 = por %p105, %p106
    %p109 = scmp.ne.s32.totalorder %s92, %s108
    %p110 = scmp.eq.s32.totalorder %s16, 0
    %p111 = por %p109, %p110
    %s112 = ssub.s32 %s10, %s17
    %p113 = scmp.eq.s32.totalorder %s112, 0
    %s115 = sadd.s32 %s114, 1
    %s116 = scalar_select %p113, %s114, %s115
    %p119 = pneg %p113
    %p120 = scmp.eq.s32.totalorder %s10, 1
    %p121 = por %p119, %p120
    %p122 = scmp.ne.s32.totalorder %s114, %s117
    %p123 = scmp.eq.s32.totalorder %s10, 0
    %p124 = por %p122, %p123
    %p125 = scmp.ne.s32.totalorder %s114, %s117
    %p126 = scmp.eq.s32.totalorder %s15, 1
    %p127 = por %p125, %p126
    %p128 = scmp.ne.s32.totalorder %s117, %s118
    %p129 = scmp.eq.s32.totalorder %s15, 0
    %p130 = por %p128, %p129
    %p131 = scmp.ne.s32.totalorder %s117, %s118
    %p132 = scmp.eq.s32.totalorder %s16, 1
    %p133 = por %p131, %p132
    %p135 = scmp.ne.s32.totalorder %s118, %s134
    %p136 = scmp.eq.s32.totalorder %s16, 0
    %p137 = por %p135, %p136
    %p138 = scmp.le.s32.totalorder 1, %s10
    %p139 = scmp.lt.s32.totalorder %s10, 3
    %p140 = pnand %p138, %p139
    %p141 = pneg %p140
    // Predicated region
    $region9: #{recurrent_down_forward.8} parent=5 // pred_check
      _
    $region10: #{recurrent_down_forward.8} parent=5 // pred_check_branch
      %143 = sbr.rel (%p140) target = $region12
    $region11: #{recurrent_down_forward.8} parent=5 // pred_region
      %s144 = ssub.s32 %s10, 1
      // Predicated region
      $region13: #{recurrent_down_forward.8} parent=11 // pred_check
        %p145 = pneg %p57
      $region14: #{recurrent_down_forward.8} parent=11 // pred_check_branch
        %147 = sbr.rel (%p145) target = $region16
      $region15: #{recurrent_down_forward.8} parent=11 // pred_region
        _
      $region16: #{recurrent_down_forward.8} parent=11 // pred_fallthru
        _
      // Predicated region
      $region17: #{recurrent_down_forward.8} parent=11 // pred_check
        %p148 = pneg %p78
      $region18: #{recurrent_down_forward.8} parent=11 // pred_check_branch
        %150 = sbr.rel (%p148) target = $region20
      $region19: #{recurrent_down_forward.8} parent=11 // pred_region
        _
      $region20: #{recurrent_down_forward.8} parent=11 // pred_fallthru
        _
    $region12: #{recurrent_down_forward.8} parent=5 // pred_fallthru
      _
    %p151 = scmp.lt.s32.totalorder %s10, 2
    // Predicated region
    $region21: #{recurrent_down_forward.8} parent=5 // pred_check
      %p152 = pneg %p151
    $region22: #{recurrent_down_forward.8} parent=5 // pred_check_branch
      %154 = sbr.rel (%p152) target = $region24
    $region23: #{recurrent_down_forward.8} parent=5 // pred_region
      // Predicated region
      $region25: #{recurrent_down_forward.8} parent=23 // pred_check
        %p155 = pneg %p30
      $region26: #{recurrent_down_forward.8} parent=23 // pred_check_branch
        %157 = sbr.rel (%p155) target = $region28
      $region27: #{recurrent_down_forward.8} parent=23 // pred_region
        %p158 = scmp.lt.s32.totalorder %s10, 1
        %s159 = scalar_select %p158, %s10, 1
        %s160 = smul.addr %s159, 20
        %s161 = smul.addr %s160, 4
        %s162 = scalar_lea.vmem %s0, %s161
      $region28: #{recurrent_down_forward.8} parent=23 // pred_fallthru
        _
      // Predicated region
      $region29: #{recurrent_down_forward.8} parent=23 // pred_check
        %p163 = pneg %p98
      $region30: #{recurrent_down_forward.8} parent=23 // pred_check_branch
        %165 = sbr.rel (%p163) target = $region32
      $region31: #{recurrent_down_forward.8} parent=23 // pred_region
        %p166 = scmp.lt.s32.totalorder %s10, 1
        %s167 = scalar_select %p166, %s10, 1
        %s168 = smul.addr %s167, 8
        %s169 = smul.addr %s168, 4
        %s170 = scalar_lea.vmem %s3, %s169
      $region32: #{recurrent_down_forward.8} parent=23 // pred_fallthru
        _
    $region24: #{recurrent_down_forward.8} parent=5 // pred_fallthru
      _
    %p171 = scmp.le.s32.totalorder 1, %s10
    %p172 = scmp.lt.s32.totalorder %s10, 3
    %p173 = pnand %p171, %p172
    %p174 = pneg %p173
    // Predicated region
    $region33: #{recurrent_down_forward.8} parent=5 // pred_check
      _
    $region34: #{recurrent_down_forward.8} parent=5 // pred_check_branch
      %176 = sbr.rel (%p173) target = $region36
    $region35: #{recurrent_down_forward.8} parent=5 // pred_region
      %s177 = ssub.s32 %s10, 1
      %p178 = scmp.lt.s32.totalorder %s15, 1
      %s179 = scalar_select %p178, %s15, 1
      %s180 = smul.addr %s179, 20
      %s181 = smul.addr %s180, 4
      %s182 = scalar_lea.vmem %s0, %s181
      %p183 = pneg %p36
      %p184 = pneg %p33
      %p185 = pneg %p57
      %p186 = pneg %p54
      %p187 = pneg %p78
      %p188 = pneg %p75
      %p189 = scmp.lt.s32.totalorder %s15, 1
      %s190 = scalar_select %p189, %s15, 1
      %s191 = smul.addr %s190, 8
      %s192 = smul.addr %s191, 4
      %s193 = scalar_lea.vmem %s3, %s192
      %p194 = pneg %p104
      %p195 = pneg %p101
      %p196 = pneg %p130
      %p197 = pneg %p127
      %p198 = scmp.lt.s32.totalorder %s15, 1
      %s199 = scalar_select %p198, %s15, 1
      %s200 = smul.addr %s199, 8
      %s201 = smul.addr %s200, 4
      %s202 = scalar_lea.vmem %s4, %s201
      %p203 = scmp.lt.s32.totalorder %s15, 1
      %s204 = scalar_select %p203, %s15, 1
      %s205 = smul.addr %s204, 20
      %s206 = smul.addr %s205, 4
      %s207 = scalar_lea.vmem %s0, %s206
      %p208 = scmp.lt.s32.totalorder %s15, 1
      %s209 = scalar_select %p208, %s15, 1
      %s210 = smul.addr %s209, 8
      %s211 = smul.addr %s210, 4
      %s212 = scalar_lea.vmem %s3, %s211
      %p213 = scmp.lt.s32.totalorder %s15, 1
      %s214 = scalar_select %p213, %s15, 1
      %s215 = smul.addr %s214, 8
      %s216 = smul.addr %s215, 4
      %s217 = scalar_lea.vmem %s4, %s216
      %v219 = vld [vmem:[%s207] sm:$0xf]
      %v220 = vld [vmem:[%s207 + $0x8] sm:$0xf]
      %v221 = vld [vmem:[%s207 + $0x10] sm:$0xf]
      %v222 = vld [vmem:[%s207 + $0x18] sm:$0xf]
      %v223 = vld [vmem:[%s207 + $0x20] sm:$0xf]
      %v224 = vld [vmem:[%s207 + $0x28] sm:$0xf]
      %v225 = vld [vmem:[%s207 + $0x30] sm:$0xf]
      %v226 = vld [vmem:[%s207 + $0x38] sm:$0xf]
      %v227 = vld [vmem:[%s1] sm:$0xf]
      %v228 = vld [vmem:[%s1 + $0x4] sm:$0xf]
      %v229 = vld [vmem:[%s1 + $0x8] sm:$0xf]
      %v230 = vld [vmem:[%s1 + $0xc] sm:$0xf]
      %v231 = vld [vmem:[%s1 + $0x10] sm:$0xf]
      %v232 = vld [vmem:[%s1 + $0x14] sm:$0xf]
      %v233 = vld [vmem:[%s1 + $0x18] sm:$0xf]
      %v234 = vld [vmem:[%s1 + $0x1c] sm:$0xf]
      %v235 = vld [vmem:[%s207 + $0x4] sm:$0x1]
      %v236 = vld [vmem:[%s207 + $0xc] sm:$0x1]
      %v237 = vld [vmem:[%s207 + $0x14] sm:$0x1]
      %v238 = vld [vmem:[%s207 + $0x1c] sm:$0x1]
      %v239 = vld [vmem:[%s207 + $0x24] sm:$0x1]
      %v240 = vld [vmem:[%s207 + $0x2c] sm:$0x1]
      %v241 = vld [vmem:[%s207 + $0x34] sm:$0x1]
      %v242 = vld [vmem:[%s207 + $0x3c] sm:$0x1]
      %vm243 = vsmask.f32 3328
      %vm244 = vsmask.f32 7440
      %vm245 = vmor %vm243, %vm244
      %v247 = vshrl.u32 %v219, 16
      %v249 = vrot.slane %v247, 4
      %v250 = vshll.u32 %v219, 16
      %v252 = vrot.slane %v250, 5
      %v253 = vor.u32 %v249, %v252
      %v254 = vrot.slane %v253, 4
      %v256 = vshll.u32 %v235, 16
      %v258 = vrot.slane %v256, 5
      %v259 = vsel %vm245, %v254, %v258
      %v261 = vshrl.u32 %v220, 16
      %v263 = vrot.slane %v261, 4
      %v264 = vshll.u32 %v220, 16
      %v266 = vrot.slane %v264, 5
      %v267 = vor.u32 %v263, %v266
      %v268 = vrot.slane %v267, 4
      %v270 = vshll.u32 %v236, 16
      %v272 = vrot.slane %v270, 5
      %v273 = vsel %vm245, %v268, %v272
      %v275 = vshrl.u32 %v221, 16
      %v277 = vrot.slane %v275, 4
      %v278 = vshll.u32 %v221, 16
      %v280 = vrot.slane %v278, 5
      %v281 = vor.u32 %v277, %v280
      %v282 = vrot.slane %v281, 4
      %v284 = vshll.u32 %v237, 16
      %v286 = vrot.slane %v284, 5
      %v287 = vsel %vm245, %v282, %v286
      %v289 = vshrl.u32 %v222, 16
      %v291 = vrot.slane %v289, 4
      %v292 = vshll.u32 %v222, 16
      %v294 = vrot.slane %v292, 5
      %v295 = vor.u32 %v291, %v294
      %v296 = vrot.slane %v295, 4
      %v298 = vshll.u32 %v238, 16
      %v300 = vrot.slane %v298, 5
      %v301 = vsel %vm245, %v296, %v300
      %v303 = vshrl.u32 %v223, 16
      %v305 = vrot.slane %v303, 4
      %v306 = vshll.u32 %v223, 16
      %v308 = vrot.slane %v306, 5
      %v309 = vor.u32 %v305, %v308
      %v310 = vrot.slane %v309, 4
      %v312 = vshll.u32 %v239, 16
      %v314 = vrot.slane %v312, 5
      %v315 = vsel %vm245, %v310, %v314
      %v317 = vshrl.u32 %v224, 16
      %v319 = vrot.slane %v317, 4
      %v320 = vshll.u32 %v224, 16
      %v322 = vrot.slane %v320, 5
      %v323 = vor.u32 %v319, %v322
      %v324 = vrot.slane %v323, 4
      %v326 = vshll.u32 %v240, 16
      %v328 = vrot.slane %v326, 5
      %v329 = vsel %vm245, %v324, %v328
      %v331 = vshrl.u32 %v225, 16
      %v333 = vrot.slane %v331, 4
      %v334 = vshll.u32 %v225, 16
      %v336 = vrot.slane %v334, 5
      %v337 = vor.u32 %v333, %v336
      %v338 = vrot.slane %v337, 4
      %v340 = vshll.u32 %v241, 16
      %v342 = vrot.slane %v340, 5
      %v343 = vsel %vm245, %v338, %v342
      %v345 = vshrl.u32 %v226, 16
      %v347 = vrot.slane %v345, 4
      %v348 = vshll.u32 %v226, 16
      %v350 = vrot.slane %v348, 5
      %v351 = vor.u32 %v347, %v350
      %v352 = vrot.slane %v351, 4
      %v354 = vshll.u32 %v242, 16
      %v356 = vrot.slane %v354, 5
      %v357 = vsel %vm245, %v352, %v356
      %v358 = vld [vmem:[%s1 + $0x20] sm:$0xf]
      %v359 = vld [vmem:[%s1 + $0x24] sm:$0xf]
      %v360 = vld [vmem:[%s1 + $0x28] sm:$0xf]
      %v361 = vld [vmem:[%s1 + $0x2c] sm:$0xf]
      %v362 = vld [vmem:[%s1 + $0x30] sm:$0xf]
      %v363 = vld [vmem:[%s1 + $0x34] sm:$0xf]
      %v364 = vld [vmem:[%s1 + $0x38] sm:$0xf]
      %v365 = vld [vmem:[%s1 + $0x3c] sm:$0xf]
      %v366 = vunpack.c.l.b16 %v259
      %v367 = vunpack.c.l.b16 %v273
      %v368 = vunpack.c.l.b16 %v287
      %v369 = vunpack.c.l.b16 %v301
      %v370 = vunpack.c.l.b16 %v315
      %v371 = vunpack.c.l.b16 %v329
      %v372 = vunpack.c.l.b16 %v343
      %v373 = vunpack.c.l.b16 %v357
      %v374 = vpack.c.b16 %v367, %v366
      %v375 = vpack.c.b16 %v369, %v368
      %v376 = vpack.c.b16 %v371, %v370
      %v377 = vpack.c.b16 %v373, %v372
      %v386 = vunpack.c.l.b16 %v358
      %v387 = vunpack.c.l.b16 %v359
      %v388 = vunpack.c.l.b16 %v360
      %v389 = vunpack.c.l.b16 %v361
      %v390 = vunpack.c.l.b16 %v362
      %v391 = vunpack.c.l.b16 %v363
      %v392 = vunpack.c.l.b16 %v364
      %v393 = vunpack.c.l.b16 %v365
      %v394 = vpack.c.b16 %v387, %v386
      %v395 = vpack.c.b16 %v389, %v388
      %v396 = vpack.c.b16 %v391, %v390
      %v397 = vpack.c.b16 %v393, %v392
      %vm402 = vcmask 523264
      %v404 = vsel %vm402, %v374, 0
      %v407 = vsel %vm402, %v375, 0
      %v410 = vsel %vm402, %v376, 0
      %v413 = vsel %vm402, %v377, 0
      %415 = vmatprep.subr.bf16.mxu0 0
      %416 = vmatpush1.bf16.msra.mxu0 %v394
      %417 = vmatprep.subr.bf16.mxu0 0
      %418 = vmatpush1.bf16.msra.mxu0 %v395
      %419 = vmatprep.subr.bf16.mxu0 0
      %420 = vmatpush1.bf16.msra.mxu0 %v396
      %421 = vmatprep.subr.bf16.mxu0 0
      %422 = vmatpush1.bf16.msra.mxu0 %v397
      %423 = vmatprep.subr.bf16.mxu0 0
      %424 = vmatpush1.bf16.msra.mxu0 0
      %425 = vmatprep.subr.bf16.mxu0 0
      %426 = vmatpush1.bf16.msra.mxu0 0
      %427 = vmatprep.subr.bf16.mxu0 0
      %428 = vmatpush1.bf16.msra.mxu0 0
      %429 = vmatprep.subr.bf16.mxu0 0
      %430 = vmatpush1.bf16.msra.mxu0 0
      %431 = vmatprep.subr.bf16.mxu0 0
      %432 = vmatpush1.bf16.msra.mxu0 0
      %433 = vmatprep.subr.bf16.mxu0 0
      %434 = vmatpush1.bf16.msra.mxu0 0
      %435 = vmatprep.subr.bf16.mxu0 0
      %436 = vmatpush1.bf16.msra.mxu0 0
      %437 = vmatprep.subr.bf16.mxu0 0
      %438 = vmatpush1.bf16.msra.mxu0 0
      %439 = vmatprep.subr.bf16.mxu0 0
      %440 = vmatpush1.bf16.msra.mxu0 0
      %441 = vmatprep.subr.bf16.mxu0 0
      %442 = vmatpush1.bf16.msra.mxu0 0
      %443 = vmatprep.subr.bf16.mxu0 0
      %444 = vmatpush1.bf16.msra.mxu0 0
      %445 = vmatprep.subr.bf16.mxu0 0
      %446 = vmatpush1.bf16.msra.mxu0 0
      %447 = vmatprep.mubr.bf16.mxu0 0
      %448 = vmatmul.mubr.bf16.gmra.mrb[0].mxu0 %v404
      %v449 = vpop.f32.mrb[0].mxu0
      %v450 = vadd.f32 0.0, %v449
      %v451 = vpop.f32.mrb[0].mxu0
      %v452 = vpop.f32.mrb[0].mxu0
      %v453 = vadd.f32 0.0, %v452
      %v454 = vpop.f32.mrb[0].mxu0
      %455 = vmatprep.mubr.bf16.mxu0 0
      %456 = vmatmul.mubr.bf16.gmra.mrb[0].mxu0 %v407
      %v457 = vpop.f32.mrb[0].mxu0
      %v458 = vadd.f32 0.0, %v457
      %v459 = vpop.f32.mrb[0].mxu0
      %v460 = vpop.f32.mrb[0].mxu0
      %v461 = vadd.f32 0.0, %v460
      %v462 = vpop.f32.mrb[0].mxu0
      %463 = vmatprep.mubr.bf16.mxu0 0
      %464 = vmatmul.mubr.bf16.gmra.mrb[0].mxu0 %v410
      %v465 = vpop.f32.mrb[0].mxu0
      %v466 = vadd.f32 0.0, %v465
      %v467 = vpop.f32.mrb[0].mxu0
      %v468 = vpop.f32.mrb[0].mxu0
      %v469 = vadd.f32 0.0, %v468
      %v470 = vpop.f32.mrb[0].mxu0
      %471 = vmatprep.mubr.bf16.mxu0 0
      %472 = vmatmul.mubr.bf16.gmra.mrb[0].mxu0 %v413
      %v473 = vpop.f32.mrb[0].mxu0
      %v474 = vadd.f32 0.0, %v473
      %v475 = vpop.f32.mrb[0].mxu0
      %v476 = vpop.f32.mrb[0].mxu0
      %v477 = vadd.f32 0.0, %v476
      %v478 = vpop.f32.mrb[0].mxu0
      %479 = vdwg.mxu0
      %v488 = vunpack.c.l.b16 %v219
      %v489 = vunpack.c.l.b16 %v220
      %v490 = vunpack.c.l.b16 %v221
      %v491 = vunpack.c.l.b16 %v222
      %v492 = vunpack.c.l.b16 %v223
      %v493 = vunpack.c.l.b16 %v224
      %v494 = vunpack.c.l.b16 %v225
      %v495 = vunpack.c.l.b16 %v226
      %v496 = vpack.c.b16 %v489, %v488
      %v497 = vpack.c.b16 %v491, %v490
      %v498 = vpack.c.b16 %v493, %v492
      %v499 = vpack.c.b16 %v495, %v494
      %v508 = vunpack.c.l.b16 %v227
      %v509 = vunpack.c.l.b16 %v228
      %v510 = vunpack.c.l.b16 %v229
      %v511 = vunpack.c.l.b16 %v230
      %v512 = vunpack.c.l.b16 %v231
      %v513 = vunpack.c.l.b16 %v232
      %v514 = vunpack.c.l.b16 %v233
      %v515 = vunpack.c.l.b16 %v234
      %v516 = vpack.c.b16 %v509, %v508
      %v517 = vpack.c.b16 %v511, %v510
      %v518 = vpack.c.b16 %v513, %v512
      %v519 = vpack.c.b16 %v515, %v514
      %v525 = vsel %vm402, %v496, 0
      %v528 = vsel %vm402, %v497, 0
      %v531 = vsel %vm402, %v498, 0
      %v534 = vsel %vm402, %v499, 0
      %536 = vmatprep.subr.bf16.mxu0 0
      %537 = vmatpush1.bf16.msra.mxu0 %v516
      %538 = vmatprep.subr.bf16.mxu0 0
      %539 = vmatpush1.bf16.msra.mxu0 %v517
      %540 = vmatprep.subr.bf16.mxu0 0
      %541 = vmatpush1.bf16.msra.mxu0 %v518
      %542 = vmatprep.subr.bf16.mxu0 0
      %543 = vmatpush1.bf16.msra.mxu0 %v519
      %544 = vmatprep.subr.bf16.mxu0 0
      %545 = vmatpush1.bf16.msra.mxu0 0
      %546 = vmatprep.subr.bf16.mxu0 0
      %547 = vmatpush1.bf16.msra.mxu0 0
      %548 = vmatprep.subr.bf16.mxu0 0
      %549 = vmatpush1.bf16.msra.mxu0 0
      %550 = vmatprep.subr.bf16.mxu0 0
      %551 = vmatpush1.bf16.msra.mxu0 0
      %552 = vmatprep.subr.bf16.mxu0 0
      %553 = vmatpush1.bf16.msra.mxu0 0
      %554 = vmatprep.subr.bf16.mxu0 0
      %555 = vmatpush1.bf16.msra.mxu0 0
      %556 = vmatprep.subr.bf16.mxu0 0
      %557 = vmatpush1.bf16.msra.mxu0 0
      %558 = vmatprep.subr.bf16.mxu0 0
      %559 = vmatpush1.bf16.msra.mxu0 0
      %560 = vmatprep.subr.bf16.mxu0 0
      %561 = vmatpush1.bf16.msra.mxu0 0
      %562 = vmatprep.subr.bf16.mxu0 0
      %563 = vmatpush1.bf16.msra.mxu0 0
      %564 = vmatprep.subr.bf16.mxu0 0
      %565 = vmatpush1.bf16.msra.mxu0 0
      %566 = vmatprep.subr.bf16.mxu0 0
      %567 = vmatpush1.bf16.msra.mxu0 0
      %568 = vmatprep.mubr.bf16.mxu0 0
      %569 = vmatmul.mubr.bf16.gmra.mrb[0].mxu0 %v525
      %v570 = vpop.f32.mrb[0].mxu0
      %v571 = vadd.f32 %v450, %v570
      %v572 = vpop.f32.mrb[0].mxu0
      %v573 = vpop.f32.mrb[0].mxu0
      %v574 = vadd.f32 %v453, %v573
      %v575 = vpop.f32.mrb[0].mxu0
      %576 = vmatprep.mubr.bf16.mxu0 0
      %577 = vmatmul.mubr.bf16.gmra.mrb[0].mxu0 %v528
      %v578 = vpop.f32.mrb[0].mxu0
      %v579 = vadd.f32 %v458, %v578
      %v580 = vpop.f32.mrb[0].mxu0
      %v581 = vpop.f32.mrb[0].mxu0
      %v582 = vadd.f32 %v461, %v581
      %v583 = vpop.f32.mrb[0].mxu0
      %584 = vmatprep.mubr.bf16.mxu0 0
      %585 = vmatmul.mubr.bf16.gmra.mrb[0].mxu0 %v531
      %v586 = vpop.f32.mrb[0].mxu0
      %v587 = vadd.f32 %v466, %v586
      %v588 = vpop.f32.mrb[0].mxu0
      %v589 = vpop.f32.mrb[0].mxu0
      %v590 = vadd.f32 %v469, %v589
      %v591 = vpop.f32.mrb[0].mxu0
      %592 = vmatprep.mubr.bf16.mxu0 0
      %593 = vmatmul.mubr.bf16.gmra.mrb[0].mxu0 %v534
      %v594 = vpop.f32.mrb[0].mxu0
      %v595 = vadd.f32 %v474, %v594
      %v596 = vpop.f32.mrb[0].mxu0
      %v597 = vpop.f32.mrb[0].mxu0
      %v598 = vadd.f32 %v477, %v597
      %v599 = vpop.f32.mrb[0].mxu0
      %600 = vdwg.mxu0
      %v601 = vld [vmem:[%s207] sm:$0xe]
      %v602 = vld [vmem:[%s207 + $0x8] sm:$0xe]
      %v603 = vld [vmem:[%s207 + $0x10] sm:$0xe]
      %v604 = vld [vmem:[%s207 + $0x18] sm:$0xe]
      %v605 = vld [vmem:[%s207 + $0x20] sm:$0xe]
      %v606 = vld [vmem:[%s207 + $0x28] sm:$0xe]
      %v607 = vld [vmem:[%s207 + $0x30] sm:$0xe]
      %v608 = vld [vmem:[%s207 + $0x38] sm:$0xe]
      %vm625 = vcmask 1042432
      %vm626 = vcmask 1046532
      %vm627 = vmor %vm625, %vm626
      %v628 = vrot.slane %v601, 5
      %v629 = vrot.slane %v628, 4
      %v630 = vrot.slane %v235, 5
      %v631 = vsel %vm627, %v629, %v630
      %v632 = vrot.slane %v602, 5
      %v633 = vrot.slane %v632, 4
      %v634 = vrot.slane %v236, 5
      %v635 = vsel %vm627, %v633, %v634
      %v636 = vrot.slane %v603, 5
      %v637 = vrot.slane %v636, 4
      %v638 = vrot.slane %v237, 5
      %v639 = vsel %vm627, %v637, %v638
      %v640 = vrot.slane %v604, 5
      %v641 = vrot.slane %v640, 4
      %v642 = vrot.slane %v238, 5
      %v643 = vsel %vm627, %v641, %v642
      %v644 = vrot.slane %v605, 5
      %v645 = vrot.slane %v644, 4
      %v646 = vrot.slane %v239, 5
      %v647 = vsel %vm627, %v645, %v646
      %v648 = vrot.slane %v606, 5
      %v649 = vrot.slane %v648, 4
      %v650 = vrot.slane %v240, 5
      %v651 = vsel %vm627, %v649, %v650
      %v652 = vrot.slane %v607, 5
      %v653 = vrot.slane %v652, 4
      %v654 = vrot.slane %v241, 5
      %v655 = vsel %vm627, %v653, %v654
      %v656 = vrot.slane %v608, 5
      %v657 = vrot.slane %v656, 4
      %v658 = vrot.slane %v242, 5
      %v659 = vsel %vm627, %v657, %v658
      %v660 = vld [vmem:[%s1 + $0x40] sm:$0xf]
      %v661 = vld [vmem:[%s1 + $0x44] sm:$0xf]
      %v662 = vld [vmem:[%s1 + $0x48] sm:$0xf]
      %v663 = vld [vmem:[%s1 + $0x4c] sm:$0xf]
      %v664 = vld [vmem:[%s1 + $0x50] sm:$0xf]
      %v665 = vld [vmem:[%s1 + $0x54] sm:$0xf]
      %v666 = vld [vmem:[%s1 + $0x58] sm:$0xf]
      %v667 = vld [vmem:[%s1 + $0x5c] sm:$0xf]
      %v668 = vunpack.c.l.b16 %v631
      %v669 = vunpack.c.l.b16 %v635
      %v670 = vunpack.c.l.b16 %v639
      %v671 = vunpack.c.l.b16 %v643
      %v672 = vunpack.c.l.b16 %v647
      %v673 = vunpack.c.l.b16 %v651
      %v674 = vunpack.c.l.b16 %v655
      %v675 = vunpack.c.l.b16 %v659
      %v676 = vpack.c.b16 %v669, %v668
      %v677 = vpack.c.b16 %v671, %v670
      %v678 = vpack.c.b16 %v673, %v672
      %v679 = vpack.c.b16 %v675, %v674
      %v688 = vunpack.c.l.b16 %v660
      %v689 = vunpack.c.l.b16 %v661
      %v690 = vunpack.c.l.b16 %v662
      %v691 = vunpack.c.l.b16 %v663
      %v692 = vunpack.c.l.b16 %v664
      %v693 = vunpack.c.l.b16 %v665
      %v694 = vunpack.c.l.b16 %v666
      %v695 = vunpack.c.l.b16 %v667
      %v696 = vpack.c.b16 %v689, %v688
      %v697 = vpack.c.b16 %v691, %v690
      %v698 = vpack.c.b16 %v693, %v692
      %v699 = vpack.c.b16 %v695, %v694
      %v705 = vsel %vm402, %v676, 0
      %v708 = vsel %vm402, %v677, 0
      %v711 = vsel %vm402, %v678, 0
      %v714 = vsel %vm402, %v679, 0
      %716 = vmatprep.subr.bf16.mxu0 0
      %717 = vmatpush1.bf16.msra.mxu0 %v696
      %718 = vmatprep.subr.bf16.mxu0 0
      %719 = vmatpush1.bf16.msra.mxu0 %v697
      %720 = vmatprep.subr.bf16.mxu0 0
      %721 = vmatpush1.bf16.msra.mxu0 %v698
      %722 = vmatprep.subr.bf16.mxu0 0
      %723 = vmatpush1.bf16.msra.mxu0 %v699
      %724 = vmatprep.subr.bf16.mxu0 0
      %725 = vmatpush1.bf16.msra.mxu0 0
      %726 = vmatprep.subr.bf16.mxu0 0
      %727 = vmatpush1.bf16.msra.mxu0 0
      %728 = vmatprep.subr.bf16.mxu0 0
      %729 = vmatpush1.bf16.msra.mxu0 0
      %730 = vmatprep.subr.bf16.mxu0 0
      %731 = vmatpush1.bf16.msra.mxu0 0
      %732 = vmatprep.subr.bf16.mxu0 0
      %733 = vmatpush1.bf16.msra.mxu0 0
      %734 = vmatprep.subr.bf16.mxu0 0
      %735 = vmatpush1.bf16.msra.mxu0 0
      %736 = vmatprep.subr.bf16.mxu0 0
      %737 = vmatpush1.bf16.msra.mxu0 0
      %738 = vmatprep.subr.bf16.mxu0 0
      %739 = vmatpush1.bf16.msra.mxu0 0
      %740 = vmatprep.subr.bf16.mxu0 0
      %741 = vmatpush1.bf16.msra.mxu0 0
      %742 = vmatprep.subr.bf16.mxu0 0
      %743 = vmatpush1.bf16.msra.mxu0 0
      %744 = vmatprep.subr.bf16.mxu0 0
      %745 = vmatpush1.bf16.msra.mxu0 0
      %746 = vmatprep.subr.bf16.mxu0 0
      %747 = vmatpush1.bf16.msra.mxu0 0
      %748 = vmatprep.mubr.bf16.mxu0 0
      %749 = vmatmul.mubr.bf16.gmra.mrb[0].mxu0 %v705
      %v750 = vpop.f32.mrb[0].mxu0
      %v751 = vadd.f32 0.0, %v750
      %v752 = vpop.f32.mrb[0].mxu0
      %v753 = vpop.f32.mrb[0].mxu0
      %v754 = vadd.f32 0.0, %v753
      %v755 = vpop.f32.mrb[0].mxu0
      %756 = vmatprep.mubr.bf16.mxu0 0
      %757 = vmatmul.mubr.bf16.gmra.mrb[0].mxu0 %v708
      %v758 = vpop.f32.mrb[0].mxu0
      %v759 = vadd.f32 0.0, %v758
      %v760 = vpop.f32.mrb[0].mxu0
      %v761 = vpop.f32.mrb[0].mxu0
      %v762 = vadd.f32 0.0, %v761
      %v763 = vpop.f32.mrb[0].mxu0
      %764 = vmatprep.mubr.bf16.mxu0 0
      %765 = vmatmul.mubr.bf16.gmra.mrb[0].mxu0 %v711
      %v766 = vpop.f32.mrb[0].mxu0
      %v767 = vadd.f32 0.0, %v766
      %v768 = vpop.f32.mrb[0].mxu0
      %v769 = vpop.f32.mrb[0].mxu0
      %v770 = vadd.f32 0.0, %v769
      %v771 = vpop.f32.mrb[0].mxu0
      %772 = vmatprep.mubr.bf16.mxu0 0
      %773 = vmatmul.mubr.bf16.gmra.mrb[0].mxu0 %v714
      %v774 = vpop.f32.mrb[0].mxu0
      %v775 = vadd.f32 0.0, %v774
      %v776 = vpop.f32.mrb[0].mxu0
      %v777 = vpop.f32.mrb[0].mxu0
      %v778 = vadd.f32 0.0, %v777
      %v779 = vpop.f32.mrb[0].mxu0
      %780 = vdwg.mxu0
      %v781 = vadd.f32 %v571, %v751
      %v782 = vadd.f32 %v574, %v754
      %v783 = vadd.f32 %v579, %v759
      %v784 = vadd.f32 %v582, %v762
      %v785 = vadd.f32 %v587, %v767
      %v786 = vadd.f32 %v590, %v770
      %v787 = vadd.f32 %v595, %v775
      %v788 = vadd.f32 %v598, %v778
      %s789 = scalar_lea.vmem %s207, 8
      %v790 = vld [vmem:[%s789] sm:$0xf]
      %v791 = vld [vmem:[%s789 + $0x8] sm:$0xf]
      %v792 = vld [vmem:[%s789 + $0x10] sm:$0xf]
      %v793 = vld [vmem:[%s789 + $0x18] sm:$0xf]
      %v794 = vld [vmem:[%s789 + $0x20] sm:$0xf]
      %v795 = vld [vmem:[%s789 + $0x28] sm:$0xf]
      %v796 = vld [vmem:[%s789 + $0x30] sm:$0xf]
      %v797 = vld [vmem:[%s789 + $0x38] sm:$0xf]
      %v798 = vld [vmem:[%s1 + $0x60] sm:$0xf]
      %v799 = vld [vmem:[%s1 + $0x64] sm:$0xf]
      %v800 = vld [vmem:[%s1 + $0x68] sm:$0xf]
      %v801 = vld [vmem:[%s1 + $0x6c] sm:$0xf]
      %v802 = vld [vmem:[%s1 + $0x70] sm:$0xf]
      %v803 = vld [vmem:[%s1 + $0x74] sm:$0xf]
      %v804 = vld [vmem:[%s1 + $0x78] sm:$0xf]
      %v805 = vld [vmem:[%s1 + $0x7c] sm:$0xf]
      %v814 = vunpack.c.l.b16 %v790
      %v815 = vunpack.c.l.b16 %v791
      %v816 = vunpack.c.l.b16 %v792
      %v817 = vunpack.c.l.b16 %v793
      %v818 = vunpack.c.l.b16 %v794
      %v819 = vunpack.c.l.b16 %v795
      %v820 = vunpack.c.l.b16 %v796
      %v821 = vunpack.c.l.b16 %v797
      %v822 = vpack.c.b16 %v815, %v814
      %v823 = vpack.c.b16 %v817, %v816
      %v824 = vpack.c.b16 %v819, %v818
      %v825 = vpack.c.b16 %v821, %v820
      %v834 = vunpack.c.l.b16 %v798
      %v835 = vunpack.c.l.b16 %v799
      %v836 = vunpack.c.l.b16 %v800
      %v837 = vunpack.c.l.b16 %v801
      %v838 = vunpack.c.l.b16 %v802
      %v839 = vunpack.c.l.b16 %v803
      %v840 = vunpack.c.l.b16 %v804
      %v841 = vunpack.c.l.b16 %v805
      %v842 = vpack.c.b16 %v835, %v834
      %v843 = vpack.c.b16 %v837, %v836
      %v844 = vpack.c.b16 %v839, %v838
      %v845 = vpack.c.b16 %v841, %v840
      %v851 = vsel %vm402, %v822, 0
      %v854 = vsel %vm402, %v823, 0
      %v857 = vsel %vm402, %v824, 0
      %v860 = vsel %vm402, %v825, 0
      %862 = vmatprep.subr.bf16.mxu0 0
      %863 = vmatpush1.bf16.msra.mxu0 %v842
      %864 = vmatprep.subr.bf16.mxu0 0
      %865 = vmatpush1.bf16.msra.mxu0 %v843
      %866 = vmatprep.subr.bf16.mxu0 0
      %867 = vmatpush1.bf16.msra.mxu0 %v844
      %868 = vmatprep.subr.bf16.mxu0 0
      %869 = vmatpush1.bf16.msra.mxu0 %v845
      %870 = vmatprep.subr.bf16.mxu0 0
      %871 = vmatpush1.bf16.msra.mxu0 0
      %872 = vmatprep.subr.bf16.mxu0 0
      %873 = vmatpush1.bf16.msra.mxu0 0
      %874 = vmatprep.subr.bf16.mxu0 0
      %875 = vmatpush1.bf16.msra.mxu0 0
      %876 = vmatprep.subr.bf16.mxu0 0
      %877 = vmatpush1.bf16.msra.mxu0 0
      %878 = vmatprep.subr.bf16.mxu0 0
      %879 = vmatpush1.bf16.msra.mxu0 0
      %880 = vmatprep.subr.bf16.mxu0 0
      %881 = vmatpush1.bf16.msra.mxu0 0
      %882 = vmatprep.subr.bf16.mxu0 0
      %883 = vmatpush1.bf16.msra.mxu0 0
      %884 = vmatprep.subr.bf16.mxu0 0
      %885 = vmatpush1.bf16.msra.mxu0 0
      %886 = vmatprep.subr.bf16.mxu0 0
      %887 = vmatpush1.bf16.msra.mxu0 0
      %888 = vmatprep.subr.bf16.mxu0 0
      %889 = vmatpush1.bf16.msra.mxu0 0
      %890 = vmatprep.subr.bf16.mxu0 0
      %891 = vmatpush1.bf16.msra.mxu0 0
      %892 = vmatprep.subr.bf16.mxu0 0
      %893 = vmatpush1.bf16.msra.mxu0 0
      %894 = vmatprep.mubr.bf16.mxu0 0
      %895 = vmatmul.mubr.bf16.gmra.mrb[0].mxu0 %v851
      %v896 = vpop.f32.mrb[0].mxu0
      %v897 = vadd.f32 0.0, %v896
      %v898 = vpop.f32.mrb[0].mxu0
      %v899 = vpop.f32.mrb[0].mxu0
      %v900 = vadd.f32 0.0, %v899
      %v901 = vpop.f32.mrb[0].mxu0
      %902 = vmatprep.mubr.bf16.mxu0 0
      %903 = vmatmul.mubr.bf16.gmra.mrb[0].mxu0 %v854
      %v904 = vpop.f32.mrb[0].mxu0
      %v905 = vadd.f32 0.0, %v904
      %v906 = vpop.f32.mrb[0].mxu0
      %v907 = vpop.f32.mrb[0].mxu0
      %v908 = vadd.f32 0.0, %v907
      %v909 = vpop.f32.mrb[0].mxu0
      %910 = vmatprep.mubr.bf16.mxu0 0
      %911 = vmatmul.mubr.bf16.gmra.mrb[0].mxu0 %v857
      %v912 = vpop.f32.mrb[0].mxu0
      %v913 = vadd.f32 0.0, %v912
      %v914 = vpop.f32.mrb[0].mxu0
      %v915 = vpop.f32.mrb[0].mxu0
      %v916 = vadd.f32 0.0, %v915
      %v917 = vpop.f32.mrb[0].mxu0
      %918 = vmatprep.mubr.bf16.mxu0 0
      %919 = vmatmul.mubr.bf16.gmra.mrb[0].mxu0 %v860
      %v920 = vpop.f32.mrb[0].mxu0
      %v921 = vadd.f32 0.0, %v920
      %v922 = vpop.f32.mrb[0].mxu0
      %v923 = vpop.f32.mrb[0].mxu0
      %v924 = vadd.f32 0.0, %v923
      %v925 = vpop.f32.mrb[0].mxu0
      %926 = vdwg.mxu0
      %v927 = vadd.f32 %v781, %v897
      %v928 = vadd.f32 %v782, %v900
      %v929 = vadd.f32 %v783, %v905
      %v930 = vadd.f32 %v784, %v908
      %v931 = vadd.f32 %v785, %v913
      %v932 = vadd.f32 %v786, %v916
      %v933 = vadd.f32 %v787, %v921
      %v934 = vadd.f32 %v788, %v924
      %v935 = vld [vmem:[%s789] sm:$0xf]
      %v936 = vld [vmem:[%s789 + $0x4] sm:$0x1]
      %v937 = vld [vmem:[%s789 + $0x8] sm:$0xf]
      %v938 = vld [vmem:[%s789 + $0xc] sm:$0x1]
      %v939 = vld [vmem:[%s789 + $0x10] sm:$0xf]
      %v940 = vld [vmem:[%s789 + $0x14] sm:$0x1]
      %v941 = vld [vmem:[%s789 + $0x18] sm:$0xf]
      %v942 = vld [vmem:[%s789 + $0x1c] sm:$0x1]
      %v943 = vld [vmem:[%s789 + $0x20] sm:$0xf]
      %v944 = vld [vmem:[%s789 + $0x24] sm:$0x1]
      %v945 = vld [vmem:[%s789 + $0x28] sm:$0xf]
      %v946 = vld [vmem:[%s789 + $0x2c] sm:$0x1]
      %v947 = vld [vmem:[%s789 + $0x30] sm:$0xf]
      %v948 = vld [vmem:[%s789 + $0x34] sm:$0x1]
      %v949 = vld [vmem:[%s789 + $0x38] sm:$0xf]
      %v950 = vld [vmem:[%s789 + $0x3c] sm:$0x1]
      %v952 = vshrl.u32 %v935, 16
      %v954 = vrot.slane %v952, 4
      %v955 = vshll.u32 %v935, 16
      %v957 = vrot.slane %v955, 5
      %v958 = vor.u32 %v954, %v957
      %v959 = vrot.slane %v958, 4
      %v961 = vshll.u32 %v936, 16
      %v963 = vrot.slane %v961, 5
      %v964 = vsel %vm245, %v959, %v963
      %v966 = vshrl.u32 %v937, 16
      %v968 = vrot.slane %v966, 4
      %v969 = vshll.u32 %v937, 16
      %v971 = vrot.slane %v969, 5
      %v972 = vor.u32 %v968, %v971
      %v973 = vrot.slane %v972, 4
      %v975 = vshll.u32 %v938, 16
      %v977 = vrot.slane %v975, 5
      %v978 = vsel %vm245, %v973, %v977
      %v980 = vshrl.u32 %v939, 16
      %v982 = vrot.slane %v980, 4
      %v983 = vshll.u32 %v939, 16
      %v985 = vrot.slane %v983, 5
      %v986 = vor.u32 %v982, %v985
      %v987 = vrot.slane %v986, 4
      %v989 = vshll.u32 %v940, 16
      %v991 = vrot.slane %v989, 5
      %v992 = vsel %vm245, %v987, %v991
      %v994 = vshrl.u32 %v941, 16
      %v996 = vrot.slane %v994, 4
      %v997 = vshll.u32 %v941, 16
      %v999 = vrot.slane %v997, 5
      %v1000 = vor.u32 %v996, %v999
      %v1001 = vrot.slane %v1000, 4
      %v1003 = vshll.u32 %v942, 16
      %v1005 = vrot.slane %v1003, 5
      %v1006 = vsel %vm245, %v1001, %v1005
      %v1008 = vshrl.u32 %v943, 16
      %v1010 = vrot.slane %v1008, 4
      %v1011 = vshll.u32 %v943, 16
      %v1013 = vrot.slane %v1011, 5
      %v1014 = vor.u32 %v1010, %v1013
      %v1015 = vrot.slane %v1014, 4
      %v1017 = vshll.u32 %v944, 16
      %v1019 = vrot.slane %v1017, 5
      %v1020 = vsel %vm245, %v1015, %v1019
      %v1022 = vshrl.u32 %v945, 16
      %v1024 = vrot.slane %v1022, 4
      %v1025 = vshll.u32 %v945, 16
      %v1027 = vrot.slane %v1025, 5
      %v1028 = vor.u32 %v1024, %v1027
      %v1029 = vrot.slane %v1028, 4
      %v1031 = vshll.u32 %v946, 16
      %v1033 = vrot.slane %v1031, 5
      %v1034 = vsel %vm245, %v1029, %v1033
      %v1036 = vshrl.u32 %v947, 16
      %v1038 = vrot.slane %v1036, 4
      %v1039 = vshll.u32 %v947, 16
      %v1041 = vrot.slane %v1039, 5
      %v1042 = vor.u32 %v1038, %v1041
      %v1043 = vrot.slane %v1042, 4
      %v1045 = vshll.u32 %v948, 16
      %v1047 = vrot.slane %v1045, 5
      %v1048 = vsel %vm245, %v1043, %v1047
      %v1050 = vshrl.u32 %v949, 16
      %v1052 = vrot.slane %v1050, 4
      %v1053 = vshll.u32 %v949, 16
      %v1055 = vrot.slane %v1053, 5
      %v1056 = vor.u32 %v1052, %v1055
      %v1057 = vrot.slane %v1056, 4
      %v1059 = vshll.u32 %v950, 16
      %v1061 = vrot.slane %v1059, 5
      %v1062 = vsel %vm245, %v1057, %v1061
      %v1063 = vld [vmem:[%s1 + $0x80] sm:$0xf]
      %v1064 = vld [vmem:[%s1 + $0x84] sm:$0xf]
      %v1065 = vld [vmem:[%s1 + $0x88] sm:$0xf]
      %v1066 = vld [vmem:[%s1 + $0x8c] sm:$0xf]
      %v1067 = vld [vmem:[%s1 + $0x90] sm:$0xf]
      %v1068 = vld [vmem:[%s1 + $0x94] sm:$0xf]
      %v1069 = vld [vmem:[%s1 + $0x98] sm:$0xf]
      %v1070 = vld [vmem:[%s1 + $0x9c] sm:$0xf]
      %v1071 = vunpack.c.l.b16 %v964
      %v1072 = vunpack.c.l.b16 %v978
      %v1073 = vunpack.c.l.b16 %v992
      %v1074 = vunpack.c.l.b16 %v1006
      %v1075 = vunpack.c.l.b16 %v1020
      %v1076 = vunpack.c.l.b16 %v1034
      %v1077 = vunpack.c.l.b16 %v1048
      %v1078 = vunpack.c.l.b16 %v1062
      %v1079 = vpack.c.b16 %v1072, %v1071
      %v1080 = vpack.c.b16 %v1074, %v1073
      %v1081 = vpack.c.b16 %v1076, %v1075
      %v1082 = vpack.c.b16 %v1078, %v1077
      %v1091 = vunpack.c.l.b16 %v1063
      %v1092 = vunpack.c.l.b16 %v1064
      %v1093 = vunpack.c.l.b16 %v1065
      %v1094 = vunpack.c.l.b16 %v1066
      %v1095 = vunpack.c.l.b16 %v1067
      %v1096 = vunpack.c.l.b16 %v1068
      %v1097 = vunpack.c.l.b16 %v1069
      %v1098 = vunpack.c.l.b16 %v1070
      %v1099 = vpack.c.b16 %v1092, %v1091
      %v1100 = vpack.c.b16 %v1094, %v1093
      %v1101 = vpack.c.b16 %v1096, %v1095
      %v1102 = vpack.c.b16 %v1098, %v1097
      %v1108 = vsel %vm402, %v1079, 0
      %v1111 = vsel %vm402, %v1080, 0
      %v1114 = vsel %vm402, %v1081, 0
      %v1117 = vsel %vm402, %v1082, 0
      %1119 = vmatprep.subr.bf16.mxu0 0
      %1120 = vmatpush1.bf16.msra.mxu0 %v1099
      %1121 = vmatprep.subr.bf16.mxu0 0
      %1122 = vmatpush1.bf16.msra.mxu0 %v1100
      %1123 = vmatprep.subr.bf16.mxu0 0
      %1124 = vmatpush1.bf16.msra.mxu0 %v1101
      %1125 = vmatprep.subr.bf16.mxu0 0
      %1126 = vmatpush1.bf16.msra.mxu0 %v1102
      %1127 = vmatprep.subr.bf16.mxu0 0
      %1128 = vmatpush1.bf16.msra.mxu0 0
      %1129 = vmatprep.subr.bf16.mxu0 0
      %1130 = vmatpush1.bf16.msra.mxu0 0
      %1131 = vmatprep.subr.bf16.mxu0 0
      %1132 = vmatpush1.bf16.msra.mxu0 0
      %1133 = vmatprep.subr.bf16.mxu0 0
      %1134 = vmatpush1.bf16.msra.mxu0 0
      %1135 = vmatprep.subr.bf16.mxu0 0
      %1136 = vmatpush1.bf16.msra.mxu0 0
      %1137 = vmatprep.subr.bf16.mxu0 0
      %1138 = vmatpush1.bf16.msra.mxu0 0
      %1139 = vmatprep.subr.bf16.mxu0 0
      %1140 = vmatpush1.bf16.msra.mxu0 0
      %1141 = vmatprep.subr.bf16.mxu0 0
      %1142 = vmatpush1.bf16.msra.mxu0 0
      %1143 = vmatprep.subr.bf16.mxu0 0
      %1144 = vmatpush1.bf16.msra.mxu0 0
      %1145 = vmatprep.subr.bf16.mxu0 0
      %1146 = vmatpush1.bf16.msra.mxu0 0
      %1147 = vmatprep.subr.bf16.mxu0 0
      %1148 = vmatpush1.bf16.msra.mxu0 0
      %1149 = vmatprep.subr.bf16.mxu0 0
      %1150 = vmatpush1.bf16.msra.mxu0 0
      %1151 = vmatprep.mubr.bf16.mxu0 0
      %1152 = vmatmul.mubr.bf16.gmra.mrb[0].mxu0 %v1108
      %v1153 = vpop.f32.mrb[0].mxu0
      %v1154 = vadd.f32 0.0, %v1153
      %v1155 = vpop.f32.mrb[0].mxu0
      %v1156 = vpop.f32.mrb[0].mxu0
      %v1157 = vadd.f32 0.0, %v1156
      %v1158 = vpop.f32.mrb[0].mxu0
      %1159 = vmatprep.mubr.bf16.mxu0 0
      %1160 = vmatmul.mubr.bf16.gmra.mrb[0].mxu0 %v1111
      %v1161 = vpop.f32.mrb[0].mxu0
      %v1162 = vadd.f32 0.0, %v1161
      %v1163 = vpop.f32.mrb[0].mxu0
      %v1164 = vpop.f32.mrb[0].mxu0
      %v1165 = vadd.f32 0.0, %v1164
      %v1166 = vpop.f32.mrb[0].mxu0
      %1167 = vmatprep.mubr.bf16.mxu0 0
      %1168 = vmatmul.mubr.bf16.gmra.mrb[0].mxu0 %v1114
      %v1169 = vpop.f32.mrb[0].mxu0
      %v1170 = vadd.f32 0.0, %v1169
      %v1171 = vpop.f32.mrb[0].mxu0
      %v1172 = vpop.f32.mrb[0].mxu0
      %v1173 = vadd.f32 0.0, %v1172
      %v1174 = vpop.f32.mrb[0].mxu0
      %1175 = vmatprep.mubr.bf16.mxu0 0
      %1176 = vmatmul.mubr.bf16.gmra.mrb[0].mxu0 %v1117
      %v1177 = vpop.f32.mrb[0].mxu0
      %v1178 = vadd.f32 0.0, %v1177
      %v1179 = vpop.f32.mrb[0].mxu0
      %v1180 = vpop.f32.mrb[0].mxu0
      %v1181 = vadd.f32 0.0, %v1180
      %v1182 = vpop.f32.mrb[0].mxu0
      %1183 = vdwg.mxu0
      %v1184 = vadd.f32 %v927, %v1154
      %v1185 = vadd.f32 %v928, %v1157
      %v1186 = vadd.f32 %v929, %v1162
      %v1187 = vadd.f32 %v930, %v1165
      %v1188 = vadd.f32 %v931, %v1170
      %v1189 = vadd.f32 %v932, %v1173
      %v1190 = vadd.f32 %v933, %v1178
      %v1191 = vadd.f32 %v934, %v1181
      %v1192 = vld [vmem:[%s789] sm:$0xe]
      %v1193 = vld [vmem:[%s789 + $0x8] sm:$0xe]
      %v1194 = vld [vmem:[%s789 + $0x10] sm:$0xe]
      %v1195 = vld [vmem:[%s789 + $0x18] sm:$0xe]
      %v1196 = vld [vmem:[%s789 + $0x20] sm:$0xe]
      %v1197 = vld [vmem:[%s789 + $0x28] sm:$0xe]
      %v1198 = vld [vmem:[%s789 + $0x30] sm:$0xe]
      %v1199 = vld [vmem:[%s789 + $0x38] sm:$0xe]
      %v1216 = vrot.slane %v1192, 5
      %v1217 = vrot.slane %v1216, 4
      %v1218 = vrot.slane %v936, 5
      %v1219 = vsel %vm627, %v1217, %v1218
      %v1220 = vrot.slane %v1193, 5
      %v1221 = vrot.slane %v1220, 4
      %v1222 = vrot.slane %v938, 5
      %v1223 = vsel %vm627, %v1221, %v1222
      %v1224 = vrot.slane %v1194, 5
      %v1225 = vrot.slane %v1224, 4
      %v1226 = vrot.slane %v940, 5
      %v1227 = vsel %vm627, %v1225, %v1226
      %v1228 = vrot.slane %v1195, 5
      %v1229 = vrot.slane %v1228, 4
      %v1230 = vrot.slane %v942, 5
      %v1231 = vsel %vm627, %v1229, %v1230
      %v1232 = vrot.slane %v1196, 5
      %v1233 = vrot.slane %v1232, 4
      %v1234 = vrot.slane %v944, 5
      %v1235 = vsel %vm627, %v1233, %v1234
      %v1236 = vrot.slane %v1197, 5
      %v1237 = vrot.slane %v1236, 4
      %v1238 = vrot.slane %v946, 5
      %v1239 = vsel %vm627, %v1237, %v1238
      %v1240 = vrot.slane %v1198, 5
      %v1241 = vrot.slane %v1240, 4
      %v1242 = vrot.slane %v948, 5
      %v1243 = vsel %vm627, %v1241, %v1242
      %v1244 = vrot.slane %v1199, 5
      %v1245 = vrot.slane %v1244, 4
      %v1246 = vrot.slane %v950, 5
      %v1247 = vsel %vm627, %v1245, %v1246
      %v1248 = vld [vmem:[%s1 + $0xa0] sm:$0xf]
      %v1249 = vld [vmem:[%s1 + $0xa4] sm:$0xf]
      %v1250 = vld [vmem:[%s1 + $0xa8] sm:$0xf]
      %v1251 = vld [vmem:[%s1 + $0xac] sm:$0xf]
      %v1252 = vld [vmem:[%s1 + $0xb0] sm:$0xf]
      %v1253 = vld [vmem:[%s1 + $0xb4] sm:$0xf]
      %v1254 = vld [vmem:[%s1 + $0xb8] sm:$0xf]
      %v1255 = vld [vmem:[%s1 + $0xbc] sm:$0xf]
      %v1256 = vunpack.c.l.b16 %v1219
      %v1257 = vunpack.c.l.b16 %v1223
      %v1258 = vunpack.c.l.b16 %v1227
      %v1259 = vunpack.c.l.b16 %v1231
      %v1260 = vunpack.c.l.b16 %v1235
      %v1261 = vunpack.c.l.b16 %v1239
      %v1262 = vunpack.c.l.b16 %v1243
      %v1263 = vunpack.c.l.b16 %v1247
      %v1264 = vpack.c.b16 %v1257, %v1256
      %v1265 = vpack.c.b16 %v1259, %v1258
      %v1266 = vpack.c.b16 %v1261, %v1260
      %v1267 = vpack.c.b16 %v1263, %v1262
      %v1276 = vunpack.c.l.b16 %v1248
      %v1277 = vunpack.c.l.b16 %v1249
      %v1278 = vunpack.c.l.b16 %v1250
      %v1279 = vunpack.c.l.b16 %v1251
      %v1280 = vunpack.c.l.b16 %v1252
      %v1281 = vunpack.c.l.b16 %v1253
      %v1282 = vunpack.c.l.b16 %v1254
      %v1283 = vunpack.c.l.b16 %v1255
      %v1284 = vpack.c.b16 %v1277, %v1276
      %v1285 = vpack.c.b16 %v1279, %v1278
      %v1286 = vpack.c.b16 %v1281, %v1280
      %v1287 = vpack.c.b16 %v1283, %v1282
      %v1293 = vsel %vm402, %v1264, 0
      %v1296 = vsel %vm402, %v1265, 0
      %v1299 = vsel %vm402, %v1266, 0
      %v1302 = vsel %vm402, %v1267, 0
      %1304 = vmatprep.subr.bf16.mxu0 0
      %1305 = vmatpush1.bf16.msra.mxu0 %v1284
      %1306 = vmatprep.subr.bf16.mxu0 0
      %1307 = vmatpush1.bf16.msra.mxu0 %v1285
      %1308 = vmatprep.subr.bf16.mxu0 0
      %1309 = vmatpush1.bf16.msra.mxu0 %v1286
      %1310 = vmatprep.subr.bf16.mxu0 0
      %1311 = vmatpush1.bf16.msra.mxu0 %v1287
      %1312 = vmatprep.subr.bf16.mxu0 0
      %1313 = vmatpush1.bf16.msra.mxu0 0
      %1314 = vmatprep.subr.bf16.mxu0 0
      %1315 = vmatpush1.bf16.msra.mxu0 0
      %1316 = vmatprep.subr.bf16.mxu0 0
      %1317 = vmatpush1.bf16.msra.mxu0 0
      %1318 = vmatprep.subr.bf16.mxu0 0
      %1319 = vmatpush1.bf16.msra.mxu0 0
      %1320 = vmatprep.subr.bf16.mxu0 0
      %1321 = vmatpush1.bf16.msra.mxu0 0
      %1322 = vmatprep.subr.bf16.mxu0 0
      %1323 = vmatpush1.bf16.msra.mxu0 0
      %1324 = vmatprep.subr.bf16.mxu0 0
      %1325 = vmatpush1.bf16.msra.mxu0 0
      %1326 = vmatprep.subr.bf16.mxu0 0
      %1327 = vmatpush1.bf16.msra.mxu0 0
      %1328 = vmatprep.subr.bf16.mxu0 0
      %1329 = vmatpush1.bf16.msra.mxu0 0
      %1330 = vmatprep.subr.bf16.mxu0 0
      %1331 = vmatpush1.bf16.msra.mxu0 0
      %1332 = vmatprep.subr.bf16.mxu0 0
      %1333 = vmatpush1.bf16.msra.mxu0 0
      %1334 = vmatprep.subr.bf16.mxu0 0
      %1335 = vmatpush1.bf16.msra.mxu0 0
      %1336 = vmatprep.mubr.bf16.mxu0 0
      %1337 = vmatmul.mubr.bf16.gmra.mrb[0].mxu0 %v1293
      %v1338 = vpop.f32.mrb[0].mxu0
      %v1339 = vadd.f32 0.0, %v1338
      %v1340 = vpop.f32.mrb[0].mxu0
      %v1341 = vpop.f32.mrb[0].mxu0
      %v1342 = vadd.f32 0.0, %v1341
      %v1343 = vpop.f32.mrb[0].mxu0
      %1344 = vmatprep.mubr.bf16.mxu0 0
      %1345 = vmatmul.mubr.bf16.gmra.mrb[0].mxu0 %v1296
      %v1346 = vpop.f32.mrb[0].mxu0
      %v1347 = vadd.f32 0.0, %v1346
      %v1348 = vpop.f32.mrb[0].mxu0
      %v1349 = vpop.f32.mrb[0].mxu0
      %v1350 = vadd.f32 0.0, %v1349
      %v1351 = vpop.f32.mrb[0].mxu0
      %1352 = vmatprep.mubr.bf16.mxu0 0
      %1353 = vmatmul.mubr.bf16.gmra.mrb[0].mxu0 %v1299
      %v1354 = vpop.f32.mrb[0].mxu0
      %v1355 = vadd.f32 0.0, %v1354
      %v1356 = vpop.f32.mrb[0].mxu0
      %v1357 = vpop.f32.mrb[0].mxu0
      %v1358 = vadd.f32 0.0, %v1357
      %v1359 = vpop.f32.mrb[0].mxu0
      %1360 = vmatprep.mubr.bf16.mxu0 0
      %1361 = vmatmul.mubr.bf16.gmra.mrb[0].mxu0 %v1302
      %v1362 = vpop.f32.mrb[0].mxu0
      %v1363 = vadd.f32 0.0, %v1362
      %v1364 = vpop.f32.mrb[0].mxu0
      %v1365 = vpop.f32.mrb[0].mxu0
      %v1366 = vadd.f32 0.0, %v1365
      %v1367 = vpop.f32.mrb[0].mxu0
      %1368 = vdwg.mxu0
      %v1369 = vadd.f32 %v1184, %v1339
      %v1370 = vadd.f32 %v1185, %v1342
      %v1371 = vadd.f32 %v1186, %v1347
      %v1372 = vadd.f32 %v1187, %v1350
      %v1373 = vadd.f32 %v1188, %v1355
      %v1374 = vadd.f32 %v1189, %v1358
      %v1375 = vadd.f32 %v1190, %v1363
      %v1376 = vadd.f32 %v1191, %v1366
      %s1377 = scalar_lea.vmem %s207, 16
      %v1378 = vld [vmem:[%s1377] sm:$0xf]
      %v1379 = vld [vmem:[%s1377 + $0x8] sm:$0xf]
      %v1380 = vld [vmem:[%s1377 + $0x10] sm:$0xf]
      %v1381 = vld [vmem:[%s1377 + $0x18] sm:$0xf]
      %v1382 = vld [vmem:[%s1377 + $0x20] sm:$0xf]
      %v1383 = vld [vmem:[%s1377 + $0x28] sm:$0xf]
      %v1384 = vld [vmem:[%s1377 + $0x30] sm:$0xf]
      %v1385 = vld [vmem:[%s1377 + $0x38] sm:$0xf]
      %v1386 = vld [vmem:[%s1 + $0xc0] sm:$0xf]
      %v1387 = vld [vmem:[%s1 + $0xc4] sm:$0xf]
      %v1388 = vld [vmem:[%s1 + $0xc8] sm:$0xf]
      %v1389 = vld [vmem:[%s1 + $0xcc] sm:$0xf]
      %v1390 = vld [vmem:[%s1 + $0xd0] sm:$0xf]
      %v1391 = vld [vmem:[%s1 + $0xd4] sm:$0xf]
      %v1392 = vld [vmem:[%s1 + $0xd8] sm:$0xf]
      %v1393 = vld [vmem:[%s1 + $0xdc] sm:$0xf]
      %v1402 = vunpack.c.l.b16 %v1378
      %v1403 = vunpack.c.l.b16 %v1379
      %v1404 = vunpack.c.l.b16 %v1380
      %v1405 = vunpack.c.l.b16 %v1381
      %v1406 = vunpack.c.l.b16 %v1382
      %v1407 = vunpack.c.l.b16 %v1383
      %v1408 = vunpack.c.l.b16 %v1384
      %v1409 = vunpack.c.l.b16 %v1385
      %v1410 = vpack.c.b16 %v1403, %v1402
      %v1411 = vpack.c.b16 %v1405, %v1404
      %v1412 = vpack.c.b16 %v1407, %v1406
      %v1413 = vpack.c.b16 %v1409, %v1408
      %v1422 = vunpack.c.l.b16 %v1386
      %v1423 = vunpack.c.l.b16 %v1387
      %v1424 = vunpack.c.l.b16 %v1388
      %v1425 = vunpack.c.l.b16 %v1389
      %v1426 = vunpack.c.l.b16 %v1390
      %v1427 = vunpack.c.l.b16 %v1391
      %v1428 = vunpack.c.l.b16 %v1392
      %v1429 = vunpack.c.l.b16 %v1393
      %v1430 = vpack.c.b16 %v1423, %v1422
      %v1431 = vpack.c.b16 %v1425, %v1424
      %v1432 = vpack.c.b16 %v1427, %v1426
      %v1433 = vpack.c.b16 %v1429, %v1428
      %v1439 = vsel %vm402, %v1410, 0
      %v1442 = vsel %vm402, %v1411, 0
      %v1445 = vsel %vm402, %v1412, 0
      %v1448 = vsel %vm402, %v1413, 0
      %1450 = vmatprep.subr.bf16.mxu0 0
      %1451 = vmatpush1.bf16.msra.mxu0 %v1430
      %1452 = vmatprep.subr.bf16.mxu0 0
      %1453 = vmatpush1.bf16.msra.mxu0 %v1431
      %1454 = vmatprep.subr.bf16.mxu0 0
      %1455 = vmatpush1.bf16.msra.mxu0 %v1432
      %1456 = vmatprep.subr.bf16.mxu0 0
      %1457 = vmatpush1.bf16.msra.mxu0 %v1433
      %1458 = vmatprep.subr.bf16.mxu0 0
      %1459 = vmatpush1.bf16.msra.mxu0 0
      %1460 = vmatprep.subr.bf16.mxu0 0
      %1461 = vmatpush1.bf16.msra.mxu0 0
      %1462 = vmatprep.subr.bf16.mxu0 0
      %1463 = vmatpush1.bf16.msra.mxu0 0
      %1464 = vmatprep.subr.bf16.mxu0 0
      %1465 = vmatpush1.bf16.msra.mxu0 0
      %1466 = vmatprep.subr.bf16.mxu0 0
      %1467 = vmatpush1.bf16.msra.mxu0 0
      %1468 = vmatprep.subr.bf16.mxu0 0
      %1469 = vmatpush1.bf16.msra.mxu0 0
      %1470 = vmatprep.subr.bf16.mxu0 0
      %1471 = vmatpush1.bf16.msra.mxu0 0
      %1472 = vmatprep.subr.bf16.mxu0 0
      %1473 = vmatpush1.bf16.msra.mxu0 0
      %1474 = vmatprep.subr.bf16.mxu0 0
      %1475 = vmatpush1.bf16.msra.mxu0 0
      %1476 = vmatprep.subr.bf16.mxu0 0
      %1477 = vmatpush1.bf16.msra.mxu0 0
      %1478 = vmatprep.subr.bf16.mxu0 0
      %1479 = vmatpush1.bf16.msra.mxu0 0
      %1480 = vmatprep.subr.bf16.mxu0 0
      %1481 = vmatpush1.bf16.msra.mxu0 0
      %1482 = vmatprep.mubr.bf16.mxu0 0
      %1483 = vmatmul.mubr.bf16.gmra.mrb[0].mxu0 %v1439
      %v1484 = vpop.f32.mrb[0].mxu0
      %v1485 = vadd.f32 0.0, %v1484
      %v1486 = vpop.f32.mrb[0].mxu0
      %v1487 = vpop.f32.mrb[0].mxu0
      %v1488 = vadd.f32 0.0, %v1487
      %v1489 = vpop.f32.mrb[0].mxu0
      %1490 = vmatprep.mubr.bf16.mxu0 0
      %1491 = vmatmul.mubr.bf16.gmra.mrb[0].mxu0 %v1442
      %v1492 = vpop.f32.mrb[0].mxu0
      %v1493 = vadd.f32 0.0, %v1492
      %v1494 = vpop.f32.mrb[0].mxu0
      %v1495 = vpop.f32.mrb[0].mxu0
      %v1496 = vadd.f32 0.0, %v1495
      %v1497 = vpop.f32.mrb[0].mxu0
      %1498 = vmatprep.mubr.bf16.mxu0 0
      %1499 = vmatmul.mubr.bf16.gmra.mrb[0].mxu0 %v1445
      %v1500 = vpop.f32.mrb[0].mxu0
      %v1501 = vadd.f32 0.0, %v1500
      %v1502 = vpop.f32.mrb[0].mxu0
      %v1503 = vpop.f32.mrb[0].mxu0
      %v1504 = vadd.f32 0.0, %v1503
      %v1505 = vpop.f32.mrb[0].mxu0
      %1506 = vmatprep.mubr.bf16.mxu0 0
      %1507 = vmatmul.mubr.bf16.gmra.mrb[0].mxu0 %v1448
      %v1508 = vpop.f32.mrb[0].mxu0
      %v1509 = vadd.f32 0.0, %v1508
      %v1510 = vpop.f32.mrb[0].mxu0
      %v1511 = vpop.f32.mrb[0].mxu0
      %v1512 = vadd.f32 0.0, %v1511
      %v1513 = vpop.f32.mrb[0].mxu0
      %1514 = vdwg.mxu0
      %v1515 = vadd.f32 %v1369, %v1485
      %v1516 = vadd.f32 %v1370, %v1488
      %v1517 = vadd.f32 %v1371, %v1493
      %v1518 = vadd.f32 %v1372, %v1496
      %v1519 = vadd.f32 %v1373, %v1501
      %v1520 = vadd.f32 %v1374, %v1504
      %v1521 = vadd.f32 %v1375, %v1509
      %v1522 = vadd.f32 %v1376, %v1512
      %v1523 = vld [vmem:[%s1377] sm:$0xf]
      %v1524 = vld [vmem:[%s1377 + $0x4] sm:$0x1]
      %v1525 = vld [vmem:[%s1377 + $0x8] sm:$0xf]
      %v1526 = vld [vmem:[%s1377 + $0xc] sm:$0x1]
      %v1527 = vld [vmem:[%s1377 + $0x10] sm:$0xf]
      %v1528 = vld [vmem:[%s1377 + $0x14] sm:$0x1]
      %v1529 = vld [vmem:[%s1377 + $0x18] sm:$0xf]
      %v1530 = vld [vmem:[%s1377 + $0x1c] sm:$0x1]
      %v1531 = vld [vmem:[%s1377 + $0x20] sm:$0xf]
      %v1532 = vld [vmem:[%s1377 + $0x24] sm:$0x1]
      %v1533 = vld [vmem:[%s1377 + $0x28] sm:$0xf]
      %v1534 = vld [vmem:[%s1377 + $0x2c] sm:$0x1]
      %v1535 = vld [vmem:[%s1377 + $0x30] sm:$0xf]
      %v1536 = vld [vmem:[%s1377 + $0x34] sm:$0x1]
      %v1537 = vld [vmem:[%s1377 + $0x38] sm:$0xf]
      %v1538 = vld [vmem:[%s1377 + $0x3c] sm:$0x1]
      %v1540 = vshrl.u32 %v1523, 16
      %v1542 = vrot.slane %v1540, 4
      %v1543 = vshll.u32 %v1523, 16
      %v1545 = vrot.slane %v1543, 5
      %v1546 = vor.u32 %v1542, %v1545
      %v1547 = vrot.slane %v1546, 4
      %v1549 = vshll.u32 %v1524, 16
      %v1551 = vrot.slane %v1549, 5
      %v1552 = vsel %vm245, %v1547, %v1551
      %v1554 = vshrl.u32 %v1525, 16
      %v1556 = vrot.slane %v1554, 4
      %v1557 = vshll.u32 %v1525, 16
      %v1559 = vrot.slane %v1557, 5
      %v1560 = vor.u32 %v1556, %v1559
      %v1561 = vrot.slane %v1560, 4
      %v1563 = vshll.u32 %v1526, 16
      %v1565 = vrot.slane %v1563, 5
      %v1566 = vsel %vm245, %v1561, %v1565
      %v1568 = vshrl.u32 %v1527, 16
      %v1570 = vrot.slane %v1568, 4
      %v1571 = vshll.u32 %v1527, 16
      %v1573 = vrot.slane %v1571, 5
      %v1574 = vor.u32 %v1570, %v1573
      %v1575 = vrot.slane %v1574, 4
      %v1577 = vshll.u32 %v1528, 16
      %v1579 = vrot.slane %v1577, 5
      %v1580 = vsel %vm245, %v1575, %v1579
      %v1582 = vshrl.u32 %v1529, 16
      %v1584 = vrot.slane %v1582, 4
      %v1585 = vshll.u32 %v1529, 16
      %v1587 = vrot.slane %v1585, 5
      %v1588 = vor.u32 %v1584, %v1587
      %v1589 = vrot.slane %v1588, 4
      %v1591 = vshll.u32 %v1530, 16
      %v1593 = vrot.slane %v1591, 5
      %v1594 = vsel %vm245, %v1589, %v1593
      %v1596 = vshrl.u32 %v1531, 16
      %v1598 = vrot.slane %v1596, 4
      %v1599 = vshll.u32 %v1531, 16
      %v1601 = vrot.slane %v1599, 5
      %v1602 = vor.u32 %v1598, %v1601
      %v1603 = vrot.slane %v1602, 4
      %v1605 = vshll.u32 %v1532, 16
      %v1607 = vrot.slane %v1605, 5
      %v1608 = vsel %vm245, %v1603, %v1607
      %v1610 = vshrl.u32 %v1533, 16
      %v1612 = vrot.slane %v1610, 4
      %v1613 = vshll.u32 %v1533, 16
      %v1615 = vrot.slane %v1613, 5
      %v1616 = vor.u32 %v1612, %v1615
      %v1617 = vrot.slane %v1616, 4
      %v1619 = vshll.u32 %v1534, 16
      %v1621 = vrot.slane %v1619, 5
      %v1622 = vsel %vm245, %v1617, %v1621
      %v1624 = vshrl.u32 %v1535, 16
      %v1626 = vrot.slane %v1624, 4
      %v1627 = vshll.u32 %v1535, 16
      %v1629 = vrot.slane %v1627, 5
      %v1630 = vor.u32 %v1626, %v1629
      %v1631 = vrot.slane %v1630, 4
      %v1633 = vshll.u32 %v1536, 16
      %v1635 = vrot.slane %v1633, 5
      %v1636 = vsel %vm245, %v1631, %v1635
      %v1638 = vshrl.u32 %v1537, 16
      %v1640 = vrot.slane %v1638, 4
      %v1641 = vshll.u32 %v1537, 16
      %v1643 = vrot.slane %v1641, 5
      %v1644 = vor.u32 %v1640, %v1643
      %v1645 = vrot.slane %v1644, 4
      %v1647 = vshll.u32 %v1538, 16
      %v1649 = vrot.slane %v1647, 5
      %v1650 = vsel %vm245, %v1645, %v1649
      %v1651 = vld [vmem:[%s1 + $0xe0] sm:$0xf]
      %v1652 = vld [vmem:[%s1 + $0xe4] sm:$0xf]
      %v1653 = vld [vmem:[%s1 + $0xe8] sm:$0xf]
      %v1654 = vld [vmem:[%s1 + $0xec] sm:$0xf]
      %v1655 = vld [vmem:[%s1 + $0xf0] sm:$0xf]
      %v1656 = vld [vmem:[%s1 + $0xf4] sm:$0xf]
      %v1657 = vld [vmem:[%s1 + $0xf8] sm:$0xf]
      %v1658 = vld [vmem:[%s1 + $0xfc] sm:$0xf]
      %v1659 = vunpack.c.l.b16 %v1552
      %v1660 = vunpack.c.l.b16 %v1566
      %v1661 = vunpack.c.l.b16 %v1580
      %v1662 = vunpack.c.l.b16 %v1594
      %v1663 = vunpack.c.l.b16 %v1608
      %v1664 = vunpack.c.l.b16 %v1622
      %v1665 = vunpack.c.l.b16 %v1636
      %v1666 = vunpack.c.l.b16 %v1650
      %v1667 = vpack.c.b16 %v1660, %v1659
      %v1668 = vpack.c.b16 %v1662, %v1661
      %v1669 = vpack.c.b16 %v1664, %v1663
      %v1670 = vpack.c.b16 %v1666, %v1665
      %v1679 = vunpack.c.l.b16 %v1651
      %v1680 = vunpack.c.l.b16 %v1652
      %v1681 = vunpack.c.l.b16 %v1653
      %v1682 = vunpack.c.l.b16 %v1654
      %v1683 = vunpack.c.l.b16 %v1655
      %v1684 = vunpack.c.l.b16 %v1656
      %v1685 = vunpack.c.l.b16 %v1657
      %v1686 = vunpack.c.l.b16 %v1658
      %v1687 = vpack.c.b16 %v1680, %v1679
      %v1688 = vpack.c.b16 %v1682, %v1681
      %v1689 = vpack.c.b16 %v1684, %v1683
      %v1690 = vpack.c.b16 %v1686, %v1685
      %v1696 = vsel %vm402, %v1667, 0
      %v1699 = vsel %vm402, %v1668, 0
      %v1702 = vsel %vm402, %v1669, 0
      %v1705 = vsel %vm402, %v1670, 0
      %1707 = vmatprep.subr.bf16.mxu0 0
      %1708 = vmatpush1.bf16.msra.mxu0 %v1687
      %1709 = vmatprep.subr.bf16.mxu0 0
      %1710 = vmatpush1.bf16.msra.mxu0 %v1688
      %1711 = vmatprep.subr.bf16.mxu0 0
      %1712 = vmatpush1.bf16.msra.mxu0 %v1689
      %1713 = vmatprep.subr.bf16.mxu0 0
      %1714 = vmatpush1.bf16.msra.mxu0 %v1690
      %1715 = vmatprep.subr.bf16.mxu0 0
      %1716 = vmatpush1.bf16.msra.mxu0 0
      %1717 = vmatprep.subr.bf16.mxu0 0
      %1718 = vmatpush1.bf16.msra.mxu0 0
      %1719 = vmatprep.subr.bf16.mxu0 0
      %1720 = vmatpush1.bf16.msra.mxu0 0
      %1721 = vmatprep.subr.bf16.mxu0 0
      %1722 = vmatpush1.bf16.msra.mxu0 0
      %1723 = vmatprep.subr.bf16.mxu0 0
      %1724 = vmatpush1.bf16.msra.mxu0 0
      %1725 = vmatprep.subr.bf16.mxu0 0
      %1726 = vmatpush1.bf16.msra.mxu0 0
      %1727 = vmatprep.subr.bf16.mxu0 0
      %1728 = vmatpush1.bf16.msra.mxu0 0
      %1729 = vmatprep.subr.bf16.mxu0 0
      %1730 = vmatpush1.bf16.msra.mxu0 0
      %1731 = vmatprep.subr.bf16.mxu0 0
      %1732 = vmatpush1.bf16.msra.mxu0 0
      %1733 = vmatprep.subr.bf16.mxu0 0
      %1734 = vmatpush1.bf16.msra.mxu0 0
      %1735 = vmatprep.subr.bf16.mxu0 0
      %1736 = vmatpush1.bf16.msra.mxu0 0
      %1737 = vmatprep.subr.bf16.mxu0 0
      %1738 = vmatpush1.bf16.msra.mxu0 0
      %1739 = vmatprep.mubr.bf16.mxu0 0
      %1740 = vmatmul.mubr.bf16.gmra.mrb[0].mxu0 %v1696
      %v1741 = vpop.f32.mrb[0].mxu0
      %v1742 = vadd.f32 0.0, %v1741
      %v1743 = vpop.f32.mrb[0].mxu0
      %v1744 = vpop.f32.mrb[0].mxu0
      %v1745 = vadd.f32 0.0, %v1744
      %v1746 = vpop.f32.mrb[0].mxu0
      %1747 = vmatprep.mubr.bf16.mxu0 0
      %1748 = vmatmul.mubr.bf16.gmra.mrb[0].mxu0 %v1699
      %v1749 = vpop.f32.mrb[0].mxu0
      %v1750 = vadd.f32 0.0, %v1749
      %v1751 = vpop.f32.mrb[0].mxu0
      %v1752 = vpop.f32.mrb[0].mxu0
      %v1753 = vadd.f32 0.0, %v1752
      %v1754 = vpop.f32.mrb[0].mxu0
      %1755 = vmatprep.mubr.bf16.mxu0 0
      %1756 = vmatmul.mubr.bf16.gmra.mrb[0].mxu0 %v1702
      %v1757 = vpop.f32.mrb[0].mxu0
      %v1758 = vadd.f32 0.0, %v1757
      %v1759 = vpop.f32.mrb[0].mxu0
      %v1760 = vpop.f32.mrb[0].mxu0
      %v1761 = vadd.f32 0.0, %v1760
      %v1762 = vpop.f32.mrb[0].mxu0
      %1763 = vmatprep.mubr.bf16.mxu0 0
      %1764 = vmatmul.mubr.bf16.gmra.mrb[0].mxu0 %v1705
      %v1765 = vpop.f32.mrb[0].mxu0
      %v1766 = vadd.f32 0.0, %v1765
      %v1767 = vpop.f32.mrb[0].mxu0
      %v1768 = vpop.f32.mrb[0].mxu0
      %v1769 = vadd.f32 0.0, %v1768
      %v1770 = vpop.f32.mrb[0].mxu0
      %1771 = vdwg.mxu0
      %v1772 = vadd.f32 %v1515, %v1742
      %v1773 = vadd.f32 %v1516, %v1745
      %v1774 = vadd.f32 %v1517, %v1750
      %v1775 = vadd.f32 %v1518, %v1753
      %v1776 = vadd.f32 %v1519, %v1758
      %v1777 = vadd.f32 %v1520, %v1761
      %v1778 = vadd.f32 %v1521, %v1766
      %v1779 = vadd.f32 %v1522, %v1769
      %v1780 = vld [vmem:[%s1377] sm:$0xe]
      %v1781 = vld [vmem:[%s1377 + $0x8] sm:$0xe]
      %v1782 = vld [vmem:[%s1377 + $0x10] sm:$0xe]
      %v1783 = vld [vmem:[%s1377 + $0x18] sm:$0xe]
      %v1784 = vld [vmem:[%s1377 + $0x20] sm:$0xe]
      %v1785 = vld [vmem:[%s1377 + $0x28] sm:$0xe]
      %v1786 = vld [vmem:[%s1377 + $0x30] sm:$0xe]
      %v1787 = vld [vmem:[%s1377 + $0x38] sm:$0xe]
      %v1804 = vrot.slane %v1780, 5
      %v1805 = vrot.slane %v1804, 4
      %v1806 = vrot.slane %v1524, 5
      %v1807 = vsel %vm627, %v1805, %v1806
      %v1808 = vrot.slane %v1781, 5
      %v1809 = vrot.slane %v1808, 4
      %v1810 = vrot.slane %v1526, 5
      %v1811 = vsel %vm627, %v1809, %v1810
      %v1812 = vrot.slane %v1782, 5
      %v1813 = vrot.slane %v1812, 4
      %v1814 = vrot.slane %v1528, 5
      %v1815 = vsel %vm627, %v1813, %v1814
      %v1816 = vrot.slane %v1783, 5
      %v1817 = vrot.slane %v1816, 4
      %v1818 = vrot.slane %v1530, 5
      %v1819 = vsel %vm627, %v1817, %v1818
      %v1820 = vrot.slane %v1784, 5
      %v1821 = vrot.slane %v1820, 4
      %v1822 = vrot.slane %v1532, 5
      %v1823 = vsel %vm627, %v1821, %v1822
      %v1824 = vrot.slane %v1785, 5
      %v1825 = vrot.slane %v1824, 4
      %v1826 = vrot.slane %v1534, 5
      %v1827 = vsel %vm627, %v1825, %v1826
      %v1828 = vrot.slane %v1786, 5
      %v1829 = vrot.slane %v1828, 4
      %v1830 = vrot.slane %v1536, 5
      %v1831 = vsel %vm627, %v1829, %v1830
      %v1832 = vrot.slane %v1787, 5
      %v1833 = vrot.slane %v1832, 4
      %v1834 = vrot.slane %v1538, 5
      %v1835 = vsel %vm627, %v1833, %v1834
      %v1836 = vld [vmem:[%s1 + $0x100] sm:$0xf]
      %v1837 = vld [vmem:[%s1 + $0x104] sm:$0xf]
      %v1838 = vld [vmem:[%s1 + $0x108] sm:$0xf]
      %v1839 = vld [vmem:[%s1 + $0x10c] sm:$0xf]
      %v1840 = vld [vmem:[%s1 + $0x110] sm:$0xf]
      %v1841 = vld [vmem:[%s1 + $0x114] sm:$0xf]
      %v1842 = vld [vmem:[%s1 + $0x118] sm:$0xf]
      %v1843 = vld [vmem:[%s1 + $0x11c] sm:$0xf]
      %v1844 = vunpack.c.l.b16 %v1807
      %v1845 = vunpack.c.l.b16 %v1811
      %v1846 = vunpack.c.l.b16 %v1815
      %v1847 = vunpack.c.l.b16 %v1819
      %v1848 = vunpack.c.l.b16 %v1823
      %v1849 = vunpack.c.l.b16 %v1827
      %v1850 = vunpack.c.l.b16 %v1831
      %v1851 = vunpack.c.l.b16 %v1835
      %v1852 = vpack.c.b16 %v1845, %v1844
      %v1853 = vpack.c.b16 %v1847, %v1846
      %v1854 = vpack.c.b16 %v1849, %v1848
      %v1855 = vpack.c.b16 %v1851, %v1850
      %v1864 = vunpack.c.l.b16 %v1836
      %v1865 = vunpack.c.l.b16 %v1837
      %v1866 = vunpack.c.l.b16 %v1838
      %v1867 = vunpack.c.l.b16 %v1839
      %v1868 = vunpack.c.l.b16 %v1840
      %v1869 = vunpack.c.l.b16 %v1841
      %v1870 = vunpack.c.l.b16 %v1842
      %v1871 = vunpack.c.l.b16 %v1843
      %v1872 = vpack.c.b16 %v1865, %v1864
      %v1873 = vpack.c.b16 %v1867, %v1866
      %v1874 = vpack.c.b16 %v1869, %v1868
      %v1875 = vpack.c.b16 %v1871, %v1870
      %v1881 = vsel %vm402, %v1852, 0
      %v1884 = vsel %vm402, %v1853, 0
      %v1887 = vsel %vm402, %v1854, 0
      %v1890 = vsel %vm402, %v1855, 0
      %1892 = vmatprep.subr.bf16.mxu0 0
      %1893 = vmatpush1.bf16.msra.mxu0 %v1872
      %1894 = vmatprep.subr.bf16.mxu0 0
      %1895 = vmatpush1.bf16.msra.mxu0 %v1873
      %1896 = vmatprep.subr.bf16.mxu0 0
      %1897 = vmatpush1.bf16.msra.mxu0 %v1874
      %1898 = vmatprep.subr.bf16.mxu0 0
      %1899 = vmatpush1.bf16.msra.mxu0 %v1875
      %1900 = vmatprep.subr.bf16.mxu0 0
      %1901 = vmatpush1.bf16.msra.mxu0 0
      %1902 = vmatprep.subr.bf16.mxu0 0
      %1903 = vmatpush1.bf16.msra.mxu0 0
      %1904 = vmatprep.subr.bf16.mxu0 0
      %1905 = vmatpush1.bf16.msra.mxu0 0
      %1906 = vmatprep.subr.bf16.mxu0 0
      %1907 = vmatpush1.bf16.msra.mxu0 0
      %1908 = vmatprep.subr.bf16.mxu0 0
      %1909 = vmatpush1.bf16.msra.mxu0 0
      %1910 = vmatprep.subr.bf16.mxu0 0
      %1911 = vmatpush1.bf16.msra.mxu0 0
      %1912 = vmatprep.subr.bf16.mxu0 0
      %1913 = vmatpush1.bf16.msra.mxu0 0
      %1914 = vmatprep.subr.bf16.mxu0 0
      %1915 = vmatpush1.bf16.msra.mxu0 0
      %1916 = vmatprep.subr.bf16.mxu0 0
      %1917 = vmatpush1.bf16.msra.mxu0 0
      %1918 = vmatprep.subr.bf16.mxu0 0
      %1919 = vmatpush1.bf16.msra.mxu0 0
      %1920 = vmatprep.subr.bf16.mxu0 0
      %1921 = vmatpush1.bf16.msra.mxu0 0
      %1922 = vmatprep.subr.bf16.mxu0 0
      %1923 = vmatpush1.bf16.msra.mxu0 0
      %1924 = vmatprep.mubr.bf16.mxu0 0
      %1925 = vmatmul.mubr.bf16.gmra.mrb[0].mxu0 %v1881
      %v1926 = vpop.f32.mrb[0].mxu0
      %v1927 = vadd.f32 0.0, %v1926
      %v1928 = vpop.f32.mrb[0].mxu0
      %v1929 = vpop.f32.mrb[0].mxu0
      %v1930 = vadd.f32 0.0, %v1929
      %v1931 = vpop.f32.mrb[0].mxu0
      %1932 = vmatprep.mubr.bf16.mxu0 0
      %1933 = vmatmul.mubr.bf16.gmra.mrb[0].mxu0 %v1884
      %v1934 = vpop.f32.mrb[0].mxu0
      %v1935 = vadd.f32 0.0, %v1934
      %v1936 = vpop.f32.mrb[0].mxu0
      %v1937 = vpop.f32.mrb[0].mxu0
      %v1938 = vadd.f32 0.0, %v1937
      %v1939 = vpop.f32.mrb[0].mxu0
      %1940 = vmatprep.mubr.bf16.mxu0 0
      %1941 = vmatmul.mubr.bf16.gmra.mrb[0].mxu0 %v1887
      %v1942 = vpop.f32.mrb[0].mxu0
      %v1943 = vadd.f32 0.0, %v1942
      %v1944 = vpop.f32.mrb[0].mxu0
      %v1945 = vpop.f32.mrb[0].mxu0
      %v1946 = vadd.f32 0.0, %v1945
      %v1947 = vpop.f32.mrb[0].mxu0
      %1948 = vmatprep.mubr.bf16.mxu0 0
      %1949 = vmatmul.mubr.bf16.gmra.mrb[0].mxu0 %v1890
      %v1950 = vpop.f32.mrb[0].mxu0
      %v1951 = vadd.f32 0.0, %v1950
      %v1952 = vpop.f32.mrb[0].mxu0
      %v1953 = vpop.f32.mrb[0].mxu0
      %v1954 = vadd.f32 0.0, %v1953
      %v1955 = vpop.f32.mrb[0].mxu0
      %1956 = vdwg.mxu0
      %v1957 = vadd.f32 %v1772, %v1927
      %v1958 = vadd.f32 %v1773, %v1930
      %v1959 = vadd.f32 %v1774, %v1935
      %v1960 = vadd.f32 %v1775, %v1938
      %v1961 = vadd.f32 %v1776, %v1943
      %v1962 = vadd.f32 %v1777, %v1946
      %v1963 = vadd.f32 %v1778, %v1951
      %v1964 = vadd.f32 %v1779, %v1954
      %v1965 = vld [vmem:[%s2] sm:$0x1]
      %v1967 = vlaneseq
      %v1968 = vshrl.u32 %v1967, 7
      %v1969 = vsub.s32 0, %v1968
      %v1970 = vrot.slane %v1965, %v1969
      %v1972 = vadd.f32 %v1957, %v1970
      %v1973 = vadd.f32 %v1958, %v1970
      %v1974 = vadd.f32 %v1959, %v1970
      %v1975 = vadd.f32 %v1960, %v1970
      %v1976 = vadd.f32 %v1961, %v1970
      %v1977 = vadd.f32 %v1962, %v1970
      %v1978 = vadd.f32 %v1963, %v1970
      %v1979 = vadd.f32 %v1964, %v1970
      %v1980 = vld [vmem:[%s212] sm:$0xf]
      %v1981 = vld [vmem:[%s212 + $0x4] sm:$0xf]
      %v1982 = vld [vmem:[%s212 + $0x8] sm:$0xf]
      %v1983 = vld [vmem:[%s212 + $0xc] sm:$0xf]
      %v1984 = vld [vmem:[%s212 + $0x10] sm:$0xf]
      %v1985 = vld [vmem:[%s212 + $0x14] sm:$0xf]
      %v1986 = vld [vmem:[%s212 + $0x18] sm:$0xf]
      %v1987 = vld [vmem:[%s212 + $0x1c] sm:$0xf]
      %v1988 = vunpack.c.l.bf16 %v1980
      %v1989 = vunpack.c.l.bf16 %v1981
      %v1990 = vunpack.c.l.bf16 %v1982
      %v1991 = vunpack.c.l.bf16 %v1983
      %v1992 = vunpack.c.l.bf16 %v1984
      %v1993 = vunpack.c.l.bf16 %v1985
      %v1994 = vunpack.c.l.bf16 %v1986
      %v1995 = vunpack.c.l.bf16 %v1987
      %v1996 = vadd.f32 %v1972, %v1988
      %v1997 = vadd.f32 %v1973, %v1989
      %v1998 = vadd.f32 %v1974, %v1990
      %v1999 = vadd.f32 %v1975, %v1991
      %v2000 = vadd.f32 %v1976, %v1992
      %v2001 = vadd.f32 %v1977, %v1993
      %v2002 = vadd.f32 %v1978, %v1994
      %v2003 = vadd.f32 %v1979, %v1995
      %v2004 = vmax.f32 %v1996, 0.0
      %v2005 = vmax.f32 %v1997, 0.0
      %v2006 = vmax.f32 %v1998, 0.0
      %v2007 = vmax.f32 %v1999, 0.0
      %v2008 = vmax.f32 %v2000, 0.0
      %v2009 = vmax.f32 %v2001, 0.0
      %v2010 = vmax.f32 %v2002, 0.0
      %v2011 = vmax.f32 %v2003, 0.0
      %v2012 = vpack.c.bf16 %v2005, %v2004
      %v2013 = vpack.c.bf16 %v2007, %v2006
      %v2014 = vpack.c.bf16 %v2009, %v2008
      %v2015 = vpack.c.bf16 %v2011, %v2010
      %v2020 = vunpack.c.l.b16 %v2012
      %v2021 = vunpack.c.h.b16 %v2012
      %v2022 = vunpack.c.l.b16 %v2013
      %v2023 = vunpack.c.h.b16 %v2013
      %v2024 = vunpack.c.l.b16 %v2014
      %v2025 = vunpack.c.h.b16 %v2014
      %v2026 = vunpack.c.l.b16 %v2015
      %v2027 = vunpack.c.h.b16 %v2015
      %v2028 = vpack.c.b16 %v2020, %v2020
      %v2029 = vpack.c.b16 %v2021, %v2021
      %v2030 = vpack.c.b16 %v2022, %v2022
      %v2031 = vpack.c.b16 %v2023, %v2023
      %v2032 = vpack.c.b16 %v2024, %v2024
      %v2033 = vpack.c.b16 %v2025, %v2025
      %v2034 = vpack.c.b16 %v2026, %v2026
      %v2035 = vpack.c.b16 %v2027, %v2027
      %vm2044 = vcmask 519168
      %2045 = vst.msk [vmem:[%s217] sm:$0xf] %vm2044, %v2028
      %2046 = vst.msk [vmem:[%s217 + $0x4] sm:$0xf] %vm2044, %v2029
      %2047 = vst.msk [vmem:[%s217 + $0x8] sm:$0xf] %vm2044, %v2030
      %2048 = vst.msk [vmem:[%s217 + $0xc] sm:$0xf] %vm2044, %v2031
      %2049 = vst.msk [vmem:[%s217 + $0x10] sm:$0xf] %vm2044, %v2032
      %2050 = vst.msk [vmem:[%s217 + $0x14] sm:$0xf] %vm2044, %v2033
      %2051 = vst.msk [vmem:[%s217 + $0x18] sm:$0xf] %vm2044, %v2034
      %2052 = vst.msk [vmem:[%s217 + $0x1c] sm:$0xf] %vm2044, %v2035
      %p2053 = scmp.lt.s32.totalorder %s15, 1
      %s2054 = scalar_select %p2053, %s15, 1
      %s2055 = smul.addr %s2054, 8
      %s2056 = smul.addr %s2055, 4
      %s2057 = scalar_lea.vmem %s4, %s2056
      // Predicated region
      $region37: #{recurrent_down_forward.8} parent=35 // pred_check
        %p2058 = pneg %p127
      $region38: #{recurrent_down_forward.8} parent=35 // pred_check_branch
        %2060 = sbr.rel (%p2058) target = $region40
      $region39: #{recurrent_down_forward.8} parent=35 // pred_region
        _
      $region40: #{recurrent_down_forward.8} parent=35 // pred_fallthru
        _
    $region36: #{recurrent_down_forward.8} parent=5 // pred_fallthru
      _
    %p2061 = scmp.le.s32.totalorder 2, %s10
    // Predicated region
    $region41: #{recurrent_down_forward.8} parent=5 // pred_check
      %p2062 = pneg %p2061
    $region42: #{recurrent_down_forward.8} parent=5 // pred_check_branch
      %2064 = sbr.rel (%p2062) target = $region44
    $region43: #{recurrent_down_forward.8} parent=5 // pred_region
      %s2065 = ssub.s32 %s10, 2
      // Predicated region
      $region45: #{recurrent_down_forward.8} parent=43 // pred_check
        %p2066 = pneg %p133
      $region46: #{recurrent_down_forward.8} parent=43 // pred_check_branch
        %2068 = sbr.rel (%p2066) target = $region48
      $region47: #{recurrent_down_forward.8} parent=43 // pred_region
        %p2069 = scmp.lt.s32.totalorder %s16, 1
        %s2070 = scalar_select %p2069, %s16, 1
        %s2071 = smul.addr %s2070, 8
        %s2072 = smul.addr %s2071, 4
        %s2073 = scalar_lea.vmem %s4, %s2072
      $region48: #{recurrent_down_forward.8} parent=43 // pred_fallthru
        _
    $region44: #{recurrent_down_forward.8} parent=5 // pred_fallthru
      _
  $region6: #{recurrent_down_forward.8} parent=0 // loop_footer
    %s14 = sadd.s32 1, %s10
  $region7: #{recurrent_down_forward.8} parent=0 // loop_footer_branch
    %9 = sbr.rel target = $region3
  $region8: #{recurrent_down_forward.8} parent=0 // loop_exit
    _

// kernel: recurrent_down_forward.9
$region0: #{recurrent_down_forward.9}
  #allocation0 [shape = 'u32[]', space=smem, size = 0x4, offset = 0x4, fixed_abs, tag = 'smem constant byte address 0x4 - core index']
  #allocation1 [shape = 'u32[144,128]{1,0:T(1,128)}', space=vmem, size = 0x12000, scoped, tag = 'internal scratch']
  %s0 = inlined_call_operand.vmem [shape: bf16[2,10,10,128], index: 0, kind: input, shape index: {}]
  %s1 = inlined_call_operand.vmem [shape: bf16[1152,256], index: 1, kind: input, shape index: {}]
  %s2 = inlined_call_operand.vmem [shape: f32[1,256], index: 2, kind: input, shape index: {}]
  %s3 = inlined_call_operand.vmem [shape: f32[2,64,64], index: 3, kind: input, shape index: {}]
  %s4 = inlined_call_operand.vmem [shape: bf16[2,64,64], index: 4, kind: output, shape index: {0}]
  %s5 = inlined_call_operand.hbm [shape: f32[2,64,64], index: 5, kind: output, shape index: {1}]
  %6 = xla_tuple %s4, %s5
  %s7 = sld [smem:[#allocation0]]
  $region57: #{recurrent_down_forward.9} parent=0
    _
  %s9 = ssub.s32 1, %s7
  %s10 = scalar_select 0, %s9, %s7
  $region1: #{recurrent_down_forward.9} parent=0
    #allocation2 [shape = 'u8[65536]{0}', space=vmem, size = 0x10000, scoped, tag = 'output window, operand 1']
    #allocation3 [shape = 's32[2]{0}', space=sflag, size = 0x8, scoped, tag = 'scoped memory for recurrent_down_forward.9']
    %11 = vsyncpa [#allocation3], 0
    %s12 = scalar_lea.sflag [#allocation3], 1
    %13 = vsyncpa %s12, 0
    loop: start=0, step=1, limit=4
    $region2: #{recurrent_down_forward.9} parent=1 // loop_pre_header
      _
    $region3: #{recurrent_down_forward.9} parent=1 // loop_header
      %s15 = sphi 0, %s19
      %p16 = scmp.ge.s32.totalorder %s15, 4
      %s25 = sphi 0, %s27
      %s28 = sphi 0, %s25
      %s29 = sphi 0, %s28
      %s45 = sphi 0, %s29
      %s49 = sphi 0, %s49
      %s51 = sphi 0, %s49
      %s52 = sphi 0, %s51
      %s66 = sphi 0, %s52
      %s70 = sphi 0, %s70
      %s72 = sphi 0, %s70
      %s73 = sphi 0, %s72
      %s87 = sphi 0, %s73
      %s93 = sphi 0, %s95
      %s96 = sphi 0, %s93
      %s97 = sphi 0, %s96
      %s113 = sphi 0, %s97
      %s119 = sphi 0, %s121
      %s122 = sphi 0, %s119
      %s123 = sphi 0, %s122
      %s139 = sphi 0, %s123
      %s145 = sphi 0, %s147
      %s148 = sphi 0, %s145
      %s149 = sphi 0, %s148
      %s165 = sphi 0, %s149
    $region4: #{recurrent_down_forward.9} parent=1 // loop_header_branch
      %18 = sbr.rel (%p16) target = $region8
    $region5: #{recurrent_down_forward.9} parent=1 // loop_body
      %s20 = ssub.s32 %s15, 1
      %s21 = ssub.s32 %s15, 2
      %s22 = sadd.s32 %s15, 1
      %s23 = ssub.s32 %s15, %s22
      %p24 = scmp.eq.s32.totalorder %s23, 0
      %s26 = sadd.s32 %s25, 1
      %s27 = scalar_select %p24, %s25, %s26
      %p30 = pneg %p24
      %p31 = scmp.eq.s32.totalorder %s15, 1
      %p32 = por %p30, %p31
      %p33 = scmp.ne.s32.totalorder %s25, %s28
      %p34 = scmp.eq.s32.totalorder %s15, 0
      %p35 = por %p33, %p34
      %p36 = scmp.ne.s32.totalorder %s25, %s28
      %p37 = scmp.eq.s32.totalorder %s20, 1
      %p38 = por %p36, %p37
      %p39 = scmp.ne.s32.totalorder %s28, %s29
      %p40 = scmp.eq.s32.totalorder %s20, 0
      %p41 = por %p39, %p40
      %p42 = scmp.ne.s32.totalorder %s28, %s29
      %p43 = scmp.eq.s32.totalorder %s21, 1
      %p44 = por %p42, %p43
      %p46 = scmp.ne.s32.totalorder %s29, %s45
      %p47 = scmp.eq.s32.totalorder %s21, 0
      %p48 = por %p46, %p47
      %s50 = sadd.s32 %s49, 1
      %p53 = scmp.eq.s32.totalorder %s15, 1
      %p54 = scmp.ne.s32.totalorder %s49, %s51
      %p55 = scmp.eq.s32.totalorder %s15, 0
      %p56 = por %p54, %p55
      %p57 = scmp.ne.s32.totalorder %s49, %s51
      %p58 = scmp.eq.s32.totalorder %s20, 1
      %p59 = por %p57, %p58
      %p60 = scmp.ne.s32.totalorder %s51, %s52
      %p61 = scmp.eq.s32.totalorder %s20, 0
      %p62 = por %p60, %p61
      %p63 = scmp.ne.s32.totalorder %s51, %s52
      %p64 = scmp.eq.s32.totalorder %s21, 1
      %p65 = por %p63, %p64
      %p67 = scmp.ne.s32.totalorder %s52, %s66
      %p68 = scmp.eq.s32.totalorder %s21, 0
      %p69 = por %p67, %p68
      %s71 = sadd.s32 %s70, 1
      %p74 = scmp.eq.s32.totalorder %s15, 1
      %p75 = scmp.ne.s32.totalorder %s70, %s72
      %p76 = scmp.eq.s32.totalorder %s15, 0
      %p77 = por %p75, %p76
      %p78 = scmp.ne.s32.totalorder %s70, %s72
      %p79 = scmp.eq.s32.totalorder %s20, 1
      %p80 = por %p78, %p79
      %p81 = scmp.ne.s32.totalorder %s72, %s73
      %p82 = scmp.eq.s32.totalorder %s20, 0
      %p83 = por %p81, %p82
      %p84 = scmp.ne.s32.totalorder %s72, %s73
      %p85 = scmp.eq.s32.totalorder %s21, 1
      %p86 = por %p84, %p85
      %p88 = scmp.ne.s32.totalorder %s73, %s87
      %p89 = scmp.eq.s32.totalorder %s21, 0
      %p90 = por %p88, %p89
      %s91 = ssub.s32 %s15, %s22
      %p92 = scmp.eq.s32.totalorder %s91, 0
      %s94 = sadd.s32 %s93, 1
      %s95 = scalar_select %p92, %s93, %s94
      %p98 = pneg %p92
      %p99 = scmp.eq.s32.totalorder %s15, 1
      %p100 = por %p98, %p99
      %p101 = scmp.ne.s32.totalorder %s93, %s96
      %p102 = scmp.eq.s32.totalorder %s15, 0
      %p103 = por %p101, %p102
      %p104 = scmp.ne.s32.totalorder %s93, %s96
      %p105 = scmp.eq.s32.totalorder %s20, 1
      %p106 = por %p104, %p105
      %p107 = scmp.ne.s32.totalorder %s96, %s97
      %p108 = scmp.eq.s32.totalorder %s20, 0
      %p109 = por %p107, %p108
      %p110 = scmp.ne.s32.totalorder %s96, %s97
      %p111 = scmp.eq.s32.totalorder %s21, 1
      %p112 = por %p110, %p111
      %p114 = scmp.ne.s32.totalorder %s97, %s113
      %p115 = scmp.eq.s32.totalorder %s21, 0
      %p116 = por %p114, %p115
      %s117 = ssub.s32 %s15, %s22
      %p118 = scmp.eq.s32.totalorder %s117, 0
      %s120 = sadd.s32 %s119, 1
      %s121 = scalar_select %p118, %s119, %s120
      %p124 = pneg %p118
      %p125 = scmp.eq.s32.totalorder %s15, 1
      %p126 = por %p124, %p125
      %p127 = scmp.ne.s32.totalorder %s119, %s122
      %p128 = scmp.eq.s32.totalorder %s15, 0
      %p129 = por %p127, %p128
      %p130 = scmp.ne.s32.totalorder %s119, %s122
      %p131 = scmp.eq.s32.totalorder %s20, 1
      %p132 = por %p130, %p131
      %p133 = scmp.ne.s32.totalorder %s122, %s123
      %p134 = scmp.eq.s32.totalorder %s20, 0
      %p135 = por %p133, %p134
      %p136 = scmp.ne.s32.totalorder %s122, %s123
      %p137 = scmp.eq.s32.totalorder %s21, 1
      %p138 = por %p136, %p137
      %p140 = scmp.ne.s32.totalorder %s123, %s139
      %p141 = scmp.eq.s32.totalorder %s21, 0
      %p142 = por %p140, %p141
      %s143 = ssub.s32 %s15, %s22
      %p144 = scmp.eq.s32.totalorder %s143, 0
      %s146 = sadd.s32 %s145, 1
      %s147 = scalar_select %p144, %s145, %s146
      %p150 = pneg %p144
      %p151 = scmp.eq.s32.totalorder %s15, 1
      %p152 = por %p150, %p151
      %p153 = scmp.ne.s32.totalorder %s145, %s148
      %p154 = scmp.eq.s32.totalorder %s15, 0
      %p155 = por %p153, %p154
      %p156 = scmp.ne.s32.totalorder %s145, %s148
      %p157 = scmp.eq.s32.totalorder %s20, 1
      %p158 = por %p156, %p157
      %p159 = scmp.ne.s32.totalorder %s148, %s149
      %p160 = scmp.eq.s32.totalorder %s20, 0
      %p161 = por %p159, %p160
      %p162 = scmp.ne.s32.totalorder %s148, %s149
      %p163 = scmp.eq.s32.totalorder %s21, 1
      %p164 = por %p162, %p163
      %p166 = scmp.ne.s32.totalorder %s149, %s165
      %p167 = scmp.eq.s32.totalorder %s21, 0
      %p168 = por %p166, %p167
      %p169 = scmp.le.s32.totalorder 1, %s15
      %p170 = scmp.lt.s32.totalorder %s15, 3
      %p171 = pnand %p169, %p170
      %p172 = pneg %p171
      // Predicated region
      $region9: #{recurrent_down_forward.9} parent=5 // pred_check
        _
      $region10: #{recurrent_down_forward.9} parent=5 // pred_check_branch
        %174 = sbr.rel (%p171) target = $region12
      $region11: #{recurrent_down_forward.9} parent=5 // pred_region
        %s175 = ssub.s32 %s15, 1
        // Predicated region
        $region13: #{recurrent_down_forward.9} parent=11 // pred_check
          %p176 = pneg %p62
        $region14: #{recurrent_down_forward.9} parent=11 // pred_check_branch
          %178 = sbr.rel (%p176) target = $region16
        $region15: #{recurrent_down_forward.9} parent=11 // pred_region
          _
        $region16: #{recurrent_down_forward.9} parent=11 // pred_fallthru
          _
        // Predicated region
        $region17: #{recurrent_down_forward.9} parent=11 // pred_check
          %p179 = pneg %p83
        $region18: #{recurrent_down_forward.9} parent=11 // pred_check_branch
          %181 = sbr.rel (%p179) target = $region20
        $region19: #{recurrent_down_forward.9} parent=11 // pred_region
          _
        $region20: #{recurrent_down_forward.9} parent=11 // pred_fallthru
          _
      $region12: #{recurrent_down_forward.9} parent=5 // pred_fallthru
        _
      %p182 = scmp.lt.s32.totalorder %s15, 2
      // Predicated region
      $region21: #{recurrent_down_forward.9} parent=5 // pred_check
        %p183 = pneg %p182
      $region22: #{recurrent_down_forward.9} parent=5 // pred_check_branch
        %185 = sbr.rel (%p183) target = $region24
      $region23: #{recurrent_down_forward.9} parent=5 // pred_region
        // Predicated region
        $region25: #{recurrent_down_forward.9} parent=23 // pred_check
          %p186 = pneg %p35
        $region26: #{recurrent_down_forward.9} parent=23 // pred_check_branch
          %188 = sbr.rel (%p186) target = $region28
        $region27: #{recurrent_down_forward.9} parent=23 // pred_region
          %p189 = scmp.lt.s32.totalorder %s15, 1
          %s190 = scalar_select %p189, %s15, 1
          %s191 = smul.addr %s190, 20
          %s192 = smul.addr %s191, 4
          %s193 = scalar_lea.vmem %s0, %s192
        $region28: #{recurrent_down_forward.9} parent=23 // pred_fallthru
          _
        // Predicated region
        $region29: #{recurrent_down_forward.9} parent=23 // pred_check
          %p194 = pneg %p103
        $region30: #{recurrent_down_forward.9} parent=23 // pred_check_branch
          %196 = sbr.rel (%p194) target = $region32
        $region31: #{recurrent_down_forward.9} parent=23 // pred_region
          %p197 = scmp.lt.s32.totalorder %s15, 1
          %s198 = scalar_select %p197, %s15, 1
          %s199 = smul.addr %s198, 8
          %s200 = smul.addr %s199, 8
          %s201 = scalar_lea.vmem %s3, %s200
        $region32: #{recurrent_down_forward.9} parent=23 // pred_fallthru
          _
      $region24: #{recurrent_down_forward.9} parent=5 // pred_fallthru
        _
      %p202 = scmp.le.s32.totalorder 1, %s15
      %p203 = scmp.lt.s32.totalorder %s15, 3
      %p204 = pnand %p202, %p203
      %p205 = pneg %p204
      // Predicated region
      $region33: #{recurrent_down_forward.9} parent=5 // pred_check
        _
      $region34: #{recurrent_down_forward.9} parent=5 // pred_check_branch
        %207 = sbr.rel (%p204) target = $region36
      $region35: #{recurrent_down_forward.9} parent=5 // pred_region
        %s208 = ssub.s32 %s15, 1
        %p209 = scmp.lt.s32.totalorder %s20, 1
        %s210 = scalar_select %p209, %s20, 1
        %s211 = smul.addr %s210, 20
        %s212 = smul.addr %s211, 4
        %s213 = scalar_lea.vmem %s0, %s212
        %p214 = pneg %p41
        %p215 = pneg %p38
        %p216 = pneg %p62
        %p217 = pneg %p59
        %p218 = pneg %p83
        %p219 = pneg %p80
        %p220 = scmp.lt.s32.totalorder %s20, 1
        %s221 = scalar_select %p220, %s20, 1
        %s222 = smul.addr %s221, 8
        %s223 = smul.addr %s222, 8
        %s224 = scalar_lea.vmem %s3, %s223
        %p225 = pneg %p109
        %p226 = pneg %p106
        %p227 = pneg %p135
        %p228 = pneg %p132
        %p229 = scmp.lt.s32.totalorder %s20, 1
        %s230 = scalar_select %p229, %s20, 1
        %s231 = smul.addr %s230, 8
        %s232 = smul.addr %s231, 4
        %s233 = scalar_lea.vmem %s4, %s232
        %p234 = pneg %p161
        %p235 = pneg %p158
        %s236 = sand.u32 %s148, 1
        %s237 = scalar_lea.sflag [#allocation3], %s236
        %s238 = sand.u32 %s148, 1
        %s239 = smul.addr %s238, 64
        %s240 = scalar_lea.vmem [#allocation2], %s239
        %p241 = scmp.lt.s32.totalorder %s20, 1
        %s242 = scalar_select %p241, %s20, 1
        %s243 = smul.addr %s242, 20
        %s244 = smul.addr %s243, 4
        %s245 = scalar_lea.vmem %s0, %s244
        %p246 = scmp.lt.s32.totalorder %s20, 1
        %s247 = scalar_select %p246, %s20, 1
        %s248 = smul.addr %s247, 8
        %s249 = smul.addr %s248, 8
        %s250 = scalar_lea.vmem %s3, %s249
        %p251 = scmp.lt.s32.totalorder %s20, 1
        %s252 = scalar_select %p251, %s20, 1
        %s253 = smul.addr %s252, 8
        %s254 = smul.addr %s253, 4
        %s255 = scalar_lea.vmem %s4, %s254
        %v257 = vld [vmem:[%s245] sm:$0xf]
        %v258 = vld [vmem:[%s245 + $0x8] sm:$0xf]
        %v259 = vld [vmem:[%s245 + $0x10] sm:$0xf]
        %v260 = vld [vmem:[%s245 + $0x18] sm:$0xf]
        %v261 = vld [vmem:[%s245 + $0x20] sm:$0xf]
        %v262 = vld [vmem:[%s245 + $0x28] sm:$0xf]
        %v263 = vld [vmem:[%s245 + $0x30] sm:$0xf]
        %v264 = vld [vmem:[%s245 + $0x38] sm:$0xf]
        %v265 = vld [vmem:[%s1] sm:$0xff]
        %v266 = vld [vmem:[%s1 + $0x8] sm:$0xff]
        %v267 = vld [vmem:[%s1 + $0x10] sm:$0xff]
        %v268 = vld [vmem:[%s1 + $0x18] sm:$0xff]
        %v269 = vld [vmem:[%s1 + $0x20] sm:$0xff]
        %v270 = vld [vmem:[%s1 + $0x28] sm:$0xff]
        %v271 = vld [vmem:[%s1 + $0x30] sm:$0xff]
        %v272 = vld [vmem:[%s1 + $0x38] sm:$0xff]
        %v273 = vld [vmem:[%s1 + $0x40] sm:$0xff]
        %v274 = vld [vmem:[%s1 + $0x48] sm:$0xff]
        %v275 = vld [vmem:[%s1 + $0x50] sm:$0xff]
        %v276 = vld [vmem:[%s1 + $0x58] sm:$0xff]
        %v277 = vld [vmem:[%s1 + $0x60] sm:$0xff]
        %v278 = vld [vmem:[%s1 + $0x68] sm:$0xff]
        %v279 = vld [vmem:[%s1 + $0x70] sm:$0xff]
        %v280 = vld [vmem:[%s1 + $0x78] sm:$0xff]
        %v281 = vld [vmem:[%s245 + $0x4] sm:$0x1]
        %v282 = vld [vmem:[%s245 + $0xc] sm:$0x1]
        %v283 = vld [vmem:[%s245 + $0x14] sm:$0x1]
        %v284 = vld [vmem:[%s245 + $0x1c] sm:$0x1]
        %v285 = vld [vmem:[%s245 + $0x24] sm:$0x1]
        %v286 = vld [vmem:[%s245 + $0x2c] sm:$0x1]
        %v287 = vld [vmem:[%s245 + $0x34] sm:$0x1]
        %v288 = vld [vmem:[%s245 + $0x3c] sm:$0x1]
        %vm289 = vsmask.f32 3328
        %vm290 = vsmask.f32 7440
        %vm291 = vmor %vm289, %vm290
        %v293 = vshrl.u32 %v257, 16
        %v295 = vrot.slane %v293, 4
        %v296 = vshll.u32 %v257, 16
        %v298 = vrot.slane %v296, 5
        %v299 = vor.u32 %v295, %v298
        %v300 = vrot.slane %v299, 4
        %v302 = vshll.u32 %v281, 16
        %v304 = vrot.slane %v302, 5
        %v305 = vsel %vm291, %v300, %v304
        %v307 = vshrl.u32 %v258, 16
        %v309 = vrot.slane %v307, 4
        %v310 = vshll.u32 %v258, 16
        %v312 = vrot.slane %v310, 5
        %v313 = vor.u32 %v309, %v312
        %v314 = vrot.slane %v313, 4
        %v316 = vshll.u32 %v282, 16
        %v318 = vrot.slane %v316, 5
        %v319 = vsel %vm291, %v314, %v318
        %v321 = vshrl.u32 %v259, 16
        %v323 = vrot.slane %v321, 4
        %v324 = vshll.u32 %v259, 16
        %v326 = vrot.slane %v324, 5
        %v327 = vor.u32 %v323, %v326
        %v328 = vrot.slane %v327, 4
        %v330 = vshll.u32 %v283, 16
        %v332 = vrot.slane %v330, 5
        %v333 = vsel %vm291, %v328, %v332
        %v335 = vshrl.u32 %v260, 16
        %v337 = vrot.slane %v335, 4
        %v338 = vshll.u32 %v260, 16
        %v340 = vrot.slane %v338, 5
        %v341 = vor.u32 %v337, %v340
        %v342 = vrot.slane %v341, 4
        %v344 = vshll.u32 %v284, 16
        %v346 = vrot.slane %v344, 5
        %v347 = vsel %vm291, %v342, %v346
        %v349 = vshrl.u32 %v261, 16
        %v351 = vrot.slane %v349, 4
        %v352 = vshll.u32 %v261, 16
        %v354 = vrot.slane %v352, 5
        %v355 = vor.u32 %v351, %v354
        %v356 = vrot.slane %v355, 4
        %v358 = vshll.u32 %v285, 16
        %v360 = vrot.slane %v358, 5
        %v361 = vsel %vm291, %v356, %v360
        %v363 = vshrl.u32 %v262, 16
        %v365 = vrot.slane %v363, 4
        %v366 = vshll.u32 %v262, 16
        %v368 = vrot.slane %v366, 5
        %v369 = vor.u32 %v365, %v368
        %v370 = vrot.slane %v369, 4
        %v372 = vshll.u32 %v286, 16
        %v374 = vrot.slane %v372, 5
        %v375 = vsel %vm291, %v370, %v374
        %v377 = vshrl.u32 %v263, 16
        %v379 = vrot.slane %v377, 4
        %v380 = vshll.u32 %v263, 16
        %v382 = vrot.slane %v380, 5
        %v383 = vor.u32 %v379, %v382
        %v384 = vrot.slane %v383, 4
        %v386 = vshll.u32 %v287, 16
        %v388 = vrot.slane %v386, 5
        %v389 = vsel %vm291, %v384, %v388
        %v391 = vshrl.u32 %v264, 16
        %v393 = vrot.slane %v391, 4
        %v394 = vshll.u32 %v264, 16
        %v396 = vrot.slane %v394, 5
        %v397 = vor.u32 %v393, %v396
        %v398 = vrot.slane %v397, 4
        %v400 = vshll.u32 %v288, 16
        %v402 = vrot.slane %v400, 5
        %v403 = vsel %vm291, %v398, %v402
        %v404 = vld [vmem:[%s1 + $0x80] sm:$0xff]
        %v405 = vld [vmem:[%s1 + $0x88] sm:$0xff]
        %v406 = vld [vmem:[%s1 + $0x90] sm:$0xff]
        %v407 = vld [vmem:[%s1 + $0x98] sm:$0xff]
        %v408 = vld [vmem:[%s1 + $0xa0] sm:$0xff]
        %v409 = vld [vmem:[%s1 + $0xa8] sm:$0xff]
        %v410 = vld [vmem:[%s1 + $0xb0] sm:$0xff]
        %v411 = vld [vmem:[%s1 + $0xb8] sm:$0xff]
        %v412 = vld [vmem:[%s1 + $0xc0] sm:$0xff]
        %v413 = vld [vmem:[%s1 + $0xc8] sm:$0xff]
        %v414 = vld [vmem:[%s1 + $0xd0] sm:$0xff]
        %v415 = vld [vmem:[%s1 + $0xd8] sm:$0xff]
        %v416 = vld [vmem:[%s1 + $0xe0] sm:$0xff]
        %v417 = vld [vmem:[%s1 + $0xe8] sm:$0xff]
        %v418 = vld [vmem:[%s1 + $0xf0] sm:$0xff]
        %v419 = vld [vmem:[%s1 + $0xf8] sm:$0xff]
        %v420 = vunpack.c.l.b16 %v305
        %v421 = vunpack.c.l.b16 %v319
        %v422 = vunpack.c.l.b16 %v333
        %v423 = vunpack.c.l.b16 %v347
        %v424 = vunpack.c.l.b16 %v361
        %v425 = vunpack.c.l.b16 %v375
        %v426 = vunpack.c.l.b16 %v389
        %v427 = vunpack.c.l.b16 %v403
        %v428 = vpack.c.b16 %v421, %v420
        %v429 = vpack.c.b16 %v423, %v422
        %v430 = vpack.c.b16 %v425, %v424
        %v431 = vpack.c.b16 %v427, %v426
        %v452 = vunpack.c.l.b16 %v404
        %v453 = vunpack.c.h.b16 %v404
        %v454 = vunpack.c.l.b16 %v405
        %v455 = vunpack.c.h.b16 %v405
        %v456 = vunpack.c.l.b16 %v406
        %v457 = vunpack.c.h.b16 %v406
        %v458 = vunpack.c.l.b16 %v407
        %v459 = vunpack.c.h.b16 %v407
        %v460 = vunpack.c.l.b16 %v408
        %v461 = vunpack.c.h.b16 %v408
        %v462 = vunpack.c.l.b16 %v409
        %v463 = vunpack.c.h.b16 %v409
        %v464 = vunpack.c.l.b16 %v410
        %v465 = vunpack.c.h.b16 %v410
        %v466 = vunpack.c.l.b16 %v411
        %v467 = vunpack.c.h.b16 %v411
        %v468 = vunpack.c.l.b16 %v412
        %v469 = vunpack.c.h.b16 %v412
        %v470 = vunpack.c.l.b16 %v413
        %v471 = vunpack.c.h.b16 %v413
        %v472 = vunpack.c.l.b16 %v414
        %v473 = vunpack.c.h.b16 %v414
        %v474 = vunpack.c.l.b16 %v415
        %v475 = vunpack.c.h.b16 %v415
        %v476 = vunpack.c.l.b16 %v416
        %v477 = vunpack.c.h.b16 %v416
        %v478 = vunpack.c.l.b16 %v417
        %v479 = vunpack.c.h.b16 %v417
        %v480 = vunpack.c.l.b16 %v418
        %v481 = vunpack.c.h.b16 %v418
        %v482 = vunpack.c.l.b16 %v419
        %v483 = vunpack.c.h.b16 %v419
        %v484 = vpack.c.b16 %v454, %v452
        %v485 = vpack.c.b16 %v455, %v453
        %v486 = vpack.c.b16 %v458, %v456
        %v487 = vpack.c.b16 %v459, %v457
        %v488 = vpack.c.b16 %v462, %v460
        %v489 = vpack.c.b16 %v463, %v461
        %v490 = vpack.c.b16 %v466, %v464
        %v491 = vpack.c.b16 %v467, %v465
        %v492 = vpack.c.b16 %v470, %v468
        %v493 = vpack.c.b16 %v471, %v469
        %v494 = vpack.c.b16 %v474, %v472
        %v495 = vpack.c.b16 %v475, %v473
        %v496 = vpack.c.b16 %v478, %v476
        %v497 = vpack.c.b16 %v479, %v477
        %v498 = vpack.c.b16 %v482, %v480
        %v499 = vpack.c.b16 %v483, %v481
        %516 = vmatprep.subr.bf16.mxu0 %v485
        %517 = vmatpush1.bf16.msra.mxu0 %v484
        %518 = vmatprep.subr.bf16.mxu0 %v487
        %519 = vmatpush1.bf16.msra.mxu0 %v486
        %520 = vmatprep.subr.bf16.mxu0 %v489
        %521 = vmatpush1.bf16.msra.mxu0 %v488
        %522 = vmatprep.subr.bf16.mxu0 %v491
        %523 = vmatpush1.bf16.msra.mxu0 %v490
        %524 = vmatprep.subr.bf16.mxu0 %v493
        %525 = vmatpush1.bf16.msra.mxu0 %v492
        %526 = vmatprep.subr.bf16.mxu0 %v495
        %527 = vmatpush1.bf16.msra.mxu0 %v494
        %528 = vmatprep.subr.bf16.mxu0 %v497
        %529 = vmatpush1.bf16.msra.mxu0 %v496
        %530 = vmatprep.subr.bf16.mxu0 %v499
        %531 = vmatpush1.bf16.msra.mxu0 %v498
        %532 = vmatprep.subr.bf16.mxu0 0
        %533 = vmatpush1.bf16.msra.mxu0 0
        %534 = vmatprep.subr.bf16.mxu0 0
        %535 = vmatpush1.bf16.msra.mxu0 0
        %536 = vmatprep.subr.bf16.mxu0 0
        %537 = vmatpush1.bf16.msra.mxu0 0
        %538 = vmatprep.subr.bf16.mxu0 0
        %539 = vmatpush1.bf16.msra.mxu0 0
        %540 = vmatprep.subr.bf16.mxu0 0
        %541 = vmatpush1.bf16.msra.mxu0 0
        %542 = vmatprep.subr.bf16.mxu0 0
        %543 = vmatpush1.bf16.msra.mxu0 0
        %544 = vmatprep.subr.bf16.mxu0 0
        %545 = vmatpush1.bf16.msra.mxu0 0
        %546 = vmatprep.subr.bf16.mxu0 0
        %547 = vmatpush1.bf16.msra.mxu0 0
        %548 = vmatprep.mubr.bf16.mxu0 0
        %549 = vmatmul.mubr.bf16.gmra.mrb[0].mxu0 %v428
        %v550 = vpop.f32.mrb[0].mxu0
        %v551 = vadd.f32 0.0, %v550
        %v552 = vpop.f32.mrb[0].mxu0
        %v553 = vadd.f32 0.0, %v552
        %v554 = vpop.f32.mrb[0].mxu0
        %v555 = vadd.f32 0.0, %v554
        %v556 = vpop.f32.mrb[0].mxu0
        %v557 = vadd.f32 0.0, %v556
        %558 = vmatprep.mubr.bf16.mxu0 0
        %559 = vmatmul.mubr.bf16.gmra.mrb[0].mxu0 %v429
        %v560 = vpop.f32.mrb[0].mxu0
        %v561 = vadd.f32 0.0, %v560
        %v562 = vpop.f32.mrb[0].mxu0
        %v563 = vadd.f32 0.0, %v562
        %v564 = vpop.f32.mrb[0].mxu0
        %v565 = vadd.f32 0.0, %v564
        %v566 = vpop.f32.mrb[0].mxu0
        %v567 = vadd.f32 0.0, %v566
        %568 = vmatprep.mubr.bf16.mxu0 0
        %569 = vmatmul.mubr.bf16.gmra.mrb[0].mxu0 %v430
        %v570 = vpop.f32.mrb[0].mxu0
        %v571 = vadd.f32 0.0, %v570
        %v572 = vpop.f32.mrb[0].mxu0
        %v573 = vadd.f32 0.0, %v572
        %v574 = vpop.f32.mrb[0].mxu0
        %v575 = vadd.f32 0.0, %v574
        %v576 = vpop.f32.mrb[0].mxu0
        %v577 = vadd.f32 0.0, %v576
        %578 = vmatprep.mubr.bf16.mxu0 0
        %579 = vmatmul.mubr.bf16.gmra.mrb[0].mxu0 %v431
        %v580 = vpop.f32.mrb[0].mxu0
        %v581 = vadd.f32 0.0, %v580
        %v582 = vpop.f32.mrb[0].mxu0
        %v583 = vadd.f32 0.0, %v582
        %v584 = vpop.f32.mrb[0].mxu0
        %v585 = vadd.f32 0.0, %v584
        %v586 = vpop.f32.mrb[0].mxu0
        %v587 = vadd.f32 0.0, %v586
        %588 = vdwg.mxu0
        %v597 = vunpack.c.l.b16 %v257
        %v598 = vunpack.c.l.b16 %v258
        %v599 = vunpack.c.l.b16 %v259
        %v600 = vunpack.c.l.b16 %v260
        %v601 = vunpack.c.l.b16 %v261
        %v602 = vunpack.c.l.b16 %v262
        %v603 = vunpack.c.l.b16 %v263
        %v604 = vunpack.c.l.b16 %v264
        %v605 = vpack.c.b16 %v598, %v597
        %v606 = vpack.c.b16 %v600, %v599
        %v607 = vpack.c.b16 %v602, %v601
        %v608 = vpack.c.b16 %v604, %v603
        %v629 = vunpack.c.l.b16 %v265
        %v630 = vunpack.c.h.b16 %v265
        %v631 = vunpack.c.l.b16 %v266
        %v632 = vunpack.c.h.b16 %v266
        %v633 = vunpack.c.l.b16 %v267
        %v634 = vunpack.c.h.b16 %v267
        %v635 = vunpack.c.l.b16 %v268
        %v636 = vunpack.c.h.b16 %v268
        %v637 = vunpack.c.l.b16 %v269
        %v638 = vunpack.c.h.b16 %v269
        %v639 = vunpack.c.l.b16 %v270
        %v640 = vunpack.c.h.b16 %v270
        %v641 = vunpack.c.l.b16 %v271
        %v642 = vunpack.c.h.b16 %v271
        %v643 = vunpack.c.l.b16 %v272
        %v644 = vunpack.c.h.b16 %v272
        %v645 = vunpack.c.l.b16 %v273
        %v646 = vunpack.c.h.b16 %v273
        %v647 = vunpack.c.l.b16 %v274
        %v648 = vunpack.c.h.b16 %v274
        %v649 = vunpack.c.l.b16 %v275
        %v650 = vunpack.c.h.b16 %v275
        %v651 = vunpack.c.l.b16 %v276
        %v652 = vunpack.c.h.b16 %v276
        %v653 = vunpack.c.l.b16 %v277
        %v654 = vunpack.c.h.b16 %v277
        %v655 = vunpack.c.l.b16 %v278
        %v656 = vunpack.c.h.b16 %v278
        %v657 = vunpack.c.l.b16 %v279
        %v658 = vunpack.c.h.b16 %v279
        %v659 = vunpack.c.l.b16 %v280
        %v660 = vunpack.c.h.b16 %v280
        %v661 = vpack.c.b16 %v631, %v629
        %v662 = vpack.c.b16 %v632, %v630
        %v663 = vpack.c.b16 %v635, %v633
        %v664 = vpack.c.b16 %v636, %v634
        %v665 = vpack.c.b16 %v639, %v637
        %v666 = vpack.c.b16 %v640, %v638
        %v667 = vpack.c.b16 %v643, %v641
        %v668 = vpack.c.b16 %v644, %v642
        %v669 = vpack.c.b16 %v647, %v645
        %v670 = vpack.c.b16 %v648, %v646
        %v671 = vpack.c.b16 %v651, %v649
        %v672 = vpack.c.b16 %v652, %v650
        %v673 = vpack.c.b16 %v655, %v653
        %v674 = vpack.c.b16 %v656, %v654
        %v675 = vpack.c.b16 %v659, %v657
        %v676 = vpack.c.b16 %v660, %v658
        %693 = vmatprep.subr.bf16.mxu0 %v662
        %694 = vmatpush1.bf16.msra.mxu0 %v661
        %695 = vmatprep.subr.bf16.mxu0 %v664
        %696 = vmatpush1.bf16.msra.mxu0 %v663
        %697 = vmatprep.subr.bf16.mxu0 %v666
        %698 = vmatpush1.bf16.msra.mxu0 %v665
        %699 = vmatprep.subr.bf16.mxu0 %v668
        %700 = vmatpush1.bf16.msra.mxu0 %v667
        %701 = vmatprep.subr.bf16.mxu0 %v670
        %702 = vmatpush1.bf16.msra.mxu0 %v669
        %703 = vmatprep.subr.bf16.mxu0 %v672
        %704 = vmatpush1.bf16.msra.mxu0 %v671
        %705 = vmatprep.subr.bf16.mxu0 %v674
        %706 = vmatpush1.bf16.msra.mxu0 %v673
        %707 = vmatprep.subr.bf16.mxu0 %v676
        %708 = vmatpush1.bf16.msra.mxu0 %v675
        %709 = vmatprep.subr.bf16.mxu0 0
        %710 = vmatpush1.bf16.msra.mxu0 0
        %711 = vmatprep.subr.bf16.mxu0 0
        %712 = vmatpush1.bf16.msra.mxu0 0
        %713 = vmatprep.subr.bf16.mxu0 0
        %714 = vmatpush1.bf16.msra.mxu0 0
        %715 = vmatprep.subr.bf16.mxu0 0
        %716 = vmatpush1.bf16.msra.mxu0 0
        %717 = vmatprep.subr.bf16.mxu0 0
        %718 = vmatpush1.bf16.msra.mxu0 0
        %719 = vmatprep.subr.bf16.mxu0 0
        %720 = vmatpush1.bf16.msra.mxu0 0
        %721 = vmatprep.subr.bf16.mxu0 0
        %722 = vmatpush1.bf16.msra.mxu0 0
        %723 = vmatprep.subr.bf16.mxu0 0
        %724 = vmatpush1.bf16.msra.mxu0 0
        %725 = vmatprep.mubr.bf16.mxu0 0
        %726 = vmatmul.mubr.bf16.gmra.mrb[0].mxu0 %v605
        %v727 = vpop.f32.mrb[0].mxu0
        %v728 = vadd.f32 %v551, %v727
        %v729 = vpop.f32.mrb[0].mxu0
        %v730 = vadd.f32 %v553, %v729
        %v731 = vpop.f32.mrb[0].mxu0
        %v732 = vadd.f32 %v555, %v731
        %v733 = vpop.f32.mrb[0].mxu0
        %v734 = vadd.f32 %v557, %v733
        %735 = vmatprep.mubr.bf16.mxu0 0
        %736 = vmatmul.mubr.bf16.gmra.mrb[0].mxu0 %v606
        %v737 = vpop.f32.mrb[0].mxu0
        %v738 = vadd.f32 %v561, %v737
        %v739 = vpop.f32.mrb[0].mxu0
        %v740 = vadd.f32 %v563, %v739
        %v741 = vpop.f32.mrb[0].mxu0
        %v742 = vadd.f32 %v565, %v741
        %v743 = vpop.f32.mrb[0].mxu0
        %v744 = vadd.f32 %v567, %v743
        %745 = vmatprep.mubr.bf16.mxu0 0
        %746 = vmatmul.mubr.bf16.gmra.mrb[0].mxu0 %v607
        %v747 = vpop.f32.mrb[0].mxu0
        %v748 = vadd.f32 %v571, %v747
        %v749 = vpop.f32.mrb[0].mxu0
        %v750 = vadd.f32 %v573, %v749
        %v751 = vpop.f32.mrb[0].mxu0
        %v752 = vadd.f32 %v575, %v751
        %v753 = vpop.f32.mrb[0].mxu0
        %v754 = vadd.f32 %v577, %v753
        %755 = vmatprep.mubr.bf16.mxu0 0
        %756 = vmatmul.mubr.bf16.gmra.mrb[0].mxu0 %v608
        %v757 = vpop.f32.mrb[0].mxu0
        %v758 = vadd.f32 %v581, %v757
        %v759 = vpop.f32.mrb[0].mxu0
        %v760 = vadd.f32 %v583, %v759
        %v761 = vpop.f32.mrb[0].mxu0
        %v762 = vadd.f32 %v585, %v761
        %v763 = vpop.f32.mrb[0].mxu0
        %v764 = vadd.f32 %v587, %v763
        %765 = vdwg.mxu0
        %v766 = vld [vmem:[%s245] sm:$0xe]
        %v767 = vld [vmem:[%s245 + $0x8] sm:$0xe]
        %v768 = vld [vmem:[%s245 + $0x10] sm:$0xe]
        %v769 = vld [vmem:[%s245 + $0x18] sm:$0xe]
        %v770 = vld [vmem:[%s245 + $0x20] sm:$0xe]
        %v771 = vld [vmem:[%s245 + $0x28] sm:$0xe]
        %v772 = vld [vmem:[%s245 + $0x30] sm:$0xe]
        %v773 = vld [vmem:[%s245 + $0x38] sm:$0xe]
        %vm790 = vcmask 1042432
        %vm791 = vcmask 1046532
        %vm792 = vmor %vm790, %vm791
        %v793 = vrot.slane %v766, 5
        %v794 = vrot.slane %v793, 4
        %v795 = vrot.slane %v281, 5
        %v796 = vsel %vm792, %v794, %v795
        %v797 = vrot.slane %v767, 5
        %v798 = vrot.slane %v797, 4
        %v799 = vrot.slane %v282, 5
        %v800 = vsel %vm792, %v798, %v799
        %v801 = vrot.slane %v768, 5
        %v802 = vrot.slane %v801, 4
        %v803 = vrot.slane %v283, 5
        %v804 = vsel %vm792, %v802, %v803
        %v805 = vrot.slane %v769, 5
        %v806 = vrot.slane %v805, 4
        %v807 = vrot.slane %v284, 5
        %v808 = vsel %vm792, %v806, %v807
        %v809 = vrot.slane %v770, 5
        %v810 = vrot.slane %v809, 4
        %v811 = vrot.slane %v285, 5
        %v812 = vsel %vm792, %v810, %v811
        %v813 = vrot.slane %v771, 5
        %v814 = vrot.slane %v813, 4
        %v815 = vrot.slane %v286, 5
        %v816 = vsel %vm792, %v814, %v815
        %v817 = vrot.slane %v772, 5
        %v818 = vrot.slane %v817, 4
        %v819 = vrot.slane %v287, 5
        %v820 = vsel %vm792, %v818, %v819
        %v821 = vrot.slane %v773, 5
        %v822 = vrot.slane %v821, 4
        %v823 = vrot.slane %v288, 5
        %v824 = vsel %vm792, %v822, %v823
        %v825 = vld [vmem:[%s1 + $0x100] sm:$0xff]
        %v826 = vld [vmem:[%s1 + $0x108] sm:$0xff]
        %v827 = vld [vmem:[%s1 + $0x110] sm:$0xff]
        %v828 = vld [vmem:[%s1 + $0x118] sm:$0xff]
        %v829 = vld [vmem:[%s1 + $0x120] sm:$0xff]
        %v830 = vld [vmem:[%s1 + $0x128] sm:$0xff]
        %v831 = vld [vmem:[%s1 + $0x130] sm:$0xff]
        %v832 = vld [vmem:[%s1 + $0x138] sm:$0xff]
        %v833 = vld [vmem:[%s1 + $0x140] sm:$0xff]
        %v834 = vld [vmem:[%s1 + $0x148] sm:$0xff]
        %v835 = vld [vmem:[%s1 + $0x150] sm:$0xff]
        %v836 = vld [vmem:[%s1 + $0x158] sm:$0xff]
        %v837 = vld [vmem:[%s1 + $0x160] sm:$0xff]
        %v838 = vld [vmem:[%s1 + $0x168] sm:$0xff]
        %v839 = vld [vmem:[%s1 + $0x170] sm:$0xff]
        %v840 = vld [vmem:[%s1 + $0x178] sm:$0xff]
        %v841 = vunpack.c.l.b16 %v796
        %v842 = vunpack.c.l.b16 %v800
        %v843 = vunpack.c.l.b16 %v804
        %v844 = vunpack.c.l.b16 %v808
        %v845 = vunpack.c.l.b16 %v812
        %v846 = vunpack.c.l.b16 %v816
        %v847 = vunpack.c.l.b16 %v820
        %v848 = vunpack.c.l.b16 %v824
        %v849 = vpack.c.b16 %v842, %v841
        %v850 = vpack.c.b16 %v844, %v843
        %v851 = vpack.c.b16 %v846, %v845
        %v852 = vpack.c.b16 %v848, %v847
        %v873 = vunpack.c.l.b16 %v825
        %v874 = vunpack.c.h.b16 %v825
        %v875 = vunpack.c.l.b16 %v826
        %v876 = vunpack.c.h.b16 %v826
        %v877 = vunpack.c.l.b16 %v827
        %v878 = vunpack.c.h.b16 %v827
        %v879 = vunpack.c.l.b16 %v828
        %v880 = vunpack.c.h.b16 %v828
        %v881 = vunpack.c.l.b16 %v829
        %v882 = vunpack.c.h.b16 %v829
        %v883 = vunpack.c.l.b16 %v830
        %v884 = vunpack.c.h.b16 %v830
        %v885 = vunpack.c.l.b16 %v831
        %v886 = vunpack.c.h.b16 %v831
        %v887 = vunpack.c.l.b16 %v832
        %v888 = vunpack.c.h.b16 %v832
        %v889 = vunpack.c.l.b16 %v833
        %v890 = vunpack.c.h.b16 %v833
        %v891 = vunpack.c.l.b16 %v834
        %v892 = vunpack.c.h.b16 %v834
        %v893 = vunpack.c.l.b16 %v835
        %v894 = vunpack.c.h.b16 %v835
        %v895 = vunpack.c.l.b16 %v836
        %v896 = vunpack.c.h.b16 %v836
        %v897 = vunpack.c.l.b16 %v837
        %v898 = vunpack.c.h.b16 %v837
        %v899 = vunpack.c.l.b16 %v838
        %v900 = vunpack.c.h.b16 %v838
        %v901 = vunpack.c.l.b16 %v839
        %v902 = vunpack.c.h.b16 %v839
        %v903 = vunpack.c.l.b16 %v840
        %v904 = vunpack.c.h.b16 %v840
        %v905 = vpack.c.b16 %v875, %v873
        %v906 = vpack.c.b16 %v876, %v874
        %v907 = vpack.c.b16 %v879, %v877
        %v908 = vpack.c.b16 %v880, %v878
        %v909 = vpack.c.b16 %v883, %v881
        %v910 = vpack.c.b16 %v884, %v882
        %v911 = vpack.c.b16 %v887, %v885
        %v912 = vpack.c.b16 %v888, %v886
        %v913 = vpack.c.b16 %v891, %v889
        %v914 = vpack.c.b16 %v892, %v890
        %v915 = vpack.c.b16 %v895, %v893
        %v916 = vpack.c.b16 %v896, %v894
        %v917 = vpack.c.b16 %v899, %v897
        %v918 = vpack.c.b16 %v900, %v898
        %v919 = vpack.c.b16 %v903, %v901
        %v920 = vpack.c.b16 %v904, %v902
        %937 = vmatprep.subr.bf16.mxu0 %v906
        %938 = vmatpush1.bf16.msra.mxu0 %v905
        %939 = vmatprep.subr.bf16.mxu0 %v908
        %940 = vmatpush1.bf16.msra.mxu0 %v907
        %941 = vmatprep.subr.bf16.mxu0 %v910
        %942 = vmatpush1.bf16.msra.mxu0 %v909
        %943 = vmatprep.subr.bf16.mxu0 %v912
        %944 = vmatpush1.bf16.msra.mxu0 %v911
        %945 = vmatprep.subr.bf16.mxu0 %v914
        %946 = vmatpush1.bf16.msra.mxu0 %v913
        %947 = vmatprep.subr.bf16.mxu0 %v916
        %948 = vmatpush1.bf16.msra.mxu0 %v915
        %949 = vmatprep.subr.bf16.mxu0 %v918
        %950 = vmatpush1.bf16.msra.mxu0 %v917
        %951 = vmatprep.subr.bf16.mxu0 %v920
        %952 = vmatpush1.bf16.msra.mxu0 %v919
        %953 = vmatprep.subr.bf16.mxu0 0
        %954 = vmatpush1.bf16.msra.mxu0 0
        %955 = vmatprep.subr.bf16.mxu0 0
        %956 = vmatpush1.bf16.msra.mxu0 0
        %957 = vmatprep.subr.bf16.mxu0 0
        %958 = vmatpush1.bf16.msra.mxu0 0
        %959 = vmatprep.subr.bf16.mxu0 0
        %960 = vmatpush1.bf16.msra.mxu0 0
        %961 = vmatprep.subr.bf16.mxu0 0
        %962 = vmatpush1.bf16.msra.mxu0 0
        %963 = vmatprep.subr.bf16.mxu0 0
        %964 = vmatpush1.bf16.msra.mxu0 0
        %965 = vmatprep.subr.bf16.mxu0 0
        %966 = vmatpush1.bf16.msra.mxu0 0
        %967 = vmatprep.subr.bf16.mxu0 0
        %968 = vmatpush1.bf16.msra.mxu0 0
        %969 = vmatprep.mubr.bf16.mxu0 0
        %970 = vmatmul.mubr.bf16.gmra.mrb[0].mxu0 %v849
        %v971 = vpop.f32.mrb[0].mxu0
        %v972 = vadd.f32 0.0, %v971
        %v973 = vpop.f32.mrb[0].mxu0
        %v974 = vadd.f32 0.0, %v973
        %v975 = vpop.f32.mrb[0].mxu0
        %v976 = vadd.f32 0.0, %v975
        %v977 = vpop.f32.mrb[0].mxu0
        %v978 = vadd.f32 0.0, %v977
        %979 = vmatprep.mubr.bf16.mxu0 0
        %980 = vmatmul.mubr.bf16.gmra.mrb[0].mxu0 %v850
        %v981 = vpop.f32.mrb[0].mxu0
        %v982 = vadd.f32 0.0, %v981
        %v983 = vpop.f32.mrb[0].mxu0
        %v984 = vadd.f32 0.0, %v983
        %v985 = vpop.f32.mrb[0].mxu0
        %v986 = vadd.f32 0.0, %v985
        %v987 = vpop.f32.mrb[0].mxu0
        %v988 = vadd.f32 0.0, %v987
        %989 = vmatprep.mubr.bf16.mxu0 0
        %990 = vmatmul.mubr.bf16.gmra.mrb[0].mxu0 %v851
        %v991 = vpop.f32.mrb[0].mxu0
        %v992 = vadd.f32 0.0, %v991
        %v993 = vpop.f32.mrb[0].mxu0
        %v994 = vadd.f32 0.0, %v993
        %v995 = vpop.f32.mrb[0].mxu0
        %v996 = vadd.f32 0.0, %v995
        %v997 = vpop.f32.mrb[0].mxu0
        %v998 = vadd.f32 0.0, %v997
        %999 = vmatprep.mubr.bf16.mxu0 0
        %1000 = vmatmul.mubr.bf16.gmra.mrb[0].mxu0 %v852
        %v1001 = vpop.f32.mrb[0].mxu0
        %v1002 = vadd.f32 0.0, %v1001
        %v1003 = vpop.f32.mrb[0].mxu0
        %v1004 = vadd.f32 0.0, %v1003
        %v1005 = vpop.f32.mrb[0].mxu0
        %v1006 = vadd.f32 0.0, %v1005
        %v1007 = vpop.f32.mrb[0].mxu0
        %v1008 = vadd.f32 0.0, %v1007
        %1009 = vdwg.mxu0
        %v1010 = vadd.f32 %v728, %v972
        %v1011 = vadd.f32 %v730, %v974
        %v1012 = vadd.f32 %v732, %v976
        %v1013 = vadd.f32 %v734, %v978
        %v1014 = vadd.f32 %v738, %v982
        %v1015 = vadd.f32 %v740, %v984
        %v1016 = vadd.f32 %v742, %v986
        %v1017 = vadd.f32 %v744, %v988
        %v1018 = vadd.f32 %v748, %v992
        %v1019 = vadd.f32 %v750, %v994
        %v1020 = vadd.f32 %v752, %v996
        %v1021 = vadd.f32 %v754, %v998
        %v1022 = vadd.f32 %v758, %v1002
        %v1023 = vadd.f32 %v760, %v1004
        %v1024 = vadd.f32 %v762, %v1006
        %v1025 = vadd.f32 %v764, %v1008
        %s1026 = scalar_lea.vmem %s245, 8
        %v1027 = vld [vmem:[%s1026] sm:$0xf]
        %v1028 = vld [vmem:[%s1026 + $0x8] sm:$0xf]
        %v1029 = vld [vmem:[%s1026 + $0x10] sm:$0xf]
        %v1030 = vld [vmem:[%s1026 + $0x18] sm:$0xf]
        %v1031 = vld [vmem:[%s1026 + $0x20] sm:$0xf]
        %v1032 = vld [vmem:[%s1026 + $0x28] sm:$0xf]
        %v1033 = vld [vmem:[%s1026 + $0x30] sm:$0xf]
        %v1034 = vld [vmem:[%s1026 + $0x38] sm:$0xf]
        %v1035 = vld [vmem:[%s1 + $0x180] sm:$0xff]
        %v1036 = vld [vmem:[%s1 + $0x188] sm:$0xff]
        %v1037 = vld [vmem:[%s1 + $0x190] sm:$0xff]
        %v1038 = vld [vmem:[%s1 + $0x198] sm:$0xff]
        %v1039 = vld [vmem:[%s1 + $0x1a0] sm:$0xff]
        %v1040 = vld [vmem:[%s1 + $0x1a8] sm:$0xff]
        %v1041 = vld [vmem:[%s1 + $0x1b0] sm:$0xff]
        %v1042 = vld [vmem:[%s1 + $0x1b8] sm:$0xff]
        %v1043 = vld [vmem:[%s1 + $0x1c0] sm:$0xff]
        %v1044 = vld [vmem:[%s1 + $0x1c8] sm:$0xff]
        %v1045 = vld [vmem:[%s1 + $0x1d0] sm:$0xff]
        %v1046 = vld [vmem:[%s1 + $0x1d8] sm:$0xff]
        %v1047 = vld [vmem:[%s1 + $0x1e0] sm:$0xff]
        %v1048 = vld [vmem:[%s1 + $0x1e8] sm:$0xff]
        %v1049 = vld [vmem:[%s1 + $0x1f0] sm:$0xff]
        %v1050 = vld [vmem:[%s1 + $0x1f8] sm:$0xff]
        %v1059 = vunpack.c.l.b16 %v1027
        %v1060 = vunpack.c.l.b16 %v1028
        %v1061 = vunpack.c.l.b16 %v1029
        %v1062 = vunpack.c.l.b16 %v1030
        %v1063 = vunpack.c.l.b16 %v1031
        %v1064 = vunpack.c.l.b16 %v1032
        %v1065 = vunpack.c.l.b16 %v1033
        %v1066 = vunpack.c.l.b16 %v1034
        %v1067 = vpack.c.b16 %v1060, %v1059
        %v1068 = vpack.c.b16 %v1062, %v1061
        %v1069 = vpack.c.b16 %v1064, %v1063
        %v1070 = vpack.c.b16 %v1066, %v1065
        %v1091 = vunpack.c.l.b16 %v1035
        %v1092 = vunpack.c.h.b16 %v1035
        %v1093 = vunpack.c.l.b16 %v1036
        %v1094 = vunpack.c.h.b16 %v1036
        %v1095 = vunpack.c.l.b16 %v1037
        %v1096 = vunpack.c.h.b16 %v1037
        %v1097 = vunpack.c.l.b16 %v1038
        %v1098 = vunpack.c.h.b16 %v1038
        %v1099 = vunpack.c.l.b16 %v1039
        %v1100 = vunpack.c.h.b16 %v1039
        %v1101 = vunpack.c.l.b16 %v1040
        %v1102 = vunpack.c.h.b16 %v1040
        %v1103 = vunpack.c.l.b16 %v1041
        %v1104 = vunpack.c.h.b16 %v1041
        %v1105 = vunpack.c.l.b16 %v1042
        %v1106 = vunpack.c.h.b16 %v1042
        %v1107 = vunpack.c.l.b16 %v1043
        %v1108 = vunpack.c.h.b16 %v1043
        %v1109 = vunpack.c.l.b16 %v1044
        %v1110 = vunpack.c.h.b16 %v1044
        %v1111 = vunpack.c.l.b16 %v1045
        %v1112 = vunpack.c.h.b16 %v1045
        %v1113 = vunpack.c.l.b16 %v1046
        %v1114 = vunpack.c.h.b16 %v1046
        %v1115 = vunpack.c.l.b16 %v1047
        %v1116 = vunpack.c.h.b16 %v1047
        %v1117 = vunpack.c.l.b16 %v1048
        %v1118 = vunpack.c.h.b16 %v1048
        %v1119 = vunpack.c.l.b16 %v1049
        %v1120 = vunpack.c.h.b16 %v1049
        %v1121 = vunpack.c.l.b16 %v1050
        %v1122 = vunpack.c.h.b16 %v1050
        %v1123 = vpack.c.b16 %v1093, %v1091
        %v1124 = vpack.c.b16 %v1094, %v1092
        %v1125 = vpack.c.b16 %v1097, %v1095
        %v1126 = vpack.c.b16 %v1098, %v1096
        %v1127 = vpack.c.b16 %v1101, %v1099
        %v1128 = vpack.c.b16 %v1102, %v1100
        %v1129 = vpack.c.b16 %v1105, %v1103
        %v1130 = vpack.c.b16 %v1106, %v1104
        %v1131 = vpack.c.b16 %v1109, %v1107
        %v1132 = vpack.c.b16 %v1110, %v1108
        %v1133 = vpack.c.b16 %v1113, %v1111
        %v1134 = vpack.c.b16 %v1114, %v1112
        %v1135 = vpack.c.b16 %v1117, %v1115
        %v1136 = vpack.c.b16 %v1118, %v1116
        %v1137 = vpack.c.b16 %v1121, %v1119
        %v1138 = vpack.c.b16 %v1122, %v1120
        %1155 = vmatprep.subr.bf16.mxu0 %v1124
        %1156 = vmatpush1.bf16.msra.mxu0 %v1123
        %1157 = vmatprep.subr.bf16.mxu0 %v1126
        %1158 = vmatpush1.bf16.msra.mxu0 %v1125
        %1159 = vmatprep.subr.bf16.mxu0 %v1128
        %1160 = vmatpush1.bf16.msra.mxu0 %v1127
        %1161 = vmatprep.subr.bf16.mxu0 %v1130
        %1162 = vmatpush1.bf16.msra.mxu0 %v1129
        %1163 = vmatprep.subr.bf16.mxu0 %v1132
        %1164 = vmatpush1.bf16.msra.mxu0 %v1131
        %1165 = vmatprep.subr.bf16.mxu0 %v1134
        %1166 = vmatpush1.bf16.msra.mxu0 %v1133
        %1167 = vmatprep.subr.bf16.mxu0 %v1136
        %1168 = vmatpush1.bf16.msra.mxu0 %v1135
        %1169 = vmatprep.subr.bf16.mxu0 %v1138
        %1170 = vmatpush1.bf16.msra.mxu0 %v1137
        %1171 = vmatprep.subr.bf16.mxu0 0
        %1172 = vmatpush1.bf16.msra.mxu0 0
        %1173 = vmatprep.subr.bf16.mxu0 0
        %1174 = vmatpush1.bf16.msra.mxu0 0
        %1175 = vmatprep.subr.bf16.mxu0 0
        %1176 = vmatpush1.bf16.msra.mxu0 0
        %1177 = vmatprep.subr.bf16.mxu0 0
        %1178 = vmatpush1.bf16.msra.mxu0 0
        %1179 = vmatprep.subr.bf16.mxu0 0
        %1180 = vmatpush1.bf16.msra.mxu0 0
        %1181 = vmatprep.subr.bf16.mxu0 0
        %1182 = vmatpush1.bf16.msra.mxu0 0
        %1183 = vmatprep.subr.bf16.mxu0 0
        %1184 = vmatpush1.bf16.msra.mxu0 0
        %1185 = vmatprep.subr.bf16.mxu0 0
        %1186 = vmatpush1.bf16.msra.mxu0 0
        %1187 = vmatprep.mubr.bf16.mxu0 0
        %1188 = vmatmul.mubr.bf16.gmra.mrb[0].mxu0 %v1067
        %v1189 = vpop.f32.mrb[0].mxu0
        %v1190 = vadd.f32 0.0, %v1189
        %v1191 = vpop.f32.mrb[0].mxu0
        %v1192 = vadd.f32 0.0, %v1191
        %v1193 = vpop.f32.mrb[0].mxu0
        %v1194 = vadd.f32 0.0, %v1193
        %v1195 = vpop.f32.mrb[0].mxu0
        %v1196 = vadd.f32 0.0, %v1195
        %1197 = vmatprep.mubr.bf16.mxu0 0
        %1198 = vmatmul.mubr.bf16.gmra.mrb[0].mxu0 %v1068
        %v1199 = vpop.f32.mrb[0].mxu0
        %v1200 = vadd.f32 0.0, %v1199
        %v1201 = vpop.f32.mrb[0].mxu0
        %v1202 = vadd.f32 0.0, %v1201
        %v1203 = vpop.f32.mrb[0].mxu0
        %v1204 = vadd.f32 0.0, %v1203
        %v1205 = vpop.f32.mrb[0].mxu0
        %v1206 = vadd.f32 0.0, %v1205
        %1207 = vmatprep.mubr.bf16.mxu0 0
        %1208 = vmatmul.mubr.bf16.gmra.mrb[0].mxu0 %v1069
        %v1209 = vpop.f32.mrb[0].mxu0
        %v1210 = vadd.f32 0.0, %v1209
        %v1211 = vpop.f32.mrb[0].mxu0
        %v1212 = vadd.f32 0.0, %v1211
        %v1213 = vpop.f32.mrb[0].mxu0
        %v1214 = vadd.f32 0.0, %v1213
        %v1215 = vpop.f32.mrb[0].mxu0
        %v1216 = vadd.f32 0.0, %v1215
        %1217 = vmatprep.mubr.bf16.mxu0 0
        %1218 = vmatmul.mubr.bf16.gmra.mrb[0].mxu0 %v1070
        %v1219 = vpop.f32.mrb[0].mxu0
        %v1220 = vadd.f32 0.0, %v1219
        %v1221 = vpop.f32.mrb[0].mxu0
        %v1222 = vadd.f32 0.0, %v1221
        %v1223 = vpop.f32.mrb[0].mxu0
        %v1224 = vadd.f32 0.0, %v1223
        %v1225 = vpop.f32.mrb[0].mxu0
        %v1226 = vadd.f32 0.0, %v1225
        %1227 = vdwg.mxu0
        %v1228 = vadd.f32 %v1010, %v1190
        %v1229 = vadd.f32 %v1011, %v1192
        %v1230 = vadd.f32 %v1012, %v1194
        %v1231 = vadd.f32 %v1013, %v1196
        %v1232 = vadd.f32 %v1014, %v1200
        %v1233 = vadd.f32 %v1015, %v1202
        %v1234 = vadd.f32 %v1016, %v1204
        %v1235 = vadd.f32 %v1017, %v1206
        %v1236 = vadd.f32 %v1018, %v1210
        %v1237 = vadd.f32 %v1019, %v1212
        %v1238 = vadd.f32 %v1020, %v1214
        %v1239 = vadd.f32 %v1021, %v1216
        %v1240 = vadd.f32 %v1022, %v1220
        %v1241 = vadd.f32 %v1023, %v1222
        %v1242 = vadd.f32 %v1024, %v1224
        %v1243 = vadd.f32 %v1025, %v1226
        %v1244 = vld [vmem:[%s1026] sm:$0xf]
        %v1245 = vld [vmem:[%s1026 + $0x4] sm:$0x1]
        %v1246 = vld [vmem:[%s1026 + $0x8] sm:$0xf]
        %v1247 = vld [vmem:[%s1026 + $0xc] sm:$0x1]
        %v1248 = vld [vmem:[%s1026 + $0x10] sm:$0xf]
        %v1249 = vld [vmem:[%s1026 + $0x14] sm:$0x1]
        %v1250 = vld [vmem:[%s1026 + $0x18] sm:$0xf]
        %v1251 = vld [vmem:[%s1026 + $0x1c] sm:$0x1]
        %v1252 = vld [vmem:[%s1026 + $0x20] sm:$0xf]
        %v1253 = vld [vmem:[%s1026 + $0x24] sm:$0x1]
        %v1254 = vld [vmem:[%s1026 + $0x28] sm:$0xf]
        %v1255 = vld [vmem:[%s1026 + $0x2c] sm:$0x1]
        %v1256 = vld [vmem:[%s1026 + $0x30] sm:$0xf]
        %v1257 = vld [vmem:[%s1026 + $0x34] sm:$0x1]
        %v1258 = vld [vmem:[%s1026 + $0x38] sm:$0xf]
        %v1259 = vld [vmem:[%s1026 + $0x3c] sm:$0x1]
        %v1261 = vshrl.u32 %v1244, 16
        %v1263 = vrot.slane %v1261, 4
        %v1264 = vshll.u32 %v1244, 16
        %v1266 = vrot.slane %v1264, 5
        %v1267 = vor.u32 %v1263, %v1266
        %v1268 = vrot.slane %v1267, 4
        %v1270 = vshll.u32 %v1245, 16
        %v1272 = vrot.slane %v1270, 5
        %v1273 = vsel %vm291, %v1268, %v1272
        %v1275 = vshrl.u32 %v1246, 16
        %v1277 = vrot.slane %v1275, 4
        %v1278 = vshll.u32 %v1246, 16
        %v1280 = vrot.slane %v1278, 5
        %v1281 = vor.u32 %v1277, %v1280
        %v1282 = vrot.slane %v1281, 4
        %v1284 = vshll.u32 %v1247, 16
        %v1286 = vrot.slane %v1284, 5
        %v1287 = vsel %vm291, %v1282, %v1286
        %v1289 = vshrl.u32 %v1248, 16
        %v1291 = vrot.slane %v1289, 4
        %v1292 = vshll.u32 %v1248, 16
        %v1294 = vrot.slane %v1292, 5
        %v1295 = vor.u32 %v1291, %v1294
        %v1296 = vrot.slane %v1295, 4
        %v1298 = vshll.u32 %v1249, 16
        %v1300 = vrot.slane %v1298, 5
        %v1301 = vsel %vm291, %v1296, %v1300
        %v1303 = vshrl.u32 %v1250, 16
        %v1305 = vrot.slane %v1303, 4
        %v1306 = vshll.u32 %v1250, 16
        %v1308 = vrot.slane %v1306, 5
        %v1309 = vor.u32 %v1305, %v1308
        %v1310 = vrot.slane %v1309, 4
        %v1312 = vshll.u32 %v1251, 16
        %v1314 = vrot.slane %v1312, 5
        %v1315 = vsel %vm291, %v1310, %v1314
        %v1317 = vshrl.u32 %v1252, 16
        %v1319 = vrot.slane %v1317, 4
        %v1320 = vshll.u32 %v1252, 16
        %v1322 = vrot.slane %v1320, 5
        %v1323 = vor.u32 %v1319, %v1322
        %v1324 = vrot.slane %v1323, 4
        %v1326 = vshll.u32 %v1253, 16
        %v1328 = vrot.slane %v1326, 5
        %v1329 = vsel %vm291, %v1324, %v1328
        %v1331 = vshrl.u32 %v1254, 16
        %v1333 = vrot.slane %v1331, 4
        %v1334 = vshll.u32 %v1254, 16
        %v1336 = vrot.slane %v1334, 5
        %v1337 = vor.u32 %v1333, %v1336
        %v1338 = vrot.slane %v1337, 4
        %v1340 = vshll.u32 %v1255, 16
        %v1342 = vrot.slane %v1340, 5
        %v1343 = vsel %vm291, %v1338, %v1342
        %v1345 = vshrl.u32 %v1256, 16
        %v1347 = vrot.slane %v1345, 4
        %v1348 = vshll.u32 %v1256, 16
        %v1350 = vrot.slane %v1348, 5
        %v1351 = vor.u32 %v1347, %v1350
        %v1352 = vrot.slane %v1351, 4
        %v1354 = vshll.u32 %v1257, 16
        %v1356 = vrot.slane %v1354, 5
        %v1357 = vsel %vm291, %v1352, %v1356
        %v1359 = vshrl.u32 %v1258, 16
        %v1361 = vrot.slane %v1359, 4
        %v1362 = vshll.u32 %v1258, 16
        %v1364 = vrot.slane %v1362, 5
        %v1365 = vor.u32 %v1361, %v1364
        %v1366 = vrot.slane %v1365, 4
        %v1368 = vshll.u32 %v1259, 16
        %v1370 = vrot.slane %v1368, 5
        %v1371 = vsel %vm291, %v1366, %v1370
        %v1372 = vld [vmem:[%s1 + $0x200] sm:$0xff]
        %v1373 = vld [vmem:[%s1 + $0x208] sm:$0xff]
        %v1374 = vld [vmem:[%s1 + $0x210] sm:$0xff]
        %v1375 = vld [vmem:[%s1 + $0x218] sm:$0xff]
        %v1376 = vld [vmem:[%s1 + $0x220] sm:$0xff]
        %v1377 = vld [vmem:[%s1 + $0x228] sm:$0xff]
        %v1378 = vld [vmem:[%s1 + $0x230] sm:$0xff]
        %v1379 = vld [vmem:[%s1 + $0x238] sm:$0xff]
        %v1380 = vld [vmem:[%s1 + $0x240] sm:$0xff]
        %v1381 = vld [vmem:[%s1 + $0x248] sm:$0xff]
        %v1382 = vld [vmem:[%s1 + $0x250] sm:$0xff]
        %v1383 = vld [vmem:[%s1 + $0x258] sm:$0xff]
        %v1384 = vld [vmem:[%s1 + $0x260] sm:$0xff]
        %v1385 = vld [vmem:[%s1 + $0x268] sm:$0xff]
        %v1386 = vld [vmem:[%s1 + $0x270] sm:$0xff]
        %v1387 = vld [vmem:[%s1 + $0x278] sm:$0xff]
        %v1388 = vunpack.c.l.b16 %v1273
        %v1389 = vunpack.c.l.b16 %v1287
        %v1390 = vunpack.c.l.b16 %v1301
        %v1391 = vunpack.c.l.b16 %v1315
        %v1392 = vunpack.c.l.b16 %v1329
        %v1393 = vunpack.c.l.b16 %v1343
        %v1394 = vunpack.c.l.b16 %v1357
        %v1395 = vunpack.c.l.b16 %v1371
        %v1396 = vpack.c.b16 %v1389, %v1388
        %v1397 = vpack.c.b16 %v1391, %v1390
        %v1398 = vpack.c.b16 %v1393, %v1392
        %v1399 = vpack.c.b16 %v1395, %v1394
        %v1420 = vunpack.c.l.b16 %v1372
        %v1421 = vunpack.c.h.b16 %v1372
        %v1422 = vunpack.c.l.b16 %v1373
        %v1423 = vunpack.c.h.b16 %v1373
        %v1424 = vunpack.c.l.b16 %v1374
        %v1425 = vunpack.c.h.b16 %v1374
        %v1426 = vunpack.c.l.b16 %v1375
        %v1427 = vunpack.c.h.b16 %v1375
        %v1428 = vunpack.c.l.b16 %v1376
        %v1429 = vunpack.c.h.b16 %v1376
        %v1430 = vunpack.c.l.b16 %v1377
        %v1431 = vunpack.c.h.b16 %v1377
        %v1432 = vunpack.c.l.b16 %v1378
        %v1433 = vunpack.c.h.b16 %v1378
        %v1434 = vunpack.c.l.b16 %v1379
        %v1435 = vunpack.c.h.b16 %v1379
        %v1436 = vunpack.c.l.b16 %v1380
        %v1437 = vunpack.c.h.b16 %v1380
        %v1438 = vunpack.c.l.b16 %v1381
        %v1439 = vunpack.c.h.b16 %v1381
        %v1440 = vunpack.c.l.b16 %v1382
        %v1441 = vunpack.c.h.b16 %v1382
        %v1442 = vunpack.c.l.b16 %v1383
        %v1443 = vunpack.c.h.b16 %v1383
        %v1444 = vunpack.c.l.b16 %v1384
        %v1445 = vunpack.c.h.b16 %v1384
        %v1446 = vunpack.c.l.b16 %v1385
        %v1447 = vunpack.c.h.b16 %v1385
        %v1448 = vunpack.c.l.b16 %v1386
        %v1449 = vunpack.c.h.b16 %v1386
        %v1450 = vunpack.c.l.b16 %v1387
        %v1451 = vunpack.c.h.b16 %v1387
        %v1452 = vpack.c.b16 %v1422, %v1420
        %v1453 = vpack.c.b16 %v1423, %v1421
        %v1454 = vpack.c.b16 %v1426, %v1424
        %v1455 = vpack.c.b16 %v1427, %v1425
        %v1456 = vpack.c.b16 %v1430, %v1428
        %v1457 = vpack.c.b16 %v1431, %v1429
        %v1458 = vpack.c.b16 %v1434, %v1432
        %v1459 = vpack.c.b16 %v1435, %v1433
        %v1460 = vpack.c.b16 %v1438, %v1436
        %v1461 = vpack.c.b16 %v1439, %v1437
        %v1462 = vpack.c.b16 %v1442, %v1440
        %v1463 = vpack.c.b16 %v1443, %v1441
        %v1464 = vpack.c.b16 %v1446, %v1444
        %v1465 = vpack.c.b16 %v1447, %v1445
        %v1466 = vpack.c.b16 %v1450, %v1448
        %v1467 = vpack.c.b16 %v1451, %v1449
        %1484 = vmatprep.subr.bf16.mxu0 %v1453
        %1485 = vmatpush1.bf16.msra.mxu0 %v1452
        %1486 = vmatprep.subr.bf16.mxu0 %v1455
        %1487 = vmatpush1.bf16.msra.mxu0 %v1454
        %1488 = vmatprep.subr.bf16.mxu0 %v1457
        %1489 = vmatpush1.bf16.msra.mxu0 %v1456
        %1490 = vmatprep.subr.bf16.mxu0 %v1459
        %1491 = vmatpush1.bf16.msra.mxu0 %v1458
        %1492 = vmatprep.subr.bf16.mxu0 %v1461
        %1493 = vmatpush1.bf16.msra.mxu0 %v1460
        %1494 = vmatprep.subr.bf16.mxu0 %v1463
        %1495 = vmatpush1.bf16.msra.mxu0 %v1462
        %1496 = vmatprep.subr.bf16.mxu0 %v1465
        %1497 = vmatpush1.bf16.msra.mxu0 %v1464
        %1498 = vmatprep.subr.bf16.mxu0 %v1467
        %1499 = vmatpush1.bf16.msra.mxu0 %v1466
        %1500 = vmatprep.subr.bf16.mxu0 0
        %1501 = vmatpush1.bf16.msra.mxu0 0
        %1502 = vmatprep.subr.bf16.mxu0 0
        %1503 = vmatpush1.bf16.msra.mxu0 0
        %1504 = vmatprep.subr.bf16.mxu0 0
        %1505 = vmatpush1.bf16.msra.mxu0 0
        %1506 = vmatprep.subr.bf16.mxu0 0
        %1507 = vmatpush1.bf16.msra.mxu0 0
        %1508 = vmatprep.subr.bf16.mxu0 0
        %1509 = vmatpush1.bf16.msra.mxu0 0
        %1510 = vmatprep.subr.bf16.mxu0 0
        %1511 = vmatpush1.bf16.msra.mxu0 0
        %1512 = vmatprep.subr.bf16.mxu0 0
        %1513 = vmatpush1.bf16.msra.mxu0 0
        %1514 = vmatprep.subr.bf16.mxu0 0
        %1515 = vmatpush1.bf16.msra.mxu0 0
        %1516 = vmatprep.mubr.bf16.mxu0 0
        %1517 = vmatmul.mubr.bf16.gmra.mrb[0].mxu0 %v1396
        %v1518 = vpop.f32.mrb[0].mxu0
        %v1519 = vadd.f32 0.0, %v1518
        %v1520 = vpop.f32.mrb[0].mxu0
        %v1521 = vadd.f32 0.0, %v1520
        %v1522 = vpop.f32.mrb[0].mxu0
        %v1523 = vadd.f32 0.0, %v1522
        %v1524 = vpop.f32.mrb[0].mxu0
        %v1525 = vadd.f32 0.0, %v1524
        %1526 = vmatprep.mubr.bf16.mxu0 0
        %1527 = vmatmul.mubr.bf16.gmra.mrb[0].mxu0 %v1397
        %v1528 = vpop.f32.mrb[0].mxu0
        %v1529 = vadd.f32 0.0, %v1528
        %v1530 = vpop.f32.mrb[0].mxu0
        %v1531 = vadd.f32 0.0, %v1530
        %v1532 = vpop.f32.mrb[0].mxu0
        %v1533 = vadd.f32 0.0, %v1532
        %v1534 = vpop.f32.mrb[0].mxu0
        %v1535 = vadd.f32 0.0, %v1534
        %1536 = vmatprep.mubr.bf16.mxu0 0
        %1537 = vmatmul.mubr.bf16.gmra.mrb[0].mxu0 %v1398
        %v1538 = vpop.f32.mrb[0].mxu0
        %v1539 = vadd.f32 0.0, %v1538
        %v1540 = vpop.f32.mrb[0].mxu0
        %v1541 = vadd.f32 0.0, %v1540
        %v1542 = vpop.f32.mrb[0].mxu0
        %v1543 = vadd.f32 0.0, %v1542
        %v1544 = vpop.f32.mrb[0].mxu0
        %v1545 = vadd.f32 0.0, %v1544
        %1546 = vmatprep.mubr.bf16.mxu0 0
        %1547 = vmatmul.mubr.bf16.gmra.mrb[0].mxu0 %v1399
        %v1548 = vpop.f32.mrb[0].mxu0
        %v1549 = vadd.f32 0.0, %v1548
        %v1550 = vpop.f32.mrb[0].mxu0
        %v1551 = vadd.f32 0.0, %v1550
        %v1552 = vpop.f32.mrb[0].mxu0
        %v1553 = vadd.f32 0.0, %v1552
        %v1554 = vpop.f32.mrb[0].mxu0
        %v1555 = vadd.f32 0.0, %v1554
        %1556 = vdwg.mxu0
        %v1557 = vadd.f32 %v1228, %v1519
        %v1558 = vadd.f32 %v1229, %v1521
        %v1559 = vadd.f32 %v1230, %v1523
        %v1560 = vadd.f32 %v1231, %v1525
        %v1561 = vadd.f32 %v1232, %v1529
        %v1562 = vadd.f32 %v1233, %v1531
        %v1563 = vadd.f32 %v1234, %v1533
        %v1564 = vadd.f32 %v1235, %v1535
        %v1565 = vadd.f32 %v1236, %v1539
        %v1566 = vadd.f32 %v1237, %v1541
        %v1567 = vadd.f32 %v1238, %v1543
        %v1568 = vadd.f32 %v1239, %v1545
        %v1569 = vadd.f32 %v1240, %v1549
        %v1570 = vadd.f32 %v1241, %v1551
        %v1571 = vadd.f32 %v1242, %v1553
        %v1572 = vadd.f32 %v1243, %v1555
        %v1573 = vld [vmem:[%s1026] sm:$0xe]
        %v1574 = vld [vmem:[%s1026 + $0x8] sm:$0xe]
        %v1575 = vld [vmem:[%s1026 + $0x10] sm:$0xe]
        %v1576 = vld [vmem:[%s1026 + $0x18] sm:$0xe]
        %v1577 = vld [vmem:[%s1026 + $0x20] sm:$0xe]
        %v1578 = vld [vmem:[%s1026 + $0x28] sm:$0xe]
        %v1579 = vld [vmem:[%s1026 + $0x30] sm:$0xe]
        %v1580 = vld [vmem:[%s1026 + $0x38] sm:$0xe]
        %v1597 = vrot.slane %v1573, 5
        %v1598 = vrot.slane %v1597, 4
        %v1599 = vrot.slane %v1245, 5
        %v1600 = vsel %vm792, %v1598, %v1599
        %v1601 = vrot.slane %v1574, 5
        %v1602 = vrot.slane %v1601, 4
        %v1603 = vrot.slane %v1247, 5
        %v1604 = vsel %vm792, %v1602, %v1603
        %v1605 = vrot.slane %v1575, 5
        %v1606 = vrot.slane %v1605, 4
        %v1607 = vrot.slane %v1249, 5
        %v1608 = vsel %vm792, %v1606, %v1607
        %v1609 = vrot.slane %v1576, 5
        %v1610 = vrot.slane %v1609, 4
        %v1611 = vrot.slane %v1251, 5
        %v1612 = vsel %vm792, %v1610, %v1611
        %v1613 = vrot.slane %v1577, 5
        %v1614 = vrot.slane %v1613, 4
        %v1615 = vrot.slane %v1253, 5
        %v1616 = vsel %vm792, %v1614, %v1615
        %v1617 = vrot.slane %v1578, 5
        %v1618 = vrot.slane %v1617, 4
        %v1619 = vrot.slane %v1255, 5
        %v1620 = vsel %vm792, %v1618, %v1619
        %v1621 = vrot.slane %v1579, 5
        %v1622 = vrot.slane %v1621, 4
        %v1623 = vrot.slane %v1257, 5
        %v1624 = vsel %vm792, %v1622, %v1623
        %v1625 = vrot.slane %v1580, 5
        %v1626 = vrot.slane %v1625, 4
        %v1627 = vrot.slane %v1259, 5
        %v1628 = vsel %vm792, %v1626, %v1627
        %v1629 = vld [vmem:[%s1 + $0x280] sm:$0xff]
        %v1630 = vld [vmem:[%s1 + $0x288] sm:$0xff]
        %v1631 = vld [vmem:[%s1 + $0x290] sm:$0xff]
        %v1632 = vld [vmem:[%s1 + $0x298] sm:$0xff]
        %v1633 = vld [vmem:[%s1 + $0x2a0] sm:$0xff]
        %v1634 = vld [vmem:[%s1 + $0x2a8] sm:$0xff]
        %v1635 = vld [vmem:[%s1 + $0x2b0] sm:$0xff]
        %v1636 = vld [vmem:[%s1 + $0x2b8] sm:$0xff]
        %v1637 = vld [vmem:[%s1 + $0x2c0] sm:$0xff]
        %v1638 = vld [vmem:[%s1 + $0x2c8] sm:$0xff]
        %v1639 = vld [vmem:[%s1 + $0x2d0] sm:$0xff]
        %v1640 = vld [vmem:[%s1 + $0x2d8] sm:$0xff]
        %v1641 = vld [vmem:[%s1 + $0x2e0] sm:$0xff]
        %v1642 = vld [vmem:[%s1 + $0x2e8] sm:$0xff]
        %v1643 = vld [vmem:[%s1 + $0x2f0] sm:$0xff]
        %v1644 = vld [vmem:[%s1 + $0x2f8] sm:$0xff]
        %v1645 = vunpack.c.l.b16 %v1600
        %v1646 = vunpack.c.l.b16 %v1604
        %v1647 = vunpack.c.l.b16 %v1608
        %v1648 = vunpack.c.l.b16 %v1612
        %v1649 = vunpack.c.l.b16 %v1616
        %v1650 = vunpack.c.l.b16 %v1620
        %v1651 = vunpack.c.l.b16 %v1624
        %v1652 = vunpack.c.l.b16 %v1628
        %v1653 = vpack.c.b16 %v1646, %v1645
        %v1654 = vpack.c.b16 %v1648, %v1647
        %v1655 = vpack.c.b16 %v1650, %v1649
        %v1656 = vpack.c.b16 %v1652, %v1651
        %v1677 = vunpack.c.l.b16 %v1629
        %v1678 = vunpack.c.h.b16 %v1629
        %v1679 = vunpack.c.l.b16 %v1630
        %v1680 = vunpack.c.h.b16 %v1630
        %v1681 = vunpack.c.l.b16 %v1631
        %v1682 = vunpack.c.h.b16 %v1631
        %v1683 = vunpack.c.l.b16 %v1632
        %v1684 = vunpack.c.h.b16 %v1632
        %v1685 = vunpack.c.l.b16 %v1633
        %v1686 = vunpack.c.h.b16 %v1633
        %v1687 = vunpack.c.l.b16 %v1634
        %v1688 = vunpack.c.h.b16 %v1634
        %v1689 = vunpack.c.l.b16 %v1635
        %v1690 = vunpack.c.h.b16 %v1635
        %v1691 = vunpack.c.l.b16 %v1636
        %v1692 = vunpack.c.h.b16 %v1636
        %v1693 = vunpack.c.l.b16 %v1637
        %v1694 = vunpack.c.h.b16 %v1637
        %v1695 = vunpack.c.l.b16 %v1638
        %v1696 = vunpack.c.h.b16 %v1638
        %v1697 = vunpack.c.l.b16 %v1639
        %v1698 = vunpack.c.h.b16 %v1639
        %v1699 = vunpack.c.l.b16 %v1640
        %v1700 = vunpack.c.h.b16 %v1640
        %v1701 = vunpack.c.l.b16 %v1641
        %v1702 = vunpack.c.h.b16 %v1641
        %v1703 = vunpack.c.l.b16 %v1642
        %v1704 = vunpack.c.h.b16 %v1642
        %v1705 = vunpack.c.l.b16 %v1643
        %v1706 = vunpack.c.h.b16 %v1643
        %v1707 = vunpack.c.l.b16 %v1644
        %v1708 = vunpack.c.h.b16 %v1644
        %v1709 = vpack.c.b16 %v1679, %v1677
        %v1710 = vpack.c.b16 %v1680, %v1678
        %v1711 = vpack.c.b16 %v1683, %v1681
        %v1712 = vpack.c.b16 %v1684, %v1682
        %v1713 = vpack.c.b16 %v1687, %v1685
        %v1714 = vpack.c.b16 %v1688, %v1686
        %v1715 = vpack.c.b16 %v1691, %v1689
        %v1716 = vpack.c.b16 %v1692, %v1690
        %v1717 = vpack.c.b16 %v1695, %v1693
        %v1718 = vpack.c.b16 %v1696, %v1694
        %v1719 = vpack.c.b16 %v1699, %v1697
        %v1720 = vpack.c.b16 %v1700, %v1698
        %v1721 = vpack.c.b16 %v1703, %v1701
        %v1722 = vpack.c.b16 %v1704, %v1702
        %v1723 = vpack.c.b16 %v1707, %v1705
        %v1724 = vpack.c.b16 %v1708, %v1706
        %1741 = vmatprep.subr.bf16.mxu0 %v1710
        %1742 = vmatpush1.bf16.msra.mxu0 %v1709
        %1743 = vmatprep.subr.bf16.mxu0 %v1712
        %1744 = vmatpush1.bf16.msra.mxu0 %v1711
        %1745 = vmatprep.subr.bf16.mxu0 %v1714
        %1746 = vmatpush1.bf16.msra.mxu0 %v1713
        %1747 = vmatprep.subr.bf16.mxu0 %v1716
        %1748 = vmatpush1.bf16.msra.mxu0 %v1715
        %1749 = vmatprep.subr.bf16.mxu0 %v1718
        %1750 = vmatpush1.bf16.msra.mxu0 %v1717
        %1751 = vmatprep.subr.bf16.mxu0 %v1720
        %1752 = vmatpush1.bf16.msra.mxu0 %v1719
        %1753 = vmatprep.subr.bf16.mxu0 %v1722
        %1754 = vmatpush1.bf16.msra.mxu0 %v1721
        %1755 = vmatprep.subr.bf16.mxu0 %v1724
        %1756 = vmatpush1.bf16.msra.mxu0 %v1723
        %1757 = vmatprep.subr.bf16.mxu0 0
        %1758 = vmatpush1.bf16.msra.mxu0 0
        %1759 = vmatprep.subr.bf16.mxu0 0
        %1760 = vmatpush1.bf16.msra.mxu0 0
        %1761 = vmatprep.subr.bf16.mxu0 0
        %1762 = vmatpush1.bf16.msra.mxu0 0
        %1763 = vmatprep.subr.bf16.mxu0 0
        %1764 = vmatpush1.bf16.msra.mxu0 0
        %1765 = vmatprep.subr.bf16.mxu0 0
        %1766 = vmatpush1.bf16.msra.mxu0 0
        %1767 = vmatprep.subr.bf16.mxu0 0
        %1768 = vmatpush1.bf16.msra.mxu0 0
        %1769 = vmatprep.subr.bf16.mxu0 0
        %1770 = vmatpush1.bf16.msra.mxu0 0
        %1771 = vmatprep.subr.bf16.mxu0 0
        %1772 = vmatpush1.bf16.msra.mxu0 0
        %1773 = vmatprep.mubr.bf16.mxu0 0
        %1774 = vmatmul.mubr.bf16.gmra.mrb[0].mxu0 %v1653
        %v1775 = vpop.f32.mrb[0].mxu0
        %v1776 = vadd.f32 0.0, %v1775
        %v1777 = vpop.f32.mrb[0].mxu0
        %v1778 = vadd.f32 0.0, %v1777
        %v1779 = vpop.f32.mrb[0].mxu0
        %v1780 = vadd.f32 0.0, %v1779
        %v1781 = vpop.f32.mrb[0].mxu0
        %v1782 = vadd.f32 0.0, %v1781
        %1783 = vmatprep.mubr.bf16.mxu0 0
        %1784 = vmatmul.mubr.bf16.gmra.mrb[0].mxu0 %v1654
        %v1785 = vpop.f32.mrb[0].mxu0
        %v1786 = vadd.f32 0.0, %v1785
        %v1787 = vpop.f32.mrb[0].mxu0
        %v1788 = vadd.f32 0.0, %v1787
        %v1789 = vpop.f32.mrb[0].mxu0
        %v1790 = vadd.f32 0.0, %v1789
        %v1791 = vpop.f32.mrb[0].mxu0
        %v1792 = vadd.f32 0.0, %v1791
        %1793 = vmatprep.mubr.bf16.mxu0 0
        %1794 = vmatmul.mubr.bf16.gmra.mrb[0].mxu0 %v1655
        %v1795 = vpop.f32.mrb[0].mxu0
        %v1796 = vadd.f32 0.0, %v1795
        %v1797 = vpop.f32.mrb[0].mxu0
        %v1798 = vadd.f32 0.0, %v1797
        %v1799 = vpop.f32.mrb[0].mxu0
        %v1800 = vadd.f32 0.0, %v1799
        %v1801 = vpop.f32.mrb[0].mxu0
        %v1802 = vadd.f32 0.0, %v1801
        %1803 = vmatprep.mubr.bf16.mxu0 0
        %1804 = vmatmul.mubr.bf16.gmra.mrb[0].mxu0 %v1656
        %v1805 = vpop.f32.mrb[0].mxu0
        %v1806 = vadd.f32 0.0, %v1805
        %v1807 = vpop.f32.mrb[0].mxu0
        %v1808 = vadd.f32 0.0, %v1807
        %v1809 = vpop.f32.mrb[0].mxu0
        %v1810 = vadd.f32 0.0, %v1809
        %v1811 = vpop.f32.mrb[0].mxu0
        %v1812 = vadd.f32 0.0, %v1811
        %1813 = vdwg.mxu0
        %v1814 = vadd.f32 %v1557, %v1776
        %v1815 = vadd.f32 %v1558, %v1778
        %v1816 = vadd.f32 %v1559, %v1780
        %v1817 = vadd.f32 %v1560, %v1782
        %v1818 = vadd.f32 %v1561, %v1786
        %v1819 = vadd.f32 %v1562, %v1788
        %v1820 = vadd.f32 %v1563, %v1790
        %v1821 = vadd.f32 %v1564, %v1792
        %v1822 = vadd.f32 %v1565, %v1796
        %v1823 = vadd.f32 %v1566, %v1798
        %v1824 = vadd.f32 %v1567, %v1800
        %v1825 = vadd.f32 %v1568, %v1802
        %v1826 = vadd.f32 %v1569, %v1806
        %v1827 = vadd.f32 %v1570, %v1808
        %v1828 = vadd.f32 %v1571, %v1810
        %v1829 = vadd.f32 %v1572, %v1812
        %s1830 = scalar_lea.vmem %s245, 16
        %v1831 = vld [vmem:[%s1830] sm:$0xf]
        %v1832 = vld [vmem:[%s1830 + $0x8] sm:$0xf]
        %v1833 = vld [vmem:[%s1830 + $0x10] sm:$0xf]
        %v1834 = vld [vmem:[%s1830 + $0x18] sm:$0xf]
        %v1835 = vld [vmem:[%s1830 + $0x20] sm:$0xf]
        %v1836 = vld [vmem:[%s1830 + $0x28] sm:$0xf]
        %v1837 = vld [vmem:[%s1830 + $0x30] sm:$0xf]
        %v1838 = vld [vmem:[%s1830 + $0x38] sm:$0xf]
        %v1839 = vld [vmem:[%s1 + $0x300] sm:$0xff]
        %v1840 = vld [vmem:[%s1 + $0x308] sm:$0xff]
        %v1841 = vld [vmem:[%s1 + $0x310] sm:$0xff]
        %v1842 = vld [vmem:[%s1 + $0x318] sm:$0xff]
        %v1843 = vld [vmem:[%s1 + $0x320] sm:$0xff]
        %v1844 = vld [vmem:[%s1 + $0x328] sm:$0xff]
        %v1845 = vld [vmem:[%s1 + $0x330] sm:$0xff]
        %v1846 = vld [vmem:[%s1 + $0x338] sm:$0xff]
        %v1847 = vld [vmem:[%s1 + $0x340] sm:$0xff]
        %v1848 = vld [vmem:[%s1 + $0x348] sm:$0xff]
        %v1849 = vld [vmem:[%s1 + $0x350] sm:$0xff]
        %v1850 = vld [vmem:[%s1 + $0x358] sm:$0xff]
        %v1851 = vld [vmem:[%s1 + $0x360] sm:$0xff]
        %v1852 = vld [vmem:[%s1 + $0x368] sm:$0xff]
        %v1853 = vld [vmem:[%s1 + $0x370] sm:$0xff]
        %v1854 = vld [vmem:[%s1 + $0x378] sm:$0xff]
        %v1863 = vunpack.c.l.b16 %v1831
        %v1864 = vunpack.c.l.b16 %v1832
        %v1865 = vunpack.c.l.b16 %v1833
        %v1866 = vunpack.c.l.b16 %v1834
        %v1867 = vunpack.c.l.b16 %v1835
        %v1868 = vunpack.c.l.b16 %v1836
        %v1869 = vunpack.c.l.b16 %v1837
        %v1870 = vunpack.c.l.b16 %v1838
        %v1871 = vpack.c.b16 %v1864, %v1863
        %v1872 = vpack.c.b16 %v1866, %v1865
        %v1873 = vpack.c.b16 %v1868, %v1867
        %v1874 = vpack.c.b16 %v1870, %v1869
        %v1895 = vunpack.c.l.b16 %v1839
        %v1896 = vunpack.c.h.b16 %v1839
        %v1897 = vunpack.c.l.b16 %v1840
        %v1898 = vunpack.c.h.b16 %v1840
        %v1899 = vunpack.c.l.b16 %v1841
        %v1900 = vunpack.c.h.b16 %v1841
        %v1901 = vunpack.c.l.b16 %v1842
        %v1902 = vunpack.c.h.b16 %v1842
        %v1903 = vunpack.c.l.b16 %v1843
        %v1904 = vunpack.c.h.b16 %v1843
        %v1905 = vunpack.c.l.b16 %v1844
        %v1906 = vunpack.c.h.b16 %v1844
        %v1907 = vunpack.c.l.b16 %v1845
        %v1908 = vunpack.c.h.b16 %v1845
        %v1909 = vunpack.c.l.b16 %v1846
        %v1910 = vunpack.c.h.b16 %v1846
        %v1911 = vunpack.c.l.b16 %v1847
        %v1912 = vunpack.c.h.b16 %v1847
        %v1913 = vunpack.c.l.b16 %v1848
        %v1914 = vunpack.c.h.b16 %v1848
        %v1915 = vunpack.c.l.b16 %v1849
        %v1916 = vunpack.c.h.b16 %v1849
        %v1917 = vunpack.c.l.b16 %v1850
        %v1918 = vunpack.c.h.b16 %v1850
        %v1919 = vunpack.c.l.b16 %v1851
        %v1920 = vunpack.c.h.b16 %v1851
        %v1921 = vunpack.c.l.b16 %v1852
        %v1922 = vunpack.c.h.b16 %v1852
        %v1923 = vunpack.c.l.b16 %v1853
        %v1924 = vunpack.c.h.b16 %v1853
        %v1925 = vunpack.c.l.b16 %v1854
        %v1926 = vunpack.c.h.b16 %v1854
        %v1927 = vpack.c.b16 %v1897, %v1895
        %v1928 = vpack.c.b16 %v1898, %v1896
        %v1929 = vpack.c.b16 %v1901, %v1899
        %v1930 = vpack.c.b16 %v1902, %v1900
        %v1931 = vpack.c.b16 %v1905, %v1903
        %v1932 = vpack.c.b16 %v1906, %v1904
        %v1933 = vpack.c.b16 %v1909, %v1907
        %v1934 = vpack.c.b16 %v1910, %v1908
        %v1935 = vpack.c.b16 %v1913, %v1911
        %v1936 = vpack.c.b16 %v1914, %v1912
        %v1937 = vpack.c.b16 %v1917, %v1915
        %v1938 = vpack.c.b16 %v1918, %v1916
        %v1939 = vpack.c.b16 %v1921, %v1919
        %v1940 = vpack.c.b16 %v1922, %v1920
        %v1941 = vpack.c.b16 %v1925, %v1923
        %v1942 = vpack.c.b16 %v1926, %v1924
        %1959 = vmatprep.subr.bf16.mxu0 %v1928
        %1960 = vmatpush1.bf16.msra.mxu0 %v1927
        %1961 = vmatprep.subr.bf16.mxu0 %v1930
        %1962 = vmatpush1.bf16.msra.mxu0 %v1929
        %1963 = vmatprep.subr.bf16.mxu0 %v1932
        %1964 = vmatpush1.bf16.msra.mxu0 %v1931
        %1965 = vmatprep.subr.bf16.mxu0 %v1934
        %1966 = vmatpush1.bf16.msra.mxu0 %v1933
        %1967 = vmatprep.subr.bf16.mxu0 %v1936
        %1968 = vmatpush1.bf16.msra.mxu0 %v1935
        %1969 = vmatprep.subr.bf16.mxu0 %v1938
        %1970 = vmatpush1.bf16.msra.mxu0 %v1937
        %1971 = vmatprep.subr.bf16.mxu0 %v1940
        %1972 = vmatpush1.bf16.msra.mxu0 %v1939
        %1973 = vmatprep.subr.bf16.mxu0 %v1942
        %1974 = vmatpush1.bf16.msra.mxu0 %v1941
        %1975 = vmatprep.subr.bf16.mxu0 0
        %1976 = vmatpush1.bf16.msra.mxu0 0
        %1977 = vmatprep.subr.bf16.mxu0 0
        %1978 = vmatpush1.bf16.msra.mxu0 0
        %1979 = vmatprep.subr.bf16.mxu0 0
        %1980 = vmatpush1.bf16.msra.mxu0 0
        %1981 = vmatprep.subr.bf16.mxu0 0
        %1982 = vmatpush1.bf16.msra.mxu0 0
        %1983 = vmatprep.subr.bf16.mxu0 0
        %1984 = vmatpush1.bf16.msra.mxu0 0
        %1985 = vmatprep.subr.bf16.mxu0 0
        %1986 = vmatpush1.bf16.msra.mxu0 0
        %1987 = vmatprep.subr.bf16.mxu0 0
        %1988 = vmatpush1.bf16.msra.mxu0 0
        %1989 = vmatprep.subr.bf16.mxu0 0
        %1990 = vmatpush1.bf16.msra.mxu0 0
        %1991 = vmatprep.mubr.bf16.mxu0 0
        %1992 = vmatmul.mubr.bf16.gmra.mrb[0].mxu0 %v1871
        %v1993 = vpop.f32.mrb[0].mxu0
        %v1994 = vadd.f32 0.0, %v1993
        %v1995 = vpop.f32.mrb[0].mxu0
        %v1996 = vadd.f32 0.0, %v1995
        %v1997 = vpop.f32.mrb[0].mxu0
        %v1998 = vadd.f32 0.0, %v1997
        %v1999 = vpop.f32.mrb[0].mxu0
        %v2000 = vadd.f32 0.0, %v1999
        %2001 = vmatprep.mubr.bf16.mxu0 0
        %2002 = vmatmul.mubr.bf16.gmra.mrb[0].mxu0 %v1872
        %v2003 = vpop.f32.mrb[0].mxu0
        %v2004 = vadd.f32 0.0, %v2003
        %v2005 = vpop.f32.mrb[0].mxu0
        %v2006 = vadd.f32 0.0, %v2005
        %v2007 = vpop.f32.mrb[0].mxu0
        %v2008 = vadd.f32 0.0, %v2007
        %v2009 = vpop.f32.mrb[0].mxu0
        %v2010 = vadd.f32 0.0, %v2009
        %2011 = vmatprep.mubr.bf16.mxu0 0
        %2012 = vmatmul.mubr.bf16.gmra.mrb[0].mxu0 %v1873
        %v2013 = vpop.f32.mrb[0].mxu0
        %v2014 = vadd.f32 0.0, %v2013
        %v2015 = vpop.f32.mrb[0].mxu0
        %v2016 = vadd.f32 0.0, %v2015
        %v2017 = vpop.f32.mrb[0].mxu0
        %v2018 = vadd.f32 0.0, %v2017
        %v2019 = vpop.f32.mrb[0].mxu0
        %v2020 = vadd.f32 0.0, %v2019
        %2021 = vmatprep.mubr.bf16.mxu0 0
        %2022 = vmatmul.mubr.bf16.gmra.mrb[0].mxu0 %v1874
        %v2023 = vpop.f32.mrb[0].mxu0
        %v2024 = vadd.f32 0.0, %v2023
        %v2025 = vpop.f32.mrb[0].mxu0
        %v2026 = vadd.f32 0.0, %v2025
        %v2027 = vpop.f32.mrb[0].mxu0
        %v2028 = vadd.f32 0.0, %v2027
        %v2029 = vpop.f32.mrb[0].mxu0
        %v2030 = vadd.f32 0.0, %v2029
        %2031 = vdwg.mxu0
        %v2032 = vadd.f32 %v1814, %v1994
        %v2033 = vadd.f32 %v1815, %v1996
        %v2034 = vadd.f32 %v1816, %v1998
        %v2035 = vadd.f32 %v1817, %v2000
        %v2036 = vadd.f32 %v1818, %v2004
        %v2037 = vadd.f32 %v1819, %v2006
        %v2038 = vadd.f32 %v1820, %v2008
        %v2039 = vadd.f32 %v1821, %v2010
        %v2040 = vadd.f32 %v1822, %v2014
        %v2041 = vadd.f32 %v1823, %v2016
        %v2042 = vadd.f32 %v1824, %v2018
        %v2043 = vadd.f32 %v1825, %v2020
        %v2044 = vadd.f32 %v1826, %v2024
        %v2045 = vadd.f32 %v1827, %v2026
        %v2046 = vadd.f32 %v1828, %v2028
        %v2047 = vadd.f32 %v1829, %v2030
        %v2048 = vld [vmem:[%s1830] sm:$0xf]
        %v2049 = vld [vmem:[%s1830 + $0x4] sm:$0x1]
        %v2050 = vld [vmem:[%s1830 + $0x8] sm:$0xf]
        %v2051 = vld [vmem:[%s1830 + $0xc] sm:$0x1]
        %v2052 = vld [vmem:[%s1830 + $0x10] sm:$0xf]
        %v2053 = vld [vmem:[%s1830 + $0x14] sm:$0x1]
        %v2054 = vld [vmem:[%s1830 + $0x18] sm:$0xf]
        %v2055 = vld [vmem:[%s1830 + $0x1c] sm:$0x1]
        %v2056 = vld [vmem:[%s1830 + $0x20] sm:$0xf]
        %v2057 = vld [vmem:[%s1830 + $0x24] sm:$0x1]
        %v2058 = vld [vmem:[%s1830 + $0x28] sm:$0xf]
        %v2059 = vld [vmem:[%s1830 + $0x2c] sm:$0x1]
        %v2060 = vld [vmem:[%s1830 + $0x30] sm:$0xf]
        %v2061 = vld [vmem:[%s1830 + $0x34] sm:$0x1]
        %v2062 = vld [vmem:[%s1830 + $0x38] sm:$0xf]
        %v2063 = vld [vmem:[%s1830 + $0x3c] sm:$0x1]
        %v2065 = vshrl.u32 %v2048, 16
        %v2067 = vrot.slane %v2065, 4
        %v2068 = vshll.u32 %v2048, 16
        %v2070 = vrot.slane %v2068, 5
        %v2071 = vor.u32 %v2067, %v2070
        %v2072 = vrot.slane %v2071, 4
        %v2074 = vshll.u32 %v2049, 16
        %v2076 = vrot.slane %v2074, 5
        %v2077 = vsel %vm291, %v2072, %v2076
        %v2079 = vshrl.u32 %v2050, 16
        %v2081 = vrot.slane %v2079, 4
        %v2082 = vshll.u32 %v2050, 16
        %v2084 = vrot.slane %v2082, 5
        %v2085 = vor.u32 %v2081, %v2084
        %v2086 = vrot.slane %v2085, 4
        %v2088 = vshll.u32 %v2051, 16
        %v2090 = vrot.slane %v2088, 5
        %v2091 = vsel %vm291, %v2086, %v2090
        %v2093 = vshrl.u32 %v2052, 16
        %v2095 = vrot.slane %v2093, 4
        %v2096 = vshll.u32 %v2052, 16
        %v2098 = vrot.slane %v2096, 5
        %v2099 = vor.u32 %v2095, %v2098
        %v2100 = vrot.slane %v2099, 4
        %v2102 = vshll.u32 %v2053, 16
        %v2104 = vrot.slane %v2102, 5
        %v2105 = vsel %vm291, %v2100, %v2104
        %v2107 = vshrl.u32 %v2054, 16
        %v2109 = vrot.slane %v2107, 4
        %v2110 = vshll.u32 %v2054, 16
        %v2112 = vrot.slane %v2110, 5
        %v2113 = vor.u32 %v2109, %v2112
        %v2114 = vrot.slane %v2113, 4
        %v2116 = vshll.u32 %v2055, 16
        %v2118 = vrot.slane %v2116, 5
        %v2119 = vsel %vm291, %v2114, %v2118
        %v2121 = vshrl.u32 %v2056, 16
        %v2123 = vrot.slane %v2121, 4
        %v2124 = vshll.u32 %v2056, 16
        %v2126 = vrot.slane %v2124, 5
        %v2127 = vor.u32 %v2123, %v2126
        %v2128 = vrot.slane %v2127, 4
        %v2130 = vshll.u32 %v2057, 16
        %v2132 = vrot.slane %v2130, 5
        %v2133 = vsel %vm291, %v2128, %v2132
        %v2135 = vshrl.u32 %v2058, 16
        %v2137 = vrot.slane %v2135, 4
        %v2138 = vshll.u32 %v2058, 16
        %v2140 = vrot.slane %v2138, 5
        %v2141 = vor.u32 %v2137, %v2140
        %v2142 = vrot.slane %v2141, 4
        %v2144 = vshll.u32 %v2059, 16
        %v2146 = vrot.slane %v2144, 5
        %v2147 = vsel %vm291, %v2142, %v2146
        %v2149 = vshrl.u32 %v2060, 16
        %v2151 = vrot.slane %v2149, 4
        %v2152 = vshll.u32 %v2060, 16
        %v2154 = vrot.slane %v2152, 5
        %v2155 = vor.u32 %v2151, %v2154
        %v2156 = vrot.slane %v2155, 4
        %v2158 = vshll.u32 %v2061, 16
        %v2160 = vrot.slane %v2158, 5
        %v2161 = vsel %vm291, %v2156, %v2160
        %v2163 = vshrl.u32 %v2062, 16
        %v2165 = vrot.slane %v2163, 4
        %v2166 = vshll.u32 %v2062, 16
        %v2168 = vrot.slane %v2166, 5
        %v2169 = vor.u32 %v2165, %v2168
        %v2170 = vrot.slane %v2169, 4
        %v2172 = vshll.u32 %v2063, 16
        %v2174 = vrot.slane %v2172, 5
        %v2175 = vsel %vm291, %v2170, %v2174
        %v2176 = vld [vmem:[%s1 + $0x380] sm:$0xff]
        %v2177 = vld [vmem:[%s1 + $0x388] sm:$0xff]
        %v2178 = vld [vmem:[%s1 + $0x390] sm:$0xff]
        %v2179 = vld [vmem:[%s1 + $0x398] sm:$0xff]
        %v2180 = vld [vmem:[%s1 + $0x3a0] sm:$0xff]
        %v2181 = vld [vmem:[%s1 + $0x3a8] sm:$0xff]
        %v2182 = vld [vmem:[%s1 + $0x3b0] sm:$0xff]
        %v2183 = vld [vmem:[%s1 + $0x3b8] sm:$0xff]
        %v2184 = vld [vmem:[%s1 + $0x3c0] sm:$0xff]
        %v2185 = vld [vmem:[%s1 + $0x3c8] sm:$0xff]
        %v2186 = vld [vmem:[%s1 + $0x3d0] sm:$0xff]
        %v2187 = vld [vmem:[%s1 + $0x3d8] sm:$0xff]
        %v2188 = vld [vmem:[%s1 + $0x3e0] sm:$0xff]
        %v2189 = vld [vmem:[%s1 + $0x3e8] sm:$0xff]
        %v2190 = vld [vmem:[%s1 + $0x3f0] sm:$0xff]
        %v2191 = vld [vmem:[%s1 + $0x3f8] sm:$0xff]
        %v2192 = vunpack.c.l.b16 %v2077
        %v2193 = vunpack.c.l.b16 %v2091
        %v2194 = vunpack.c.l.b16 %v2105
        %v2195 = vunpack.c.l.b16 %v2119
        %v2196 = vunpack.c.l.b16 %v2133
        %v2197 = vunpack.c.l.b16 %v2147
        %v2198 = vunpack.c.l.b16 %v2161
        %v2199 = vunpack.c.l.b16 %v2175
        %v2200 = vpack.c.b16 %v2193, %v2192
        %v2201 = vpack.c.b16 %v2195, %v2194
        %v2202 = vpack.c.b16 %v2197, %v2196
        %v2203 = vpack.c.b16 %v2199, %v2198
        %v2224 = vunpack.c.l.b16 %v2176
        %v2225 = vunpack.c.h.b16 %v2176
        %v2226 = vunpack.c.l.b16 %v2177
        %v2227 = vunpack.c.h.b16 %v2177
        %v2228 = vunpack.c.l.b16 %v2178
        %v2229 = vunpack.c.h.b16 %v2178
        %v2230 = vunpack.c.l.b16 %v2179
        %v2231 = vunpack.c.h.b16 %v2179
        %v2232 = vunpack.c.l.b16 %v2180
        %v2233 = vunpack.c.h.b16 %v2180
        %v2234 = vunpack.c.l.b16 %v2181
        %v2235 = vunpack.c.h.b16 %v2181
        %v2236 = vunpack.c.l.b16 %v2182
        %v2237 = vunpack.c.h.b16 %v2182
        %v2238 = vunpack.c.l.b16 %v2183
        %v2239 = vunpack.c.h.b16 %v2183
        %v2240 = vunpack.c.l.b16 %v2184
        %v2241 = vunpack.c.h.b16 %v2184
        %v2242 = vunpack.c.l.b16 %v2185
        %v2243 = vunpack.c.h.b16 %v2185
        %v2244 = vunpack.c.l.b16 %v2186
        %v2245 = vunpack.c.h.b16 %v2186
        %v2246 = vunpack.c.l.b16 %v2187
        %v2247 = vunpack.c.h.b16 %v2187
        %v2248 = vunpack.c.l.b16 %v2188
        %v2249 = vunpack.c.h.b16 %v2188
        %v2250 = vunpack.c.l.b16 %v2189
        %v2251 = vunpack.c.h.b16 %v2189
        %v2252 = vunpack.c.l.b16 %v2190
        %v2253 = vunpack.c.h.b16 %v2190
        %v2254 = vunpack.c.l.b16 %v2191
        %v2255 = vunpack.c.h.b16 %v2191
        %v2256 = vpack.c.b16 %v2226, %v2224
        %v2257 = vpack.c.b16 %v2227, %v2225
        %v2258 = vpack.c.b16 %v2230, %v2228
        %v2259 = vpack.c.b16 %v2231, %v2229
        %v2260 = vpack.c.b16 %v2234, %v2232
        %v2261 = vpack.c.b16 %v2235, %v2233
        %v2262 = vpack.c.b16 %v2238, %v2236
        %v2263 = vpack.c.b16 %v2239, %v2237
        %v2264 = vpack.c.b16 %v2242, %v2240
        %v2265 = vpack.c.b16 %v2243, %v2241
        %v2266 = vpack.c.b16 %v2246, %v2244
        %v2267 = vpack.c.b16 %v2247, %v2245
        %v2268 = vpack.c.b16 %v2250, %v2248
        %v2269 = vpack.c.b16 %v2251, %v2249
        %v2270 = vpack.c.b16 %v2254, %v2252
        %v2271 = vpack.c.b16 %v2255, %v2253
        %2288 = vmatprep.subr.bf16.mxu0 %v2257
        %2289 = vmatpush1.bf16.msra.mxu0 %v2256
        %2290 = vmatprep.subr.bf16.mxu0 %v2259
        %2291 = vmatpush1.bf16.msra.mxu0 %v2258
        %2292 = vmatprep.subr.bf16.mxu0 %v2261
        %2293 = vmatpush1.bf16.msra.mxu0 %v2260
        %2294 = vmatprep.subr.bf16.mxu0 %v2263
        %2295 = vmatpush1.bf16.msra.mxu0 %v2262
        %2296 = vmatprep.subr.bf16.mxu0 %v2265
        %2297 = vmatpush1.bf16.msra.mxu0 %v2264
        %2298 = vmatprep.subr.bf16.mxu0 %v2267
        %2299 = vmatpush1.bf16.msra.mxu0 %v2266
        %2300 = vmatprep.subr.bf16.mxu0 %v2269
        %2301 = vmatpush1.bf16.msra.mxu0 %v2268
        %2302 = vmatprep.subr.bf16.mxu0 %v2271
        %2303 = vmatpush1.bf16.msra.mxu0 %v2270
        %2304 = vmatprep.subr.bf16.mxu0 0
        %2305 = vmatpush1.bf16.msra.mxu0 0
        %2306 = vmatprep.subr.bf16.mxu0 0
        %2307 = vmatpush1.bf16.msra.mxu0 0
        %2308 = vmatprep.subr.bf16.mxu0 0
        %2309 = vmatpush1.bf16.msra.mxu0 0
        %2310 = vmatprep.subr.bf16.mxu0 0
        %2311 = vmatpush1.bf16.msra.mxu0 0
        %2312 = vmatprep.subr.bf16.mxu0 0
        %2313 = vmatpush1.bf16.msra.mxu0 0
        %2314 = vmatprep.subr.bf16.mxu0 0
        %2315 = vmatpush1.bf16.msra.mxu0 0
        %2316 = vmatprep.subr.bf16.mxu0 0
        %2317 = vmatpush1.bf16.msra.mxu0 0
        %2318 = vmatprep.subr.bf16.mxu0 0
        %2319 = vmatpush1.bf16.msra.mxu0 0
        %2320 = vmatprep.mubr.bf16.mxu0 0
        %2321 = vmatmul.mubr.bf16.gmra.mrb[0].mxu0 %v2200
        %v2322 = vpop.f32.mrb[0].mxu0
        %v2323 = vadd.f32 0.0, %v2322
        %v2324 = vpop.f32.mrb[0].mxu0
        %v2325 = vadd.f32 0.0, %v2324
        %v2326 = vpop.f32.mrb[0].mxu0
        %v2327 = vadd.f32 0.0, %v2326
        %v2328 = vpop.f32.mrb[0].mxu0
        %v2329 = vadd.f32 0.0, %v2328
        %2330 = vmatprep.mubr.bf16.mxu0 0
        %2331 = vmatmul.mubr.bf16.gmra.mrb[0].mxu0 %v2201
        %v2332 = vpop.f32.mrb[0].mxu0
        %v2333 = vadd.f32 0.0, %v2332
        %v2334 = vpop.f32.mrb[0].mxu0
        %v2335 = vadd.f32 0.0, %v2334
        %v2336 = vpop.f32.mrb[0].mxu0
        %v2337 = vadd.f32 0.0, %v2336
        %v2338 = vpop.f32.mrb[0].mxu0
        %v2339 = vadd.f32 0.0, %v2338
        %2340 = vmatprep.mubr.bf16.mxu0 0
        %2341 = vmatmul.mubr.bf16.gmra.mrb[0].mxu0 %v2202
        %v2342 = vpop.f32.mrb[0].mxu0
        %v2343 = vadd.f32 0.0, %v2342
        %v2344 = vpop.f32.mrb[0].mxu0
        %v2345 = vadd.f32 0.0, %v2344
        %v2346 = vpop.f32.mrb[0].mxu0
        %v2347 = vadd.f32 0.0, %v2346
        %v2348 = vpop.f32.mrb[0].mxu0
        %v2349 = vadd.f32 0.0, %v2348
        %2350 = vmatprep.mubr.bf16.mxu0 0
        %2351 = vmatmul.mubr.bf16.gmra.mrb[0].mxu0 %v2203
        %v2352 = vpop.f32.mrb[0].mxu0
        %v2353 = vadd.f32 0.0, %v2352
        %v2354 = vpop.f32.mrb[0].mxu0
        %v2355 = vadd.f32 0.0, %v2354
        %v2356 = vpop.f32.mrb[0].mxu0
        %v2357 = vadd.f32 0.0, %v2356
        %v2358 = vpop.f32.mrb[0].mxu0
        %v2359 = vadd.f32 0.0, %v2358
        %2360 = vdwg.mxu0
        %v2361 = vadd.f32 %v2032, %v2323
        %v2362 = vadd.f32 %v2033, %v2325
        %v2363 = vadd.f32 %v2034, %v2327
        %v2364 = vadd.f32 %v2035, %v2329
        %v2365 = vadd.f32 %v2036, %v2333
        %v2366 = vadd.f32 %v2037, %v2335
        %v2367 = vadd.f32 %v2038, %v2337
        %v2368 = vadd.f32 %v2039, %v2339
        %v2369 = vadd.f32 %v2040, %v2343
        %v2370 = vadd.f32 %v2041, %v2345
        %v2371 = vadd.f32 %v2042, %v2347
        %v2372 = vadd.f32 %v2043, %v2349
        %v2373 = vadd.f32 %v2044, %v2353
        %v2374 = vadd.f32 %v2045, %v2355
        %v2375 = vadd.f32 %v2046, %v2357
        %v2376 = vadd.f32 %v2047, %v2359
        %v2377 = vld [vmem:[%s1830] sm:$0xe]
        %v2378 = vld [vmem:[%s1830 + $0x8] sm:$0xe]
        %v2379 = vld [vmem:[%s1830 + $0x10] sm:$0xe]
        %v2380 = vld [vmem:[%s1830 + $0x18] sm:$0xe]
        %v2381 = vld [vmem:[%s1830 + $0x20] sm:$0xe]
        %v2382 = vld [vmem:[%s1830 + $0x28] sm:$0xe]
        %v2383 = vld [vmem:[%s1830 + $0x30] sm:$0xe]
        %v2384 = vld [vmem:[%s1830 + $0x38] sm:$0xe]
        %v2401 = vrot.slane %v2377, 5
        %v2402 = vrot.slane %v2401, 4
        %v2403 = vrot.slane %v2049, 5
        %v2404 = vsel %vm792, %v2402, %v2403
        %v2405 = vrot.slane %v2378, 5
        %v2406 = vrot.slane %v2405, 4
        %v2407 = vrot.slane %v2051, 5
        %v2408 = vsel %vm792, %v2406, %v2407
        %v2409 = vrot.slane %v2379, 5
        %v2410 = vrot.slane %v2409, 4
        %v2411 = vrot.slane %v2053, 5
        %v2412 = vsel %vm792, %v2410, %v2411
        %v2413 = vrot.slane %v2380, 5
        %v2414 = vrot.slane %v2413, 4
        %v2415 = vrot.slane %v2055, 5
        %v2416 = vsel %vm792, %v2414, %v2415
        %v2417 = vrot.slane %v2381, 5
        %v2418 = vrot.slane %v2417, 4
        %v2419 = vrot.slane %v2057, 5
        %v2420 = vsel %vm792, %v2418, %v2419
        %v2421 = vrot.slane %v2382, 5
        %v2422 = vrot.slane %v2421, 4
        %v2423 = vrot.slane %v2059, 5
        %v2424 = vsel %vm792, %v2422, %v2423
        %v2425 = vrot.slane %v2383, 5
        %v2426 = vrot.slane %v2425, 4
        %v2427 = vrot.slane %v2061, 5
        %v2428 = vsel %vm792, %v2426, %v2427
        %v2429 = vrot.slane %v2384, 5
        %v2430 = vrot.slane %v2429, 4
        %v2431 = vrot.slane %v2063, 5
        %v2432 = vsel %vm792, %v2430, %v2431
        %v2433 = vld [vmem:[%s1 + $0x400] sm:$0xff]
        %v2434 = vld [vmem:[%s1 + $0x408] sm:$0xff]
        %v2435 = vld [vmem:[%s1 + $0x410] sm:$0xff]
        %v2436 = vld [vmem:[%s1 + $0x418] sm:$0xff]
        %v2437 = vld [vmem:[%s1 + $0x420] sm:$0xff]
        %v2438 = vld [vmem:[%s1 + $0x428] sm:$0xff]
        %v2439 = vld [vmem:[%s1 + $0x430] sm:$0xff]
        %v2440 = vld [vmem:[%s1 + $0x438] sm:$0xff]
        %v2441 = vld [vmem:[%s1 + $0x440] sm:$0xff]
        %v2442 = vld [vmem:[%s1 + $0x448] sm:$0xff]
        %v2443 = vld [vmem:[%s1 + $0x450] sm:$0xff]
        %v2444 = vld [vmem:[%s1 + $0x458] sm:$0xff]
        %v2445 = vld [vmem:[%s1 + $0x460] sm:$0xff]
        %v2446 = vld [vmem:[%s1 + $0x468] sm:$0xff]
        %v2447 = vld [vmem:[%s1 + $0x470] sm:$0xff]
        %v2448 = vld [vmem:[%s1 + $0x478] sm:$0xff]
        %v2449 = vunpack.c.l.b16 %v2404
        %v2450 = vunpack.c.l.b16 %v2408
        %v2451 = vunpack.c.l.b16 %v2412
        %v2452 = vunpack.c.l.b16 %v2416
        %v2453 = vunpack.c.l.b16 %v2420
        %v2454 = vunpack.c.l.b16 %v2424
        %v2455 = vunpack.c.l.b16 %v2428
        %v2456 = vunpack.c.l.b16 %v2432
        %v2457 = vpack.c.b16 %v2450, %v2449
        %v2458 = vpack.c.b16 %v2452, %v2451
        %v2459 = vpack.c.b16 %v2454, %v2453
        %v2460 = vpack.c.b16 %v2456, %v2455
        %v2481 = vunpack.c.l.b16 %v2433
        %v2482 = vunpack.c.h.b16 %v2433
        %v2483 = vunpack.c.l.b16 %v2434
        %v2484 = vunpack.c.h.b16 %v2434
        %v2485 = vunpack.c.l.b16 %v2435
        %v2486 = vunpack.c.h.b16 %v2435
        %v2487 = vunpack.c.l.b16 %v2436
        %v2488 = vunpack.c.h.b16 %v2436
        %v2489 = vunpack.c.l.b16 %v2437
        %v2490 = vunpack.c.h.b16 %v2437
        %v2491 = vunpack.c.l.b16 %v2438
        %v2492 = vunpack.c.h.b16 %v2438
        %v2493 = vunpack.c.l.b16 %v2439
        %v2494 = vunpack.c.h.b16 %v2439
        %v2495 = vunpack.c.l.b16 %v2440
        %v2496 = vunpack.c.h.b16 %v2440
        %v2497 = vunpack.c.l.b16 %v2441
        %v2498 = vunpack.c.h.b16 %v2441
        %v2499 = vunpack.c.l.b16 %v2442
        %v2500 = vunpack.c.h.b16 %v2442
        %v2501 = vunpack.c.l.b16 %v2443
        %v2502 = vunpack.c.h.b16 %v2443
        %v2503 = vunpack.c.l.b16 %v2444
        %v2504 = vunpack.c.h.b16 %v2444
        %v2505 = vunpack.c.l.b16 %v2445
        %v2506 = vunpack.c.h.b16 %v2445
        %v2507 = vunpack.c.l.b16 %v2446
        %v2508 = vunpack.c.h.b16 %v2446
        %v2509 = vunpack.c.l.b16 %v2447
        %v2510 = vunpack.c.h.b16 %v2447
        %v2511 = vunpack.c.l.b16 %v2448
        %v2512 = vunpack.c.h.b16 %v2448
        %v2513 = vpack.c.b16 %v2483, %v2481
        %v2514 = vpack.c.b16 %v2484, %v2482
        %v2515 = vpack.c.b16 %v2487, %v2485
        %v2516 = vpack.c.b16 %v2488, %v2486
        %v2517 = vpack.c.b16 %v2491, %v2489
        %v2518 = vpack.c.b16 %v2492, %v2490
        %v2519 = vpack.c.b16 %v2495, %v2493
        %v2520 = vpack.c.b16 %v2496, %v2494
        %v2521 = vpack.c.b16 %v2499, %v2497
        %v2522 = vpack.c.b16 %v2500, %v2498
        %v2523 = vpack.c.b16 %v2503, %v2501
        %v2524 = vpack.c.b16 %v2504, %v2502
        %v2525 = vpack.c.b16 %v2507, %v2505
        %v2526 = vpack.c.b16 %v2508, %v2506
        %v2527 = vpack.c.b16 %v2511, %v2509
        %v2528 = vpack.c.b16 %v2512, %v2510
        %2545 = vmatprep.subr.bf16.mxu0 %v2514
        %2546 = vmatpush1.bf16.msra.mxu0 %v2513
        %2547 = vmatprep.subr.bf16.mxu0 %v2516
        %2548 = vmatpush1.bf16.msra.mxu0 %v2515
        %2549 = vmatprep.subr.bf16.mxu0 %v2518
        %2550 = vmatpush1.bf16.msra.mxu0 %v2517
        %2551 = vmatprep.subr.bf16.mxu0 %v2520
        %2552 = vmatpush1.bf16.msra.mxu0 %v2519
        %2553 = vmatprep.subr.bf16.mxu0 %v2522
        %2554 = vmatpush1.bf16.msra.mxu0 %v2521
        %2555 = vmatprep.subr.bf16.mxu0 %v2524
        %2556 = vmatpush1.bf16.msra.mxu0 %v2523
        %2557 = vmatprep.subr.bf16.mxu0 %v2526
        %2558 = vmatpush1.bf16.msra.mxu0 %v2525
        %2559 = vmatprep.subr.bf16.mxu0 %v2528
        %2560 = vmatpush1.bf16.msra.mxu0 %v2527
        %2561 = vmatprep.subr.bf16.mxu0 0
        %2562 = vmatpush1.bf16.msra.mxu0 0
        %2563 = vmatprep.subr.bf16.mxu0 0
        %2564 = vmatpush1.bf16.msra.mxu0 0
        %2565 = vmatprep.subr.bf16.mxu0 0
        %2566 = vmatpush1.bf16.msra.mxu0 0
        %2567 = vmatprep.subr.bf16.mxu0 0
        %2568 = vmatpush1.bf16.msra.mxu0 0
        %2569 = vmatprep.subr.bf16.mxu0 0
        %2570 = vmatpush1.bf16.msra.mxu0 0
        %2571 = vmatprep.subr.bf16.mxu0 0
        %2572 = vmatpush1.bf16.msra.mxu0 0
        %2573 = vmatprep.subr.bf16.mxu0 0
        %2574 = vmatpush1.bf16.msra.mxu0 0
        %2575 = vmatprep.subr.bf16.mxu0 0
        %2576 = vmatpush1.bf16.msra.mxu0 0
        %2577 = vmatprep.mubr.bf16.mxu0 0
        %2578 = vmatmul.mubr.bf16.gmra.mrb[0].mxu0 %v2457
        %v2579 = vpop.f32.mrb[0].mxu0
        %v2580 = vadd.f32 0.0, %v2579
        %v2581 = vpop.f32.mrb[0].mxu0
        %v2582 = vadd.f32 0.0, %v2581
        %v2583 = vpop.f32.mrb[0].mxu0
        %v2584 = vadd.f32 0.0, %v2583
        %v2585 = vpop.f32.mrb[0].mxu0
        %v2586 = vadd.f32 0.0, %v2585
        %2587 = vmatprep.mubr.bf16.mxu0 0
        %2588 = vmatmul.mubr.bf16.gmra.mrb[0].mxu0 %v2458
        %v2589 = vpop.f32.mrb[0].mxu0
        %v2590 = vadd.f32 0.0, %v2589
        %v2591 = vpop.f32.mrb[0].mxu0
        %v2592 = vadd.f32 0.0, %v2591
        %v2593 = vpop.f32.mrb[0].mxu0
        %v2594 = vadd.f32 0.0, %v2593
        %v2595 = vpop.f32.mrb[0].mxu0
        %v2596 = vadd.f32 0.0, %v2595
        %2597 = vmatprep.mubr.bf16.mxu0 0
        %2598 = vmatmul.mubr.bf16.gmra.mrb[0].mxu0 %v2459
        %v2599 = vpop.f32.mrb[0].mxu0
        %v2600 = vadd.f32 0.0, %v2599
        %v2601 = vpop.f32.mrb[0].mxu0
        %v2602 = vadd.f32 0.0, %v2601
        %v2603 = vpop.f32.mrb[0].mxu0
        %v2604 = vadd.f32 0.0, %v2603
        %v2605 = vpop.f32.mrb[0].mxu0
        %v2606 = vadd.f32 0.0, %v2605
        %2607 = vmatprep.mubr.bf16.mxu0 0
        %2608 = vmatmul.mubr.bf16.gmra.mrb[0].mxu0 %v2460
        %v2609 = vpop.f32.mrb[0].mxu0
        %v2610 = vadd.f32 0.0, %v2609
        %v2611 = vpop.f32.mrb[0].mxu0
        %v2612 = vadd.f32 0.0, %v2611
        %v2613 = vpop.f32.mrb[0].mxu0
        %v2614 = vadd.f32 0.0, %v2613
        %v2615 = vpop.f32.mrb[0].mxu0
        %v2616 = vadd.f32 0.0, %v2615
        %2617 = vdwg.mxu0
        %v2618 = vadd.f32 %v2361, %v2580
        %v2619 = vadd.f32 %v2362, %v2582
        %v2620 = vadd.f32 %v2363, %v2584
        %v2621 = vadd.f32 %v2364, %v2586
        %v2622 = vadd.f32 %v2365, %v2590
        %v2623 = vadd.f32 %v2366, %v2592
        %v2624 = vadd.f32 %v2367, %v2594
        %v2625 = vadd.f32 %v2368, %v2596
        %v2626 = vadd.f32 %v2369, %v2600
        %v2627 = vadd.f32 %v2370, %v2602
        %v2628 = vadd.f32 %v2371, %v2604
        %v2629 = vadd.f32 %v2372, %v2606
        %v2630 = vadd.f32 %v2373, %v2610
        %v2631 = vadd.f32 %v2374, %v2612
        %v2632 = vadd.f32 %v2375, %v2614
        %v2633 = vadd.f32 %v2376, %v2616
        %v2634 = vld [vmem:[%s2] sm:$0x3]
        %v2636 = vlaneseq
        %v2637 = vshrl.u32 %v2636, 7
        %v2638 = vsub.s32 0, %v2637
        %v2639 = vrot.slane %v2634, %v2638
        %v2640 = vlaneseq
        %v2641 = vshrl.u32 %v2640, 7
        %v2642 = vsub.s32 1, %v2641
        %v2643 = vrot.slane %v2634, %v2642
        %v2646 = vadd.f32 %v2618, %v2639
        %v2647 = vadd.f32 %v2619, %v2643
        %v2648 = vadd.f32 %v2620, %v2639
        %v2649 = vadd.f32 %v2621, %v2643
        %v2650 = vadd.f32 %v2622, %v2639
        %v2651 = vadd.f32 %v2623, %v2643
        %v2652 = vadd.f32 %v2624, %v2639
        %v2653 = vadd.f32 %v2625, %v2643
        %v2654 = vadd.f32 %v2626, %v2639
        %v2655 = vadd.f32 %v2627, %v2643
        %v2656 = vadd.f32 %v2628, %v2639
        %v2657 = vadd.f32 %v2629, %v2643
        %v2658 = vadd.f32 %v2630, %v2639
        %v2659 = vadd.f32 %v2631, %v2643
        %v2660 = vadd.f32 %v2632, %v2639
        %v2661 = vadd.f32 %v2633, %v2643
        %v2662 = vld [vmem:[%s250] sm:$0xff]
        %v2663 = vld [vmem:[%s250 + $0x8] sm:$0xff]
        %v2664 = vld [vmem:[%s250 + $0x10] sm:$0xff]
        %v2665 = vld [vmem:[%s250 + $0x18] sm:$0xff]
        %v2666 = vld [vmem:[%s250 + $0x20] sm:$0xff]
        %v2667 = vld [vmem:[%s250 + $0x28] sm:$0xff]
        %v2668 = vld [vmem:[%s250 + $0x30] sm:$0xff]
        %v2669 = vld [vmem:[%s250 + $0x38] sm:$0xff]
        %v2670 = vxor.u32 %v2646, 2147483648
        %v2671 = vxor.u32 %v2648, 2147483648
        %v2672 = vxor.u32 %v2650, 2147483648
        %v2673 = vxor.u32 %v2652, 2147483648
        %v2674 = vxor.u32 %v2654, 2147483648
        %v2675 = vxor.u32 %v2656, 2147483648
        %v2676 = vxor.u32 %v2658, 2147483648
        %v2677 = vxor.u32 %v2660, 2147483648
        %v2678 = vmul.f32 %v2670, 1.442695
        %v2679 = vpow.pop %v2678
        %v2680 = vmul.f32 %v2671, 1.442695
        %v2681 = vpow.pop %v2680
        %v2682 = vmul.f32 %v2672, 1.442695
        %v2683 = vpow.pop %v2682
        %v2684 = vmul.f32 %v2673, 1.442695
        %v2685 = vpow.pop %v2684
        %v2686 = vmul.f32 %v2674, 1.442695
        %v2687 = vpow.pop %v2686
        %v2688 = vmul.f32 %v2675, 1.442695
        %v2689 = vpow.pop %v2688
        %v2690 = vmul.f32 %v2676, 1.442695
        %v2691 = vpow.pop %v2690
        %v2692 = vmul.f32 %v2677, 1.442695
        %v2693 = vpow.pop %v2692
        %v2694 = vadd.f32 %v2679, 1.0
        %v2695 = vadd.f32 %v2681, 1.0
        %v2696 = vadd.f32 %v2683, 1.0
        %v2697 = vadd.f32 %v2685, 1.0
        %v2698 = vadd.f32 %v2687, 1.0
        %v2699 = vadd.f32 %v2689, 1.0
        %v2700 = vadd.f32 %v2691, 1.0
        %v2701 = vadd.f32 %v2693, 1.0
        %v2702 = vrcp.pop %v2694
        %v2703 = vmul.f32 1.0, %v2702
        %v2704 = vrcp.pop %v2695
        %v2705 = vmul.f32 1.0, %v2704
        %v2706 = vrcp.pop %v2696
        %v2707 = vmul.f32 1.0, %v2706
        %v2708 = vrcp.pop %v2697
        %v2709 = vmul.f32 1.0, %v2708
        %v2710 = vrcp.pop %v2698
        %v2711 = vmul.f32 1.0, %v2710
        %v2712 = vrcp.pop %v2699
        %v2713 = vmul.f32 1.0, %v2712
        %v2714 = vrcp.pop %v2700
        %v2715 = vmul.f32 1.0, %v2714
        %v2716 = vrcp.pop %v2701
        %v2717 = vmul.f32 1.0, %v2716
        %v2718 = vxor.u32 %v2647, 2147483648
        %v2719 = vxor.u32 %v2649, 2147483648
        %v2720 = vxor.u32 %v2651, 2147483648
        %v2721 = vxor.u32 %v2653, 2147483648
        %v2722 = vxor.u32 %v2655, 2147483648
        %v2723 = vxor.u32 %v2657, 2147483648
        %v2724 = vxor.u32 %v2659, 2147483648
        %v2725 = vxor.u32 %v2661, 2147483648
        %v2726 = vmul.f32 %v2718, 1.442695
        %v2727 = vpow.pop %v2726
        %v2728 = vmul.f32 %v2719, 1.442695
        %v2729 = vpow.pop %v2728
        %v2730 = vmul.f32 %v2720, 1.442695
        %v2731 = vpow.pop %v2730
        %v2732 = vmul.f32 %v2721, 1.442695
        %v2733 = vpow.pop %v2732
        %v2734 = vmul.f32 %v2722, 1.442695
        %v2735 = vpow.pop %v2734
        %v2736 = vmul.f32 %v2723, 1.442695
        %v2737 = vpow.pop %v2736
        %v2738 = vmul.f32 %v2724, 1.442695
        %v2739 = vpow.pop %v2738
        %v2740 = vmul.f32 %v2725, 1.442695
        %v2741 = vpow.pop %v2740
        %v2742 = vadd.f32 %v2727, 1.0
        %v2743 = vadd.f32 %v2729, 1.0
        %v2744 = vadd.f32 %v2731, 1.0
        %v2745 = vadd.f32 %v2733, 1.0
        %v2746 = vadd.f32 %v2735, 1.0
        %v2747 = vadd.f32 %v2737, 1.0
        %v2748 = vadd.f32 %v2739, 1.0
        %v2749 = vadd.f32 %v2741, 1.0
        %v2750 = vrcp.pop %v2742
        %v2751 = vmul.f32 1.0, %v2750
        %v2752 = vrcp.pop %v2743
        %v2753 = vmul.f32 1.0, %v2752
        %v2754 = vrcp.pop %v2744
        %v2755 = vmul.f32 1.0, %v2754
        %v2756 = vrcp.pop %v2745
        %v2757 = vmul.f32 1.0, %v2756
        %v2758 = vrcp.pop %v2746
        %v2759 = vmul.f32 1.0, %v2758
        %v2760 = vrcp.pop %v2747
        %v2761 = vmul.f32 1.0, %v2760
        %v2762 = vrcp.pop %v2748
        %v2763 = vmul.f32 1.0, %v2762
        %v2764 = vrcp.pop %v2749
        %v2765 = vmul.f32 1.0, %v2764
        %v2766 = vtanh.pop %v2647
        %v2767 = vtanh.pop %v2649
        %v2768 = vtanh.pop %v2651
        %v2769 = vtanh.pop %v2653
        %v2770 = vtanh.pop %v2655
        %v2771 = vtanh.pop %v2657
        %v2772 = vtanh.pop %v2659
        %v2773 = vtanh.pop %v2661
        %2782 = vrot.lane.b32.xlu0 %v2662, 64
        %v2783 = vpop.permute.xlu0 %2782
        %2784 = vrot.lane.b32.xlu0 %v2663, 64
        %v2785 = vpop.permute.xlu0 %2784
        %2786 = vrot.lane.b32.xlu0 %v2664, 64
        %v2787 = vpop.permute.xlu0 %2786
        %2788 = vrot.lane.b32.xlu0 %v2665, 64
        %v2789 = vpop.permute.xlu0 %2788
        %2790 = vrot.lane.b32.xlu0 %v2666, 64
        %v2791 = vpop.permute.xlu0 %2790
        %2792 = vrot.lane.b32.xlu0 %v2667, 64
        %v2793 = vpop.permute.xlu0 %2792
        %2794 = vrot.lane.b32.xlu0 %v2668, 64
        %v2795 = vpop.permute.xlu0 %2794
        %2796 = vrot.lane.b32.xlu0 %v2669, 64
        %v2797 = vpop.permute.xlu0 %2796
        %v2806 = vmul.f32 %v2703, %v2783
        %v2807 = vmul.f32 %v2705, %v2785
        %v2808 = vmul.f32 %v2707, %v2787
        %v2809 = vmul.f32 %v2709, %v2789
        %v2810 = vmul.f32 %v2711, %v2791
        %v2811 = vmul.f32 %v2713, %v2793
        %v2812 = vmul.f32 %v2715, %v2795
        %v2813 = vmul.f32 %v2717, %v2797
        %2822 = vrot.lane.b32.xlu0 %v2766, 64
        %v2823 = vpop.permute.xlu0 %2822
        %2824 = vrot.lane.b32.xlu0 %v2767, 64
        %v2825 = vpop.permute.xlu0 %2824
        %2826 = vrot.lane.b32.xlu0 %v2768, 64
        %v2827 = vpop.permute.xlu0 %2826
        %2828 = vrot.lane.b32.xlu0 %v2769, 64
        %v2829 = vpop.permute.xlu0 %2828
        %2830 = vrot.lane.b32.xlu0 %v2770, 64
        %v2831 = vpop.permute.xlu0 %2830
        %2832 = vrot.lane.b32.xlu0 %v2771, 64
        %v2833 = vpop.permute.xlu0 %2832
        %2834 = vrot.lane.b32.xlu0 %v2772, 64
        %v2835 = vpop.permute.xlu0 %2834
        %2836 = vrot.lane.b32.xlu0 %v2773, 64
        %v2837 = vpop.permute.xlu0 %2836
        %v2846 = vmul.f32 %v2703, %v2823
        %v2847 = vmul.f32 %v2705, %v2825
        %v2848 = vmul.f32 %v2707, %v2827
        %v2849 = vmul.f32 %v2709, %v2829
        %v2850 = vmul.f32 %v2711, %v2831
        %v2851 = vmul.f32 %v2713, %v2833
        %v2852 = vmul.f32 %v2715, %v2835
        %v2853 = vmul.f32 %v2717, %v2837
        %2862 = vrot.lane.b32.xlu0 %v2846, 64
        %v2863 = vpop.permute.xlu0 %2862
        %2864 = vrot.lane.b32.xlu0 %v2847, 64
        %v2865 = vpop.permute.xlu0 %2864
        %2866 = vrot.lane.b32.xlu0 %v2848, 64
        %v2867 = vpop.permute.xlu0 %2866
        %2868 = vrot.lane.b32.xlu0 %v2849, 64
        %v2869 = vpop.permute.xlu0 %2868
        %2870 = vrot.lane.b32.xlu0 %v2850, 64
        %v2871 = vpop.permute.xlu0 %2870
        %2872 = vrot.lane.b32.xlu0 %v2851, 64
        %v2873 = vpop.permute.xlu0 %2872
        %2874 = vrot.lane.b32.xlu0 %v2852, 64
        %v2875 = vpop.permute.xlu0 %2874
        %2876 = vrot.lane.b32.xlu0 %v2853, 64
        %v2877 = vpop.permute.xlu0 %2876
        %v2886 = vadd.f32 %v2806, %v2863
        %v2887 = vadd.f32 %v2807, %v2865
        %v2888 = vadd.f32 %v2808, %v2867
        %v2889 = vadd.f32 %v2809, %v2869
        %v2890 = vadd.f32 %v2810, %v2871
        %v2891 = vadd.f32 %v2811, %v2873
        %v2892 = vadd.f32 %v2812, %v2875
        %v2893 = vadd.f32 %v2813, %v2877
        %v2894 = vtanh.pop %v2886
        %v2895 = vtanh.pop %v2887
        %v2896 = vtanh.pop %v2888
        %v2897 = vtanh.pop %v2889
        %v2898 = vtanh.pop %v2890
        %v2899 = vtanh.pop %v2891
        %v2900 = vtanh.pop %v2892
        %v2901 = vtanh.pop %v2893
        %2910 = vrot.lane.b32.xlu0 %v2894, 64
        %v2911 = vpop.permute.xlu0 %2910
        %2912 = vrot.lane.b32.xlu0 %v2895, 64
        %v2913 = vpop.permute.xlu0 %2912
        %2914 = vrot.lane.b32.xlu0 %v2896, 64
        %v2915 = vpop.permute.xlu0 %2914
        %2916 = vrot.lane.b32.xlu0 %v2897, 64
        %v2917 = vpop.permute.xlu0 %2916
        %2918 = vrot.lane.b32.xlu0 %v2898, 64
        %v2919 = vpop.permute.xlu0 %2918
        %2920 = vrot.lane.b32.xlu0 %v2899, 64
        %v2921 = vpop.permute.xlu0 %2920
        %2922 = vrot.lane.b32.xlu0 %v2900, 64
        %v2923 = vpop.permute.xlu0 %2922
        %2924 = vrot.lane.b32.xlu0 %v2901, 64
        %v2925 = vpop.permute.xlu0 %2924
        %v2934 = vmul.f32 %v2751, %v2911
        %v2935 = vmul.f32 %v2753, %v2913
        %v2936 = vmul.f32 %v2755, %v2915
        %v2937 = vmul.f32 %v2757, %v2917
        %v2938 = vmul.f32 %v2759, %v2919
        %v2939 = vmul.f32 %v2761, %v2921
        %v2940 = vmul.f32 %v2763, %v2923
        %v2941 = vmul.f32 %v2765, %v2925
        %v2942 = vpack.c.bf16 %v2935, %v2934
        %v2943 = vpack.c.bf16 %v2937, %v2936
        %v2944 = vpack.c.bf16 %v2939, %v2938
        %v2945 = vpack.c.bf16 %v2941, %v2940
        %v2950 = vunpack.c.l.b16 %v2942
        %v2951 = vunpack.c.h.b16 %v2942
        %v2952 = vunpack.c.l.b16 %v2943
        %v2953 = vunpack.c.h.b16 %v2943
        %v2954 = vunpack.c.l.b16 %v2944
        %v2955 = vunpack.c.h.b16 %v2944
        %v2956 = vunpack.c.l.b16 %v2945
        %v2957 = vunpack.c.h.b16 %v2945
        %v2958 = vpack.c.b16 %v2950, %v2950
        %v2959 = vpack.c.b16 %v2951, %v2951
        %v2960 = vpack.c.b16 %v2952, %v2952
        %v2961 = vpack.c.b16 %v2953, %v2953
        %v2962 = vpack.c.b16 %v2954, %v2954
        %v2963 = vpack.c.b16 %v2955, %v2955
        %v2964 = vpack.c.b16 %v2956, %v2956
        %v2965 = vpack.c.b16 %v2957, %v2957
        %vm2974 = vcmask 519168
        %2975 = vst.msk [vmem:[%s255] sm:$0xf] %vm2974, %v2958
        %2976 = vst.msk [vmem:[%s255 + $0x4] sm:$0xf] %vm2974, %v2959
        %2977 = vst.msk [vmem:[%s255 + $0x8] sm:$0xf] %vm2974, %v2960
        %2978 = vst.msk [vmem:[%s255 + $0xc] sm:$0xf] %vm2974, %v2961
        %2979 = vst.msk [vmem:[%s255 + $0x10] sm:$0xf] %vm2974, %v2962
        %2980 = vst.msk [vmem:[%s255 + $0x14] sm:$0xf] %vm2974, %v2963
        %2981 = vst.msk [vmem:[%s255 + $0x18] sm:$0xf] %vm2974, %v2964
        %2982 = vst.msk [vmem:[%s255 + $0x1c] sm:$0xf] %vm2974, %v2965
        %2991 = vrot.lane.b32.xlu0 %v2886, 64
        %v2992 = vpop.permute.xlu0 %2991
        %2993 = vrot.lane.b32.xlu0 %v2887, 64
        %v2994 = vpop.permute.xlu0 %2993
        %2995 = vrot.lane.b32.xlu0 %v2888, 64
        %v2996 = vpop.permute.xlu0 %2995
        %2997 = vrot.lane.b32.xlu0 %v2889, 64
        %v2998 = vpop.permute.xlu0 %2997
        %2999 = vrot.lane.b32.xlu0 %v2890, 64
        %v3000 = vpop.permute.xlu0 %2999
        %3001 = vrot.lane.b32.xlu0 %v2891, 64
        %v3002 = vpop.permute.xlu0 %3001
        %3003 = vrot.lane.b32.xlu0 %v2892, 64
        %v3004 = vpop.permute.xlu0 %3003
        %3005 = vrot.lane.b32.xlu0 %v2893, 64
        %v3006 = vpop.permute.xlu0 %3005
        %vm3015 = vcmask 523264
        %3016 = vst.msk [vmem:[%s240] sm:$0xff] %vm3015, %v2992
        %3017 = vst.msk [vmem:[%s240 + $0x8] sm:$0xff] %vm3015, %v2994
        %3018 = vst.msk [vmem:[%s240 + $0x10] sm:$0xff] %vm3015, %v2996
        %3019 = vst.msk [vmem:[%s240 + $0x18] sm:$0xff] %vm3015, %v2998
        %3020 = vst.msk [vmem:[%s240 + $0x20] sm:$0xff] %vm3015, %v3000
        %3021 = vst.msk [vmem:[%s240 + $0x28] sm:$0xff] %vm3015, %v3002
        %3022 = vst.msk [vmem:[%s240 + $0x30] sm:$0xff] %vm3015, %v3004
        %3023 = vst.msk [vmem:[%s240 + $0x38] sm:$0xff] %vm3015, %v3006
        %p3024 = scmp.lt.s32.totalorder %s20, 1
        %s3025 = scalar_select %p3024, %s20, 1
        %s3026 = smul.addr %s3025, 8
        %s3027 = smul.addr %s3026, 4
        %s3028 = scalar_lea.vmem %s4, %s3027
        %s3029 = sand.u32 %s148, 1
        %s3030 = scalar_lea.sflag [#allocation3], %s3029
        %s3031 = sand.u32 %s148, 1
        %s3032 = smul.addr %s3031, 64
        %s3033 = scalar_lea.vmem [#allocation2], %s3032
        // Predicated region
        $region37: #{recurrent_down_forward.9} parent=35 // pred_check
          %p3034 = pneg %p132
        $region38: #{recurrent_down_forward.9} parent=35 // pred_check_branch
          %3036 = sbr.rel (%p3034) target = $region40
        $region39: #{recurrent_down_forward.9} parent=35 // pred_region
          _
        $region40: #{recurrent_down_forward.9} parent=35 // pred_fallthru
          _
        // Predicated region
        $region41: #{recurrent_down_forward.9} parent=35 // pred_check
          %p3037 = pneg %p158
        $region42: #{recurrent_down_forward.9} parent=35 // pred_check_branch
          %3039 = sbr.rel (%p3037) target = $region44
        $region43: #{recurrent_down_forward.9} parent=35 // pred_region
          %s3041 = ssub.s32 1024, 1024
          %3042 = vsyncadd %s3030, %s3041
          %s3043 = smul.addr %s20, 8
          %s3044 = smul.addr %s3043, 128
          %s3045 = scalar_lea.hbm %s5, %s3044
          %s3046 = sshll.u32 %s3033, 4
          %s3047 = int_to_ptr.vmem [resolvable:$true] %s3046
          %3052 = dma.vmem_to_hbm [thread:$0]  %s3047, 1024, %s3045, %s3030, 128, 128, 8
        $region44: #{recurrent_down_forward.9} parent=35 // pred_fallthru
          _
      $region36: #{recurrent_down_forward.9} parent=5 // pred_fallthru
        _
      %p3053 = scmp.le.s32.totalorder 2, %s15
      // Predicated region
      $region45: #{recurrent_down_forward.9} parent=5 // pred_check
        %p3054 = pneg %p3053
      $region46: #{recurrent_down_forward.9} parent=5 // pred_check_branch
        %3056 = sbr.rel (%p3054) target = $region48
      $region47: #{recurrent_down_forward.9} parent=5 // pred_region
        %s3057 = ssub.s32 %s15, 2
        // Predicated region
        $region49: #{recurrent_down_forward.9} parent=47 // pred_check
          %p3058 = pneg %p138
        $region50: #{recurrent_down_forward.9} parent=47 // pred_check_branch
          %3060 = sbr.rel (%p3058) target = $region52
        $region51: #{recurrent_down_forward.9} parent=47 // pred_region
          %p3061 = scmp.lt.s32.totalorder %s21, 1
          %s3062 = scalar_select %p3061, %s21, 1
          %s3063 = smul.addr %s3062, 8
          %s3064 = smul.addr %s3063, 4
          %s3065 = scalar_lea.vmem %s4, %s3064
        $region52: #{recurrent_down_forward.9} parent=47 // pred_fallthru
          _
        // Predicated region
        $region53: #{recurrent_down_forward.9} parent=47 // pred_check
          %p3066 = pneg %p164
        $region54: #{recurrent_down_forward.9} parent=47 // pred_check_branch
          %3068 = sbr.rel (%p3066) target = $region56
        $region55: #{recurrent_down_forward.9} parent=47 // pred_region
          %s3069 = sand.u32 %s149, 1
          %s3070 = scalar_lea.sflag [#allocation3], %s3069
          %s3071 = sand.u32 %s149, 1
          %s3072 = smul.addr %s3071, 64
          %s3073 = scalar_lea.vmem [#allocation2], %s3072
          %3074 = dma.done %s3070, 1024
        $region56: #{recurrent_down_forward.9} parent=47 // pred_fallthru
          _
      $region48: #{recurrent_down_forward.9} parent=5 // pred_fallthru
        _
    $region6: #{recurrent_down_forward.9} parent=1 // loop_footer
      %s19 = sadd.s32 1, %s15
    $region7: #{recurrent_down_forward.9} parent=1 // loop_footer_branch
      %14 = sbr.rel target = $region3
    $region8: #{recurrent_down_forward.9} parent=1 // loop_exit
      _
    %3075 = vsyncpa [#allocation3], 1
    %s3076 = scalar_lea.sflag [#allocation3], 1
    %3077 = vsyncpa %s3076, 1

</llo_original>
